<compile_context>
chip_gen: v5e
topology: v5e:2x2
jax: 0.10.0
libtpu: 0.0.40
codegen_flags: <defaults>
</compile_context>

<pallas_src>
from functools import partial

import jax
import jax.numpy as jnp
from jax.experimental import pallas as pl
from jax.experimental.pallas import tpu as pltpu

EPS = 1e-5
K = 5  # conv kernel size


def style_enc_kernel(x_ref, w1_ref, consts_ref, w2_ref, w3_ref, b3_ref,
                     out_ref, acc_ref, *, vpu_final):
    k = pl.program_id(0)

    # ---- Conv1d(k=5): K-chunked contraction, one tap per grid step ---------
    @pl.when(k == 0)
    def _():
        acc_ref[...] = jnp.zeros_like(acc_ref)

    # bf16 x bf16 -> f32 accumulate on the MXU; one (NT, C) x (C, C) tap.
    acc_ref[...] += jnp.dot(x_ref[...], w1_ref[...],
                            preferred_element_type=jnp.float32)

    # ---- Epilogue only on the last tap --------------------------------------
    @pl.when(k == pl.num_programs(0) - 1)
    def _():
        # Packed constant rows: 0=b1 1=b2 2=g1 3=be1 4=g2 5=be2
        b1 = consts_ref[0:1, :]
        b2 = consts_ref[1:2, :]
        g1 = consts_ref[2:3, :]
        be1 = consts_ref[3:4, :]
        g2 = consts_ref[4:5, :]
        be2 = consts_ref[5:6, :]

        # h1 = conv + b1, kept in place in the accumulator.
        acc_ref[...] += b1
        h1 = acc_ref[...]                                     # (NT, C) f32

        # Residual block: BN (batch stats, centered variance) -> ReLU -> 1x1
        mu1 = jnp.mean(h1, axis=0, keepdims=True)
        var1 = jnp.mean(jnp.square(h1 - mu1), axis=0, keepdims=True)
        n1 = jnp.maximum(
            (h1 - mu1) * jax.lax.rsqrt(var1 + EPS) * g1 + be1, 0.0)

        # h2 = h1 + n1 @ w2 + b2, overwriting the accumulator.
        acc_ref[...] += jnp.dot(n1.astype(w2_ref.dtype), w2_ref[...],
                                preferred_element_type=jnp.float32) + b2
        h2 = acc_ref[...]

        # BN -> ReLU -> Conv1x1(C -> out) -> Sigmoid
        mu2 = jnp.mean(h2, axis=0, keepdims=True)
        var2 = jnp.mean(jnp.square(h2 - mu2), axis=0, keepdims=True)
        n2 = jnp.maximum(
            (h2 - mu2) * jax.lax.rsqrt(var2 + EPS) * g2 + be2, 0.0)

        if vpu_final:
            # out_size == 1: VPU multiply + lane reduction (avoids a 1-column
            # MXU matmul / masked MXU drain).
            logits = jnp.sum(n2 * w3_ref[...], axis=-1, keepdims=True)
            logits = logits + b3_ref[...]
        else:
            logits = jnp.dot(n2.astype(w3_ref.dtype), w3_ref[...],
                             preferred_element_type=jnp.float32) + b3_ref[...]
        out_ref[...] = jax.nn.sigmoid(logits)


def _vmem_budget_bytes(NT, C, out_size, mxu_itemsize):
    """Rough resident-VMEM estimate for the pipeline (incl. double-buffers)."""
    return (
        NT * C * 4                       # f32 accumulator scratch
        + 2 * NT * C * mxu_itemsize      # x tap, double-buffered
        + 2 * C * C * mxu_itemsize       # w1 tap, double-buffered
        + 2 * C * C * mxu_itemsize       # w2 (default double-buffered)
        + 2 * 8 * C * 4                  # packed consts (padded to 8 rows)
        + 2 * max(C, C * out_size) * 4   # w3
        + 2 * 8 * max(out_size, 128) * 4 # b3 (padded tile)
        + 2 * NT * max(out_size, 128) * 4  # output tile
    )


def style_enc_forward(x, params, *, mxu_dtype=jnp.bfloat16):
    """x: (N, C, T) float32, matching the PyTorch Conv1d input layout."""
    N, C, T = x.shape
    out_size = params["w3"].shape[1]
    NT = N * T

    # ---- wrapper-side layout work: transpose, pad, tap-major im2col, casts --
    xt = jnp.transpose(x, (0, 2, 1))                       # (N, T, C)
    xpad = jnp.pad(xt, ((0, 0), (2, 2), (0, 0)))           # (N, T+4, C)
    # (K, NT, C): tap-major so each grid step DMAs one contiguous slab.
    x_taps = jnp.stack(
        [xpad[:, k:k + T, :].reshape(NT, C) for k in range(K)],
        axis=0).astype(mxu_dtype)                          # (K, NT, C)

    w1 = params["w1"].astype(mxu_dtype)                    # (K, C, C)
    w2 = params["w2"].astype(mxu_dtype)                    # (C, C)

    # Pack the six per-channel constants into one (6, C) f32 operand.
    consts = jnp.concatenate(
        [params["b1"], params["b2"], params["g1"], params["be1"],
         params["g2"], params["be2"]], axis=0).astype(jnp.float32)  # (6, C)

    vpu_final = (out_size == 1)
    if vpu_final:
        w3_in = params["w3"].reshape(1, C).astype(jnp.float32)   # f32 VPU row
        w3_spec = pl.BlockSpec((1, C), lambda k: (0, 0))
    else:
        w3_in = params["w3"].astype(mxu_dtype)                   # (C, out)
        w3_spec = pl.BlockSpec((C, out_size), lambda k: (0, 0))

    itemsize = jnp.dtype(mxu_dtype).itemsize
    budget = _vmem_budget_bytes(NT, C, out_size, itemsize)
    vmem_limit = int(min(max(2 * budget, 24 * 2**20), 48 * 2**20))

    out = pl.pallas_call(
        partial(style_enc_kernel, vpu_final=vpu_final),
        out_shape=jax.ShapeDtypeStruct((NT, out_size), jnp.float32),
        grid_spec=pltpu.PrefetchScalarGridSpec(
            num_scalar_prefetch=0,
            grid=(K,),
            in_specs=[
                pl.BlockSpec((None, NT, C), lambda k: (k, 0, 0)),  # x tap k
                pl.BlockSpec((None, C, C), lambda k: (k, 0, 0)),   # w1 tap k
                pl.BlockSpec((6, C), lambda k: (0, 0)),            # packed consts
                pl.BlockSpec((C, C), lambda k: (0, 0)),            # w2 (bf16)
                w3_spec,                                           # w3
                pl.BlockSpec((1, out_size), lambda k: (0, 0)),     # b3
            ],
            out_specs=pl.BlockSpec((NT, out_size), lambda k: (0, 0)),
            scratch_shapes=[pltpu.VMEM((NT, C), jnp.float32)],
        ),
        compiler_params=pltpu.CompilerParams(
            dimension_semantics=("arbitrary",),
            vmem_limit_bytes=vmem_limit),
    )(x_taps, w1, consts, w2, w3_in, params["b3"])

    return jnp.transpose(out.reshape(N, T, out_size), (0, 2, 1))  # (N, out, T)


def reference_forward(x, params):
    """Pure-JAX f32 reference with the module's forward semantics."""
    N, C, T = x.shape
    xt = jnp.transpose(x, (0, 2, 1))
    xpad = jnp.pad(xt, ((0, 0), (2, 2), (0, 0)))
    h1 = jnp.zeros((N * T, C), jnp.float32)
    for k in range(K):
        h1 = h1 + xpad[:, k:k + T, :].reshape(N * T, C) @ params["w1"][k]
    h1 = h1 + params["b1"]

    def bn(h, g, b):
        mu = jnp.mean(h, axis=0, keepdims=True)
        d = h - mu
        var = jnp.mean(d * d, axis=0, keepdims=True)
        return d * jax.lax.rsqrt(var + EPS) * g + b

    n1 = jnp.maximum(bn(h1, params["g1"], params["be1"]), 0.0)
    h2 = h1 + n1 @ params["w2"] + params["b2"]
    n2 = jnp.maximum(bn(h2, params["g2"], params["be2"]), 0.0)
    logits = n2 @ params["w3"] + params["b3"]
    out = jax.nn.sigmoid(logits)
    out_size = params["w3"].shape[1]
    return jnp.transpose(out.reshape(N, T, out_size), (0, 2, 1))


def init_params(key, C=1024, out_size=1):
    ks = jax.random.split(key, 6)
    return {
        # Conv1d(1024->1024, k=5): stored as (K, Cin, Cout) for matmul form.
        "w1": 0.02 * jax.random.normal(ks[0], (K, C, C), jnp.float32),
        "b1": 0.02 * jax.random.normal(ks[1], (1, C), jnp.float32),
        # Residual Conv1d(1024->1024, k=1)
        "w2": 0.02 * jax.random.normal(ks[2], (C, C), jnp.float32),
        "b2": 0.02 * jax.random.normal(ks[3], (1, C), jnp.float32),
        # BatchNorm affine params (PyTorch default init: weight=1, bias=0)
        "g1": jnp.ones((1, C), jnp.float32),
        "be1": jnp.zeros((1, C), jnp.float32),
        "g2": jnp.ones((1, C), jnp.float32),
        "be2": jnp.zeros((1, C), jnp.float32),
        # Final Conv1d(1024 -> output_size, k=1)
        "w3": 0.02 * jax.random.normal(ks[4], (C, out_size), jnp.float32),
        "b3": 0.02 * jax.random.normal(ks[5], (1, out_size), jnp.float32),
    }


if __name__ == "__main__":
    key = jax.random.PRNGKey(0)
    kp, kx = jax.random.split(key)

    N, C, T, OUT = 2, 1024, 16, 1          # C=1024 is fixed by the module
    params = init_params(kp, C=C, out_size=OUT)
    x = jax.random.normal(kx, (N, C, T), jnp.float32)

    y = style_enc_forward(x, params)
    y = jax.block_until_ready(y)

    assert y.shape == (N, OUT, T), y.shape
    y_ref = reference_forward(x, params)
    # bf16 weights/activations on the MXU path => modest tolerance vs f32 ref.
    assert jnp.allclose(y, y_ref, atol=3e-2, rtol=3e-2), (
        float(jnp.max(jnp.abs(y - y_ref))))
    assert bool(jnp.all((y >= 0.0) & (y <= 1.0)))  # sigmoid range

    print("KERNEL_OK")
</pallas_src>

<mosaic_0001>
module attributes {stable_mosaic.version = 11 : i64} {
  func.func @style_enc_kernel(%arg0: i32, %arg1: memref<1x32x1024xbf16, #tpu.memory_space<vmem>>, %arg2: memref<1x1024x1024xbf16, #tpu.memory_space<vmem>>, %arg3: memref<6x1024xf32, #tpu.memory_space<vmem>>, %arg4: memref<1024x1024xbf16, #tpu.memory_space<vmem>>, %arg5: memref<1x1024xf32, #tpu.memory_space<vmem>>, %arg6: memref<1x1xf32, #tpu.memory_space<vmem>>, %arg7: memref<32x1xf32, #tpu.memory_space<vmem>>, %arg8: memref<32x1024xf32, #tpu.memory_space<vmem>>) attributes {dimension_semantics = [#tpu.dimension_semantics<arbitrary>], iteration_bounds = array<i64: 5>, scalar_prefetch = 0 : i64, scratch_operands = 1 : i64, tpu.core_type = #tpu.core_type<tc>, window_params = [{transform_indices = @transform_0, window_bounds = array<i64: 1, 32, 1024>}, {transform_indices = @transform_1, window_bounds = array<i64: 1, 1024, 1024>}, {pipeline_mode = #tpu.pipeline_mode<synchronous>, transform_indices = @transform_2, window_bounds = array<i64: 6, 1024>}, {pipeline_mode = #tpu.pipeline_mode<synchronous>, transform_indices = @transform_3, window_bounds = array<i64: 1024, 1024>}, {pipeline_mode = #tpu.pipeline_mode<synchronous>, transform_indices = @transform_4, window_bounds = array<i64: 1, 1024>}, {pipeline_mode = #tpu.pipeline_mode<synchronous>, transform_indices = @transform_5, window_bounds = array<i64: 1, 1>}, {pipeline_mode = #tpu.pipeline_mode<synchronous>, transform_indices = @transform_6, window_bounds = array<i64: 32, 1>}]} {
    %c0_i32 = arith.constant 0 : i32
    %0 = arith.cmpi eq, %arg0, %c0_i32 : i32
    %1 = arith.extui %0 : i1 to i32
    %c0_i32_0 = arith.constant 0 : i32
    %2 = arith.cmpi ne, %1, %c0_i32_0 : i32
    scf.if %2 {
      %cst_11 = arith.constant 0.000000e+00 : f32
      %14 = vector.broadcast %cst_11 : f32 to vector<32x1024xf32>
      %c0_12 = arith.constant 0 : index
      %c0_13 = arith.constant 0 : index
      %15 = vector.load %arg8[%c0_12, %c0_13] : memref<32x1024xf32, #tpu.memory_space<vmem>>, vector<32x1024xf32>
      tpu.vector_store %arg8[%c0_12, %c0_13], %14 {strides = array<i32>} : memref<32x1024xf32, #tpu.memory_space<vmem>>, vector<32x1024xf32>,
    } else {
    }
    %c0 = arith.constant 0 : index
    %c0_1 = arith.constant 0 : index
    %3 = vector.load %arg8[%c0, %c0_1] : memref<32x1024xf32, #tpu.memory_space<vmem>>, vector<32x1024xf32>
    %c0_2 = arith.constant 0 : index
    %c0_3 = arith.constant 0 : index
    %c0_4 = arith.constant 0 : index
    %4 = vector.load %arg1[%c0_2, %c0_3, %c0_4] : memref<1x32x1024xbf16, #tpu.memory_space<vmem>>, vector<1x32x1024xbf16>
    %5 = vector.shape_cast %4 : vector<1x32x1024xbf16> to vector<32x1024xbf16>
    %c0_5 = arith.constant 0 : index
    %c0_6 = arith.constant 0 : index
    %c0_7 = arith.constant 0 : index
    %6 = vector.load %arg2[%c0_5, %c0_6, %c0_7] : memref<1x1024x1024xbf16, #tpu.memory_space<vmem>>, vector<1x1024x1024xbf16>
    %7 = vector.shape_cast %6 : vector<1x1024x1024xbf16> to vector<1024x1024xbf16>
    %cst = arith.constant dense<0.000000e+00> : vector<32x1024xf32>
    %8 = tpu.matmul %5, %7, %cst {dimension_numbers = #tpu.dot_dimension_numbers<[1], [0], [0], [1], [0, 0, 1, 1], [], []>} : vector<32x1024xbf16>, vector<1024x1024xbf16>, vector<32x1024xf32> -> vector<32x1024xf32>
    %9 = arith.addf %3, %8 : vector<32x1024xf32>
    %c0_8 = arith.constant 0 : index
    %c0_9 = arith.constant 0 : index
    %10 = vector.load %arg8[%c0_8, %c0_9] : memref<32x1024xf32, #tpu.memory_space<vmem>>, vector<32x1024xf32>
    tpu.vector_store %arg8[%c0_8, %c0_9], %9 {strides = array<i32>} : memref<32x1024xf32, #tpu.memory_space<vmem>>, vector<32x1024xf32>,
    %c4_i32 = arith.constant 4 : i32
    %11 = arith.cmpi eq, %arg0, %c4_i32 : i32
    %12 = arith.extui %11 : i1 to i32
    %c0_i32_10 = arith.constant 0 : i32
    %13 = arith.cmpi ne, %12, %c0_i32_10 : i32
    scf.if %13 {
      %c0_11 = arith.constant 0 : index
      %c0_12 = arith.constant 0 : index
      %14 = vector.load %arg3[%c0_11, %c0_12] : memref<6x1024xf32, #tpu.memory_space<vmem>>, vector<1x1024xf32>
      %c1 = arith.constant 1 : index
      %c0_13 = arith.constant 0 : index
      %15 = vector.load %arg3[%c1, %c0_13] : memref<6x1024xf32, #tpu.memory_space<vmem>>, vector<1x1024xf32>
      %c2 = arith.constant 2 : index
      %c0_14 = arith.constant 0 : index
      %16 = vector.load %arg3[%c2, %c0_14] : memref<6x1024xf32, #tpu.memory_space<vmem>>, vector<1x1024xf32>
      %c3 = arith.constant 3 : index
      %c0_15 = arith.constant 0 : index
      %17 = vector.load %arg3[%c3, %c0_15] : memref<6x1024xf32, #tpu.memory_space<vmem>>, vector<1x1024xf32>
      %c4 = arith.constant 4 : index
      %c0_16 = arith.constant 0 : index
      %18 = vector.load %arg3[%c4, %c0_16] : memref<6x1024xf32, #tpu.memory_space<vmem>>, vector<1x1024xf32>
      %c5 = arith.constant 5 : index
      %c0_17 = arith.constant 0 : index
      %19 = vector.load %arg3[%c5, %c0_17] : memref<6x1024xf32, #tpu.memory_space<vmem>>, vector<1x1024xf32>
      %c0_18 = arith.constant 0 : index
      %c0_19 = arith.constant 0 : index
      %20 = vector.load %arg8[%c0_18, %c0_19] : memref<32x1024xf32, #tpu.memory_space<vmem>>, vector<32x1024xf32>
      %21 = vector.broadcast %14 : vector<1x1024xf32> to vector<32x1024xf32>
      %22 = arith.addf %20, %21 : vector<32x1024xf32>
      %c0_20 = arith.constant 0 : index
      %c0_21 = arith.constant 0 : index
      %23 = vector.load %arg8[%c0_20, %c0_21] : memref<32x1024xf32, #tpu.memory_space<vmem>>, vector<32x1024xf32>
      tpu.vector_store %arg8[%c0_20, %c0_21], %22 {strides = array<i32>} : memref<32x1024xf32, #tpu.memory_space<vmem>>, vector<32x1024xf32>,
      %c0_22 = arith.constant 0 : index
      %c0_23 = arith.constant 0 : index
      %24 = vector.load %arg8[%c0_22, %c0_23] : memref<32x1024xf32, #tpu.memory_space<vmem>>, vector<32x1024xf32>
      %cst_24 = arith.constant dense<0.000000e+00> : vector<1024xf32>
      %25 = vector.multi_reduction <add>, %24, %cst_24 [0] : vector<32x1024xf32> to vector<1024xf32>
      %26 = vector.shape_cast %25 : vector<1024xf32> to vector<1x1024xf32>
      %cst_25 = arith.constant 3.200000e+01 : f32
      %27 = vector.broadcast %cst_25 : f32 to vector<1x1024xf32>
      %28 = arith.divf %26, %27 : vector<1x1024xf32>
      %29 = vector.broadcast %28 : vector<1x1024xf32> to vector<32x1024xf32>
      %30 = arith.subf %24, %29 : vector<32x1024xf32>
      %31 = arith.mulf %30, %30 : vector<32x1024xf32>
      %cst_26 = arith.constant dense<0.000000e+00> : vector<1024xf32>
      %32 = vector.multi_reduction <add>, %31, %cst_26 [0] : vector<32x1024xf32> to vector<1024xf32>
      %33 = vector.shape_cast %32 : vector<1024xf32> to vector<1x1024xf32>
      %cst_27 = arith.constant 3.200000e+01 : f32
      %34 = vector.broadcast %cst_27 : f32 to vector<1x1024xf32>
      %35 = arith.divf %33, %34 : vector<1x1024xf32>
      %36 = vector.broadcast %28 : vector<1x1024xf32> to vector<32x1024xf32>
      %37 = arith.subf %24, %36 : vector<32x1024xf32>
      %cst_28 = arith.constant 9.99999974E-6 : f32
      %38 = vector.broadcast %cst_28 : f32 to vector<1x1024xf32>
      %39 = arith.addf %35, %38 : vector<1x1024xf32>
      %40 = math.rsqrt %39 : vector<1x1024xf32>
      %41 = vector.broadcast %40 : vector<1x1024xf32> to vector<32x1024xf32>
      %42 = arith.mulf %37, %41 : vector<32x1024xf32>
      %43 = vector.broadcast %16 : vector<1x1024xf32> to vector<32x1024xf32>
      %44 = arith.mulf %42, %43 : vector<32x1024xf32>
      %45 = vector.broadcast %17 : vector<1x1024xf32> to vector<32x1024xf32>
      %46 = arith.addf %44, %45 : vector<32x1024xf32>
      %cst_29 = arith.constant 0.000000e+00 : f32
      %47 = vector.broadcast %cst_29 : f32 to vector<32x1024xf32>
      %48 = arith.maximumf %46, %47 : vector<32x1024xf32>
      %c0_30 = arith.constant 0 : index
      %c0_31 = arith.constant 0 : index
      %49 = vector.load %arg8[%c0_30, %c0_31] : memref<32x1024xf32, #tpu.memory_space<vmem>>, vector<32x1024xf32>
      %50 = arith.truncf %48 : vector<32x1024xf32> to vector<32x1024xbf16>
      %c0_32 = arith.constant 0 : index
      %c0_33 = arith.constant 0 : index
      %51 = vector.load %arg4[%c0_32, %c0_33] : memref<1024x1024xbf16, #tpu.memory_space<vmem>>, vector<1024x1024xbf16>
      %cst_34 = arith.constant dense<0.000000e+00> : vector<32x1024xf32>
      %52 = tpu.matmul %50, %51, %cst_34 {dimension_numbers = #tpu.dot_dimension_numbers<[1], [0], [0], [1], [0, 0, 1, 1], [], []>} : vector<32x1024xbf16>, vector<1024x1024xbf16>, vector<32x1024xf32> -> vector<32x1024xf32>
      %53 = vector.broadcast %15 : vector<1x1024xf32> to vector<32x1024xf32>
      %54 = arith.addf %52, %53 : vector<32x1024xf32>
      %55 = arith.addf %49, %54 : vector<32x1024xf32>
      %c0_35 = arith.constant 0 : index
      %c0_36 = arith.constant 0 : index
      %56 = vector.load %arg8[%c0_35, %c0_36] : memref<32x1024xf32, #tpu.memory_space<vmem>>, vector<32x1024xf32>
      tpu.vector_store %arg8[%c0_35, %c0_36], %55 {strides = array<i32>} : memref<32x1024xf32, #tpu.memory_space<vmem>>, vector<32x1024xf32>,
      %c0_37 = arith.constant 0 : index
      %c0_38 = arith.constant 0 : index
      %57 = vector.load %arg8[%c0_37, %c0_38] : memref<32x1024xf32, #tpu.memory_space<vmem>>, vector<32x1024xf32>
      %cst_39 = arith.constant dense<0.000000e+00> : vector<1024xf32>
      %58 = vector.multi_reduction <add>, %57, %cst_39 [0] : vector<32x1024xf32> to vector<1024xf32>
      %59 = vector.shape_cast %58 : vector<1024xf32> to vector<1x1024xf32>
      %cst_40 = arith.constant 3.200000e+01 : f32
      %60 = vector.broadcast %cst_40 : f32 to vector<1x1024xf32>
      %61 = arith.divf %59, %60 : vector<1x1024xf32>
      %62 = vector.broadcast %61 : vector<1x1024xf32> to vector<32x1024xf32>
      %63 = arith.subf %57, %62 : vector<32x1024xf32>
      %64 = arith.mulf %63, %63 : vector<32x1024xf32>
      %cst_41 = arith.constant dense<0.000000e+00> : vector<1024xf32>
      %65 = vector.multi_reduction <add>, %64, %cst_41 [0] : vector<32x1024xf32> to vector<1024xf32>
      %66 = vector.shape_cast %65 : vector<1024xf32> to vector<1x1024xf32>
      %cst_42 = arith.constant 3.200000e+01 : f32
      %67 = vector.broadcast %cst_42 : f32 to vector<1x1024xf32>
      %68 = arith.divf %66, %67 : vector<1x1024xf32>
      %69 = vector.broadcast %61 : vector<1x1024xf32> to vector<32x1024xf32>
      %70 = arith.subf %57, %69 : vector<32x1024xf32>
      %cst_43 = arith.constant 9.99999974E-6 : f32
      %71 = vector.broadcast %cst_43 : f32 to vector<1x1024xf32>
      %72 = arith.addf %68, %71 : vector<1x1024xf32>
      %73 = math.rsqrt %72 : vector<1x1024xf32>
      %74 = vector.broadcast %73 : vector<1x1024xf32> to vector<32x1024xf32>
      %75 = arith.mulf %70, %74 : vector<32x1024xf32>
      %76 = vector.broadcast %18 : vector<1x1024xf32> to vector<32x1024xf32>
      %77 = arith.mulf %75, %76 : vector<32x1024xf32>
      %78 = vector.broadcast %19 : vector<1x1024xf32> to vector<32x1024xf32>
      %79 = arith.addf %77, %78 : vector<32x1024xf32>
      %cst_44 = arith.constant 0.000000e+00 : f32
      %80 = vector.broadcast %cst_44 : f32 to vector<32x1024xf32>
      %81 = arith.maximumf %79, %80 : vector<32x1024xf32>
      %c0_45 = arith.constant 0 : index
      %c0_46 = arith.constant 0 : index
      %82 = vector.load %arg5[%c0_45, %c0_46] : memref<1x1024xf32, #tpu.memory_space<vmem>>, vector<1x1024xf32>
      %83 = vector.broadcast %82 : vector<1x1024xf32> to vector<32x1024xf32>
      %84 = arith.mulf %81, %83 : vector<32x1024xf32>
      %cst_47 = arith.constant dense<0.000000e+00> : vector<32xf32>
      %85 = vector.multi_reduction <add>, %84, %cst_47 [1] : vector<32x1024xf32> to vector<32xf32>
      %86 = vector.shape_cast %85 : vector<32xf32> to vector<32x1xf32>
      %c0_48 = arith.constant 0 : index
      %c0_49 = arith.constant 0 : index
      %87 = vector.load %arg6[%c0_48, %c0_49] : memref<1x1xf32, #tpu.memory_space<vmem>>, vector<1x1xf32>
      %88 = vector.broadcast %87 : vector<1x1xf32> to vector<32x1xf32>
      %89 = arith.addf %86, %88 : vector<32x1xf32>
      %90 = arith.negf %89 : vector<32x1xf32>
      %91 = math.exp %90 : vector<32x1xf32>
      %cst_50 = arith.constant 1.000000e+00 : f32
      %92 = vector.broadcast %cst_50 : f32 to vector<32x1xf32>
      %93 = arith.addf %92, %91 : vector<32x1xf32>
      %94 = arith.divf %92, %93 : vector<32x1xf32>
      %c0_51 = arith.constant 0 : index
      %c0_52 = arith.constant 0 : index
      %95 = vector.load %arg7[%c0_51, %c0_52] : memref<32x1xf32, #tpu.memory_space<vmem>>, vector<32x1xf32>
      tpu.vector_store %arg7[%c0_51, %c0_52], %94 {strides = array<i32>} : memref<32x1xf32, #tpu.memory_space<vmem>>, vector<32x1xf32>,
    } else {
    }
    return
  }
  func.func @transform_0(%arg0: i32) -> (i32, i32, i32) {
    %c0_i32 = arith.constant 0 : i32
    %c0_i32_0 = arith.constant 0 : i32
    %c0_i32_1 = arith.constant 0 : i32
    return %arg0, %c0_i32, %c0_i32_0 : i32, i32, i32
  }
  func.func @transform_1(%arg0: i32) -> (i32, i32, i32) {
    %c0_i32 = arith.constant 0 : i32
    %c0_i32_0 = arith.constant 0 : i32
    %c0_i32_1 = arith.constant 0 : i32
    return %arg0, %c0_i32, %c0_i32_0 : i32, i32, i32
  }
  func.func @transform_2(%arg0: i32) -> (i32, i32) {
    %c0_i32 = arith.constant 0 : i32
    %c0_i32_0 = arith.constant 0 : i32
    %c0_i32_1 = arith.constant 0 : i32
    return %c0_i32, %c0_i32_0 : i32, i32
  }
  func.func @transform_3(%arg0: i32) -> (i32, i32) {
    %c0_i32 = arith.constant 0 : i32
    %c0_i32_0 = arith.constant 0 : i32
    %c0_i32_1 = arith.constant 0 : i32
    return %c0_i32, %c0_i32_0 : i32, i32
  }
  func.func @transform_4(%arg0: i32) -> (i32, i32) {
    %c0_i32 = arith.constant 0 : i32
    %c0_i32_0 = arith.constant 0 : i32
    %c0_i32_1 = arith.constant 0 : i32
    return %c0_i32, %c0_i32_0 : i32, i32
  }
  func.func @transform_5(%arg0: i32) -> (i32, i32) {
    %c0_i32 = arith.constant 0 : i32
    %c0_i32_0 = arith.constant 0 : i32
    %c0_i32_1 = arith.constant 0 : i32
    return %c0_i32, %c0_i32_0 : i32, i32
  }
  func.func @transform_6(%arg0: i32) -> (i32, i32) {
    %c0_i32 = arith.constant 0 : i32
    %c0_i32_0 = arith.constant 0 : i32
    %c0_i32_1 = arith.constant 0 : i32
    return %c0_i32, %c0_i32_0 : i32, i32
  }
}

</mosaic_0001>

<llo_original>
// kernel: tpu_custom_call.1
$region0: #{tpu_custom_call.1}
  #allocation0 [shape = 'u32[]', space=smem, size = 0x4, offset = 0x4, fixed_abs, tag = 'smem constant byte address 0x4 - core index']
  #allocation1 [shape = 'u32[72,128]{1,0:T(1,128)}', space=vmem, size = 0x9000, scoped, tag = 'internal scratch']
  #allocation2 [shape = 'f32[32,1024]{1,0:T(8,128)}', space=vmem, size = 0x20000, scoped, tag = 'scratch operand']
  #allocation3 [shape = 'f32[1,1]{1,0:T(1,128)S(1)}', space=vmem, size = 0x200, scoped, tag = 'scoped memory for tpu_custom_call.1']
  %s0 = inlined_call_operand.hbm [shape: bf16[5,32,1024], index: 0, kind: input, shape index: {}]
  %s1 = inlined_call_operand.hbm [shape: bf16[5,1024,1024], index: 1, kind: input, shape index: {}]
  %s2 = inlined_call_operand.hbm [shape: f32[6,1024], index: 2, kind: input, shape index: {}]
  %s3 = inlined_call_operand.hbm [shape: bf16[1024,1024], index: 3, kind: input, shape index: {}]
  %s4 = inlined_call_operand.hbm [shape: f32[1,1024], index: 4, kind: input, shape index: {}]
  %s5 = inlined_call_operand.<no memory space> [shape: f32[1,1], index: 5, kind: input, shape index: {}]
  %s6 = inlined_call_operand.vmem [shape: f32[32,1], index: 6, kind: output, shape index: {}]
  %s7 = sld [smem:[#allocation0]]
  $region85: #{tpu_custom_call.1} parent=0
    _
  %s9 = ssub.s32 1, %s7
  %s10 = scalar_select 0, %s9, %s7
  %v11 = vstv %s5
  %12 = vst [vmem:[#allocation3] sm:$0x1] %v11
  $region1: #{tpu_custom_call.1} parent=0
    #allocation4 [shape = 'u8[131072]{0}', space=vmem, size = 0x20000, scoped, tag = 'input window, operand 0']
    #allocation5 [shape = 's32[2]{0}', space=sflag, size = 0x8, scoped, tag = 'scoped memory for tpu_custom_call.1']
    #allocation6 [shape = 'u8[4194304]{0}', space=vmem, size = 0x400000, scoped, tag = 'input window, operand 1']
    #allocation7 [shape = 's32[2]{0}', space=sflag, size = 0x8, scoped, tag = 'scoped memory for tpu_custom_call.1']
    #allocation8 [shape = 'u8[32768]{0}', space=vmem, size = 0x8000, scoped, tag = 'input window, operand 2, single buffered']
    #allocation9 [shape = 'u8[2097152]{0}', space=vmem, size = 0x200000, scoped, tag = 'input window, operand 3, single buffered']
    #allocation10 [shape = 's32[1]{0}', space=sflag, size = 0x4, scoped, tag = 'scoped memory for tpu_custom_call.1']
    #allocation11 [shape = 'u8[4096]{0}', space=vmem, size = 0x1000, scoped, tag = 'input window, operand 4, single buffered']
    %13 = vsyncpa [#allocation5], 0
    %s14 = scalar_lea.sflag [#allocation5], 1
    %15 = vsyncpa %s14, 0
    %16 = vsyncpa [#allocation7], 0
    %s17 = scalar_lea.sflag [#allocation7], 1
    %18 = vsyncpa %s17, 0
    %19 = vsyncpa [#allocation10], 0
    loop: start=0, step=1, limit=7
    $region2: #{tpu_custom_call.1} parent=1 // loop_pre_header
      _
    $region3: #{tpu_custom_call.1} parent=1 // loop_header
      %s21 = sphi 0, %s25
      %p22 = scmp.ge.s32.totalorder %s21, 7
      %s31 = sphi 0, %s33
      %s34 = sphi 0, %s31
      %s35 = sphi 0, %s34
      %s51 = sphi 0, %s35
      %s57 = sphi 0, %s59
      %s60 = sphi 0, %s57
      %s61 = sphi 0, %s60
      %s77 = sphi 0, %s61
      %s81 = sphi 0, %s81
      %s83 = sphi 0, %s81
      %s84 = sphi 0, %s83
      %s98 = sphi 0, %s84
      %s102 = sphi 0, %s102
      %s104 = sphi 0, %s102
      %s105 = sphi 0, %s104
      %s119 = sphi 0, %s105
      %s123 = sphi 0, %s123
      %s125 = sphi 0, %s123
      %s126 = sphi 0, %s125
      %s140 = sphi 0, %s126
      %s144 = sphi 0, %s144
      %s146 = sphi 0, %s144
      %s147 = sphi 0, %s146
      %s161 = sphi 0, %s147
      %s165 = sphi 0, %s165
      %s167 = sphi 0, %s165
      %s168 = sphi 0, %s167
      %s182 = sphi 0, %s168
    $region4: #{tpu_custom_call.1} parent=1 // loop_header_branch
      %24 = sbr.rel (%p22) target = $region8
    $region5: #{tpu_custom_call.1} parent=1 // loop_body
      %s26 = ssub.s32 %s21, 1
      %s27 = ssub.s32 %s21, 2
      %s28 = sadd.s32 %s21, 1
      %s29 = ssub.s32 %s21, %s28
      %p30 = scmp.eq.s32.totalorder %s29, 0
      %s32 = sadd.s32 %s31, 1
      %s33 = scalar_select %p30, %s31, %s32
      %p36 = pneg %p30
      %p37 = scmp.eq.s32.totalorder %s21, 4
      %p38 = por %p36, %p37
      %p39 = scmp.ne.s32.totalorder %s31, %s34
      %p40 = scmp.eq.s32.totalorder %s21, 0
      %p41 = por %p39, %p40
      %p42 = scmp.ne.s32.totalorder %s31, %s34
      %p43 = scmp.eq.s32.totalorder %s26, 4
      %p44 = por %p42, %p43
      %p45 = scmp.ne.s32.totalorder %s34, %s35
      %p46 = scmp.eq.s32.totalorder %s26, 0
      %p47 = por %p45, %p46
      %p48 = scmp.ne.s32.totalorder %s34, %s35
      %p49 = scmp.eq.s32.totalorder %s27, 4
      %p50 = por %p48, %p49
      %p52 = scmp.ne.s32.totalorder %s35, %s51
      %p53 = scmp.eq.s32.totalorder %s27, 0
      %p54 = por %p52, %p53
      %s55 = ssub.s32 %s21, %s28
      %p56 = scmp.eq.s32.totalorder %s55, 0
      %s58 = sadd.s32 %s57, 1
      %s59 = scalar_select %p56, %s57, %s58
      %p62 = pneg %p56
      %p63 = scmp.eq.s32.totalorder %s21, 4
      %p64 = por %p62, %p63
      %p65 = scmp.ne.s32.totalorder %s57, %s60
      %p66 = scmp.eq.s32.totalorder %s21, 0
      %p67 = por %p65, %p66
      %p68 = scmp.ne.s32.totalorder %s57, %s60
      %p69 = scmp.eq.s32.totalorder %s26, 4
      %p70 = por %p68, %p69
      %p71 = scmp.ne.s32.totalorder %s60, %s61
      %p72 = scmp.eq.s32.totalorder %s26, 0
      %p73 = por %p71, %p72
      %p74 = scmp.ne.s32.totalorder %s60, %s61
      %p75 = scmp.eq.s32.totalorder %s27, 4
      %p76 = por %p74, %p75
      %p78 = scmp.ne.s32.totalorder %s61, %s77
      %p79 = scmp.eq.s32.totalorder %s27, 0
      %p80 = por %p78, %p79
      %s82 = sadd.s32 %s81, 1
      %p85 = scmp.eq.s32.totalorder %s21, 4
      %p86 = scmp.ne.s32.totalorder %s81, %s83
      %p87 = scmp.eq.s32.totalorder %s21, 0
      %p88 = por %p86, %p87
      %p89 = scmp.ne.s32.totalorder %s81, %s83
      %p90 = scmp.eq.s32.totalorder %s26, 4
      %p91 = por %p89, %p90
      %p92 = scmp.ne.s32.totalorder %s83, %s84
      %p93 = scmp.eq.s32.totalorder %s26, 0
      %p94 = por %p92, %p93
      %p95 = scmp.ne.s32.totalorder %s83, %s84
      %p96 = scmp.eq.s32.totalorder %s27, 4
      %p97 = por %p95, %p96
      %p99 = scmp.ne.s32.totalorder %s84, %s98
      %p100 = scmp.eq.s32.totalorder %s27, 0
      %p101 = por %p99, %p100
      %s103 = sadd.s32 %s102, 1
      %p106 = scmp.eq.s32.totalorder %s21, 4
      %p107 = scmp.ne.s32.totalorder %s102, %s104
      %p108 = scmp.eq.s32.totalorder %s21, 0
      %p109 = por %p107, %p108
      %p110 = scmp.ne.s32.totalorder %s102, %s104
      %p111 = scmp.eq.s32.totalorder %s26, 4
      %p112 = por %p110, %p111
      %p113 = scmp.ne.s32.totalorder %s104, %s105
      %p114 = scmp.eq.s32.totalorder %s26, 0
      %p115 = por %p113, %p114
      %p116 = scmp.ne.s32.totalorder %s104, %s105
      %p117 = scmp.eq.s32.totalorder %s27, 4
      %p118 = por %p116, %p117
      %p120 = scmp.ne.s32.totalorder %s105, %s119
      %p121 = scmp.eq.s32.totalorder %s27, 0
      %p122 = por %p120, %p121
      %s124 = sadd.s32 %s123, 1
      %p127 = scmp.eq.s32.totalorder %s21, 4
      %p128 = scmp.ne.s32.totalorder %s123, %s125
      %p129 = scmp.eq.s32.totalorder %s21, 0
      %p130 = por %p128, %p129
      %p131 = scmp.ne.s32.totalorder %s123, %s125
      %p132 = scmp.eq.s32.totalorder %s26, 4
      %p133 = por %p131, %p132
      %p134 = scmp.ne.s32.totalorder %s125, %s126
      %p135 = scmp.eq.s32.totalorder %s26, 0
      %p136 = por %p134, %p135
      %p137 = scmp.ne.s32.totalorder %s125, %s126
      %p138 = scmp.eq.s32.totalorder %s27, 4
      %p139 = por %p137, %p138
      %p141 = scmp.ne.s32.totalorder %s126, %s140
      %p142 = scmp.eq.s32.totalorder %s27, 0
      %p143 = por %p141, %p142
      %s145 = sadd.s32 %s144, 1
      %p148 = scmp.eq.s32.totalorder %s21, 4
      %p149 = scmp.ne.s32.totalorder %s144, %s146
      %p150 = scmp.eq.s32.totalorder %s21, 0
      %p151 = por %p149, %p150
      %p152 = scmp.ne.s32.totalorder %s144, %s146
      %p153 = scmp.eq.s32.totalorder %s26, 4
      %p154 = por %p152, %p153
      %p155 = scmp.ne.s32.totalorder %s146, %s147
      %p156 = scmp.eq.s32.totalorder %s26, 0
      %p157 = por %p155, %p156
      %p158 = scmp.ne.s32.totalorder %s146, %s147
      %p159 = scmp.eq.s32.totalorder %s27, 4
      %p160 = por %p158, %p159
      %p162 = scmp.ne.s32.totalorder %s147, %s161
      %p163 = scmp.eq.s32.totalorder %s27, 0
      %p164 = por %p162, %p163
      %s166 = sadd.s32 %s165, 1
      %p169 = scmp.eq.s32.totalorder %s21, 4
      %p170 = scmp.ne.s32.totalorder %s165, %s167
      %p171 = scmp.eq.s32.totalorder %s21, 0
      %p172 = por %p170, %p171
      %p173 = scmp.ne.s32.totalorder %s165, %s167
      %p174 = scmp.eq.s32.totalorder %s26, 4
      %p175 = por %p173, %p174
      %p176 = scmp.ne.s32.totalorder %s167, %s168
      %p177 = scmp.eq.s32.totalorder %s26, 0
      %p178 = por %p176, %p177
      %p179 = scmp.ne.s32.totalorder %s167, %s168
      %p180 = scmp.eq.s32.totalorder %s27, 4
      %p181 = por %p179, %p180
      %p183 = scmp.ne.s32.totalorder %s168, %s182
      %p184 = scmp.eq.s32.totalorder %s27, 0
      %p185 = por %p183, %p184
      %p186 = scmp.le.s32.totalorder 1, %s21
      %p187 = scmp.lt.s32.totalorder %s21, 6
      %p188 = pnand %p186, %p187
      %p189 = pneg %p188
      // Predicated region
      $region9: #{tpu_custom_call.1} parent=5 // pred_check
        _
      $region10: #{tpu_custom_call.1} parent=5 // pred_check_branch
        %191 = sbr.rel (%p188) target = $region12
      $region11: #{tpu_custom_call.1} parent=5 // pred_region
        %s192 = ssub.s32 %s21, 1
        // Predicated region
        $region13: #{tpu_custom_call.1} parent=11 // pred_check
          %p193 = pneg %p94
        $region14: #{tpu_custom_call.1} parent=11 // pred_check_branch
          %195 = sbr.rel (%p193) target = $region16
        $region15: #{tpu_custom_call.1} parent=11 // pred_region
          %197 = vsyncadd [#allocation7], 0
          %s199 = sshll.u32 %s2, 4
          %s200 = int_to_ptr.hbm [resolvable:$true] %s199
          %s201 = sshll.u32 [#allocation8], 4
          %s202 = int_to_ptr.vmem [resolvable:$true] %s201
          %204 = dma.hbm_to_vmem [thread:$0]  %s200, 1024, %s202, [#allocation7]
        $region16: #{tpu_custom_call.1} parent=11 // pred_fallthru
          _
        // Predicated region
        $region17: #{tpu_custom_call.1} parent=11 // pred_check
          %p205 = pneg %p115
        $region18: #{tpu_custom_call.1} parent=11 // pred_check_branch
          %207 = sbr.rel (%p205) target = $region20
        $region19: #{tpu_custom_call.1} parent=11 // pred_region
          %209 = vsyncadd [#allocation10], 0
          %s210 = sshll.u32 %s3, 4
          %s211 = int_to_ptr.hbm [resolvable:$true] %s210
          %s212 = sshll.u32 [#allocation9], 4
          %s213 = int_to_ptr.vmem [resolvable:$true] %s212
          %218 = dma.hbm_to_vmem [thread:$0]  %s211, 65536, %s213, [#allocation10], 512, 512, 32
        $region20: #{tpu_custom_call.1} parent=11 // pred_fallthru
          _
        // Predicated region
        $region21: #{tpu_custom_call.1} parent=11 // pred_check
          %p219 = pneg %p136
        $region22: #{tpu_custom_call.1} parent=11 // pred_check_branch
          %221 = sbr.rel (%p219) target = $region24
        $region23: #{tpu_custom_call.1} parent=11 // pred_region
          %223 = vsyncadd [#allocation10], 0
          %s225 = sshll.u32 %s4, 4
          %s226 = int_to_ptr.hbm [resolvable:$true] %s225
          %s227 = sshll.u32 [#allocation11], 4
          %s228 = int_to_ptr.vmem [resolvable:$true] %s227
          %230 = dma.hbm_to_vmem [thread:$0]  %s226, 128, %s228, [#allocation10]
        $region24: #{tpu_custom_call.1} parent=11 // pred_fallthru
          _
        // Predicated region
        $region25: #{tpu_custom_call.1} parent=11 // pred_check
          %p231 = pneg %p157
        $region26: #{tpu_custom_call.1} parent=11 // pred_check_branch
          %233 = sbr.rel (%p231) target = $region28
        $region27: #{tpu_custom_call.1} parent=11 // pred_region
          _
        $region28: #{tpu_custom_call.1} parent=11 // pred_fallthru
          _
      $region12: #{tpu_custom_call.1} parent=5 // pred_fallthru
        _
      %p234 = scmp.lt.s32.totalorder %s21, 5
      // Predicated region
      $region29: #{tpu_custom_call.1} parent=5 // pred_check
        %p235 = pneg %p234
      $region30: #{tpu_custom_call.1} parent=5 // pred_check_branch
        %237 = sbr.rel (%p235) target = $region32
      $region31: #{tpu_custom_call.1} parent=5 // pred_region
        // Predicated region
        $region33: #{tpu_custom_call.1} parent=31 // pred_check
          %p238 = pneg %p41
        $region34: #{tpu_custom_call.1} parent=31 // pred_check_branch
          %240 = sbr.rel (%p238) target = $region36
        $region35: #{tpu_custom_call.1} parent=31 // pred_region
          %s241 = sand.u32 %s31, 1
          %s242 = scalar_lea.sflag [#allocation5], %s241
          %s243 = sand.u32 %s31, 1
          %s244 = smul.addr %s243, 128
          %s245 = scalar_lea.vmem [#allocation4], %s244
          %247 = vsyncadd %s242, 0
          %s248 = smul.addr %s21, 32
          %s249 = smul.addr %s248, 4
          %s250 = scalar_lea.hbm %s0, %s249
          %s251 = sshll.u32 %s250, 4
          %s252 = int_to_ptr.hbm [resolvable:$true] %s251
          %s253 = sshll.u32 %s245, 4
          %s254 = int_to_ptr.vmem [resolvable:$true] %s253
          %259 = dma.hbm_to_vmem [thread:$0]  %s252, 2048, %s254, %s242, 512, 512, 32
        $region36: #{tpu_custom_call.1} parent=31 // pred_fallthru
          _
        // Predicated region
        $region37: #{tpu_custom_call.1} parent=31 // pred_check
          %p260 = pneg %p67
        $region38: #{tpu_custom_call.1} parent=31 // pred_check_branch
          %262 = sbr.rel (%p260) target = $region40
        $region39: #{tpu_custom_call.1} parent=31 // pred_region
          %s263 = sand.u32 %s21, 1
          %s264 = scalar_lea.sflag [#allocation7], %s263
          %s265 = sand.u32 %s57, 1
          %s266 = smul.addr %s265, 4096
          %s267 = scalar_lea.vmem [#allocation6], %s266
          %269 = vsyncadd %s264, 0
          %s270 = smul.addr %s21, 1024
          %s271 = smul.addr %s270, 4
          %s272 = scalar_lea.hbm %s1, %s271
          %s273 = sshll.u32 %s272, 4
          %s274 = int_to_ptr.hbm [resolvable:$true] %s273
          %s275 = sshll.u32 %s267, 4
          %s276 = int_to_ptr.vmem [resolvable:$true] %s275
          %281 = dma.hbm_to_vmem [thread:$0]  %s274, 65536, %s276, %s264, 512, 512, 32
        $region40: #{tpu_custom_call.1} parent=31 // pred_fallthru
          _
      $region32: #{tpu_custom_call.1} parent=5 // pred_fallthru
        _
      %p282 = scmp.le.s32.totalorder 1, %s21
      %p283 = scmp.lt.s32.totalorder %s21, 6
      %p284 = pnand %p282, %p283
      %p285 = pneg %p284
      // Predicated region
      $region41: #{tpu_custom_call.1} parent=5 // pred_check
        _
      $region42: #{tpu_custom_call.1} parent=5 // pred_check_branch
        %287 = sbr.rel (%p284) target = $region44
      $region43: #{tpu_custom_call.1} parent=5 // pred_region
        %s288 = ssub.s32 %s21, 1
        %s289 = sand.u32 %s34, 1
        %s290 = scalar_lea.sflag [#allocation5], %s289
        %s291 = sand.u32 %s34, 1
        %s292 = smul.addr %s291, 128
        %s293 = scalar_lea.vmem [#allocation4], %s292
        // Predicated region
        $region45: #{tpu_custom_call.1} parent=43 // pred_check
          %p294 = pneg %p47
        $region46: #{tpu_custom_call.1} parent=43 // pred_check_branch
          %296 = sbr.rel (%p294) target = $region48
        $region47: #{tpu_custom_call.1} parent=43 // pred_region
          %298 = dma.done %s290, 2048
        $region48: #{tpu_custom_call.1} parent=43 // pred_fallthru
          _
        %s299 = sand.u32 %s26, 1
        %s300 = scalar_lea.sflag [#allocation7], %s299
        %s301 = sand.u32 %s60, 1
        %s302 = smul.addr %s301, 4096
        %s303 = scalar_lea.vmem [#allocation6], %s302
        // Predicated region
        $region49: #{tpu_custom_call.1} parent=43 // pred_check
          %p304 = pneg %p73
        $region50: #{tpu_custom_call.1} parent=43 // pred_check_branch
          %306 = sbr.rel (%p304) target = $region52
        $region51: #{tpu_custom_call.1} parent=43 // pred_region
          %308 = dma.done %s300, 65536
        $region52: #{tpu_custom_call.1} parent=43 // pred_fallthru
          _
        // Predicated region
        $region53: #{tpu_custom_call.1} parent=43 // pred_check
          %p309 = pneg %p94
        $region54: #{tpu_custom_call.1} parent=43 // pred_check_branch
          %311 = sbr.rel (%p309) target = $region56
        $region55: #{tpu_custom_call.1} parent=43 // pred_region
          %313 = dma.done [#allocation7], 1024
        $region56: #{tpu_custom_call.1} parent=43 // pred_fallthru
          _
        // Predicated region
        $region57: #{tpu_custom_call.1} parent=43 // pred_check
          %p314 = pneg %p115
        $region58: #{tpu_custom_call.1} parent=43 // pred_check_branch
          %316 = sbr.rel (%p314) target = $region60
        $region59: #{tpu_custom_call.1} parent=43 // pred_region
          %318 = dma.done [#allocation10], 65536
        $region60: #{tpu_custom_call.1} parent=43 // pred_fallthru
          _
        // Predicated region
        $region61: #{tpu_custom_call.1} parent=43 // pred_check
          %p319 = pneg %p136
        $region62: #{tpu_custom_call.1} parent=43 // pred_check_branch
          %321 = sbr.rel (%p319) target = $region64
        $region63: #{tpu_custom_call.1} parent=43 // pred_region
          %323 = dma.done [#allocation10], 128
        $region64: #{tpu_custom_call.1} parent=43 // pred_fallthru
          _
        %s324 = sand.u32 %s34, 1
        %s325 = scalar_lea.sflag [#allocation5], %s324
        %s326 = sand.u32 %s34, 1
        %s327 = smul.addr %s326, 128
        %s328 = scalar_lea.vmem [#allocation4], %s327
        %p329 = pneg %p47
        %p330 = pneg %p44
        %s331 = sand.u32 %s26, 1
        %s332 = scalar_lea.sflag [#allocation7], %s331
        %s333 = sand.u32 %s60, 1
        %s334 = smul.addr %s333, 4096
        %s335 = scalar_lea.vmem [#allocation6], %s334
        %p336 = pneg %p73
        %p337 = pneg %p70
        %p338 = pneg %p94
        %p339 = pneg %p91
        %p340 = pneg %p115
        %p341 = pneg %p112
        %p342 = pneg %p136
        %p343 = pneg %p133
        %p344 = pneg %p157
        %p345 = pneg %p154
        %p346 = pneg %p178
        %p347 = pneg %p175
        %p348 = scmp.eq.s32.totalorder %s26, 0
        // Predicated region
        $region65: #{tpu_custom_call.1} parent=43 // pred_check
          %p349 = pneg %p348
        $region66: #{tpu_custom_call.1} parent=43 // pred_check_branch
          %351 = sbr.rel (%p349) target = $region68
        $region67: #{tpu_custom_call.1} parent=43 // pred_region
          %352 = vst [vmem:[#allocation2] sm:$0xff] 0.0
          %353 = vst [vmem:[#allocation2 + $0x8] sm:$0xff] 0.0
          %354 = vst [vmem:[#allocation2 + $0x10] sm:$0xff] 0.0
          %355 = vst [vmem:[#allocation2 + $0x18] sm:$0xff] 0.0
          %356 = vst [vmem:[#allocation2 + $0x20] sm:$0xff] 0.0
          %357 = vst [vmem:[#allocation2 + $0x28] sm:$0xff] 0.0
          %358 = vst [vmem:[#allocation2 + $0x30] sm:$0xff] 0.0
          %359 = vst [vmem:[#allocation2 + $0x38] sm:$0xff] 0.0
          %360 = vst [vmem:[#allocation2 + $0x40] sm:$0xff] 0.0
          %361 = vst [vmem:[#allocation2 + $0x48] sm:$0xff] 0.0
          %362 = vst [vmem:[#allocation2 + $0x50] sm:$0xff] 0.0
          %363 = vst [vmem:[#allocation2 + $0x58] sm:$0xff] 0.0
          %364 = vst [vmem:[#allocation2 + $0x60] sm:$0xff] 0.0
          %365 = vst [vmem:[#allocation2 + $0x68] sm:$0xff] 0.0
          %366 = vst [vmem:[#allocation2 + $0x70] sm:$0xff] 0.0
          %367 = vst [vmem:[#allocation2 + $0x78] sm:$0xff] 0.0
          %368 = vst [vmem:[#allocation2 + $0x80] sm:$0xff] 0.0
          %369 = vst [vmem:[#allocation2 + $0x88] sm:$0xff] 0.0
          %370 = vst [vmem:[#allocation2 + $0x90] sm:$0xff] 0.0
          %371 = vst [vmem:[#allocation2 + $0x98] sm:$0xff] 0.0
          %372 = vst [vmem:[#allocation2 + $0xa0] sm:$0xff] 0.0
          %373 = vst [vmem:[#allocation2 + $0xa8] sm:$0xff] 0.0
          %374 = vst [vmem:[#allocation2 + $0xb0] sm:$0xff] 0.0
          %375 = vst [vmem:[#allocation2 + $0xb8] sm:$0xff] 0.0
          %376 = vst [vmem:[#allocation2 + $0xc0] sm:$0xff] 0.0
          %377 = vst [vmem:[#allocation2 + $0xc8] sm:$0xff] 0.0
          %378 = vst [vmem:[#allocation2 + $0xd0] sm:$0xff] 0.0
          %379 = vst [vmem:[#allocation2 + $0xd8] sm:$0xff] 0.0
          %380 = vst [vmem:[#allocation2 + $0xe0] sm:$0xff] 0.0
          %381 = vst [vmem:[#allocation2 + $0xe8] sm:$0xff] 0.0
          %382 = vst [vmem:[#allocation2 + $0xf0] sm:$0xff] 0.0
          %383 = vst [vmem:[#allocation2 + $0xf8] sm:$0xff] 0.0
        $region68: #{tpu_custom_call.1} parent=43 // pred_fallthru
          _
        %v384 = vld [vmem:[#allocation2] sm:$0xff]
        %v385 = vld [vmem:[#allocation2 + $0x8] sm:$0xff]
        %v386 = vld [vmem:[#allocation2 + $0x10] sm:$0xff]
        %v387 = vld [vmem:[#allocation2 + $0x18] sm:$0xff]
        %v388 = vld [vmem:[#allocation2 + $0x20] sm:$0xff]
        %v389 = vld [vmem:[#allocation2 + $0x28] sm:$0xff]
        %v390 = vld [vmem:[#allocation2 + $0x30] sm:$0xff]
        %v391 = vld [vmem:[#allocation2 + $0x38] sm:$0xff]
        %v392 = vld [vmem:[#allocation2 + $0x40] sm:$0xff]
        %v393 = vld [vmem:[#allocation2 + $0x48] sm:$0xff]
        %v394 = vld [vmem:[#allocation2 + $0x50] sm:$0xff]
        %v395 = vld [vmem:[#allocation2 + $0x58] sm:$0xff]
        %v396 = vld [vmem:[#allocation2 + $0x60] sm:$0xff]
        %v397 = vld [vmem:[#allocation2 + $0x68] sm:$0xff]
        %v398 = vld [vmem:[#allocation2 + $0x70] sm:$0xff]
        %v399 = vld [vmem:[#allocation2 + $0x78] sm:$0xff]
        %v400 = vld [vmem:[#allocation2 + $0x80] sm:$0xff]
        %v401 = vld [vmem:[#allocation2 + $0x88] sm:$0xff]
        %v402 = vld [vmem:[#allocation2 + $0x90] sm:$0xff]
        %v403 = vld [vmem:[#allocation2 + $0x98] sm:$0xff]
        %v404 = vld [vmem:[#allocation2 + $0xa0] sm:$0xff]
        %v405 = vld [vmem:[#allocation2 + $0xa8] sm:$0xff]
        %v406 = vld [vmem:[#allocation2 + $0xb0] sm:$0xff]
        %v407 = vld [vmem:[#allocation2 + $0xb8] sm:$0xff]
        %v408 = vld [vmem:[#allocation2 + $0xc0] sm:$0xff]
        %v409 = vld [vmem:[#allocation2 + $0xc8] sm:$0xff]
        %v410 = vld [vmem:[#allocation2 + $0xd0] sm:$0xff]
        %v411 = vld [vmem:[#allocation2 + $0xd8] sm:$0xff]
        %v412 = vld [vmem:[#allocation2 + $0xe0] sm:$0xff]
        %v413 = vld [vmem:[#allocation2 + $0xe8] sm:$0xff]
        %v414 = vld [vmem:[#allocation2 + $0xf0] sm:$0xff]
        %v415 = vld [vmem:[#allocation2 + $0xf8] sm:$0xff]
        %v416 = vld [vmem:[%s293] sm:$0xff]
        %v417 = vld [vmem:[%s293 + $0x8] sm:$0xff]
        %v418 = vld [vmem:[%s293 + $0x10] sm:$0xff]
        %v419 = vld [vmem:[%s293 + $0x18] sm:$0xff]
        %v420 = vld [vmem:[%s293 + $0x20] sm:$0xff]
        %v421 = vld [vmem:[%s293 + $0x28] sm:$0xff]
        %v422 = vld [vmem:[%s293 + $0x30] sm:$0xff]
        %v423 = vld [vmem:[%s293 + $0x38] sm:$0xff]
        %v424 = vld [vmem:[%s293 + $0x40] sm:$0xff]
        %v425 = vld [vmem:[%s293 + $0x48] sm:$0xff]
        %v426 = vld [vmem:[%s293 + $0x50] sm:$0xff]
        %v427 = vld [vmem:[%s293 + $0x58] sm:$0xff]
        %v428 = vld [vmem:[%s293 + $0x60] sm:$0xff]
        %v429 = vld [vmem:[%s293 + $0x68] sm:$0xff]
        %v430 = vld [vmem:[%s293 + $0x70] sm:$0xff]
        %v431 = vld [vmem:[%s293 + $0x78] sm:$0xff]
        %v432 = vld [vmem:[%s303] sm:$0xff]
        %v433 = vld [vmem:[%s303 + $0x8] sm:$0xff]
        %v434 = vld [vmem:[%s303 + $0x10] sm:$0xff]
        %v435 = vld [vmem:[%s303 + $0x18] sm:$0xff]
        %v436 = vld [vmem:[%s303 + $0x20] sm:$0xff]
        %v437 = vld [vmem:[%s303 + $0x28] sm:$0xff]
        %v438 = vld [vmem:[%s303 + $0x30] sm:$0xff]
        %v439 = vld [vmem:[%s303 + $0x38] sm:$0xff]
        %v440 = vld [vmem:[%s303 + $0x40] sm:$0xff]
        %v441 = vld [vmem:[%s303 + $0x48] sm:$0xff]
        %v442 = vld [vmem:[%s303 + $0x50] sm:$0xff]
        %v443 = vld [vmem:[%s303 + $0x58] sm:$0xff]
        %v444 = vld [vmem:[%s303 + $0x60] sm:$0xff]
        %v445 = vld [vmem:[%s303 + $0x68] sm:$0xff]
        %v446 = vld [vmem:[%s303 + $0x70] sm:$0xff]
        %v447 = vld [vmem:[%s303 + $0x78] sm:$0xff]
        %v448 = vld [vmem:[%s303 + $0x80] sm:$0xff]
        %v449 = vld [vmem:[%s303 + $0x88] sm:$0xff]
        %v450 = vld [vmem:[%s303 + $0x90] sm:$0xff]
        %v451 = vld [vmem:[%s303 + $0x98] sm:$0xff]
        %v452 = vld [vmem:[%s303 + $0xa0] sm:$0xff]
        %v453 = vld [vmem:[%s303 + $0xa8] sm:$0xff]
        %v454 = vld [vmem:[%s303 + $0xb0] sm:$0xff]
        %v455 = vld [vmem:[%s303 + $0xb8] sm:$0xff]
        %v456 = vld [vmem:[%s303 + $0xc0] sm:$0xff]
        %v457 = vld [vmem:[%s303 + $0xc8] sm:$0xff]
        %v458 = vld [vmem:[%s303 + $0xd0] sm:$0xff]
        %v459 = vld [vmem:[%s303 + $0xd8] sm:$0xff]
        %v460 = vld [vmem:[%s303 + $0xe0] sm:$0xff]
        %v461 = vld [vmem:[%s303 + $0xe8] sm:$0xff]
        %v462 = vld [vmem:[%s303 + $0xf0] sm:$0xff]
        %v463 = vld [vmem:[%s303 + $0xf8] sm:$0xff]
        %v464 = vld [vmem:[%s303 + $0x100] sm:$0xff]
        %v465 = vld [vmem:[%s303 + $0x108] sm:$0xff]
        %v466 = vld [vmem:[%s303 + $0x110] sm:$0xff]
        %v467 = vld [vmem:[%s303 + $0x118] sm:$0xff]
        %v468 = vld [vmem:[%s303 + $0x120] sm:$0xff]
        %v469 = vld [vmem:[%s303 + $0x128] sm:$0xff]
        %v470 = vld [vmem:[%s303 + $0x130] sm:$0xff]
        %v471 = vld [vmem:[%s303 + $0x138] sm:$0xff]
        %v472 = vld [vmem:[%s303 + $0x140] sm:$0xff]
        %v473 = vld [vmem:[%s303 + $0x148] sm:$0xff]
        %v474 = vld [vmem:[%s303 + $0x150] sm:$0xff]
        %v475 = vld [vmem:[%s303 + $0x158] sm:$0xff]
        %v476 = vld [vmem:[%s303 + $0x160] sm:$0xff]
        %v477 = vld [vmem:[%s303 + $0x168] sm:$0xff]
        %v478 = vld [vmem:[%s303 + $0x170] sm:$0xff]
        %v479 = vld [vmem:[%s303 + $0x178] sm:$0xff]
        %v480 = vld [vmem:[%s303 + $0x180] sm:$0xff]
        %v481 = vld [vmem:[%s303 + $0x188] sm:$0xff]
        %v482 = vld [vmem:[%s303 + $0x190] sm:$0xff]
        %v483 = vld [vmem:[%s303 + $0x198] sm:$0xff]
        %v484 = vld [vmem:[%s303 + $0x1a0] sm:$0xff]
        %v485 = vld [vmem:[%s303 + $0x1a8] sm:$0xff]
        %v486 = vld [vmem:[%s303 + $0x1b0] sm:$0xff]
        %v487 = vld [vmem:[%s303 + $0x1b8] sm:$0xff]
        %v488 = vld [vmem:[%s303 + $0x1c0] sm:$0xff]
        %v489 = vld [vmem:[%s303 + $0x1c8] sm:$0xff]
        %v490 = vld [vmem:[%s303 + $0x1d0] sm:$0xff]
        %v491 = vld [vmem:[%s303 + $0x1d8] sm:$0xff]
        %v492 = vld [vmem:[%s303 + $0x1e0] sm:$0xff]
        %v493 = vld [vmem:[%s303 + $0x1e8] sm:$0xff]
        %v494 = vld [vmem:[%s303 + $0x1f0] sm:$0xff]
        %v495 = vld [vmem:[%s303 + $0x1f8] sm:$0xff]
        %v496 = vld [vmem:[%s303 + $0x200] sm:$0xff]
        %v497 = vld [vmem:[%s303 + $0x208] sm:$0xff]
        %v498 = vld [vmem:[%s303 + $0x210] sm:$0xff]
        %v499 = vld [vmem:[%s303 + $0x218] sm:$0xff]
        %v500 = vld [vmem:[%s303 + $0x220] sm:$0xff]
        %v501 = vld [vmem:[%s303 + $0x228] sm:$0xff]
        %v502 = vld [vmem:[%s303 + $0x230] sm:$0xff]
        %v503 = vld [vmem:[%s303 + $0x238] sm:$0xff]
        %v504 = vld [vmem:[%s303 + $0x240] sm:$0xff]
        %v505 = vld [vmem:[%s303 + $0x248] sm:$0xff]
        %v506 = vld [vmem:[%s303 + $0x250] sm:$0xff]
        %v507 = vld [vmem:[%s303 + $0x258] sm:$0xff]
        %v508 = vld [vmem:[%s303 + $0x260] sm:$0xff]
        %v509 = vld [vmem:[%s303 + $0x268] sm:$0xff]
        %v510 = vld [vmem:[%s303 + $0x270] sm:$0xff]
        %v511 = vld [vmem:[%s303 + $0x278] sm:$0xff]
        %v512 = vld [vmem:[%s303 + $0x280] sm:$0xff]
        %v513 = vld [vmem:[%s303 + $0x288] sm:$0xff]
        %v514 = vld [vmem:[%s303 + $0x290] sm:$0xff]
        %v515 = vld [vmem:[%s303 + $0x298] sm:$0xff]
        %v516 = vld [vmem:[%s303 + $0x2a0] sm:$0xff]
        %v517 = vld [vmem:[%s303 + $0x2a8] sm:$0xff]
        %v518 = vld [vmem:[%s303 + $0x2b0] sm:$0xff]
        %v519 = vld [vmem:[%s303 + $0x2b8] sm:$0xff]
        %v520 = vld [vmem:[%s303 + $0x2c0] sm:$0xff]
        %v521 = vld [vmem:[%s303 + $0x2c8] sm:$0xff]
        %v522 = vld [vmem:[%s303 + $0x2d0] sm:$0xff]
        %v523 = vld [vmem:[%s303 + $0x2d8] sm:$0xff]
        %v524 = vld [vmem:[%s303 + $0x2e0] sm:$0xff]
        %v525 = vld [vmem:[%s303 + $0x2e8] sm:$0xff]
        %v526 = vld [vmem:[%s303 + $0x2f0] sm:$0xff]
        %v527 = vld [vmem:[%s303 + $0x2f8] sm:$0xff]
        %v528 = vld [vmem:[%s303 + $0x300] sm:$0xff]
        %v529 = vld [vmem:[%s303 + $0x308] sm:$0xff]
        %v530 = vld [vmem:[%s303 + $0x310] sm:$0xff]
        %v531 = vld [vmem:[%s303 + $0x318] sm:$0xff]
        %v532 = vld [vmem:[%s303 + $0x320] sm:$0xff]
        %v533 = vld [vmem:[%s303 + $0x328] sm:$0xff]
        %v534 = vld [vmem:[%s303 + $0x330] sm:$0xff]
        %v535 = vld [vmem:[%s303 + $0x338] sm:$0xff]
        %v536 = vld [vmem:[%s303 + $0x340] sm:$0xff]
        %v537 = vld [vmem:[%s303 + $0x348] sm:$0xff]
        %v538 = vld [vmem:[%s303 + $0x350] sm:$0xff]
        %v539 = vld [vmem:[%s303 + $0x358] sm:$0xff]
        %v540 = vld [vmem:[%s303 + $0x360] sm:$0xff]
        %v541 = vld [vmem:[%s303 + $0x368] sm:$0xff]
        %v542 = vld [vmem:[%s303 + $0x370] sm:$0xff]
        %v543 = vld [vmem:[%s303 + $0x378] sm:$0xff]
        %v544 = vld [vmem:[%s303 + $0x380] sm:$0xff]
        %v545 = vld [vmem:[%s303 + $0x388] sm:$0xff]
        %v546 = vld [vmem:[%s303 + $0x390] sm:$0xff]
        %v547 = vld [vmem:[%s303 + $0x398] sm:$0xff]
        %v548 = vld [vmem:[%s303 + $0x3a0] sm:$0xff]
        %v549 = vld [vmem:[%s303 + $0x3a8] sm:$0xff]
        %v550 = vld [vmem:[%s303 + $0x3b0] sm:$0xff]
        %v551 = vld [vmem:[%s303 + $0x3b8] sm:$0xff]
        %v552 = vld [vmem:[%s303 + $0x3c0] sm:$0xff]
        %v553 = vld [vmem:[%s303 + $0x3c8] sm:$0xff]
        %v554 = vld [vmem:[%s303 + $0x3d0] sm:$0xff]
        %v555 = vld [vmem:[%s303 + $0x3d8] sm:$0xff]
        %v556 = vld [vmem:[%s303 + $0x3e0] sm:$0xff]
        %v557 = vld [vmem:[%s303 + $0x3e8] sm:$0xff]
        %v558 = vld [vmem:[%s303 + $0x3f0] sm:$0xff]
        %v559 = vld [vmem:[%s303 + $0x3f8] sm:$0xff]
        %v560 = vld [vmem:[%s303 + $0x400] sm:$0xff]
        %v561 = vld [vmem:[%s303 + $0x408] sm:$0xff]
        %v562 = vld [vmem:[%s303 + $0x410] sm:$0xff]
        %v563 = vld [vmem:[%s303 + $0x418] sm:$0xff]
        %v564 = vld [vmem:[%s303 + $0x420] sm:$0xff]
        %v565 = vld [vmem:[%s303 + $0x428] sm:$0xff]
        %v566 = vld [vmem:[%s303 + $0x430] sm:$0xff]
        %v567 = vld [vmem:[%s303 + $0x438] sm:$0xff]
        %v568 = vld [vmem:[%s303 + $0x440] sm:$0xff]
        %v569 = vld [vmem:[%s303 + $0x448] sm:$0xff]
        %v570 = vld [vmem:[%s303 + $0x450] sm:$0xff]
        %v571 = vld [vmem:[%s303 + $0x458] sm:$0xff]
        %v572 = vld [vmem:[%s303 + $0x460] sm:$0xff]
        %v573 = vld [vmem:[%s303 + $0x468] sm:$0xff]
        %v574 = vld [vmem:[%s303 + $0x470] sm:$0xff]
        %v575 = vld [vmem:[%s303 + $0x478] sm:$0xff]
        %v576 = vld [vmem:[%s303 + $0x480] sm:$0xff]
        %v577 = vld [vmem:[%s303 + $0x488] sm:$0xff]
        %v578 = vld [vmem:[%s303 + $0x490] sm:$0xff]
        %v579 = vld [vmem:[%s303 + $0x498] sm:$0xff]
        %v580 = vld [vmem:[%s303 + $0x4a0] sm:$0xff]
        %v581 = vld [vmem:[%s303 + $0x4a8] sm:$0xff]
        %v582 = vld [vmem:[%s303 + $0x4b0] sm:$0xff]
        %v583 = vld [vmem:[%s303 + $0x4b8] sm:$0xff]
        %v584 = vld [vmem:[%s303 + $0x4c0] sm:$0xff]
        %v585 = vld [vmem:[%s303 + $0x4c8] sm:$0xff]
        %v586 = vld [vmem:[%s303 + $0x4d0] sm:$0xff]
        %v587 = vld [vmem:[%s303 + $0x4d8] sm:$0xff]
        %v588 = vld [vmem:[%s303 + $0x4e0] sm:$0xff]
        %v589 = vld [vmem:[%s303 + $0x4e8] sm:$0xff]
        %v590 = vld [vmem:[%s303 + $0x4f0] sm:$0xff]
        %v591 = vld [vmem:[%s303 + $0x4f8] sm:$0xff]
        %v592 = vld [vmem:[%s303 + $0x500] sm:$0xff]
        %v593 = vld [vmem:[%s303 + $0x508] sm:$0xff]
        %v594 = vld [vmem:[%s303 + $0x510] sm:$0xff]
        %v595 = vld [vmem:[%s303 + $0x518] sm:$0xff]
        %v596 = vld [vmem:[%s303 + $0x520] sm:$0xff]
        %v597 = vld [vmem:[%s303 + $0x528] sm:$0xff]
        %v598 = vld [vmem:[%s303 + $0x530] sm:$0xff]
        %v599 = vld [vmem:[%s303 + $0x538] sm:$0xff]
        %v600 = vld [vmem:[%s303 + $0x540] sm:$0xff]
        %v601 = vld [vmem:[%s303 + $0x548] sm:$0xff]
        %v602 = vld [vmem:[%s303 + $0x550] sm:$0xff]
        %v603 = vld [vmem:[%s303 + $0x558] sm:$0xff]
        %v604 = vld [vmem:[%s303 + $0x560] sm:$0xff]
        %v605 = vld [vmem:[%s303 + $0x568] sm:$0xff]
        %v606 = vld [vmem:[%s303 + $0x570] sm:$0xff]
        %v607 = vld [vmem:[%s303 + $0x578] sm:$0xff]
        %v608 = vld [vmem:[%s303 + $0x580] sm:$0xff]
        %v609 = vld [vmem:[%s303 + $0x588] sm:$0xff]
        %v610 = vld [vmem:[%s303 + $0x590] sm:$0xff]
        %v611 = vld [vmem:[%s303 + $0x598] sm:$0xff]
        %v612 = vld [vmem:[%s303 + $0x5a0] sm:$0xff]
        %v613 = vld [vmem:[%s303 + $0x5a8] sm:$0xff]
        %v614 = vld [vmem:[%s303 + $0x5b0] sm:$0xff]
        %v615 = vld [vmem:[%s303 + $0x5b8] sm:$0xff]
        %v616 = vld [vmem:[%s303 + $0x5c0] sm:$0xff]
        %v617 = vld [vmem:[%s303 + $0x5c8] sm:$0xff]
        %v618 = vld [vmem:[%s303 + $0x5d0] sm:$0xff]
        %v619 = vld [vmem:[%s303 + $0x5d8] sm:$0xff]
        %v620 = vld [vmem:[%s303 + $0x5e0] sm:$0xff]
        %v621 = vld [vmem:[%s303 + $0x5e8] sm:$0xff]
        %v622 = vld [vmem:[%s303 + $0x5f0] sm:$0xff]
        %v623 = vld [vmem:[%s303 + $0x5f8] sm:$0xff]
        %v624 = vld [vmem:[%s303 + $0x600] sm:$0xff]
        %v625 = vld [vmem:[%s303 + $0x608] sm:$0xff]
        %v626 = vld [vmem:[%s303 + $0x610] sm:$0xff]
        %v627 = vld [vmem:[%s303 + $0x618] sm:$0xff]
        %v628 = vld [vmem:[%s303 + $0x620] sm:$0xff]
        %v629 = vld [vmem:[%s303 + $0x628] sm:$0xff]
        %v630 = vld [vmem:[%s303 + $0x630] sm:$0xff]
        %v631 = vld [vmem:[%s303 + $0x638] sm:$0xff]
        %v632 = vld [vmem:[%s303 + $0x640] sm:$0xff]
        %v633 = vld [vmem:[%s303 + $0x648] sm:$0xff]
        %v634 = vld [vmem:[%s303 + $0x650] sm:$0xff]
        %v635 = vld [vmem:[%s303 + $0x658] sm:$0xff]
        %v636 = vld [vmem:[%s303 + $0x660] sm:$0xff]
        %v637 = vld [vmem:[%s303 + $0x668] sm:$0xff]
        %v638 = vld [vmem:[%s303 + $0x670] sm:$0xff]
        %v639 = vld [vmem:[%s303 + $0x678] sm:$0xff]
        %v640 = vld [vmem:[%s303 + $0x680] sm:$0xff]
        %v641 = vld [vmem:[%s303 + $0x688] sm:$0xff]
        %v642 = vld [vmem:[%s303 + $0x690] sm:$0xff]
        %v643 = vld [vmem:[%s303 + $0x698] sm:$0xff]
        %v644 = vld [vmem:[%s303 + $0x6a0] sm:$0xff]
        %v645 = vld [vmem:[%s303 + $0x6a8] sm:$0xff]
        %v646 = vld [vmem:[%s303 + $0x6b0] sm:$0xff]
        %v647 = vld [vmem:[%s303 + $0x6b8] sm:$0xff]
        %v648 = vld [vmem:[%s303 + $0x6c0] sm:$0xff]
        %v649 = vld [vmem:[%s303 + $0x6c8] sm:$0xff]
        %v650 = vld [vmem:[%s303 + $0x6d0] sm:$0xff]
        %v651 = vld [vmem:[%s303 + $0x6d8] sm:$0xff]
        %v652 = vld [vmem:[%s303 + $0x6e0] sm:$0xff]
        %v653 = vld [vmem:[%s303 + $0x6e8] sm:$0xff]
        %v654 = vld [vmem:[%s303 + $0x6f0] sm:$0xff]
        %v655 = vld [vmem:[%s303 + $0x6f8] sm:$0xff]
        %v656 = vld [vmem:[%s303 + $0x700] sm:$0xff]
        %v657 = vld [vmem:[%s303 + $0x708] sm:$0xff]
        %v658 = vld [vmem:[%s303 + $0x710] sm:$0xff]
        %v659 = vld [vmem:[%s303 + $0x718] sm:$0xff]
        %v660 = vld [vmem:[%s303 + $0x720] sm:$0xff]
        %v661 = vld [vmem:[%s303 + $0x728] sm:$0xff]
        %v662 = vld [vmem:[%s303 + $0x730] sm:$0xff]
        %v663 = vld [vmem:[%s303 + $0x738] sm:$0xff]
        %v664 = vld [vmem:[%s303 + $0x740] sm:$0xff]
        %v665 = vld [vmem:[%s303 + $0x748] sm:$0xff]
        %v666 = vld [vmem:[%s303 + $0x750] sm:$0xff]
        %v667 = vld [vmem:[%s303 + $0x758] sm:$0xff]
        %v668 = vld [vmem:[%s303 + $0x760] sm:$0xff]
        %v669 = vld [vmem:[%s303 + $0x768] sm:$0xff]
        %v670 = vld [vmem:[%s303 + $0x770] sm:$0xff]
        %v671 = vld [vmem:[%s303 + $0x778] sm:$0xff]
        %v672 = vld [vmem:[%s303 + $0x780] sm:$0xff]
        %v673 = vld [vmem:[%s303 + $0x788] sm:$0xff]
        %v674 = vld [vmem:[%s303 + $0x790] sm:$0xff]
        %v675 = vld [vmem:[%s303 + $0x798] sm:$0xff]
        %v676 = vld [vmem:[%s303 + $0x7a0] sm:$0xff]
        %v677 = vld [vmem:[%s303 + $0x7a8] sm:$0xff]
        %v678 = vld [vmem:[%s303 + $0x7b0] sm:$0xff]
        %v679 = vld [vmem:[%s303 + $0x7b8] sm:$0xff]
        %v680 = vld [vmem:[%s303 + $0x7c0] sm:$0xff]
        %v681 = vld [vmem:[%s303 + $0x7c8] sm:$0xff]
        %v682 = vld [vmem:[%s303 + $0x7d0] sm:$0xff]
        %v683 = vld [vmem:[%s303 + $0x7d8] sm:$0xff]
        %v684 = vld [vmem:[%s303 + $0x7e0] sm:$0xff]
        %v685 = vld [vmem:[%s303 + $0x7e8] sm:$0xff]
        %v686 = vld [vmem:[%s303 + $0x7f0] sm:$0xff]
        %v687 = vld [vmem:[%s303 + $0x7f8] sm:$0xff]
        %v688 = vld [vmem:[%s303 + $0x800] sm:$0xff]
        %v689 = vld [vmem:[%s303 + $0x808] sm:$0xff]
        %v690 = vld [vmem:[%s303 + $0x810] sm:$0xff]
        %v691 = vld [vmem:[%s303 + $0x818] sm:$0xff]
        %v692 = vld [vmem:[%s303 + $0x820] sm:$0xff]
        %v693 = vld [vmem:[%s303 + $0x828] sm:$0xff]
        %v694 = vld [vmem:[%s303 + $0x830] sm:$0xff]
        %v695 = vld [vmem:[%s303 + $0x838] sm:$0xff]
        %v696 = vld [vmem:[%s303 + $0x840] sm:$0xff]
        %v697 = vld [vmem:[%s303 + $0x848] sm:$0xff]
        %v698 = vld [vmem:[%s303 + $0x850] sm:$0xff]
        %v699 = vld [vmem:[%s303 + $0x858] sm:$0xff]
        %v700 = vld [vmem:[%s303 + $0x860] sm:$0xff]
        %v701 = vld [vmem:[%s303 + $0x868] sm:$0xff]
        %v702 = vld [vmem:[%s303 + $0x870] sm:$0xff]
        %v703 = vld [vmem:[%s303 + $0x878] sm:$0xff]
        %v704 = vld [vmem:[%s303 + $0x880] sm:$0xff]
        %v705 = vld [vmem:[%s303 + $0x888] sm:$0xff]
        %v706 = vld [vmem:[%s303 + $0x890] sm:$0xff]
        %v707 = vld [vmem:[%s303 + $0x898] sm:$0xff]
        %v708 = vld [vmem:[%s303 + $0x8a0] sm:$0xff]
        %v709 = vld [vmem:[%s303 + $0x8a8] sm:$0xff]
        %v710 = vld [vmem:[%s303 + $0x8b0] sm:$0xff]
        %v711 = vld [vmem:[%s303 + $0x8b8] sm:$0xff]
        %v712 = vld [vmem:[%s303 + $0x8c0] sm:$0xff]
        %v713 = vld [vmem:[%s303 + $0x8c8] sm:$0xff]
        %v714 = vld [vmem:[%s303 + $0x8d0] sm:$0xff]
        %v715 = vld [vmem:[%s303 + $0x8d8] sm:$0xff]
        %v716 = vld [vmem:[%s303 + $0x8e0] sm:$0xff]
        %v717 = vld [vmem:[%s303 + $0x8e8] sm:$0xff]
        %v718 = vld [vmem:[%s303 + $0x8f0] sm:$0xff]
        %v719 = vld [vmem:[%s303 + $0x8f8] sm:$0xff]
        %v720 = vld [vmem:[%s303 + $0x900] sm:$0xff]
        %v721 = vld [vmem:[%s303 + $0x908] sm:$0xff]
        %v722 = vld [vmem:[%s303 + $0x910] sm:$0xff]
        %v723 = vld [vmem:[%s303 + $0x918] sm:$0xff]
        %v724 = vld [vmem:[%s303 + $0x920] sm:$0xff]
        %v725 = vld [vmem:[%s303 + $0x928] sm:$0xff]
        %v726 = vld [vmem:[%s303 + $0x930] sm:$0xff]
        %v727 = vld [vmem:[%s303 + $0x938] sm:$0xff]
        %v728 = vld [vmem:[%s303 + $0x940] sm:$0xff]
        %v729 = vld [vmem:[%s303 + $0x948] sm:$0xff]
        %v730 = vld [vmem:[%s303 + $0x950] sm:$0xff]
        %v731 = vld [vmem:[%s303 + $0x958] sm:$0xff]
        %v732 = vld [vmem:[%s303 + $0x960] sm:$0xff]
        %v733 = vld [vmem:[%s303 + $0x968] sm:$0xff]
        %v734 = vld [vmem:[%s303 + $0x970] sm:$0xff]
        %v735 = vld [vmem:[%s303 + $0x978] sm:$0xff]
        %v736 = vld [vmem:[%s303 + $0x980] sm:$0xff]
        %v737 = vld [vmem:[%s303 + $0x988] sm:$0xff]
        %v738 = vld [vmem:[%s303 + $0x990] sm:$0xff]
        %v739 = vld [vmem:[%s303 + $0x998] sm:$0xff]
        %v740 = vld [vmem:[%s303 + $0x9a0] sm:$0xff]
        %v741 = vld [vmem:[%s303 + $0x9a8] sm:$0xff]
        %v742 = vld [vmem:[%s303 + $0x9b0] sm:$0xff]
        %v743 = vld [vmem:[%s303 + $0x9b8] sm:$0xff]
        %v744 = vld [vmem:[%s303 + $0x9c0] sm:$0xff]
        %v745 = vld [vmem:[%s303 + $0x9c8] sm:$0xff]
        %v746 = vld [vmem:[%s303 + $0x9d0] sm:$0xff]
        %v747 = vld [vmem:[%s303 + $0x9d8] sm:$0xff]
        %v748 = vld [vmem:[%s303 + $0x9e0] sm:$0xff]
        %v749 = vld [vmem:[%s303 + $0x9e8] sm:$0xff]
        %v750 = vld [vmem:[%s303 + $0x9f0] sm:$0xff]
        %v751 = vld [vmem:[%s303 + $0x9f8] sm:$0xff]
        %v752 = vld [vmem:[%s303 + $0xa00] sm:$0xff]
        %v753 = vld [vmem:[%s303 + $0xa08] sm:$0xff]
        %v754 = vld [vmem:[%s303 + $0xa10] sm:$0xff]
        %v755 = vld [vmem:[%s303 + $0xa18] sm:$0xff]
        %v756 = vld [vmem:[%s303 + $0xa20] sm:$0xff]
        %v757 = vld [vmem:[%s303 + $0xa28] sm:$0xff]
        %v758 = vld [vmem:[%s303 + $0xa30] sm:$0xff]
        %v759 = vld [vmem:[%s303 + $0xa38] sm:$0xff]
        %v760 = vld [vmem:[%s303 + $0xa40] sm:$0xff]
        %v761 = vld [vmem:[%s303 + $0xa48] sm:$0xff]
        %v762 = vld [vmem:[%s303 + $0xa50] sm:$0xff]
        %v763 = vld [vmem:[%s303 + $0xa58] sm:$0xff]
        %v764 = vld [vmem:[%s303 + $0xa60] sm:$0xff]
        %v765 = vld [vmem:[%s303 + $0xa68] sm:$0xff]
        %v766 = vld [vmem:[%s303 + $0xa70] sm:$0xff]
        %v767 = vld [vmem:[%s303 + $0xa78] sm:$0xff]
        %v768 = vld [vmem:[%s303 + $0xa80] sm:$0xff]
        %v769 = vld [vmem:[%s303 + $0xa88] sm:$0xff]
        %v770 = vld [vmem:[%s303 + $0xa90] sm:$0xff]
        %v771 = vld [vmem:[%s303 + $0xa98] sm:$0xff]
        %v772 = vld [vmem:[%s303 + $0xaa0] sm:$0xff]
        %v773 = vld [vmem:[%s303 + $0xaa8] sm:$0xff]
        %v774 = vld [vmem:[%s303 + $0xab0] sm:$0xff]
        %v775 = vld [vmem:[%s303 + $0xab8] sm:$0xff]
        %v776 = vld [vmem:[%s303 + $0xac0] sm:$0xff]
        %v777 = vld [vmem:[%s303 + $0xac8] sm:$0xff]
        %v778 = vld [vmem:[%s303 + $0xad0] sm:$0xff]
        %v779 = vld [vmem:[%s303 + $0xad8] sm:$0xff]
        %v780 = vld [vmem:[%s303 + $0xae0] sm:$0xff]
        %v781 = vld [vmem:[%s303 + $0xae8] sm:$0xff]
        %v782 = vld [vmem:[%s303 + $0xaf0] sm:$0xff]
        %v783 = vld [vmem:[%s303 + $0xaf8] sm:$0xff]
        %v784 = vld [vmem:[%s303 + $0xb00] sm:$0xff]
        %v785 = vld [vmem:[%s303 + $0xb08] sm:$0xff]
        %v786 = vld [vmem:[%s303 + $0xb10] sm:$0xff]
        %v787 = vld [vmem:[%s303 + $0xb18] sm:$0xff]
        %v788 = vld [vmem:[%s303 + $0xb20] sm:$0xff]
        %v789 = vld [vmem:[%s303 + $0xb28] sm:$0xff]
        %v790 = vld [vmem:[%s303 + $0xb30] sm:$0xff]
        %v791 = vld [vmem:[%s303 + $0xb38] sm:$0xff]
        %v792 = vld [vmem:[%s303 + $0xb40] sm:$0xff]
        %v793 = vld [vmem:[%s303 + $0xb48] sm:$0xff]
        %v794 = vld [vmem:[%s303 + $0xb50] sm:$0xff]
        %v795 = vld [vmem:[%s303 + $0xb58] sm:$0xff]
        %v796 = vld [vmem:[%s303 + $0xb60] sm:$0xff]
        %v797 = vld [vmem:[%s303 + $0xb68] sm:$0xff]
        %v798 = vld [vmem:[%s303 + $0xb70] sm:$0xff]
        %v799 = vld [vmem:[%s303 + $0xb78] sm:$0xff]
        %v800 = vld [vmem:[%s303 + $0xb80] sm:$0xff]
        %v801 = vld [vmem:[%s303 + $0xb88] sm:$0xff]
        %v802 = vld [vmem:[%s303 + $0xb90] sm:$0xff]
        %v803 = vld [vmem:[%s303 + $0xb98] sm:$0xff]
        %v804 = vld [vmem:[%s303 + $0xba0] sm:$0xff]
        %v805 = vld [vmem:[%s303 + $0xba8] sm:$0xff]
        %v806 = vld [vmem:[%s303 + $0xbb0] sm:$0xff]
        %v807 = vld [vmem:[%s303 + $0xbb8] sm:$0xff]
        %v808 = vld [vmem:[%s303 + $0xbc0] sm:$0xff]
        %v809 = vld [vmem:[%s303 + $0xbc8] sm:$0xff]
        %v810 = vld [vmem:[%s303 + $0xbd0] sm:$0xff]
        %v811 = vld [vmem:[%s303 + $0xbd8] sm:$0xff]
        %v812 = vld [vmem:[%s303 + $0xbe0] sm:$0xff]
        %v813 = vld [vmem:[%s303 + $0xbe8] sm:$0xff]
        %v814 = vld [vmem:[%s303 + $0xbf0] sm:$0xff]
        %v815 = vld [vmem:[%s303 + $0xbf8] sm:$0xff]
        %v816 = vld [vmem:[%s303 + $0xc00] sm:$0xff]
        %v817 = vld [vmem:[%s303 + $0xc08] sm:$0xff]
        %v818 = vld [vmem:[%s303 + $0xc10] sm:$0xff]
        %v819 = vld [vmem:[%s303 + $0xc18] sm:$0xff]
        %v820 = vld [vmem:[%s303 + $0xc20] sm:$0xff]
        %v821 = vld [vmem:[%s303 + $0xc28] sm:$0xff]
        %v822 = vld [vmem:[%s303 + $0xc30] sm:$0xff]
        %v823 = vld [vmem:[%s303 + $0xc38] sm:$0xff]
        %v824 = vld [vmem:[%s303 + $0xc40] sm:$0xff]
        %v825 = vld [vmem:[%s303 + $0xc48] sm:$0xff]
        %v826 = vld [vmem:[%s303 + $0xc50] sm:$0xff]
        %v827 = vld [vmem:[%s303 + $0xc58] sm:$0xff]
        %v828 = vld [vmem:[%s303 + $0xc60] sm:$0xff]
        %v829 = vld [vmem:[%s303 + $0xc68] sm:$0xff]
        %v830 = vld [vmem:[%s303 + $0xc70] sm:$0xff]
        %v831 = vld [vmem:[%s303 + $0xc78] sm:$0xff]
        %v832 = vld [vmem:[%s303 + $0xc80] sm:$0xff]
        %v833 = vld [vmem:[%s303 + $0xc88] sm:$0xff]
        %v834 = vld [vmem:[%s303 + $0xc90] sm:$0xff]
        %v835 = vld [vmem:[%s303 + $0xc98] sm:$0xff]
        %v836 = vld [vmem:[%s303 + $0xca0] sm:$0xff]
        %v837 = vld [vmem:[%s303 + $0xca8] sm:$0xff]
        %v838 = vld [vmem:[%s303 + $0xcb0] sm:$0xff]
        %v839 = vld [vmem:[%s303 + $0xcb8] sm:$0xff]
        %v840 = vld [vmem:[%s303 + $0xcc0] sm:$0xff]
        %v841 = vld [vmem:[%s303 + $0xcc8] sm:$0xff]
        %v842 = vld [vmem:[%s303 + $0xcd0] sm:$0xff]
        %v843 = vld [vmem:[%s303 + $0xcd8] sm:$0xff]
        %v844 = vld [vmem:[%s303 + $0xce0] sm:$0xff]
        %v845 = vld [vmem:[%s303 + $0xce8] sm:$0xff]
        %v846 = vld [vmem:[%s303 + $0xcf0] sm:$0xff]
        %v847 = vld [vmem:[%s303 + $0xcf8] sm:$0xff]
        %v848 = vld [vmem:[%s303 + $0xd00] sm:$0xff]
        %v849 = vld [vmem:[%s303 + $0xd08] sm:$0xff]
        %v850 = vld [vmem:[%s303 + $0xd10] sm:$0xff]
        %v851 = vld [vmem:[%s303 + $0xd18] sm:$0xff]
        %v852 = vld [vmem:[%s303 + $0xd20] sm:$0xff]
        %v853 = vld [vmem:[%s303 + $0xd28] sm:$0xff]
        %v854 = vld [vmem:[%s303 + $0xd30] sm:$0xff]
        %v855 = vld [vmem:[%s303 + $0xd38] sm:$0xff]
        %v856 = vld [vmem:[%s303 + $0xd40] sm:$0xff]
        %v857 = vld [vmem:[%s303 + $0xd48] sm:$0xff]
        %v858 = vld [vmem:[%s303 + $0xd50] sm:$0xff]
        %v859 = vld [vmem:[%s303 + $0xd58] sm:$0xff]
        %v860 = vld [vmem:[%s303 + $0xd60] sm:$0xff]
        %v861 = vld [vmem:[%s303 + $0xd68] sm:$0xff]
        %v862 = vld [vmem:[%s303 + $0xd70] sm:$0xff]
        %v863 = vld [vmem:[%s303 + $0xd78] sm:$0xff]
        %v864 = vld [vmem:[%s303 + $0xd80] sm:$0xff]
        %v865 = vld [vmem:[%s303 + $0xd88] sm:$0xff]
        %v866 = vld [vmem:[%s303 + $0xd90] sm:$0xff]
        %v867 = vld [vmem:[%s303 + $0xd98] sm:$0xff]
        %v868 = vld [vmem:[%s303 + $0xda0] sm:$0xff]
        %v869 = vld [vmem:[%s303 + $0xda8] sm:$0xff]
        %v870 = vld [vmem:[%s303 + $0xdb0] sm:$0xff]
        %v871 = vld [vmem:[%s303 + $0xdb8] sm:$0xff]
        %v872 = vld [vmem:[%s303 + $0xdc0] sm:$0xff]
        %v873 = vld [vmem:[%s303 + $0xdc8] sm:$0xff]
        %v874 = vld [vmem:[%s303 + $0xdd0] sm:$0xff]
        %v875 = vld [vmem:[%s303 + $0xdd8] sm:$0xff]
        %v876 = vld [vmem:[%s303 + $0xde0] sm:$0xff]
        %v877 = vld [vmem:[%s303 + $0xde8] sm:$0xff]
        %v878 = vld [vmem:[%s303 + $0xdf0] sm:$0xff]
        %v879 = vld [vmem:[%s303 + $0xdf8] sm:$0xff]
        %v880 = vld [vmem:[%s303 + $0xe00] sm:$0xff]
        %v881 = vld [vmem:[%s303 + $0xe08] sm:$0xff]
        %v882 = vld [vmem:[%s303 + $0xe10] sm:$0xff]
        %v883 = vld [vmem:[%s303 + $0xe18] sm:$0xff]
        %v884 = vld [vmem:[%s303 + $0xe20] sm:$0xff]
        %v885 = vld [vmem:[%s303 + $0xe28] sm:$0xff]
        %v886 = vld [vmem:[%s303 + $0xe30] sm:$0xff]
        %v887 = vld [vmem:[%s303 + $0xe38] sm:$0xff]
        %v888 = vld [vmem:[%s303 + $0xe40] sm:$0xff]
        %v889 = vld [vmem:[%s303 + $0xe48] sm:$0xff]
        %v890 = vld [vmem:[%s303 + $0xe50] sm:$0xff]
        %v891 = vld [vmem:[%s303 + $0xe58] sm:$0xff]
        %v892 = vld [vmem:[%s303 + $0xe60] sm:$0xff]
        %v893 = vld [vmem:[%s303 + $0xe68] sm:$0xff]
        %v894 = vld [vmem:[%s303 + $0xe70] sm:$0xff]
        %v895 = vld [vmem:[%s303 + $0xe78] sm:$0xff]
        %v896 = vld [vmem:[%s303 + $0xe80] sm:$0xff]
        %v897 = vld [vmem:[%s303 + $0xe88] sm:$0xff]
        %v898 = vld [vmem:[%s303 + $0xe90] sm:$0xff]
        %v899 = vld [vmem:[%s303 + $0xe98] sm:$0xff]
        %v900 = vld [vmem:[%s303 + $0xea0] sm:$0xff]
        %v901 = vld [vmem:[%s303 + $0xea8] sm:$0xff]
        %v902 = vld [vmem:[%s303 + $0xeb0] sm:$0xff]
        %v903 = vld [vmem:[%s303 + $0xeb8] sm:$0xff]
        %v904 = vld [vmem:[%s303 + $0xec0] sm:$0xff]
        %v905 = vld [vmem:[%s303 + $0xec8] sm:$0xff]
        %v906 = vld [vmem:[%s303 + $0xed0] sm:$0xff]
        %v907 = vld [vmem:[%s303 + $0xed8] sm:$0xff]
        %v908 = vld [vmem:[%s303 + $0xee0] sm:$0xff]
        %v909 = vld [vmem:[%s303 + $0xee8] sm:$0xff]
        %v910 = vld [vmem:[%s303 + $0xef0] sm:$0xff]
        %v911 = vld [vmem:[%s303 + $0xef8] sm:$0xff]
        %v912 = vld [vmem:[%s303 + $0xf00] sm:$0xff]
        %v913 = vld [vmem:[%s303 + $0xf08] sm:$0xff]
        %v914 = vld [vmem:[%s303 + $0xf10] sm:$0xff]
        %v915 = vld [vmem:[%s303 + $0xf18] sm:$0xff]
        %v916 = vld [vmem:[%s303 + $0xf20] sm:$0xff]
        %v917 = vld [vmem:[%s303 + $0xf28] sm:$0xff]
        %v918 = vld [vmem:[%s303 + $0xf30] sm:$0xff]
        %v919 = vld [vmem:[%s303 + $0xf38] sm:$0xff]
        %v920 = vld [vmem:[%s303 + $0xf40] sm:$0xff]
        %v921 = vld [vmem:[%s303 + $0xf48] sm:$0xff]
        %v922 = vld [vmem:[%s303 + $0xf50] sm:$0xff]
        %v923 = vld [vmem:[%s303 + $0xf58] sm:$0xff]
        %v924 = vld [vmem:[%s303 + $0xf60] sm:$0xff]
        %v925 = vld [vmem:[%s303 + $0xf68] sm:$0xff]
        %v926 = vld [vmem:[%s303 + $0xf70] sm:$0xff]
        %v927 = vld [vmem:[%s303 + $0xf78] sm:$0xff]
        %v928 = vld [vmem:[%s303 + $0xf80] sm:$0xff]
        %v929 = vld [vmem:[%s303 + $0xf88] sm:$0xff]
        %v930 = vld [vmem:[%s303 + $0xf90] sm:$0xff]
        %v931 = vld [vmem:[%s303 + $0xf98] sm:$0xff]
        %v932 = vld [vmem:[%s303 + $0xfa0] sm:$0xff]
        %v933 = vld [vmem:[%s303 + $0xfa8] sm:$0xff]
        %v934 = vld [vmem:[%s303 + $0xfb0] sm:$0xff]
        %v935 = vld [vmem:[%s303 + $0xfb8] sm:$0xff]
        %v936 = vld [vmem:[%s303 + $0xfc0] sm:$0xff]
        %v937 = vld [vmem:[%s303 + $0xfc8] sm:$0xff]
        %v938 = vld [vmem:[%s303 + $0xfd0] sm:$0xff]
        %v939 = vld [vmem:[%s303 + $0xfd8] sm:$0xff]
        %v940 = vld [vmem:[%s303 + $0xfe0] sm:$0xff]
        %v941 = vld [vmem:[%s303 + $0xfe8] sm:$0xff]
        %v942 = vld [vmem:[%s303 + $0xff0] sm:$0xff]
        %v943 = vld [vmem:[%s303 + $0xff8] sm:$0xff]
        %v960 = vunpack.c.l.b16 %v416
        %v961 = vunpack.c.h.b16 %v416
        %v962 = vunpack.c.l.b16 %v417
        %v963 = vunpack.c.h.b16 %v417
        %v964 = vunpack.c.l.b16 %v418
        %v965 = vunpack.c.h.b16 %v418
        %v966 = vunpack.c.l.b16 %v419
        %v967 = vunpack.c.h.b16 %v419
        %v968 = vunpack.c.l.b16 %v420
        %v969 = vunpack.c.h.b16 %v420
        %v970 = vunpack.c.l.b16 %v421
        %v971 = vunpack.c.h.b16 %v421
        %v972 = vunpack.c.l.b16 %v422
        %v973 = vunpack.c.h.b16 %v422
        %v974 = vunpack.c.l.b16 %v423
        %v975 = vunpack.c.h.b16 %v423
        %v976 = vunpack.c.l.b16 %v424
        %v977 = vunpack.c.h.b16 %v424
        %v978 = vunpack.c.l.b16 %v425
        %v979 = vunpack.c.h.b16 %v425
        %v980 = vunpack.c.l.b16 %v426
        %v981 = vunpack.c.h.b16 %v426
        %v982 = vunpack.c.l.b16 %v427
        %v983 = vunpack.c.h.b16 %v427
        %v984 = vunpack.c.l.b16 %v428
        %v985 = vunpack.c.h.b16 %v428
        %v986 = vunpack.c.l.b16 %v429
        %v987 = vunpack.c.h.b16 %v429
        %v988 = vunpack.c.l.b16 %v430
        %v989 = vunpack.c.h.b16 %v430
        %v990 = vunpack.c.l.b16 %v431
        %v991 = vunpack.c.h.b16 %v431
        %v992 = vpack.c.b16 %v968, %v960
        %v993 = vpack.c.b16 %v969, %v961
        %v994 = vpack.c.b16 %v970, %v962
        %v995 = vpack.c.b16 %v971, %v963
        %v996 = vpack.c.b16 %v972, %v964
        %v997 = vpack.c.b16 %v973, %v965
        %v998 = vpack.c.b16 %v974, %v966
        %v999 = vpack.c.b16 %v975, %v967
        %v1000 = vpack.c.b16 %v984, %v976
        %v1001 = vpack.c.b16 %v985, %v977
        %v1002 = vpack.c.b16 %v986, %v978
        %v1003 = vpack.c.b16 %v987, %v979
        %v1004 = vpack.c.b16 %v988, %v980
        %v1005 = vpack.c.b16 %v989, %v981
        %v1006 = vpack.c.b16 %v990, %v982
        %v1007 = vpack.c.b16 %v991, %v983
        %v1536 = vunpack.c.l.b16 %v432
        %v1537 = vunpack.c.h.b16 %v432
        %v1538 = vunpack.c.l.b16 %v433
        %v1539 = vunpack.c.h.b16 %v433
        %v1540 = vunpack.c.l.b16 %v434
        %v1541 = vunpack.c.h.b16 %v434
        %v1542 = vunpack.c.l.b16 %v435
        %v1543 = vunpack.c.h.b16 %v435
        %v1544 = vunpack.c.l.b16 %v436
        %v1545 = vunpack.c.h.b16 %v436
        %v1546 = vunpack.c.l.b16 %v437
        %v1547 = vunpack.c.h.b16 %v437
        %v1548 = vunpack.c.l.b16 %v438
        %v1549 = vunpack.c.h.b16 %v438
        %v1550 = vunpack.c.l.b16 %v439
        %v1551 = vunpack.c.h.b16 %v439
        %v1552 = vunpack.c.l.b16 %v440
        %v1553 = vunpack.c.h.b16 %v440
        %v1554 = vunpack.c.l.b16 %v441
        %v1555 = vunpack.c.h.b16 %v441
        %v1556 = vunpack.c.l.b16 %v442
        %v1557 = vunpack.c.h.b16 %v442
        %v1558 = vunpack.c.l.b16 %v443
        %v1559 = vunpack.c.h.b16 %v443
        %v1560 = vunpack.c.l.b16 %v444
        %v1561 = vunpack.c.h.b16 %v444
        %v1562 = vunpack.c.l.b16 %v445
        %v1563 = vunpack.c.h.b16 %v445
        %v1564 = vunpack.c.l.b16 %v446
        %v1565 = vunpack.c.h.b16 %v446
        %v1566 = vunpack.c.l.b16 %v447
        %v1567 = vunpack.c.h.b16 %v447
        %v1568 = vunpack.c.l.b16 %v448
        %v1569 = vunpack.c.h.b16 %v448
        %v1570 = vunpack.c.l.b16 %v449
        %v1571 = vunpack.c.h.b16 %v449
        %v1572 = vunpack.c.l.b16 %v450
        %v1573 = vunpack.c.h.b16 %v450
        %v1574 = vunpack.c.l.b16 %v451
        %v1575 = vunpack.c.h.b16 %v451
        %v1576 = vunpack.c.l.b16 %v452
        %v1577 = vunpack.c.h.b16 %v452
        %v1578 = vunpack.c.l.b16 %v453
        %v1579 = vunpack.c.h.b16 %v453
        %v1580 = vunpack.c.l.b16 %v454
        %v1581 = vunpack.c.h.b16 %v454
        %v1582 = vunpack.c.l.b16 %v455
        %v1583 = vunpack.c.h.b16 %v455
        %v1584 = vunpack.c.l.b16 %v456
        %v1585 = vunpack.c.h.b16 %v456
        %v1586 = vunpack.c.l.b16 %v457
        %v1587 = vunpack.c.h.b16 %v457
        %v1588 = vunpack.c.l.b16 %v458
        %v1589 = vunpack.c.h.b16 %v458
        %v1590 = vunpack.c.l.b16 %v459
        %v1591 = vunpack.c.h.b16 %v459
        %v1592 = vunpack.c.l.b16 %v460
        %v1593 = vunpack.c.h.b16 %v460
        %v1594 = vunpack.c.l.b16 %v461
        %v1595 = vunpack.c.h.b16 %v461
        %v1596 = vunpack.c.l.b16 %v462
        %v1597 = vunpack.c.h.b16 %v462
        %v1598 = vunpack.c.l.b16 %v463
        %v1599 = vunpack.c.h.b16 %v463
        %v1600 = vunpack.c.l.b16 %v464
        %v1601 = vunpack.c.h.b16 %v464
        %v1602 = vunpack.c.l.b16 %v465
        %v1603 = vunpack.c.h.b16 %v465
        %v1604 = vunpack.c.l.b16 %v466
        %v1605 = vunpack.c.h.b16 %v466
        %v1606 = vunpack.c.l.b16 %v467
        %v1607 = vunpack.c.h.b16 %v467
        %v1608 = vunpack.c.l.b16 %v468
        %v1609 = vunpack.c.h.b16 %v468
        %v1610 = vunpack.c.l.b16 %v469
        %v1611 = vunpack.c.h.b16 %v469
        %v1612 = vunpack.c.l.b16 %v470
        %v1613 = vunpack.c.h.b16 %v470
        %v1614 = vunpack.c.l.b16 %v471
        %v1615 = vunpack.c.h.b16 %v471
        %v1616 = vunpack.c.l.b16 %v472
        %v1617 = vunpack.c.h.b16 %v472
        %v1618 = vunpack.c.l.b16 %v473
        %v1619 = vunpack.c.h.b16 %v473
        %v1620 = vunpack.c.l.b16 %v474
        %v1621 = vunpack.c.h.b16 %v474
        %v1622 = vunpack.c.l.b16 %v475
        %v1623 = vunpack.c.h.b16 %v475
        %v1624 = vunpack.c.l.b16 %v476
        %v1625 = vunpack.c.h.b16 %v476
        %v1626 = vunpack.c.l.b16 %v477
        %v1627 = vunpack.c.h.b16 %v477
        %v1628 = vunpack.c.l.b16 %v478
        %v1629 = vunpack.c.h.b16 %v478
        %v1630 = vunpack.c.l.b16 %v479
        %v1631 = vunpack.c.h.b16 %v479
        %v1632 = vunpack.c.l.b16 %v480
        %v1633 = vunpack.c.h.b16 %v480
        %v1634 = vunpack.c.l.b16 %v481
        %v1635 = vunpack.c.h.b16 %v481
        %v1636 = vunpack.c.l.b16 %v482
        %v1637 = vunpack.c.h.b16 %v482
        %v1638 = vunpack.c.l.b16 %v483
        %v1639 = vunpack.c.h.b16 %v483
        %v1640 = vunpack.c.l.b16 %v484
        %v1641 = vunpack.c.h.b16 %v484
        %v1642 = vunpack.c.l.b16 %v485
        %v1643 = vunpack.c.h.b16 %v485
        %v1644 = vunpack.c.l.b16 %v486
        %v1645 = vunpack.c.h.b16 %v486
        %v1646 = vunpack.c.l.b16 %v487
        %v1647 = vunpack.c.h.b16 %v487
        %v1648 = vunpack.c.l.b16 %v488
        %v1649 = vunpack.c.h.b16 %v488
        %v1650 = vunpack.c.l.b16 %v489
        %v1651 = vunpack.c.h.b16 %v489
        %v1652 = vunpack.c.l.b16 %v490
        %v1653 = vunpack.c.h.b16 %v490
        %v1654 = vunpack.c.l.b16 %v491
        %v1655 = vunpack.c.h.b16 %v491
        %v1656 = vunpack.c.l.b16 %v492
        %v1657 = vunpack.c.h.b16 %v492
        %v1658 = vunpack.c.l.b16 %v493
        %v1659 = vunpack.c.h.b16 %v493
        %v1660 = vunpack.c.l.b16 %v494
        %v1661 = vunpack.c.h.b16 %v494
        %v1662 = vunpack.c.l.b16 %v495
        %v1663 = vunpack.c.h.b16 %v495
        %v1664 = vunpack.c.l.b16 %v496
        %v1665 = vunpack.c.h.b16 %v496
        %v1666 = vunpack.c.l.b16 %v497
        %v1667 = vunpack.c.h.b16 %v497
        %v1668 = vunpack.c.l.b16 %v498
        %v1669 = vunpack.c.h.b16 %v498
        %v1670 = vunpack.c.l.b16 %v499
        %v1671 = vunpack.c.h.b16 %v499
        %v1672 = vunpack.c.l.b16 %v500
        %v1673 = vunpack.c.h.b16 %v500
        %v1674 = vunpack.c.l.b16 %v501
        %v1675 = vunpack.c.h.b16 %v501
        %v1676 = vunpack.c.l.b16 %v502
        %v1677 = vunpack.c.h.b16 %v502
        %v1678 = vunpack.c.l.b16 %v503
        %v1679 = vunpack.c.h.b16 %v503
        %v1680 = vunpack.c.l.b16 %v504
        %v1681 = vunpack.c.h.b16 %v504
        %v1682 = vunpack.c.l.b16 %v505
        %v1683 = vunpack.c.h.b16 %v505
        %v1684 = vunpack.c.l.b16 %v506
        %v1685 = vunpack.c.h.b16 %v506
        %v1686 = vunpack.c.l.b16 %v507
        %v1687 = vunpack.c.h.b16 %v507
        %v1688 = vunpack.c.l.b16 %v508
        %v1689 = vunpack.c.h.b16 %v508
        %v1690 = vunpack.c.l.b16 %v509
        %v1691 = vunpack.c.h.b16 %v509
        %v1692 = vunpack.c.l.b16 %v510
        %v1693 = vunpack.c.h.b16 %v510
        %v1694 = vunpack.c.l.b16 %v511
        %v1695 = vunpack.c.h.b16 %v511
        %v1696 = vunpack.c.l.b16 %v512
        %v1697 = vunpack.c.h.b16 %v512
        %v1698 = vunpack.c.l.b16 %v513
        %v1699 = vunpack.c.h.b16 %v513
        %v1700 = vunpack.c.l.b16 %v514
        %v1701 = vunpack.c.h.b16 %v514
        %v1702 = vunpack.c.l.b16 %v515
        %v1703 = vunpack.c.h.b16 %v515
        %v1704 = vunpack.c.l.b16 %v516
        %v1705 = vunpack.c.h.b16 %v516
        %v1706 = vunpack.c.l.b16 %v517
        %v1707 = vunpack.c.h.b16 %v517
        %v1708 = vunpack.c.l.b16 %v518
        %v1709 = vunpack.c.h.b16 %v518
        %v1710 = vunpack.c.l.b16 %v519
        %v1711 = vunpack.c.h.b16 %v519
        %v1712 = vunpack.c.l.b16 %v520
        %v1713 = vunpack.c.h.b16 %v520
        %v1714 = vunpack.c.l.b16 %v521
        %v1715 = vunpack.c.h.b16 %v521
        %v1716 = vunpack.c.l.b16 %v522
        %v1717 = vunpack.c.h.b16 %v522
        %v1718 = vunpack.c.l.b16 %v523
        %v1719 = vunpack.c.h.b16 %v523
        %v1720 = vunpack.c.l.b16 %v524
        %v1721 = vunpack.c.h.b16 %v524
        %v1722 = vunpack.c.l.b16 %v525
        %v1723 = vunpack.c.h.b16 %v525
        %v1724 = vunpack.c.l.b16 %v526
        %v1725 = vunpack.c.h.b16 %v526
        %v1726 = vunpack.c.l.b16 %v527
        %v1727 = vunpack.c.h.b16 %v527
        %v1728 = vunpack.c.l.b16 %v528
        %v1729 = vunpack.c.h.b16 %v528
        %v1730 = vunpack.c.l.b16 %v529
        %v1731 = vunpack.c.h.b16 %v529
        %v1732 = vunpack.c.l.b16 %v530
        %v1733 = vunpack.c.h.b16 %v530
        %v1734 = vunpack.c.l.b16 %v531
        %v1735 = vunpack.c.h.b16 %v531
        %v1736 = vunpack.c.l.b16 %v532
        %v1737 = vunpack.c.h.b16 %v532
        %v1738 = vunpack.c.l.b16 %v533
        %v1739 = vunpack.c.h.b16 %v533
        %v1740 = vunpack.c.l.b16 %v534
        %v1741 = vunpack.c.h.b16 %v534
        %v1742 = vunpack.c.l.b16 %v535
        %v1743 = vunpack.c.h.b16 %v535
        %v1744 = vunpack.c.l.b16 %v536
        %v1745 = vunpack.c.h.b16 %v536
        %v1746 = vunpack.c.l.b16 %v537
        %v1747 = vunpack.c.h.b16 %v537
        %v1748 = vunpack.c.l.b16 %v538
        %v1749 = vunpack.c.h.b16 %v538
        %v1750 = vunpack.c.l.b16 %v539
        %v1751 = vunpack.c.h.b16 %v539
        %v1752 = vunpack.c.l.b16 %v540
        %v1753 = vunpack.c.h.b16 %v540
        %v1754 = vunpack.c.l.b16 %v541
        %v1755 = vunpack.c.h.b16 %v541
        %v1756 = vunpack.c.l.b16 %v542
        %v1757 = vunpack.c.h.b16 %v542
        %v1758 = vunpack.c.l.b16 %v543
        %v1759 = vunpack.c.h.b16 %v543
        %v1760 = vunpack.c.l.b16 %v544
        %v1761 = vunpack.c.h.b16 %v544
        %v1762 = vunpack.c.l.b16 %v545
        %v1763 = vunpack.c.h.b16 %v545
        %v1764 = vunpack.c.l.b16 %v546
        %v1765 = vunpack.c.h.b16 %v546
        %v1766 = vunpack.c.l.b16 %v547
        %v1767 = vunpack.c.h.b16 %v547
        %v1768 = vunpack.c.l.b16 %v548
        %v1769 = vunpack.c.h.b16 %v548
        %v1770 = vunpack.c.l.b16 %v549
        %v1771 = vunpack.c.h.b16 %v549
        %v1772 = vunpack.c.l.b16 %v550
        %v1773 = vunpack.c.h.b16 %v550
        %v1774 = vunpack.c.l.b16 %v551
        %v1775 = vunpack.c.h.b16 %v551
        %v1776 = vunpack.c.l.b16 %v552
        %v1777 = vunpack.c.h.b16 %v552
        %v1778 = vunpack.c.l.b16 %v553
        %v1779 = vunpack.c.h.b16 %v553
        %v1780 = vunpack.c.l.b16 %v554
        %v1781 = vunpack.c.h.b16 %v554
        %v1782 = vunpack.c.l.b16 %v555
        %v1783 = vunpack.c.h.b16 %v555
        %v1784 = vunpack.c.l.b16 %v556
        %v1785 = vunpack.c.h.b16 %v556
        %v1786 = vunpack.c.l.b16 %v557
        %v1787 = vunpack.c.h.b16 %v557
        %v1788 = vunpack.c.l.b16 %v558
        %v1789 = vunpack.c.h.b16 %v558
        %v1790 = vunpack.c.l.b16 %v559
        %v1791 = vunpack.c.h.b16 %v559
        %v1792 = vunpack.c.l.b16 %v560
        %v1793 = vunpack.c.h.b16 %v560
        %v1794 = vunpack.c.l.b16 %v561
        %v1795 = vunpack.c.h.b16 %v561
        %v1796 = vunpack.c.l.b16 %v562
        %v1797 = vunpack.c.h.b16 %v562
        %v1798 = vunpack.c.l.b16 %v563
        %v1799 = vunpack.c.h.b16 %v563
        %v1800 = vunpack.c.l.b16 %v564
        %v1801 = vunpack.c.h.b16 %v564
        %v1802 = vunpack.c.l.b16 %v565
        %v1803 = vunpack.c.h.b16 %v565
        %v1804 = vunpack.c.l.b16 %v566
        %v1805 = vunpack.c.h.b16 %v566
        %v1806 = vunpack.c.l.b16 %v567
        %v1807 = vunpack.c.h.b16 %v567
        %v1808 = vunpack.c.l.b16 %v568
        %v1809 = vunpack.c.h.b16 %v568
        %v1810 = vunpack.c.l.b16 %v569
        %v1811 = vunpack.c.h.b16 %v569
        %v1812 = vunpack.c.l.b16 %v570
        %v1813 = vunpack.c.h.b16 %v570
        %v1814 = vunpack.c.l.b16 %v571
        %v1815 = vunpack.c.h.b16 %v571
        %v1816 = vunpack.c.l.b16 %v572
        %v1817 = vunpack.c.h.b16 %v572
        %v1818 = vunpack.c.l.b16 %v573
        %v1819 = vunpack.c.h.b16 %v573
        %v1820 = vunpack.c.l.b16 %v574
        %v1821 = vunpack.c.h.b16 %v574
        %v1822 = vunpack.c.l.b16 %v575
        %v1823 = vunpack.c.h.b16 %v575
        %v1824 = vunpack.c.l.b16 %v576
        %v1825 = vunpack.c.h.b16 %v576
        %v1826 = vunpack.c.l.b16 %v577
        %v1827 = vunpack.c.h.b16 %v577
        %v1828 = vunpack.c.l.b16 %v578
        %v1829 = vunpack.c.h.b16 %v578
        %v1830 = vunpack.c.l.b16 %v579
        %v1831 = vunpack.c.h.b16 %v579
        %v1832 = vunpack.c.l.b16 %v580
        %v1833 = vunpack.c.h.b16 %v580
        %v1834 = vunpack.c.l.b16 %v581
        %v1835 = vunpack.c.h.b16 %v581
        %v1836 = vunpack.c.l.b16 %v582
        %v1837 = vunpack.c.h.b16 %v582
        %v1838 = vunpack.c.l.b16 %v583
        %v1839 = vunpack.c.h.b16 %v583
        %v1840 = vunpack.c.l.b16 %v584
        %v1841 = vunpack.c.h.b16 %v584
        %v1842 = vunpack.c.l.b16 %v585
        %v1843 = vunpack.c.h.b16 %v585
        %v1844 = vunpack.c.l.b16 %v586
        %v1845 = vunpack.c.h.b16 %v586
        %v1846 = vunpack.c.l.b16 %v587
        %v1847 = vunpack.c.h.b16 %v587
        %v1848 = vunpack.c.l.b16 %v588
        %v1849 = vunpack.c.h.b16 %v588
        %v1850 = vunpack.c.l.b16 %v589
        %v1851 = vunpack.c.h.b16 %v589
        %v1852 = vunpack.c.l.b16 %v590
        %v1853 = vunpack.c.h.b16 %v590
        %v1854 = vunpack.c.l.b16 %v591
        %v1855 = vunpack.c.h.b16 %v591
        %v1856 = vunpack.c.l.b16 %v592
        %v1857 = vunpack.c.h.b16 %v592
        %v1858 = vunpack.c.l.b16 %v593
        %v1859 = vunpack.c.h.b16 %v593
        %v1860 = vunpack.c.l.b16 %v594
        %v1861 = vunpack.c.h.b16 %v594
        %v1862 = vunpack.c.l.b16 %v595
        %v1863 = vunpack.c.h.b16 %v595
        %v1864 = vunpack.c.l.b16 %v596
        %v1865 = vunpack.c.h.b16 %v596
        %v1866 = vunpack.c.l.b16 %v597
        %v1867 = vunpack.c.h.b16 %v597
        %v1868 = vunpack.c.l.b16 %v598
        %v1869 = vunpack.c.h.b16 %v598
        %v1870 = vunpack.c.l.b16 %v599
        %v1871 = vunpack.c.h.b16 %v599
        %v1872 = vunpack.c.l.b16 %v600
        %v1873 = vunpack.c.h.b16 %v600
        %v1874 = vunpack.c.l.b16 %v601
        %v1875 = vunpack.c.h.b16 %v601
        %v1876 = vunpack.c.l.b16 %v602
        %v1877 = vunpack.c.h.b16 %v602
        %v1878 = vunpack.c.l.b16 %v603
        %v1879 = vunpack.c.h.b16 %v603
        %v1880 = vunpack.c.l.b16 %v604
        %v1881 = vunpack.c.h.b16 %v604
        %v1882 = vunpack.c.l.b16 %v605
        %v1883 = vunpack.c.h.b16 %v605
        %v1884 = vunpack.c.l.b16 %v606
        %v1885 = vunpack.c.h.b16 %v606
        %v1886 = vunpack.c.l.b16 %v607
        %v1887 = vunpack.c.h.b16 %v607
        %v1888 = vunpack.c.l.b16 %v608
        %v1889 = vunpack.c.h.b16 %v608
        %v1890 = vunpack.c.l.b16 %v609
        %v1891 = vunpack.c.h.b16 %v609
        %v1892 = vunpack.c.l.b16 %v610
        %v1893 = vunpack.c.h.b16 %v610
        %v1894 = vunpack.c.l.b16 %v611
        %v1895 = vunpack.c.h.b16 %v611
        %v1896 = vunpack.c.l.b16 %v612
        %v1897 = vunpack.c.h.b16 %v612
        %v1898 = vunpack.c.l.b16 %v613
        %v1899 = vunpack.c.h.b16 %v613
        %v1900 = vunpack.c.l.b16 %v614
        %v1901 = vunpack.c.h.b16 %v614
        %v1902 = vunpack.c.l.b16 %v615
        %v1903 = vunpack.c.h.b16 %v615
        %v1904 = vunpack.c.l.b16 %v616
        %v1905 = vunpack.c.h.b16 %v616
        %v1906 = vunpack.c.l.b16 %v617
        %v1907 = vunpack.c.h.b16 %v617
        %v1908 = vunpack.c.l.b16 %v618
        %v1909 = vunpack.c.h.b16 %v618
        %v1910 = vunpack.c.l.b16 %v619
        %v1911 = vunpack.c.h.b16 %v619
        %v1912 = vunpack.c.l.b16 %v620
        %v1913 = vunpack.c.h.b16 %v620
        %v1914 = vunpack.c.l.b16 %v621
        %v1915 = vunpack.c.h.b16 %v621
        %v1916 = vunpack.c.l.b16 %v622
        %v1917 = vunpack.c.h.b16 %v622
        %v1918 = vunpack.c.l.b16 %v623
        %v1919 = vunpack.c.h.b16 %v623
        %v1920 = vunpack.c.l.b16 %v624
        %v1921 = vunpack.c.h.b16 %v624
        %v1922 = vunpack.c.l.b16 %v625
        %v1923 = vunpack.c.h.b16 %v625
        %v1924 = vunpack.c.l.b16 %v626
        %v1925 = vunpack.c.h.b16 %v626
        %v1926 = vunpack.c.l.b16 %v627
        %v1927 = vunpack.c.h.b16 %v627
        %v1928 = vunpack.c.l.b16 %v628
        %v1929 = vunpack.c.h.b16 %v628
        %v1930 = vunpack.c.l.b16 %v629
        %v1931 = vunpack.c.h.b16 %v629
        %v1932 = vunpack.c.l.b16 %v630
        %v1933 = vunpack.c.h.b16 %v630
        %v1934 = vunpack.c.l.b16 %v631
        %v1935 = vunpack.c.h.b16 %v631
        %v1936 = vunpack.c.l.b16 %v632
        %v1937 = vunpack.c.h.b16 %v632
        %v1938 = vunpack.c.l.b16 %v633
        %v1939 = vunpack.c.h.b16 %v633
        %v1940 = vunpack.c.l.b16 %v634
        %v1941 = vunpack.c.h.b16 %v634
        %v1942 = vunpack.c.l.b16 %v635
        %v1943 = vunpack.c.h.b16 %v635
        %v1944 = vunpack.c.l.b16 %v636
        %v1945 = vunpack.c.h.b16 %v636
        %v1946 = vunpack.c.l.b16 %v637
        %v1947 = vunpack.c.h.b16 %v637
        %v1948 = vunpack.c.l.b16 %v638
        %v1949 = vunpack.c.h.b16 %v638
        %v1950 = vunpack.c.l.b16 %v639
        %v1951 = vunpack.c.h.b16 %v639
        %v1952 = vunpack.c.l.b16 %v640
        %v1953 = vunpack.c.h.b16 %v640
        %v1954 = vunpack.c.l.b16 %v641
        %v1955 = vunpack.c.h.b16 %v641
        %v1956 = vunpack.c.l.b16 %v642
        %v1957 = vunpack.c.h.b16 %v642
        %v1958 = vunpack.c.l.b16 %v643
        %v1959 = vunpack.c.h.b16 %v643
        %v1960 = vunpack.c.l.b16 %v644
        %v1961 = vunpack.c.h.b16 %v644
        %v1962 = vunpack.c.l.b16 %v645
        %v1963 = vunpack.c.h.b16 %v645
        %v1964 = vunpack.c.l.b16 %v646
        %v1965 = vunpack.c.h.b16 %v646
        %v1966 = vunpack.c.l.b16 %v647
        %v1967 = vunpack.c.h.b16 %v647
        %v1968 = vunpack.c.l.b16 %v648
        %v1969 = vunpack.c.h.b16 %v648
        %v1970 = vunpack.c.l.b16 %v649
        %v1971 = vunpack.c.h.b16 %v649
        %v1972 = vunpack.c.l.b16 %v650
        %v1973 = vunpack.c.h.b16 %v650
        %v1974 = vunpack.c.l.b16 %v651
        %v1975 = vunpack.c.h.b16 %v651
        %v1976 = vunpack.c.l.b16 %v652
        %v1977 = vunpack.c.h.b16 %v652
        %v1978 = vunpack.c.l.b16 %v653
        %v1979 = vunpack.c.h.b16 %v653
        %v1980 = vunpack.c.l.b16 %v654
        %v1981 = vunpack.c.h.b16 %v654
        %v1982 = vunpack.c.l.b16 %v655
        %v1983 = vunpack.c.h.b16 %v655
        %v1984 = vunpack.c.l.b16 %v656
        %v1985 = vunpack.c.h.b16 %v656
        %v1986 = vunpack.c.l.b16 %v657
        %v1987 = vunpack.c.h.b16 %v657
        %v1988 = vunpack.c.l.b16 %v658
        %v1989 = vunpack.c.h.b16 %v658
        %v1990 = vunpack.c.l.b16 %v659
        %v1991 = vunpack.c.h.b16 %v659
        %v1992 = vunpack.c.l.b16 %v660
        %v1993 = vunpack.c.h.b16 %v660
        %v1994 = vunpack.c.l.b16 %v661
        %v1995 = vunpack.c.h.b16 %v661
        %v1996 = vunpack.c.l.b16 %v662
        %v1997 = vunpack.c.h.b16 %v662
        %v1998 = vunpack.c.l.b16 %v663
        %v1999 = vunpack.c.h.b16 %v663
        %v2000 = vunpack.c.l.b16 %v664
        %v2001 = vunpack.c.h.b16 %v664
        %v2002 = vunpack.c.l.b16 %v665
        %v2003 = vunpack.c.h.b16 %v665
        %v2004 = vunpack.c.l.b16 %v666
        %v2005 = vunpack.c.h.b16 %v666
        %v2006 = vunpack.c.l.b16 %v667
        %v2007 = vunpack.c.h.b16 %v667
        %v2008 = vunpack.c.l.b16 %v668
        %v2009 = vunpack.c.h.b16 %v668
        %v2010 = vunpack.c.l.b16 %v669
        %v2011 = vunpack.c.h.b16 %v669
        %v2012 = vunpack.c.l.b16 %v670
        %v2013 = vunpack.c.h.b16 %v670
        %v2014 = vunpack.c.l.b16 %v671
        %v2015 = vunpack.c.h.b16 %v671
        %v2016 = vunpack.c.l.b16 %v672
        %v2017 = vunpack.c.h.b16 %v672
        %v2018 = vunpack.c.l.b16 %v673
        %v2019 = vunpack.c.h.b16 %v673
        %v2020 = vunpack.c.l.b16 %v674
        %v2021 = vunpack.c.h.b16 %v674
        %v2022 = vunpack.c.l.b16 %v675
        %v2023 = vunpack.c.h.b16 %v675
        %v2024 = vunpack.c.l.b16 %v676
        %v2025 = vunpack.c.h.b16 %v676
        %v2026 = vunpack.c.l.b16 %v677
        %v2027 = vunpack.c.h.b16 %v677
        %v2028 = vunpack.c.l.b16 %v678
        %v2029 = vunpack.c.h.b16 %v678
        %v2030 = vunpack.c.l.b16 %v679
        %v2031 = vunpack.c.h.b16 %v679
        %v2032 = vunpack.c.l.b16 %v680
        %v2033 = vunpack.c.h.b16 %v680
        %v2034 = vunpack.c.l.b16 %v681
        %v2035 = vunpack.c.h.b16 %v681
        %v2036 = vunpack.c.l.b16 %v682
        %v2037 = vunpack.c.h.b16 %v682
        %v2038 = vunpack.c.l.b16 %v683
        %v2039 = vunpack.c.h.b16 %v683
        %v2040 = vunpack.c.l.b16 %v684
        %v2041 = vunpack.c.h.b16 %v684
        %v2042 = vunpack.c.l.b16 %v685
        %v2043 = vunpack.c.h.b16 %v685
        %v2044 = vunpack.c.l.b16 %v686
        %v2045 = vunpack.c.h.b16 %v686
        %v2046 = vunpack.c.l.b16 %v687
        %v2047 = vunpack.c.h.b16 %v687
        %v2048 = vunpack.c.l.b16 %v688
        %v2049 = vunpack.c.h.b16 %v688
        %v2050 = vunpack.c.l.b16 %v689
        %v2051 = vunpack.c.h.b16 %v689
        %v2052 = vunpack.c.l.b16 %v690
        %v2053 = vunpack.c.h.b16 %v690
        %v2054 = vunpack.c.l.b16 %v691
        %v2055 = vunpack.c.h.b16 %v691
        %v2056 = vunpack.c.l.b16 %v692
        %v2057 = vunpack.c.h.b16 %v692
        %v2058 = vunpack.c.l.b16 %v693
        %v2059 = vunpack.c.h.b16 %v693
        %v2060 = vunpack.c.l.b16 %v694
        %v2061 = vunpack.c.h.b16 %v694
        %v2062 = vunpack.c.l.b16 %v695
        %v2063 = vunpack.c.h.b16 %v695
        %v2064 = vunpack.c.l.b16 %v696
        %v2065 = vunpack.c.h.b16 %v696
        %v2066 = vunpack.c.l.b16 %v697
        %v2067 = vunpack.c.h.b16 %v697
        %v2068 = vunpack.c.l.b16 %v698
        %v2069 = vunpack.c.h.b16 %v698
        %v2070 = vunpack.c.l.b16 %v699
        %v2071 = vunpack.c.h.b16 %v699
        %v2072 = vunpack.c.l.b16 %v700
        %v2073 = vunpack.c.h.b16 %v700
        %v2074 = vunpack.c.l.b16 %v701
        %v2075 = vunpack.c.h.b16 %v701
        %v2076 = vunpack.c.l.b16 %v702
        %v2077 = vunpack.c.h.b16 %v702
        %v2078 = vunpack.c.l.b16 %v703
        %v2079 = vunpack.c.h.b16 %v703
        %v2080 = vunpack.c.l.b16 %v704
        %v2081 = vunpack.c.h.b16 %v704
        %v2082 = vunpack.c.l.b16 %v705
        %v2083 = vunpack.c.h.b16 %v705
        %v2084 = vunpack.c.l.b16 %v706
        %v2085 = vunpack.c.h.b16 %v706
        %v2086 = vunpack.c.l.b16 %v707
        %v2087 = vunpack.c.h.b16 %v707
        %v2088 = vunpack.c.l.b16 %v708
        %v2089 = vunpack.c.h.b16 %v708
        %v2090 = vunpack.c.l.b16 %v709
        %v2091 = vunpack.c.h.b16 %v709
        %v2092 = vunpack.c.l.b16 %v710
        %v2093 = vunpack.c.h.b16 %v710
        %v2094 = vunpack.c.l.b16 %v711
        %v2095 = vunpack.c.h.b16 %v711
        %v2096 = vunpack.c.l.b16 %v712
        %v2097 = vunpack.c.h.b16 %v712
        %v2098 = vunpack.c.l.b16 %v713
        %v2099 = vunpack.c.h.b16 %v713
        %v2100 = vunpack.c.l.b16 %v714
        %v2101 = vunpack.c.h.b16 %v714
        %v2102 = vunpack.c.l.b16 %v715
        %v2103 = vunpack.c.h.b16 %v715
        %v2104 = vunpack.c.l.b16 %v716
        %v2105 = vunpack.c.h.b16 %v716
        %v2106 = vunpack.c.l.b16 %v717
        %v2107 = vunpack.c.h.b16 %v717
        %v2108 = vunpack.c.l.b16 %v718
        %v2109 = vunpack.c.h.b16 %v718
        %v2110 = vunpack.c.l.b16 %v719
        %v2111 = vunpack.c.h.b16 %v719
        %v2112 = vunpack.c.l.b16 %v720
        %v2113 = vunpack.c.h.b16 %v720
        %v2114 = vunpack.c.l.b16 %v721
        %v2115 = vunpack.c.h.b16 %v721
        %v2116 = vunpack.c.l.b16 %v722
        %v2117 = vunpack.c.h.b16 %v722
        %v2118 = vunpack.c.l.b16 %v723
        %v2119 = vunpack.c.h.b16 %v723
        %v2120 = vunpack.c.l.b16 %v724
        %v2121 = vunpack.c.h.b16 %v724
        %v2122 = vunpack.c.l.b16 %v725
        %v2123 = vunpack.c.h.b16 %v725
        %v2124 = vunpack.c.l.b16 %v726
        %v2125 = vunpack.c.h.b16 %v726
        %v2126 = vunpack.c.l.b16 %v727
        %v2127 = vunpack.c.h.b16 %v727
        %v2128 = vunpack.c.l.b16 %v728
        %v2129 = vunpack.c.h.b16 %v728
        %v2130 = vunpack.c.l.b16 %v729
        %v2131 = vunpack.c.h.b16 %v729
        %v2132 = vunpack.c.l.b16 %v730
        %v2133 = vunpack.c.h.b16 %v730
        %v2134 = vunpack.c.l.b16 %v731
        %v2135 = vunpack.c.h.b16 %v731
        %v2136 = vunpack.c.l.b16 %v732
        %v2137 = vunpack.c.h.b16 %v732
        %v2138 = vunpack.c.l.b16 %v733
        %v2139 = vunpack.c.h.b16 %v733
        %v2140 = vunpack.c.l.b16 %v734
        %v2141 = vunpack.c.h.b16 %v734
        %v2142 = vunpack.c.l.b16 %v735
        %v2143 = vunpack.c.h.b16 %v735
        %v2144 = vunpack.c.l.b16 %v736
        %v2145 = vunpack.c.h.b16 %v736
        %v2146 = vunpack.c.l.b16 %v737
        %v2147 = vunpack.c.h.b16 %v737
        %v2148 = vunpack.c.l.b16 %v738
        %v2149 = vunpack.c.h.b16 %v738
        %v2150 = vunpack.c.l.b16 %v739
        %v2151 = vunpack.c.h.b16 %v739
        %v2152 = vunpack.c.l.b16 %v740
        %v2153 = vunpack.c.h.b16 %v740
        %v2154 = vunpack.c.l.b16 %v741
        %v2155 = vunpack.c.h.b16 %v741
        %v2156 = vunpack.c.l.b16 %v742
        %v2157 = vunpack.c.h.b16 %v742
        %v2158 = vunpack.c.l.b16 %v743
        %v2159 = vunpack.c.h.b16 %v743
        %v2160 = vunpack.c.l.b16 %v744
        %v2161 = vunpack.c.h.b16 %v744
        %v2162 = vunpack.c.l.b16 %v745
        %v2163 = vunpack.c.h.b16 %v745
        %v2164 = vunpack.c.l.b16 %v746
        %v2165 = vunpack.c.h.b16 %v746
        %v2166 = vunpack.c.l.b16 %v747
        %v2167 = vunpack.c.h.b16 %v747
        %v2168 = vunpack.c.l.b16 %v748
        %v2169 = vunpack.c.h.b16 %v748
        %v2170 = vunpack.c.l.b16 %v749
        %v2171 = vunpack.c.h.b16 %v749
        %v2172 = vunpack.c.l.b16 %v750
        %v2173 = vunpack.c.h.b16 %v750
        %v2174 = vunpack.c.l.b16 %v751
        %v2175 = vunpack.c.h.b16 %v751
        %v2176 = vunpack.c.l.b16 %v752
        %v2177 = vunpack.c.h.b16 %v752
        %v2178 = vunpack.c.l.b16 %v753
        %v2179 = vunpack.c.h.b16 %v753
        %v2180 = vunpack.c.l.b16 %v754
        %v2181 = vunpack.c.h.b16 %v754
        %v2182 = vunpack.c.l.b16 %v755
        %v2183 = vunpack.c.h.b16 %v755
        %v2184 = vunpack.c.l.b16 %v756
        %v2185 = vunpack.c.h.b16 %v756
        %v2186 = vunpack.c.l.b16 %v757
        %v2187 = vunpack.c.h.b16 %v757
        %v2188 = vunpack.c.l.b16 %v758
        %v2189 = vunpack.c.h.b16 %v758
        %v2190 = vunpack.c.l.b16 %v759
        %v2191 = vunpack.c.h.b16 %v759
        %v2192 = vunpack.c.l.b16 %v760
        %v2193 = vunpack.c.h.b16 %v760
        %v2194 = vunpack.c.l.b16 %v761
        %v2195 = vunpack.c.h.b16 %v761
        %v2196 = vunpack.c.l.b16 %v762
        %v2197 = vunpack.c.h.b16 %v762
        %v2198 = vunpack.c.l.b16 %v763
        %v2199 = vunpack.c.h.b16 %v763
        %v2200 = vunpack.c.l.b16 %v764
        %v2201 = vunpack.c.h.b16 %v764
        %v2202 = vunpack.c.l.b16 %v765
        %v2203 = vunpack.c.h.b16 %v765
        %v2204 = vunpack.c.l.b16 %v766
        %v2205 = vunpack.c.h.b16 %v766
        %v2206 = vunpack.c.l.b16 %v767
        %v2207 = vunpack.c.h.b16 %v767
        %v2208 = vunpack.c.l.b16 %v768
        %v2209 = vunpack.c.h.b16 %v768
        %v2210 = vunpack.c.l.b16 %v769
        %v2211 = vunpack.c.h.b16 %v769
        %v2212 = vunpack.c.l.b16 %v770
        %v2213 = vunpack.c.h.b16 %v770
        %v2214 = vunpack.c.l.b16 %v771
        %v2215 = vunpack.c.h.b16 %v771
        %v2216 = vunpack.c.l.b16 %v772
        %v2217 = vunpack.c.h.b16 %v772
        %v2218 = vunpack.c.l.b16 %v773
        %v2219 = vunpack.c.h.b16 %v773
        %v2220 = vunpack.c.l.b16 %v774
        %v2221 = vunpack.c.h.b16 %v774
        %v2222 = vunpack.c.l.b16 %v775
        %v2223 = vunpack.c.h.b16 %v775
        %v2224 = vunpack.c.l.b16 %v776
        %v2225 = vunpack.c.h.b16 %v776
        %v2226 = vunpack.c.l.b16 %v777
        %v2227 = vunpack.c.h.b16 %v777
        %v2228 = vunpack.c.l.b16 %v778
        %v2229 = vunpack.c.h.b16 %v778
        %v2230 = vunpack.c.l.b16 %v779
        %v2231 = vunpack.c.h.b16 %v779
        %v2232 = vunpack.c.l.b16 %v780
        %v2233 = vunpack.c.h.b16 %v780
        %v2234 = vunpack.c.l.b16 %v781
        %v2235 = vunpack.c.h.b16 %v781
        %v2236 = vunpack.c.l.b16 %v782
        %v2237 = vunpack.c.h.b16 %v782
        %v2238 = vunpack.c.l.b16 %v783
        %v2239 = vunpack.c.h.b16 %v783
        %v2240 = vunpack.c.l.b16 %v784
        %v2241 = vunpack.c.h.b16 %v784
        %v2242 = vunpack.c.l.b16 %v785
        %v2243 = vunpack.c.h.b16 %v785
        %v2244 = vunpack.c.l.b16 %v786
        %v2245 = vunpack.c.h.b16 %v786
        %v2246 = vunpack.c.l.b16 %v787
        %v2247 = vunpack.c.h.b16 %v787
        %v2248 = vunpack.c.l.b16 %v788
        %v2249 = vunpack.c.h.b16 %v788
        %v2250 = vunpack.c.l.b16 %v789
        %v2251 = vunpack.c.h.b16 %v789
        %v2252 = vunpack.c.l.b16 %v790
        %v2253 = vunpack.c.h.b16 %v790
        %v2254 = vunpack.c.l.b16 %v791
        %v2255 = vunpack.c.h.b16 %v791
        %v2256 = vunpack.c.l.b16 %v792
        %v2257 = vunpack.c.h.b16 %v792
        %v2258 = vunpack.c.l.b16 %v793
        %v2259 = vunpack.c.h.b16 %v793
        %v2260 = vunpack.c.l.b16 %v794
        %v2261 = vunpack.c.h.b16 %v794
        %v2262 = vunpack.c.l.b16 %v795
        %v2263 = vunpack.c.h.b16 %v795
        %v2264 = vunpack.c.l.b16 %v796
        %v2265 = vunpack.c.h.b16 %v796
        %v2266 = vunpack.c.l.b16 %v797
        %v2267 = vunpack.c.h.b16 %v797
        %v2268 = vunpack.c.l.b16 %v798
        %v2269 = vunpack.c.h.b16 %v798
        %v2270 = vunpack.c.l.b16 %v799
        %v2271 = vunpack.c.h.b16 %v799
        %v2272 = vunpack.c.l.b16 %v800
        %v2273 = vunpack.c.h.b16 %v800
        %v2274 = vunpack.c.l.b16 %v801
        %v2275 = vunpack.c.h.b16 %v801
        %v2276 = vunpack.c.l.b16 %v802
        %v2277 = vunpack.c.h.b16 %v802
        %v2278 = vunpack.c.l.b16 %v803
        %v2279 = vunpack.c.h.b16 %v803
        %v2280 = vunpack.c.l.b16 %v804
        %v2281 = vunpack.c.h.b16 %v804
        %v2282 = vunpack.c.l.b16 %v805
        %v2283 = vunpack.c.h.b16 %v805
        %v2284 = vunpack.c.l.b16 %v806
        %v2285 = vunpack.c.h.b16 %v806
        %v2286 = vunpack.c.l.b16 %v807
        %v2287 = vunpack.c.h.b16 %v807
        %v2288 = vunpack.c.l.b16 %v808
        %v2289 = vunpack.c.h.b16 %v808
        %v2290 = vunpack.c.l.b16 %v809
        %v2291 = vunpack.c.h.b16 %v809
        %v2292 = vunpack.c.l.b16 %v810
        %v2293 = vunpack.c.h.b16 %v810
        %v2294 = vunpack.c.l.b16 %v811
        %v2295 = vunpack.c.h.b16 %v811
        %v2296 = vunpack.c.l.b16 %v812
        %v2297 = vunpack.c.h.b16 %v812
        %v2298 = vunpack.c.l.b16 %v813
        %v2299 = vunpack.c.h.b16 %v813
        %v2300 = vunpack.c.l.b16 %v814
        %v2301 = vunpack.c.h.b16 %v814
        %v2302 = vunpack.c.l.b16 %v815
        %v2303 = vunpack.c.h.b16 %v815
        %v2304 = vunpack.c.l.b16 %v816
        %v2305 = vunpack.c.h.b16 %v816
        %v2306 = vunpack.c.l.b16 %v817
        %v2307 = vunpack.c.h.b16 %v817
        %v2308 = vunpack.c.l.b16 %v818
        %v2309 = vunpack.c.h.b16 %v818
        %v2310 = vunpack.c.l.b16 %v819
        %v2311 = vunpack.c.h.b16 %v819
        %v2312 = vunpack.c.l.b16 %v820
        %v2313 = vunpack.c.h.b16 %v820
        %v2314 = vunpack.c.l.b16 %v821
        %v2315 = vunpack.c.h.b16 %v821
        %v2316 = vunpack.c.l.b16 %v822
        %v2317 = vunpack.c.h.b16 %v822
        %v2318 = vunpack.c.l.b16 %v823
        %v2319 = vunpack.c.h.b16 %v823
        %v2320 = vunpack.c.l.b16 %v824
        %v2321 = vunpack.c.h.b16 %v824
        %v2322 = vunpack.c.l.b16 %v825
        %v2323 = vunpack.c.h.b16 %v825
        %v2324 = vunpack.c.l.b16 %v826
        %v2325 = vunpack.c.h.b16 %v826
        %v2326 = vunpack.c.l.b16 %v827
        %v2327 = vunpack.c.h.b16 %v827
        %v2328 = vunpack.c.l.b16 %v828
        %v2329 = vunpack.c.h.b16 %v828
        %v2330 = vunpack.c.l.b16 %v829
        %v2331 = vunpack.c.h.b16 %v829
        %v2332 = vunpack.c.l.b16 %v830
        %v2333 = vunpack.c.h.b16 %v830
        %v2334 = vunpack.c.l.b16 %v831
        %v2335 = vunpack.c.h.b16 %v831
        %v2336 = vunpack.c.l.b16 %v832
        %v2337 = vunpack.c.h.b16 %v832
        %v2338 = vunpack.c.l.b16 %v833
        %v2339 = vunpack.c.h.b16 %v833
        %v2340 = vunpack.c.l.b16 %v834
        %v2341 = vunpack.c.h.b16 %v834
        %v2342 = vunpack.c.l.b16 %v835
        %v2343 = vunpack.c.h.b16 %v835
        %v2344 = vunpack.c.l.b16 %v836
        %v2345 = vunpack.c.h.b16 %v836
        %v2346 = vunpack.c.l.b16 %v837
        %v2347 = vunpack.c.h.b16 %v837
        %v2348 = vunpack.c.l.b16 %v838
        %v2349 = vunpack.c.h.b16 %v838
        %v2350 = vunpack.c.l.b16 %v839
        %v2351 = vunpack.c.h.b16 %v839
        %v2352 = vunpack.c.l.b16 %v840
        %v2353 = vunpack.c.h.b16 %v840
        %v2354 = vunpack.c.l.b16 %v841
        %v2355 = vunpack.c.h.b16 %v841
        %v2356 = vunpack.c.l.b16 %v842
        %v2357 = vunpack.c.h.b16 %v842
        %v2358 = vunpack.c.l.b16 %v843
        %v2359 = vunpack.c.h.b16 %v843
        %v2360 = vunpack.c.l.b16 %v844
        %v2361 = vunpack.c.h.b16 %v844
        %v2362 = vunpack.c.l.b16 %v845
        %v2363 = vunpack.c.h.b16 %v845
        %v2364 = vunpack.c.l.b16 %v846
        %v2365 = vunpack.c.h.b16 %v846
        %v2366 = vunpack.c.l.b16 %v847
        %v2367 = vunpack.c.h.b16 %v847
        %v2368 = vunpack.c.l.b16 %v848
        %v2369 = vunpack.c.h.b16 %v848
        %v2370 = vunpack.c.l.b16 %v849
        %v2371 = vunpack.c.h.b16 %v849
        %v2372 = vunpack.c.l.b16 %v850
        %v2373 = vunpack.c.h.b16 %v850
        %v2374 = vunpack.c.l.b16 %v851
        %v2375 = vunpack.c.h.b16 %v851
        %v2376 = vunpack.c.l.b16 %v852
        %v2377 = vunpack.c.h.b16 %v852
        %v2378 = vunpack.c.l.b16 %v853
        %v2379 = vunpack.c.h.b16 %v853
        %v2380 = vunpack.c.l.b16 %v854
        %v2381 = vunpack.c.h.b16 %v854
        %v2382 = vunpack.c.l.b16 %v855
        %v2383 = vunpack.c.h.b16 %v855
        %v2384 = vunpack.c.l.b16 %v856
        %v2385 = vunpack.c.h.b16 %v856
        %v2386 = vunpack.c.l.b16 %v857
        %v2387 = vunpack.c.h.b16 %v857
        %v2388 = vunpack.c.l.b16 %v858
        %v2389 = vunpack.c.h.b16 %v858
        %v2390 = vunpack.c.l.b16 %v859
        %v2391 = vunpack.c.h.b16 %v859
        %v2392 = vunpack.c.l.b16 %v860
        %v2393 = vunpack.c.h.b16 %v860
        %v2394 = vunpack.c.l.b16 %v861
        %v2395 = vunpack.c.h.b16 %v861
        %v2396 = vunpack.c.l.b16 %v862
        %v2397 = vunpack.c.h.b16 %v862
        %v2398 = vunpack.c.l.b16 %v863
        %v2399 = vunpack.c.h.b16 %v863
        %v2400 = vunpack.c.l.b16 %v864
        %v2401 = vunpack.c.h.b16 %v864
        %v2402 = vunpack.c.l.b16 %v865
        %v2403 = vunpack.c.h.b16 %v865
        %v2404 = vunpack.c.l.b16 %v866
        %v2405 = vunpack.c.h.b16 %v866
        %v2406 = vunpack.c.l.b16 %v867
        %v2407 = vunpack.c.h.b16 %v867
        %v2408 = vunpack.c.l.b16 %v868
        %v2409 = vunpack.c.h.b16 %v868
        %v2410 = vunpack.c.l.b16 %v869
        %v2411 = vunpack.c.h.b16 %v869
        %v2412 = vunpack.c.l.b16 %v870
        %v2413 = vunpack.c.h.b16 %v870
        %v2414 = vunpack.c.l.b16 %v871
        %v2415 = vunpack.c.h.b16 %v871
        %v2416 = vunpack.c.l.b16 %v872
        %v2417 = vunpack.c.h.b16 %v872
        %v2418 = vunpack.c.l.b16 %v873
        %v2419 = vunpack.c.h.b16 %v873
        %v2420 = vunpack.c.l.b16 %v874
        %v2421 = vunpack.c.h.b16 %v874
        %v2422 = vunpack.c.l.b16 %v875
        %v2423 = vunpack.c.h.b16 %v875
        %v2424 = vunpack.c.l.b16 %v876
        %v2425 = vunpack.c.h.b16 %v876
        %v2426 = vunpack.c.l.b16 %v877
        %v2427 = vunpack.c.h.b16 %v877
        %v2428 = vunpack.c.l.b16 %v878
        %v2429 = vunpack.c.h.b16 %v878
        %v2430 = vunpack.c.l.b16 %v879
        %v2431 = vunpack.c.h.b16 %v879
        %v2432 = vunpack.c.l.b16 %v880
        %v2433 = vunpack.c.h.b16 %v880
        %v2434 = vunpack.c.l.b16 %v881
        %v2435 = vunpack.c.h.b16 %v881
        %v2436 = vunpack.c.l.b16 %v882
        %v2437 = vunpack.c.h.b16 %v882
        %v2438 = vunpack.c.l.b16 %v883
        %v2439 = vunpack.c.h.b16 %v883
        %v2440 = vunpack.c.l.b16 %v884
        %v2441 = vunpack.c.h.b16 %v884
        %v2442 = vunpack.c.l.b16 %v885
        %v2443 = vunpack.c.h.b16 %v885
        %v2444 = vunpack.c.l.b16 %v886
        %v2445 = vunpack.c.h.b16 %v886
        %v2446 = vunpack.c.l.b16 %v887
        %v2447 = vunpack.c.h.b16 %v887
        %v2448 = vunpack.c.l.b16 %v888
        %v2449 = vunpack.c.h.b16 %v888
        %v2450 = vunpack.c.l.b16 %v889
        %v2451 = vunpack.c.h.b16 %v889
        %v2452 = vunpack.c.l.b16 %v890
        %v2453 = vunpack.c.h.b16 %v890
        %v2454 = vunpack.c.l.b16 %v891
        %v2455 = vunpack.c.h.b16 %v891
        %v2456 = vunpack.c.l.b16 %v892
        %v2457 = vunpack.c.h.b16 %v892
        %v2458 = vunpack.c.l.b16 %v893
        %v2459 = vunpack.c.h.b16 %v893
        %v2460 = vunpack.c.l.b16 %v894
        %v2461 = vunpack.c.h.b16 %v894
        %v2462 = vunpack.c.l.b16 %v895
        %v2463 = vunpack.c.h.b16 %v895
        %v2464 = vunpack.c.l.b16 %v896
        %v2465 = vunpack.c.h.b16 %v896
        %v2466 = vunpack.c.l.b16 %v897
        %v2467 = vunpack.c.h.b16 %v897
        %v2468 = vunpack.c.l.b16 %v898
        %v2469 = vunpack.c.h.b16 %v898
        %v2470 = vunpack.c.l.b16 %v899
        %v2471 = vunpack.c.h.b16 %v899
        %v2472 = vunpack.c.l.b16 %v900
        %v2473 = vunpack.c.h.b16 %v900
        %v2474 = vunpack.c.l.b16 %v901
        %v2475 = vunpack.c.h.b16 %v901
        %v2476 = vunpack.c.l.b16 %v902
        %v2477 = vunpack.c.h.b16 %v902
        %v2478 = vunpack.c.l.b16 %v903
        %v2479 = vunpack.c.h.b16 %v903
        %v2480 = vunpack.c.l.b16 %v904
        %v2481 = vunpack.c.h.b16 %v904
        %v2482 = vunpack.c.l.b16 %v905
        %v2483 = vunpack.c.h.b16 %v905
        %v2484 = vunpack.c.l.b16 %v906
        %v2485 = vunpack.c.h.b16 %v906
        %v2486 = vunpack.c.l.b16 %v907
        %v2487 = vunpack.c.h.b16 %v907
        %v2488 = vunpack.c.l.b16 %v908
        %v2489 = vunpack.c.h.b16 %v908
        %v2490 = vunpack.c.l.b16 %v909
        %v2491 = vunpack.c.h.b16 %v909
        %v2492 = vunpack.c.l.b16 %v910
        %v2493 = vunpack.c.h.b16 %v910
        %v2494 = vunpack.c.l.b16 %v911
        %v2495 = vunpack.c.h.b16 %v911
        %v2496 = vunpack.c.l.b16 %v912
        %v2497 = vunpack.c.h.b16 %v912
        %v2498 = vunpack.c.l.b16 %v913
        %v2499 = vunpack.c.h.b16 %v913
        %v2500 = vunpack.c.l.b16 %v914
        %v2501 = vunpack.c.h.b16 %v914
        %v2502 = vunpack.c.l.b16 %v915
        %v2503 = vunpack.c.h.b16 %v915
        %v2504 = vunpack.c.l.b16 %v916
        %v2505 = vunpack.c.h.b16 %v916
        %v2506 = vunpack.c.l.b16 %v917
        %v2507 = vunpack.c.h.b16 %v917
        %v2508 = vunpack.c.l.b16 %v918
        %v2509 = vunpack.c.h.b16 %v918
        %v2510 = vunpack.c.l.b16 %v919
        %v2511 = vunpack.c.h.b16 %v919
        %v2512 = vunpack.c.l.b16 %v920
        %v2513 = vunpack.c.h.b16 %v920
        %v2514 = vunpack.c.l.b16 %v921
        %v2515 = vunpack.c.h.b16 %v921
        %v2516 = vunpack.c.l.b16 %v922
        %v2517 = vunpack.c.h.b16 %v922
        %v2518 = vunpack.c.l.b16 %v923
        %v2519 = vunpack.c.h.b16 %v923
        %v2520 = vunpack.c.l.b16 %v924
        %v2521 = vunpack.c.h.b16 %v924
        %v2522 = vunpack.c.l.b16 %v925
        %v2523 = vunpack.c.h.b16 %v925
        %v2524 = vunpack.c.l.b16 %v926
        %v2525 = vunpack.c.h.b16 %v926
        %v2526 = vunpack.c.l.b16 %v927
        %v2527 = vunpack.c.h.b16 %v927
        %v2528 = vunpack.c.l.b16 %v928
        %v2529 = vunpack.c.h.b16 %v928
        %v2530 = vunpack.c.l.b16 %v929
        %v2531 = vunpack.c.h.b16 %v929
        %v2532 = vunpack.c.l.b16 %v930
        %v2533 = vunpack.c.h.b16 %v930
        %v2534 = vunpack.c.l.b16 %v931
        %v2535 = vunpack.c.h.b16 %v931
        %v2536 = vunpack.c.l.b16 %v932
        %v2537 = vunpack.c.h.b16 %v932
        %v2538 = vunpack.c.l.b16 %v933
        %v2539 = vunpack.c.h.b16 %v933
        %v2540 = vunpack.c.l.b16 %v934
        %v2541 = vunpack.c.h.b16 %v934
        %v2542 = vunpack.c.l.b16 %v935
        %v2543 = vunpack.c.h.b16 %v935
        %v2544 = vunpack.c.l.b16 %v936
        %v2545 = vunpack.c.h.b16 %v936
        %v2546 = vunpack.c.l.b16 %v937
        %v2547 = vunpack.c.h.b16 %v937
        %v2548 = vunpack.c.l.b16 %v938
        %v2549 = vunpack.c.h.b16 %v938
        %v2550 = vunpack.c.l.b16 %v939
        %v2551 = vunpack.c.h.b16 %v939
        %v2552 = vunpack.c.l.b16 %v940
        %v2553 = vunpack.c.h.b16 %v940
        %v2554 = vunpack.c.l.b16 %v941
        %v2555 = vunpack.c.h.b16 %v941
        %v2556 = vunpack.c.l.b16 %v942
        %v2557 = vunpack.c.h.b16 %v942
        %v2558 = vunpack.c.l.b16 %v943
        %v2559 = vunpack.c.h.b16 %v943
        %v2560 = vpack.c.b16 %v1544, %v1536
        %v2561 = vpack.c.b16 %v1545, %v1537
        %v2562 = vpack.c.b16 %v1546, %v1538
        %v2563 = vpack.c.b16 %v1547, %v1539
        %v2564 = vpack.c.b16 %v1548, %v1540
        %v2565 = vpack.c.b16 %v1549, %v1541
        %v2566 = vpack.c.b16 %v1550, %v1542
        %v2567 = vpack.c.b16 %v1551, %v1543
        %v2568 = vpack.c.b16 %v1560, %v1552
        %v2569 = vpack.c.b16 %v1561, %v1553
        %v2570 = vpack.c.b16 %v1562, %v1554
        %v2571 = vpack.c.b16 %v1563, %v1555
        %v2572 = vpack.c.b16 %v1564, %v1556
        %v2573 = vpack.c.b16 %v1565, %v1557
        %v2574 = vpack.c.b16 %v1566, %v1558
        %v2575 = vpack.c.b16 %v1567, %v1559
        %v2576 = vpack.c.b16 %v1576, %v1568
        %v2577 = vpack.c.b16 %v1577, %v1569
        %v2578 = vpack.c.b16 %v1578, %v1570
        %v2579 = vpack.c.b16 %v1579, %v1571
        %v2580 = vpack.c.b16 %v1580, %v1572
        %v2581 = vpack.c.b16 %v1581, %v1573
        %v2582 = vpack.c.b16 %v1582, %v1574
        %v2583 = vpack.c.b16 %v1583, %v1575
        %v2584 = vpack.c.b16 %v1592, %v1584
        %v2585 = vpack.c.b16 %v1593, %v1585
        %v2586 = vpack.c.b16 %v1594, %v1586
        %v2587 = vpack.c.b16 %v1595, %v1587
        %v2588 = vpack.c.b16 %v1596, %v1588
        %v2589 = vpack.c.b16 %v1597, %v1589
        %v2590 = vpack.c.b16 %v1598, %v1590
        %v2591 = vpack.c.b16 %v1599, %v1591
        %v2592 = vpack.c.b16 %v1608, %v1600
        %v2593 = vpack.c.b16 %v1609, %v1601
        %v2594 = vpack.c.b16 %v1610, %v1602
        %v2595 = vpack.c.b16 %v1611, %v1603
        %v2596 = vpack.c.b16 %v1612, %v1604
        %v2597 = vpack.c.b16 %v1613, %v1605
        %v2598 = vpack.c.b16 %v1614, %v1606
        %v2599 = vpack.c.b16 %v1615, %v1607
        %v2600 = vpack.c.b16 %v1624, %v1616
        %v2601 = vpack.c.b16 %v1625, %v1617
        %v2602 = vpack.c.b16 %v1626, %v1618
        %v2603 = vpack.c.b16 %v1627, %v1619
        %v2604 = vpack.c.b16 %v1628, %v1620
        %v2605 = vpack.c.b16 %v1629, %v1621
        %v2606 = vpack.c.b16 %v1630, %v1622
        %v2607 = vpack.c.b16 %v1631, %v1623
        %v2608 = vpack.c.b16 %v1640, %v1632
        %v2609 = vpack.c.b16 %v1641, %v1633
        %v2610 = vpack.c.b16 %v1642, %v1634
        %v2611 = vpack.c.b16 %v1643, %v1635
        %v2612 = vpack.c.b16 %v1644, %v1636
        %v2613 = vpack.c.b16 %v1645, %v1637
        %v2614 = vpack.c.b16 %v1646, %v1638
        %v2615 = vpack.c.b16 %v1647, %v1639
        %v2616 = vpack.c.b16 %v1656, %v1648
        %v2617 = vpack.c.b16 %v1657, %v1649
        %v2618 = vpack.c.b16 %v1658, %v1650
        %v2619 = vpack.c.b16 %v1659, %v1651
        %v2620 = vpack.c.b16 %v1660, %v1652
        %v2621 = vpack.c.b16 %v1661, %v1653
        %v2622 = vpack.c.b16 %v1662, %v1654
        %v2623 = vpack.c.b16 %v1663, %v1655
        %v2624 = vpack.c.b16 %v1672, %v1664
        %v2625 = vpack.c.b16 %v1673, %v1665
        %v2626 = vpack.c.b16 %v1674, %v1666
        %v2627 = vpack.c.b16 %v1675, %v1667
        %v2628 = vpack.c.b16 %v1676, %v1668
        %v2629 = vpack.c.b16 %v1677, %v1669
        %v2630 = vpack.c.b16 %v1678, %v1670
        %v2631 = vpack.c.b16 %v1679, %v1671
        %v2632 = vpack.c.b16 %v1688, %v1680
        %v2633 = vpack.c.b16 %v1689, %v1681
        %v2634 = vpack.c.b16 %v1690, %v1682
        %v2635 = vpack.c.b16 %v1691, %v1683
        %v2636 = vpack.c.b16 %v1692, %v1684
        %v2637 = vpack.c.b16 %v1693, %v1685
        %v2638 = vpack.c.b16 %v1694, %v1686
        %v2639 = vpack.c.b16 %v1695, %v1687
        %v2640 = vpack.c.b16 %v1704, %v1696
        %v2641 = vpack.c.b16 %v1705, %v1697
        %v2642 = vpack.c.b16 %v1706, %v1698
        %v2643 = vpack.c.b16 %v1707, %v1699
        %v2644 = vpack.c.b16 %v1708, %v1700
        %v2645 = vpack.c.b16 %v1709, %v1701
        %v2646 = vpack.c.b16 %v1710, %v1702
        %v2647 = vpack.c.b16 %v1711, %v1703
        %v2648 = vpack.c.b16 %v1720, %v1712
        %v2649 = vpack.c.b16 %v1721, %v1713
        %v2650 = vpack.c.b16 %v1722, %v1714
        %v2651 = vpack.c.b16 %v1723, %v1715
        %v2652 = vpack.c.b16 %v1724, %v1716
        %v2653 = vpack.c.b16 %v1725, %v1717
        %v2654 = vpack.c.b16 %v1726, %v1718
        %v2655 = vpack.c.b16 %v1727, %v1719
        %v2656 = vpack.c.b16 %v1736, %v1728
        %v2657 = vpack.c.b16 %v1737, %v1729
        %v2658 = vpack.c.b16 %v1738, %v1730
        %v2659 = vpack.c.b16 %v1739, %v1731
        %v2660 = vpack.c.b16 %v1740, %v1732
        %v2661 = vpack.c.b16 %v1741, %v1733
        %v2662 = vpack.c.b16 %v1742, %v1734
        %v2663 = vpack.c.b16 %v1743, %v1735
        %v2664 = vpack.c.b16 %v1752, %v1744
        %v2665 = vpack.c.b16 %v1753, %v1745
        %v2666 = vpack.c.b16 %v1754, %v1746
        %v2667 = vpack.c.b16 %v1755, %v1747
        %v2668 = vpack.c.b16 %v1756, %v1748
        %v2669 = vpack.c.b16 %v1757, %v1749
        %v2670 = vpack.c.b16 %v1758, %v1750
        %v2671 = vpack.c.b16 %v1759, %v1751
        %v2672 = vpack.c.b16 %v1768, %v1760
        %v2673 = vpack.c.b16 %v1769, %v1761
        %v2674 = vpack.c.b16 %v1770, %v1762
        %v2675 = vpack.c.b16 %v1771, %v1763
        %v2676 = vpack.c.b16 %v1772, %v1764
        %v2677 = vpack.c.b16 %v1773, %v1765
        %v2678 = vpack.c.b16 %v1774, %v1766
        %v2679 = vpack.c.b16 %v1775, %v1767
        %v2680 = vpack.c.b16 %v1784, %v1776
        %v2681 = vpack.c.b16 %v1785, %v1777
        %v2682 = vpack.c.b16 %v1786, %v1778
        %v2683 = vpack.c.b16 %v1787, %v1779
        %v2684 = vpack.c.b16 %v1788, %v1780
        %v2685 = vpack.c.b16 %v1789, %v1781
        %v2686 = vpack.c.b16 %v1790, %v1782
        %v2687 = vpack.c.b16 %v1791, %v1783
        %v2688 = vpack.c.b16 %v1800, %v1792
        %v2689 = vpack.c.b16 %v1801, %v1793
        %v2690 = vpack.c.b16 %v1802, %v1794
        %v2691 = vpack.c.b16 %v1803, %v1795
        %v2692 = vpack.c.b16 %v1804, %v1796
        %v2693 = vpack.c.b16 %v1805, %v1797
        %v2694 = vpack.c.b16 %v1806, %v1798
        %v2695 = vpack.c.b16 %v1807, %v1799
        %v2696 = vpack.c.b16 %v1816, %v1808
        %v2697 = vpack.c.b16 %v1817, %v1809
        %v2698 = vpack.c.b16 %v1818, %v1810
        %v2699 = vpack.c.b16 %v1819, %v1811
        %v2700 = vpack.c.b16 %v1820, %v1812
        %v2701 = vpack.c.b16 %v1821, %v1813
        %v2702 = vpack.c.b16 %v1822, %v1814
        %v2703 = vpack.c.b16 %v1823, %v1815
        %v2704 = vpack.c.b16 %v1832, %v1824
        %v2705 = vpack.c.b16 %v1833, %v1825
        %v2706 = vpack.c.b16 %v1834, %v1826
        %v2707 = vpack.c.b16 %v1835, %v1827
        %v2708 = vpack.c.b16 %v1836, %v1828
        %v2709 = vpack.c.b16 %v1837, %v1829
        %v2710 = vpack.c.b16 %v1838, %v1830
        %v2711 = vpack.c.b16 %v1839, %v1831
        %v2712 = vpack.c.b16 %v1848, %v1840
        %v2713 = vpack.c.b16 %v1849, %v1841
        %v2714 = vpack.c.b16 %v1850, %v1842
        %v2715 = vpack.c.b16 %v1851, %v1843
        %v2716 = vpack.c.b16 %v1852, %v1844
        %v2717 = vpack.c.b16 %v1853, %v1845
        %v2718 = vpack.c.b16 %v1854, %v1846
        %v2719 = vpack.c.b16 %v1855, %v1847
        %v2720 = vpack.c.b16 %v1864, %v1856
        %v2721 = vpack.c.b16 %v1865, %v1857
        %v2722 = vpack.c.b16 %v1866, %v1858
        %v2723 = vpack.c.b16 %v1867, %v1859
        %v2724 = vpack.c.b16 %v1868, %v1860
        %v2725 = vpack.c.b16 %v1869, %v1861
        %v2726 = vpack.c.b16 %v1870, %v1862
        %v2727 = vpack.c.b16 %v1871, %v1863
        %v2728 = vpack.c.b16 %v1880, %v1872
        %v2729 = vpack.c.b16 %v1881, %v1873
        %v2730 = vpack.c.b16 %v1882, %v1874
        %v2731 = vpack.c.b16 %v1883, %v1875
        %v2732 = vpack.c.b16 %v1884, %v1876
        %v2733 = vpack.c.b16 %v1885, %v1877
        %v2734 = vpack.c.b16 %v1886, %v1878
        %v2735 = vpack.c.b16 %v1887, %v1879
        %v2736 = vpack.c.b16 %v1896, %v1888
        %v2737 = vpack.c.b16 %v1897, %v1889
        %v2738 = vpack.c.b16 %v1898, %v1890
        %v2739 = vpack.c.b16 %v1899, %v1891
        %v2740 = vpack.c.b16 %v1900, %v1892
        %v2741 = vpack.c.b16 %v1901, %v1893
        %v2742 = vpack.c.b16 %v1902, %v1894
        %v2743 = vpack.c.b16 %v1903, %v1895
        %v2744 = vpack.c.b16 %v1912, %v1904
        %v2745 = vpack.c.b16 %v1913, %v1905
        %v2746 = vpack.c.b16 %v1914, %v1906
        %v2747 = vpack.c.b16 %v1915, %v1907
        %v2748 = vpack.c.b16 %v1916, %v1908
        %v2749 = vpack.c.b16 %v1917, %v1909
        %v2750 = vpack.c.b16 %v1918, %v1910
        %v2751 = vpack.c.b16 %v1919, %v1911
        %v2752 = vpack.c.b16 %v1928, %v1920
        %v2753 = vpack.c.b16 %v1929, %v1921
        %v2754 = vpack.c.b16 %v1930, %v1922
        %v2755 = vpack.c.b16 %v1931, %v1923
        %v2756 = vpack.c.b16 %v1932, %v1924
        %v2757 = vpack.c.b16 %v1933, %v1925
        %v2758 = vpack.c.b16 %v1934, %v1926
        %v2759 = vpack.c.b16 %v1935, %v1927
        %v2760 = vpack.c.b16 %v1944, %v1936
        %v2761 = vpack.c.b16 %v1945, %v1937
        %v2762 = vpack.c.b16 %v1946, %v1938
        %v2763 = vpack.c.b16 %v1947, %v1939
        %v2764 = vpack.c.b16 %v1948, %v1940
        %v2765 = vpack.c.b16 %v1949, %v1941
        %v2766 = vpack.c.b16 %v1950, %v1942
        %v2767 = vpack.c.b16 %v1951, %v1943
        %v2768 = vpack.c.b16 %v1960, %v1952
        %v2769 = vpack.c.b16 %v1961, %v1953
        %v2770 = vpack.c.b16 %v1962, %v1954
        %v2771 = vpack.c.b16 %v1963, %v1955
        %v2772 = vpack.c.b16 %v1964, %v1956
        %v2773 = vpack.c.b16 %v1965, %v1957
        %v2774 = vpack.c.b16 %v1966, %v1958
        %v2775 = vpack.c.b16 %v1967, %v1959
        %v2776 = vpack.c.b16 %v1976, %v1968
        %v2777 = vpack.c.b16 %v1977, %v1969
        %v2778 = vpack.c.b16 %v1978, %v1970
        %v2779 = vpack.c.b16 %v1979, %v1971
        %v2780 = vpack.c.b16 %v1980, %v1972
        %v2781 = vpack.c.b16 %v1981, %v1973
        %v2782 = vpack.c.b16 %v1982, %v1974
        %v2783 = vpack.c.b16 %v1983, %v1975
        %v2784 = vpack.c.b16 %v1992, %v1984
        %v2785 = vpack.c.b16 %v1993, %v1985
        %v2786 = vpack.c.b16 %v1994, %v1986
        %v2787 = vpack.c.b16 %v1995, %v1987
        %v2788 = vpack.c.b16 %v1996, %v1988
        %v2789 = vpack.c.b16 %v1997, %v1989
        %v2790 = vpack.c.b16 %v1998, %v1990
        %v2791 = vpack.c.b16 %v1999, %v1991
        %v2792 = vpack.c.b16 %v2008, %v2000
        %v2793 = vpack.c.b16 %v2009, %v2001
        %v2794 = vpack.c.b16 %v2010, %v2002
        %v2795 = vpack.c.b16 %v2011, %v2003
        %v2796 = vpack.c.b16 %v2012, %v2004
        %v2797 = vpack.c.b16 %v2013, %v2005
        %v2798 = vpack.c.b16 %v2014, %v2006
        %v2799 = vpack.c.b16 %v2015, %v2007
        %v2800 = vpack.c.b16 %v2024, %v2016
        %v2801 = vpack.c.b16 %v2025, %v2017
        %v2802 = vpack.c.b16 %v2026, %v2018
        %v2803 = vpack.c.b16 %v2027, %v2019
        %v2804 = vpack.c.b16 %v2028, %v2020
        %v2805 = vpack.c.b16 %v2029, %v2021
        %v2806 = vpack.c.b16 %v2030, %v2022
        %v2807 = vpack.c.b16 %v2031, %v2023
        %v2808 = vpack.c.b16 %v2040, %v2032
        %v2809 = vpack.c.b16 %v2041, %v2033
        %v2810 = vpack.c.b16 %v2042, %v2034
        %v2811 = vpack.c.b16 %v2043, %v2035
        %v2812 = vpack.c.b16 %v2044, %v2036
        %v2813 = vpack.c.b16 %v2045, %v2037
        %v2814 = vpack.c.b16 %v2046, %v2038
        %v2815 = vpack.c.b16 %v2047, %v2039
        %v2816 = vpack.c.b16 %v2056, %v2048
        %v2817 = vpack.c.b16 %v2057, %v2049
        %v2818 = vpack.c.b16 %v2058, %v2050
        %v2819 = vpack.c.b16 %v2059, %v2051
        %v2820 = vpack.c.b16 %v2060, %v2052
        %v2821 = vpack.c.b16 %v2061, %v2053
        %v2822 = vpack.c.b16 %v2062, %v2054
        %v2823 = vpack.c.b16 %v2063, %v2055
        %v2824 = vpack.c.b16 %v2072, %v2064
        %v2825 = vpack.c.b16 %v2073, %v2065
        %v2826 = vpack.c.b16 %v2074, %v2066
        %v2827 = vpack.c.b16 %v2075, %v2067
        %v2828 = vpack.c.b16 %v2076, %v2068
        %v2829 = vpack.c.b16 %v2077, %v2069
        %v2830 = vpack.c.b16 %v2078, %v2070
        %v2831 = vpack.c.b16 %v2079, %v2071
        %v2832 = vpack.c.b16 %v2088, %v2080
        %v2833 = vpack.c.b16 %v2089, %v2081
        %v2834 = vpack.c.b16 %v2090, %v2082
        %v2835 = vpack.c.b16 %v2091, %v2083
        %v2836 = vpack.c.b16 %v2092, %v2084
        %v2837 = vpack.c.b16 %v2093, %v2085
        %v2838 = vpack.c.b16 %v2094, %v2086
        %v2839 = vpack.c.b16 %v2095, %v2087
        %v2840 = vpack.c.b16 %v2104, %v2096
        %v2841 = vpack.c.b16 %v2105, %v2097
        %v2842 = vpack.c.b16 %v2106, %v2098
        %v2843 = vpack.c.b16 %v2107, %v2099
        %v2844 = vpack.c.b16 %v2108, %v2100
        %v2845 = vpack.c.b16 %v2109, %v2101
        %v2846 = vpack.c.b16 %v2110, %v2102
        %v2847 = vpack.c.b16 %v2111, %v2103
        %v2848 = vpack.c.b16 %v2120, %v2112
        %v2849 = vpack.c.b16 %v2121, %v2113
        %v2850 = vpack.c.b16 %v2122, %v2114
        %v2851 = vpack.c.b16 %v2123, %v2115
        %v2852 = vpack.c.b16 %v2124, %v2116
        %v2853 = vpack.c.b16 %v2125, %v2117
        %v2854 = vpack.c.b16 %v2126, %v2118
        %v2855 = vpack.c.b16 %v2127, %v2119
        %v2856 = vpack.c.b16 %v2136, %v2128
        %v2857 = vpack.c.b16 %v2137, %v2129
        %v2858 = vpack.c.b16 %v2138, %v2130
        %v2859 = vpack.c.b16 %v2139, %v2131
        %v2860 = vpack.c.b16 %v2140, %v2132
        %v2861 = vpack.c.b16 %v2141, %v2133
        %v2862 = vpack.c.b16 %v2142, %v2134
        %v2863 = vpack.c.b16 %v2143, %v2135
        %v2864 = vpack.c.b16 %v2152, %v2144
        %v2865 = vpack.c.b16 %v2153, %v2145
        %v2866 = vpack.c.b16 %v2154, %v2146
        %v2867 = vpack.c.b16 %v2155, %v2147
        %v2868 = vpack.c.b16 %v2156, %v2148
        %v2869 = vpack.c.b16 %v2157, %v2149
        %v2870 = vpack.c.b16 %v2158, %v2150
        %v2871 = vpack.c.b16 %v2159, %v2151
        %v2872 = vpack.c.b16 %v2168, %v2160
        %v2873 = vpack.c.b16 %v2169, %v2161
        %v2874 = vpack.c.b16 %v2170, %v2162
        %v2875 = vpack.c.b16 %v2171, %v2163
        %v2876 = vpack.c.b16 %v2172, %v2164
        %v2877 = vpack.c.b16 %v2173, %v2165
        %v2878 = vpack.c.b16 %v2174, %v2166
        %v2879 = vpack.c.b16 %v2175, %v2167
        %v2880 = vpack.c.b16 %v2184, %v2176
        %v2881 = vpack.c.b16 %v2185, %v2177
        %v2882 = vpack.c.b16 %v2186, %v2178
        %v2883 = vpack.c.b16 %v2187, %v2179
        %v2884 = vpack.c.b16 %v2188, %v2180
        %v2885 = vpack.c.b16 %v2189, %v2181
        %v2886 = vpack.c.b16 %v2190, %v2182
        %v2887 = vpack.c.b16 %v2191, %v2183
        %v2888 = vpack.c.b16 %v2200, %v2192
        %v2889 = vpack.c.b16 %v2201, %v2193
        %v2890 = vpack.c.b16 %v2202, %v2194
        %v2891 = vpack.c.b16 %v2203, %v2195
        %v2892 = vpack.c.b16 %v2204, %v2196
        %v2893 = vpack.c.b16 %v2205, %v2197
        %v2894 = vpack.c.b16 %v2206, %v2198
        %v2895 = vpack.c.b16 %v2207, %v2199
        %v2896 = vpack.c.b16 %v2216, %v2208
        %v2897 = vpack.c.b16 %v2217, %v2209
        %v2898 = vpack.c.b16 %v2218, %v2210
        %v2899 = vpack.c.b16 %v2219, %v2211
        %v2900 = vpack.c.b16 %v2220, %v2212
        %v2901 = vpack.c.b16 %v2221, %v2213
        %v2902 = vpack.c.b16 %v2222, %v2214
        %v2903 = vpack.c.b16 %v2223, %v2215
        %v2904 = vpack.c.b16 %v2232, %v2224
        %v2905 = vpack.c.b16 %v2233, %v2225
        %v2906 = vpack.c.b16 %v2234, %v2226
        %v2907 = vpack.c.b16 %v2235, %v2227
        %v2908 = vpack.c.b16 %v2236, %v2228
        %v2909 = vpack.c.b16 %v2237, %v2229
        %v2910 = vpack.c.b16 %v2238, %v2230
        %v2911 = vpack.c.b16 %v2239, %v2231
        %v2912 = vpack.c.b16 %v2248, %v2240
        %v2913 = vpack.c.b16 %v2249, %v2241
        %v2914 = vpack.c.b16 %v2250, %v2242
        %v2915 = vpack.c.b16 %v2251, %v2243
        %v2916 = vpack.c.b16 %v2252, %v2244
        %v2917 = vpack.c.b16 %v2253, %v2245
        %v2918 = vpack.c.b16 %v2254, %v2246
        %v2919 = vpack.c.b16 %v2255, %v2247
        %v2920 = vpack.c.b16 %v2264, %v2256
        %v2921 = vpack.c.b16 %v2265, %v2257
        %v2922 = vpack.c.b16 %v2266, %v2258
        %v2923 = vpack.c.b16 %v2267, %v2259
        %v2924 = vpack.c.b16 %v2268, %v2260
        %v2925 = vpack.c.b16 %v2269, %v2261
        %v2926 = vpack.c.b16 %v2270, %v2262
        %v2927 = vpack.c.b16 %v2271, %v2263
        %v2928 = vpack.c.b16 %v2280, %v2272
        %v2929 = vpack.c.b16 %v2281, %v2273
        %v2930 = vpack.c.b16 %v2282, %v2274
        %v2931 = vpack.c.b16 %v2283, %v2275
        %v2932 = vpack.c.b16 %v2284, %v2276
        %v2933 = vpack.c.b16 %v2285, %v2277
        %v2934 = vpack.c.b16 %v2286, %v2278
        %v2935 = vpack.c.b16 %v2287, %v2279
        %v2936 = vpack.c.b16 %v2296, %v2288
        %v2937 = vpack.c.b16 %v2297, %v2289
        %v2938 = vpack.c.b16 %v2298, %v2290
        %v2939 = vpack.c.b16 %v2299, %v2291
        %v2940 = vpack.c.b16 %v2300, %v2292
        %v2941 = vpack.c.b16 %v2301, %v2293
        %v2942 = vpack.c.b16 %v2302, %v2294
        %v2943 = vpack.c.b16 %v2303, %v2295
        %v2944 = vpack.c.b16 %v2312, %v2304
        %v2945 = vpack.c.b16 %v2313, %v2305
        %v2946 = vpack.c.b16 %v2314, %v2306
        %v2947 = vpack.c.b16 %v2315, %v2307
        %v2948 = vpack.c.b16 %v2316, %v2308
        %v2949 = vpack.c.b16 %v2317, %v2309
        %v2950 = vpack.c.b16 %v2318, %v2310
        %v2951 = vpack.c.b16 %v2319, %v2311
        %v2952 = vpack.c.b16 %v2328, %v2320
        %v2953 = vpack.c.b16 %v2329, %v2321
        %v2954 = vpack.c.b16 %v2330, %v2322
        %v2955 = vpack.c.b16 %v2331, %v2323
        %v2956 = vpack.c.b16 %v2332, %v2324
        %v2957 = vpack.c.b16 %v2333, %v2325
        %v2958 = vpack.c.b16 %v2334, %v2326
        %v2959 = vpack.c.b16 %v2335, %v2327
        %v2960 = vpack.c.b16 %v2344, %v2336
        %v2961 = vpack.c.b16 %v2345, %v2337
        %v2962 = vpack.c.b16 %v2346, %v2338
        %v2963 = vpack.c.b16 %v2347, %v2339
        %v2964 = vpack.c.b16 %v2348, %v2340
        %v2965 = vpack.c.b16 %v2349, %v2341
        %v2966 = vpack.c.b16 %v2350, %v2342
        %v2967 = vpack.c.b16 %v2351, %v2343
        %v2968 = vpack.c.b16 %v2360, %v2352
        %v2969 = vpack.c.b16 %v2361, %v2353
        %v2970 = vpack.c.b16 %v2362, %v2354
        %v2971 = vpack.c.b16 %v2363, %v2355
        %v2972 = vpack.c.b16 %v2364, %v2356
        %v2973 = vpack.c.b16 %v2365, %v2357
        %v2974 = vpack.c.b16 %v2366, %v2358
        %v2975 = vpack.c.b16 %v2367, %v2359
        %v2976 = vpack.c.b16 %v2376, %v2368
        %v2977 = vpack.c.b16 %v2377, %v2369
        %v2978 = vpack.c.b16 %v2378, %v2370
        %v2979 = vpack.c.b16 %v2379, %v2371
        %v2980 = vpack.c.b16 %v2380, %v2372
        %v2981 = vpack.c.b16 %v2381, %v2373
        %v2982 = vpack.c.b16 %v2382, %v2374
        %v2983 = vpack.c.b16 %v2383, %v2375
        %v2984 = vpack.c.b16 %v2392, %v2384
        %v2985 = vpack.c.b16 %v2393, %v2385
        %v2986 = vpack.c.b16 %v2394, %v2386
        %v2987 = vpack.c.b16 %v2395, %v2387
        %v2988 = vpack.c.b16 %v2396, %v2388
        %v2989 = vpack.c.b16 %v2397, %v2389
        %v2990 = vpack.c.b16 %v2398, %v2390
        %v2991 = vpack.c.b16 %v2399, %v2391
        %v2992 = vpack.c.b16 %v2408, %v2400
        %v2993 = vpack.c.b16 %v2409, %v2401
        %v2994 = vpack.c.b16 %v2410, %v2402
        %v2995 = vpack.c.b16 %v2411, %v2403
        %v2996 = vpack.c.b16 %v2412, %v2404
        %v2997 = vpack.c.b16 %v2413, %v2405
        %v2998 = vpack.c.b16 %v2414, %v2406
        %v2999 = vpack.c.b16 %v2415, %v2407
        %v3000 = vpack.c.b16 %v2424, %v2416
        %v3001 = vpack.c.b16 %v2425, %v2417
        %v3002 = vpack.c.b16 %v2426, %v2418
        %v3003 = vpack.c.b16 %v2427, %v2419
        %v3004 = vpack.c.b16 %v2428, %v2420
        %v3005 = vpack.c.b16 %v2429, %v2421
        %v3006 = vpack.c.b16 %v2430, %v2422
        %v3007 = vpack.c.b16 %v2431, %v2423
        %v3008 = vpack.c.b16 %v2440, %v2432
        %v3009 = vpack.c.b16 %v2441, %v2433
        %v3010 = vpack.c.b16 %v2442, %v2434
        %v3011 = vpack.c.b16 %v2443, %v2435
        %v3012 = vpack.c.b16 %v2444, %v2436
        %v3013 = vpack.c.b16 %v2445, %v2437
        %v3014 = vpack.c.b16 %v2446, %v2438
        %v3015 = vpack.c.b16 %v2447, %v2439
        %v3016 = vpack.c.b16 %v2456, %v2448
        %v3017 = vpack.c.b16 %v2457, %v2449
        %v3018 = vpack.c.b16 %v2458, %v2450
        %v3019 = vpack.c.b16 %v2459, %v2451
        %v3020 = vpack.c.b16 %v2460, %v2452
        %v3021 = vpack.c.b16 %v2461, %v2453
        %v3022 = vpack.c.b16 %v2462, %v2454
        %v3023 = vpack.c.b16 %v2463, %v2455
        %v3024 = vpack.c.b16 %v2472, %v2464
        %v3025 = vpack.c.b16 %v2473, %v2465
        %v3026 = vpack.c.b16 %v2474, %v2466
        %v3027 = vpack.c.b16 %v2475, %v2467
        %v3028 = vpack.c.b16 %v2476, %v2468
        %v3029 = vpack.c.b16 %v2477, %v2469
        %v3030 = vpack.c.b16 %v2478, %v2470
        %v3031 = vpack.c.b16 %v2479, %v2471
        %v3032 = vpack.c.b16 %v2488, %v2480
        %v3033 = vpack.c.b16 %v2489, %v2481
        %v3034 = vpack.c.b16 %v2490, %v2482
        %v3035 = vpack.c.b16 %v2491, %v2483
        %v3036 = vpack.c.b16 %v2492, %v2484
        %v3037 = vpack.c.b16 %v2493, %v2485
        %v3038 = vpack.c.b16 %v2494, %v2486
        %v3039 = vpack.c.b16 %v2495, %v2487
        %v3040 = vpack.c.b16 %v2504, %v2496
        %v3041 = vpack.c.b16 %v2505, %v2497
        %v3042 = vpack.c.b16 %v2506, %v2498
        %v3043 = vpack.c.b16 %v2507, %v2499
        %v3044 = vpack.c.b16 %v2508, %v2500
        %v3045 = vpack.c.b16 %v2509, %v2501
        %v3046 = vpack.c.b16 %v2510, %v2502
        %v3047 = vpack.c.b16 %v2511, %v2503
        %v3048 = vpack.c.b16 %v2520, %v2512
        %v3049 = vpack.c.b16 %v2521, %v2513
        %v3050 = vpack.c.b16 %v2522, %v2514
        %v3051 = vpack.c.b16 %v2523, %v2515
        %v3052 = vpack.c.b16 %v2524, %v2516
        %v3053 = vpack.c.b16 %v2525, %v2517
        %v3054 = vpack.c.b16 %v2526, %v2518
        %v3055 = vpack.c.b16 %v2527, %v2519
        %v3056 = vpack.c.b16 %v2536, %v2528
        %v3057 = vpack.c.b16 %v2537, %v2529
        %v3058 = vpack.c.b16 %v2538, %v2530
        %v3059 = vpack.c.b16 %v2539, %v2531
        %v3060 = vpack.c.b16 %v2540, %v2532
        %v3061 = vpack.c.b16 %v2541, %v2533
        %v3062 = vpack.c.b16 %v2542, %v2534
        %v3063 = vpack.c.b16 %v2543, %v2535
        %v3064 = vpack.c.b16 %v2552, %v2544
        %v3065 = vpack.c.b16 %v2553, %v2545
        %v3066 = vpack.c.b16 %v2554, %v2546
        %v3067 = vpack.c.b16 %v2555, %v2547
        %v3068 = vpack.c.b16 %v2556, %v2548
        %v3069 = vpack.c.b16 %v2557, %v2549
        %v3070 = vpack.c.b16 %v2558, %v2550
        %v3071 = vpack.c.b16 %v2559, %v2551
        %3584 = vmatpush.bf16.msra.mxu0 %v2616
        %3585 = vmatpush.bf16.msra.mxu0 %v2608
        %3586 = vmatpush.bf16.msra.mxu0 %v2600
        %3587 = vmatpush.bf16.msra.mxu0 %v2592
        %3588 = vmatpush.bf16.msra.mxu0 %v2584
        %3589 = vmatpush.bf16.msra.mxu0 %v2576
        %3590 = vmatpush.bf16.msra.mxu0 %v2568
        %3591 = vmatpush.bf16.msra.mxu0 %v2560
        %3592 = vmatmul.bf16.gmra.mxu0 %v992
        %v3593 = vpop.f32.mrf.mxu0
        %v3594 = vadd.f32 0.0, %v3593
        %v3595 = vpop.f32.mrf.mxu0
        %v3596 = vadd.f32 0.0, %v3595
        %3597 = vmatmul.bf16.gmra.mxu0 %v1000
        %v3598 = vpop.f32.mrf.mxu0
        %v3599 = vadd.f32 0.0, %v3598
        %v3600 = vpop.f32.mrf.mxu0
        %v3601 = vadd.f32 0.0, %v3600
        %3602 = vdwg.mxu0
        %3603 = vmatpush.bf16.msra.mxu0 %v2680
        %3604 = vmatpush.bf16.msra.mxu0 %v2672
        %3605 = vmatpush.bf16.msra.mxu0 %v2664
        %3606 = vmatpush.bf16.msra.mxu0 %v2656
        %3607 = vmatpush.bf16.msra.mxu0 %v2648
        %3608 = vmatpush.bf16.msra.mxu0 %v2640
        %3609 = vmatpush.bf16.msra.mxu0 %v2632
        %3610 = vmatpush.bf16.msra.mxu0 %v2624
        %3611 = vmatmul.bf16.gmra.mxu0 %v993
        %v3612 = vpop.f32.mrf.mxu0
        %v3613 = vadd.f32 %v3594, %v3612
        %v3614 = vpop.f32.mrf.mxu0
        %v3615 = vadd.f32 %v3596, %v3614
        %3616 = vmatmul.bf16.gmra.mxu0 %v1001
        %v3617 = vpop.f32.mrf.mxu0
        %v3618 = vadd.f32 %v3599, %v3617
        %v3619 = vpop.f32.mrf.mxu0
        %v3620 = vadd.f32 %v3601, %v3619
        %3621 = vdwg.mxu0
        %3622 = vmatpush.bf16.msra.mxu0 %v2744
        %3623 = vmatpush.bf16.msra.mxu0 %v2736
        %3624 = vmatpush.bf16.msra.mxu0 %v2728
        %3625 = vmatpush.bf16.msra.mxu0 %v2720
        %3626 = vmatpush.bf16.msra.mxu0 %v2712
        %3627 = vmatpush.bf16.msra.mxu0 %v2704
        %3628 = vmatpush.bf16.msra.mxu0 %v2696
        %3629 = vmatpush.bf16.msra.mxu0 %v2688
        %3630 = vmatmul.bf16.gmra.mxu0 %v994
        %v3631 = vpop.f32.mrf.mxu0
        %v3632 = vadd.f32 %v3613, %v3631
        %v3633 = vpop.f32.mrf.mxu0
        %v3634 = vadd.f32 %v3615, %v3633
        %3635 = vmatmul.bf16.gmra.mxu0 %v1002
        %v3636 = vpop.f32.mrf.mxu0
        %v3637 = vadd.f32 %v3618, %v3636
        %v3638 = vpop.f32.mrf.mxu0
        %v3639 = vadd.f32 %v3620, %v3638
        %3640 = vdwg.mxu0
        %3641 = vmatpush.bf16.msra.mxu0 %v2808
        %3642 = vmatpush.bf16.msra.mxu0 %v2800
        %3643 = vmatpush.bf16.msra.mxu0 %v2792
        %3644 = vmatpush.bf16.msra.mxu0 %v2784
        %3645 = vmatpush.bf16.msra.mxu0 %v2776
        %3646 = vmatpush.bf16.msra.mxu0 %v2768
        %3647 = vmatpush.bf16.msra.mxu0 %v2760
        %3648 = vmatpush.bf16.msra.mxu0 %v2752
        %3649 = vmatmul.bf16.gmra.mxu0 %v995
        %v3650 = vpop.f32.mrf.mxu0
        %v3651 = vadd.f32 %v3632, %v3650
        %v3652 = vpop.f32.mrf.mxu0
        %v3653 = vadd.f32 %v3634, %v3652
        %3654 = vmatmul.bf16.gmra.mxu0 %v1003
        %v3655 = vpop.f32.mrf.mxu0
        %v3656 = vadd.f32 %v3637, %v3655
        %v3657 = vpop.f32.mrf.mxu0
        %v3658 = vadd.f32 %v3639, %v3657
        %3659 = vdwg.mxu0
        %3660 = vmatpush.bf16.msra.mxu0 %v2872
        %3661 = vmatpush.bf16.msra.mxu0 %v2864
        %3662 = vmatpush.bf16.msra.mxu0 %v2856
        %3663 = vmatpush.bf16.msra.mxu0 %v2848
        %3664 = vmatpush.bf16.msra.mxu0 %v2840
        %3665 = vmatpush.bf16.msra.mxu0 %v2832
        %3666 = vmatpush.bf16.msra.mxu0 %v2824
        %3667 = vmatpush.bf16.msra.mxu0 %v2816
        %3668 = vmatmul.bf16.gmra.mxu0 %v996
        %v3669 = vpop.f32.mrf.mxu0
        %v3670 = vadd.f32 %v3651, %v3669
        %v3671 = vpop.f32.mrf.mxu0
        %v3672 = vadd.f32 %v3653, %v3671
        %3673 = vmatmul.bf16.gmra.mxu0 %v1004
        %v3674 = vpop.f32.mrf.mxu0
        %v3675 = vadd.f32 %v3656, %v3674
        %v3676 = vpop.f32.mrf.mxu0
        %v3677 = vadd.f32 %v3658, %v3676
        %3678 = vdwg.mxu0
        %3679 = vmatpush.bf16.msra.mxu0 %v2936
        %3680 = vmatpush.bf16.msra.mxu0 %v2928
        %3681 = vmatpush.bf16.msra.mxu0 %v2920
        %3682 = vmatpush.bf16.msra.mxu0 %v2912
        %3683 = vmatpush.bf16.msra.mxu0 %v2904
        %3684 = vmatpush.bf16.msra.mxu0 %v2896
        %3685 = vmatpush.bf16.msra.mxu0 %v2888
        %3686 = vmatpush.bf16.msra.mxu0 %v2880
        %3687 = vmatmul.bf16.gmra.mxu0 %v997
        %v3688 = vpop.f32.mrf.mxu0
        %v3689 = vadd.f32 %v3670, %v3688
        %v3690 = vpop.f32.mrf.mxu0
        %v3691 = vadd.f32 %v3672, %v3690
        %3692 = vmatmul.bf16.gmra.mxu0 %v1005
        %v3693 = vpop.f32.mrf.mxu0
        %v3694 = vadd.f32 %v3675, %v3693
        %v3695 = vpop.f32.mrf.mxu0
        %v3696 = vadd.f32 %v3677, %v3695
        %3697 = vdwg.mxu0
        %3698 = vmatpush.bf16.msra.mxu0 %v3000
        %3699 = vmatpush.bf16.msra.mxu0 %v2992
        %3700 = vmatpush.bf16.msra.mxu0 %v2984
        %3701 = vmatpush.bf16.msra.mxu0 %v2976
        %3702 = vmatpush.bf16.msra.mxu0 %v2968
        %3703 = vmatpush.bf16.msra.mxu0 %v2960
        %3704 = vmatpush.bf16.msra.mxu0 %v2952
        %3705 = vmatpush.bf16.msra.mxu0 %v2944
        %3706 = vmatmul.bf16.gmra.mxu0 %v998
        %v3707 = vpop.f32.mrf.mxu0
        %v3708 = vadd.f32 %v3689, %v3707
        %v3709 = vpop.f32.mrf.mxu0
        %v3710 = vadd.f32 %v3691, %v3709
        %3711 = vmatmul.bf16.gmra.mxu0 %v1006
        %v3712 = vpop.f32.mrf.mxu0
        %v3713 = vadd.f32 %v3694, %v3712
        %v3714 = vpop.f32.mrf.mxu0
        %v3715 = vadd.f32 %v3696, %v3714
        %3716 = vdwg.mxu0
        %3717 = vmatpush.bf16.msra.mxu0 %v3064
        %3718 = vmatpush.bf16.msra.mxu0 %v3056
        %3719 = vmatpush.bf16.msra.mxu0 %v3048
        %3720 = vmatpush.bf16.msra.mxu0 %v3040
        %3721 = vmatpush.bf16.msra.mxu0 %v3032
        %3722 = vmatpush.bf16.msra.mxu0 %v3024
        %3723 = vmatpush.bf16.msra.mxu0 %v3016
        %3724 = vmatpush.bf16.msra.mxu0 %v3008
        %3725 = vmatmul.bf16.gmra.mxu0 %v999
        %v3726 = vpop.f32.mrf.mxu0
        %v3727 = vadd.f32 %v3708, %v3726
        %v3728 = vpop.f32.mrf.mxu0
        %v3729 = vadd.f32 %v3710, %v3728
        %3730 = vmatmul.bf16.gmra.mxu0 %v1007
        %v3731 = vpop.f32.mrf.mxu0
        %v3732 = vadd.f32 %v3713, %v3731
        %v3733 = vpop.f32.mrf.mxu0
        %v3734 = vadd.f32 %v3715, %v3733
        %3735 = vdwg.mxu0
        %3736 = vmatpush.bf16.msra.mxu0 %v2617
        %3737 = vmatpush.bf16.msra.mxu0 %v2609
        %3738 = vmatpush.bf16.msra.mxu0 %v2601
        %3739 = vmatpush.bf16.msra.mxu0 %v2593
        %3740 = vmatpush.bf16.msra.mxu0 %v2585
        %3741 = vmatpush.bf16.msra.mxu0 %v2577
        %3742 = vmatpush.bf16.msra.mxu0 %v2569
        %3743 = vmatpush.bf16.msra.mxu0 %v2561
        %3744 = vmatmul.bf16.gmra.mxu0 %v992
        %v3745 = vpop.f32.mrf.mxu0
        %v3746 = vadd.f32 0.0, %v3745
        %v3747 = vpop.f32.mrf.mxu0
        %v3748 = vadd.f32 0.0, %v3747
        %3749 = vmatmul.bf16.gmra.mxu0 %v1000
        %v3750 = vpop.f32.mrf.mxu0
        %v3751 = vadd.f32 0.0, %v3750
        %v3752 = vpop.f32.mrf.mxu0
        %v3753 = vadd.f32 0.0, %v3752
        %3754 = vdwg.mxu0
        %3755 = vmatpush.bf16.msra.mxu0 %v2681
        %3756 = vmatpush.bf16.msra.mxu0 %v2673
        %3757 = vmatpush.bf16.msra.mxu0 %v2665
        %3758 = vmatpush.bf16.msra.mxu0 %v2657
        %3759 = vmatpush.bf16.msra.mxu0 %v2649
        %3760 = vmatpush.bf16.msra.mxu0 %v2641
        %3761 = vmatpush.bf16.msra.mxu0 %v2633
        %3762 = vmatpush.bf16.msra.mxu0 %v2625
        %3763 = vmatmul.bf16.gmra.mxu0 %v993
        %v3764 = vpop.f32.mrf.mxu0
        %v3765 = vadd.f32 %v3746, %v3764
        %v3766 = vpop.f32.mrf.mxu0
        %v3767 = vadd.f32 %v3748, %v3766
        %3768 = vmatmul.bf16.gmra.mxu0 %v1001
        %v3769 = vpop.f32.mrf.mxu0
        %v3770 = vadd.f32 %v3751, %v3769
        %v3771 = vpop.f32.mrf.mxu0
        %v3772 = vadd.f32 %v3753, %v3771
        %3773 = vdwg.mxu0
        %3774 = vmatpush.bf16.msra.mxu0 %v2745
        %3775 = vmatpush.bf16.msra.mxu0 %v2737
        %3776 = vmatpush.bf16.msra.mxu0 %v2729
        %3777 = vmatpush.bf16.msra.mxu0 %v2721
        %3778 = vmatpush.bf16.msra.mxu0 %v2713
        %3779 = vmatpush.bf16.msra.mxu0 %v2705
        %3780 = vmatpush.bf16.msra.mxu0 %v2697
        %3781 = vmatpush.bf16.msra.mxu0 %v2689
        %3782 = vmatmul.bf16.gmra.mxu0 %v994
        %v3783 = vpop.f32.mrf.mxu0
        %v3784 = vadd.f32 %v3765, %v3783
        %v3785 = vpop.f32.mrf.mxu0
        %v3786 = vadd.f32 %v3767, %v3785
        %3787 = vmatmul.bf16.gmra.mxu0 %v1002
        %v3788 = vpop.f32.mrf.mxu0
        %v3789 = vadd.f32 %v3770, %v3788
        %v3790 = vpop.f32.mrf.mxu0
        %v3791 = vadd.f32 %v3772, %v3790
        %3792 = vdwg.mxu0
        %3793 = vmatpush.bf16.msra.mxu0 %v2809
        %3794 = vmatpush.bf16.msra.mxu0 %v2801
        %3795 = vmatpush.bf16.msra.mxu0 %v2793
        %3796 = vmatpush.bf16.msra.mxu0 %v2785
        %3797 = vmatpush.bf16.msra.mxu0 %v2777
        %3798 = vmatpush.bf16.msra.mxu0 %v2769
        %3799 = vmatpush.bf16.msra.mxu0 %v2761
        %3800 = vmatpush.bf16.msra.mxu0 %v2753
        %3801 = vmatmul.bf16.gmra.mxu0 %v995
        %v3802 = vpop.f32.mrf.mxu0
        %v3803 = vadd.f32 %v3784, %v3802
        %v3804 = vpop.f32.mrf.mxu0
        %v3805 = vadd.f32 %v3786, %v3804
        %3806 = vmatmul.bf16.gmra.mxu0 %v1003
        %v3807 = vpop.f32.mrf.mxu0
        %v3808 = vadd.f32 %v3789, %v3807
        %v3809 = vpop.f32.mrf.mxu0
        %v3810 = vadd.f32 %v3791, %v3809
        %3811 = vdwg.mxu0
        %3812 = vmatpush.bf16.msra.mxu0 %v2873
        %3813 = vmatpush.bf16.msra.mxu0 %v2865
        %3814 = vmatpush.bf16.msra.mxu0 %v2857
        %3815 = vmatpush.bf16.msra.mxu0 %v2849
        %3816 = vmatpush.bf16.msra.mxu0 %v2841
        %3817 = vmatpush.bf16.msra.mxu0 %v2833
        %3818 = vmatpush.bf16.msra.mxu0 %v2825
        %3819 = vmatpush.bf16.msra.mxu0 %v2817
        %3820 = vmatmul.bf16.gmra.mxu0 %v996
        %v3821 = vpop.f32.mrf.mxu0
        %v3822 = vadd.f32 %v3803, %v3821
        %v3823 = vpop.f32.mrf.mxu0
        %v3824 = vadd.f32 %v3805, %v3823
        %3825 = vmatmul.bf16.gmra.mxu0 %v1004
        %v3826 = vpop.f32.mrf.mxu0
        %v3827 = vadd.f32 %v3808, %v3826
        %v3828 = vpop.f32.mrf.mxu0
        %v3829 = vadd.f32 %v3810, %v3828
        %3830 = vdwg.mxu0
        %3831 = vmatpush.bf16.msra.mxu0 %v2937
        %3832 = vmatpush.bf16.msra.mxu0 %v2929
        %3833 = vmatpush.bf16.msra.mxu0 %v2921
        %3834 = vmatpush.bf16.msra.mxu0 %v2913
        %3835 = vmatpush.bf16.msra.mxu0 %v2905
        %3836 = vmatpush.bf16.msra.mxu0 %v2897
        %3837 = vmatpush.bf16.msra.mxu0 %v2889
        %3838 = vmatpush.bf16.msra.mxu0 %v2881
        %3839 = vmatmul.bf16.gmra.mxu0 %v997
        %v3840 = vpop.f32.mrf.mxu0
        %v3841 = vadd.f32 %v3822, %v3840
        %v3842 = vpop.f32.mrf.mxu0
        %v3843 = vadd.f32 %v3824, %v3842
        %3844 = vmatmul.bf16.gmra.mxu0 %v1005
        %v3845 = vpop.f32.mrf.mxu0
        %v3846 = vadd.f32 %v3827, %v3845
        %v3847 = vpop.f32.mrf.mxu0
        %v3848 = vadd.f32 %v3829, %v3847
        %3849 = vdwg.mxu0
        %3850 = vmatpush.bf16.msra.mxu0 %v3001
        %3851 = vmatpush.bf16.msra.mxu0 %v2993
        %3852 = vmatpush.bf16.msra.mxu0 %v2985
        %3853 = vmatpush.bf16.msra.mxu0 %v2977
        %3854 = vmatpush.bf16.msra.mxu0 %v2969
        %3855 = vmatpush.bf16.msra.mxu0 %v2961
        %3856 = vmatpush.bf16.msra.mxu0 %v2953
        %3857 = vmatpush.bf16.msra.mxu0 %v2945
        %3858 = vmatmul.bf16.gmra.mxu0 %v998
        %v3859 = vpop.f32.mrf.mxu0
        %v3860 = vadd.f32 %v3841, %v3859
        %v3861 = vpop.f32.mrf.mxu0
        %v3862 = vadd.f32 %v3843, %v3861
        %3863 = vmatmul.bf16.gmra.mxu0 %v1006
        %v3864 = vpop.f32.mrf.mxu0
        %v3865 = vadd.f32 %v3846, %v3864
        %v3866 = vpop.f32.mrf.mxu0
        %v3867 = vadd.f32 %v3848, %v3866
        %3868 = vdwg.mxu0
        %3869 = vmatpush.bf16.msra.mxu0 %v3065
        %3870 = vmatpush.bf16.msra.mxu0 %v3057
        %3871 = vmatpush.bf16.msra.mxu0 %v3049
        %3872 = vmatpush.bf16.msra.mxu0 %v3041
        %3873 = vmatpush.bf16.msra.mxu0 %v3033
        %3874 = vmatpush.bf16.msra.mxu0 %v3025
        %3875 = vmatpush.bf16.msra.mxu0 %v3017
        %3876 = vmatpush.bf16.msra.mxu0 %v3009
        %3877 = vmatmul.bf16.gmra.mxu0 %v999
        %v3878 = vpop.f32.mrf.mxu0
        %v3879 = vadd.f32 %v3860, %v3878
        %v3880 = vpop.f32.mrf.mxu0
        %v3881 = vadd.f32 %v3862, %v3880
        %3882 = vmatmul.bf16.gmra.mxu0 %v1007
        %v3883 = vpop.f32.mrf.mxu0
        %v3884 = vadd.f32 %v3865, %v3883
        %v3885 = vpop.f32.mrf.mxu0
        %v3886 = vadd.f32 %v3867, %v3885
        %3887 = vdwg.mxu0
        %3888 = vmatpush.bf16.msra.mxu0 %v2618
        %3889 = vmatpush.bf16.msra.mxu0 %v2610
        %3890 = vmatpush.bf16.msra.mxu0 %v2602
        %3891 = vmatpush.bf16.msra.mxu0 %v2594
        %3892 = vmatpush.bf16.msra.mxu0 %v2586
        %3893 = vmatpush.bf16.msra.mxu0 %v2578
        %3894 = vmatpush.bf16.msra.mxu0 %v2570
        %3895 = vmatpush.bf16.msra.mxu0 %v2562
        %3896 = vmatmul.bf16.gmra.mxu0 %v992
        %v3897 = vpop.f32.mrf.mxu0
        %v3898 = vadd.f32 0.0, %v3897
        %v3899 = vpop.f32.mrf.mxu0
        %v3900 = vadd.f32 0.0, %v3899
        %3901 = vmatmul.bf16.gmra.mxu0 %v1000
        %v3902 = vpop.f32.mrf.mxu0
        %v3903 = vadd.f32 0.0, %v3902
        %v3904 = vpop.f32.mrf.mxu0
        %v3905 = vadd.f32 0.0, %v3904
        %3906 = vdwg.mxu0
        %3907 = vmatpush.bf16.msra.mxu0 %v2682
        %3908 = vmatpush.bf16.msra.mxu0 %v2674
        %3909 = vmatpush.bf16.msra.mxu0 %v2666
        %3910 = vmatpush.bf16.msra.mxu0 %v2658
        %3911 = vmatpush.bf16.msra.mxu0 %v2650
        %3912 = vmatpush.bf16.msra.mxu0 %v2642
        %3913 = vmatpush.bf16.msra.mxu0 %v2634
        %3914 = vmatpush.bf16.msra.mxu0 %v2626
        %3915 = vmatmul.bf16.gmra.mxu0 %v993
        %v3916 = vpop.f32.mrf.mxu0
        %v3917 = vadd.f32 %v3898, %v3916
        %v3918 = vpop.f32.mrf.mxu0
        %v3919 = vadd.f32 %v3900, %v3918
        %3920 = vmatmul.bf16.gmra.mxu0 %v1001
        %v3921 = vpop.f32.mrf.mxu0
        %v3922 = vadd.f32 %v3903, %v3921
        %v3923 = vpop.f32.mrf.mxu0
        %v3924 = vadd.f32 %v3905, %v3923
        %3925 = vdwg.mxu0
        %3926 = vmatpush.bf16.msra.mxu0 %v2746
        %3927 = vmatpush.bf16.msra.mxu0 %v2738
        %3928 = vmatpush.bf16.msra.mxu0 %v2730
        %3929 = vmatpush.bf16.msra.mxu0 %v2722
        %3930 = vmatpush.bf16.msra.mxu0 %v2714
        %3931 = vmatpush.bf16.msra.mxu0 %v2706
        %3932 = vmatpush.bf16.msra.mxu0 %v2698
        %3933 = vmatpush.bf16.msra.mxu0 %v2690
        %3934 = vmatmul.bf16.gmra.mxu0 %v994
        %v3935 = vpop.f32.mrf.mxu0
        %v3936 = vadd.f32 %v3917, %v3935
        %v3937 = vpop.f32.mrf.mxu0
        %v3938 = vadd.f32 %v3919, %v3937
        %3939 = vmatmul.bf16.gmra.mxu0 %v1002
        %v3940 = vpop.f32.mrf.mxu0
        %v3941 = vadd.f32 %v3922, %v3940
        %v3942 = vpop.f32.mrf.mxu0
        %v3943 = vadd.f32 %v3924, %v3942
        %3944 = vdwg.mxu0
        %3945 = vmatpush.bf16.msra.mxu0 %v2810
        %3946 = vmatpush.bf16.msra.mxu0 %v2802
        %3947 = vmatpush.bf16.msra.mxu0 %v2794
        %3948 = vmatpush.bf16.msra.mxu0 %v2786
        %3949 = vmatpush.bf16.msra.mxu0 %v2778
        %3950 = vmatpush.bf16.msra.mxu0 %v2770
        %3951 = vmatpush.bf16.msra.mxu0 %v2762
        %3952 = vmatpush.bf16.msra.mxu0 %v2754
        %3953 = vmatmul.bf16.gmra.mxu0 %v995
        %v3954 = vpop.f32.mrf.mxu0
        %v3955 = vadd.f32 %v3936, %v3954
        %v3956 = vpop.f32.mrf.mxu0
        %v3957 = vadd.f32 %v3938, %v3956
        %3958 = vmatmul.bf16.gmra.mxu0 %v1003
        %v3959 = vpop.f32.mrf.mxu0
        %v3960 = vadd.f32 %v3941, %v3959
        %v3961 = vpop.f32.mrf.mxu0
        %v3962 = vadd.f32 %v3943, %v3961
        %3963 = vdwg.mxu0
        %3964 = vmatpush.bf16.msra.mxu0 %v2874
        %3965 = vmatpush.bf16.msra.mxu0 %v2866
        %3966 = vmatpush.bf16.msra.mxu0 %v2858
        %3967 = vmatpush.bf16.msra.mxu0 %v2850
        %3968 = vmatpush.bf16.msra.mxu0 %v2842
        %3969 = vmatpush.bf16.msra.mxu0 %v2834
        %3970 = vmatpush.bf16.msra.mxu0 %v2826
        %3971 = vmatpush.bf16.msra.mxu0 %v2818
        %3972 = vmatmul.bf16.gmra.mxu0 %v996
        %v3973 = vpop.f32.mrf.mxu0
        %v3974 = vadd.f32 %v3955, %v3973
        %v3975 = vpop.f32.mrf.mxu0
        %v3976 = vadd.f32 %v3957, %v3975
        %3977 = vmatmul.bf16.gmra.mxu0 %v1004
        %v3978 = vpop.f32.mrf.mxu0
        %v3979 = vadd.f32 %v3960, %v3978
        %v3980 = vpop.f32.mrf.mxu0
        %v3981 = vadd.f32 %v3962, %v3980
        %3982 = vdwg.mxu0
        %3983 = vmatpush.bf16.msra.mxu0 %v2938
        %3984 = vmatpush.bf16.msra.mxu0 %v2930
        %3985 = vmatpush.bf16.msra.mxu0 %v2922
        %3986 = vmatpush.bf16.msra.mxu0 %v2914
        %3987 = vmatpush.bf16.msra.mxu0 %v2906
        %3988 = vmatpush.bf16.msra.mxu0 %v2898
        %3989 = vmatpush.bf16.msra.mxu0 %v2890
        %3990 = vmatpush.bf16.msra.mxu0 %v2882
        %3991 = vmatmul.bf16.gmra.mxu0 %v997
        %v3992 = vpop.f32.mrf.mxu0
        %v3993 = vadd.f32 %v3974, %v3992
        %v3994 = vpop.f32.mrf.mxu0
        %v3995 = vadd.f32 %v3976, %v3994
        %3996 = vmatmul.bf16.gmra.mxu0 %v1005
        %v3997 = vpop.f32.mrf.mxu0
        %v3998 = vadd.f32 %v3979, %v3997
        %v3999 = vpop.f32.mrf.mxu0
        %v4000 = vadd.f32 %v3981, %v3999
        %4001 = vdwg.mxu0
        %4002 = vmatpush.bf16.msra.mxu0 %v3002
        %4003 = vmatpush.bf16.msra.mxu0 %v2994
        %4004 = vmatpush.bf16.msra.mxu0 %v2986
        %4005 = vmatpush.bf16.msra.mxu0 %v2978
        %4006 = vmatpush.bf16.msra.mxu0 %v2970
        %4007 = vmatpush.bf16.msra.mxu0 %v2962
        %4008 = vmatpush.bf16.msra.mxu0 %v2954
        %4009 = vmatpush.bf16.msra.mxu0 %v2946
        %4010 = vmatmul.bf16.gmra.mxu0 %v998
        %v4011 = vpop.f32.mrf.mxu0
        %v4012 = vadd.f32 %v3993, %v4011
        %v4013 = vpop.f32.mrf.mxu0
        %v4014 = vadd.f32 %v3995, %v4013
        %4015 = vmatmul.bf16.gmra.mxu0 %v1006
        %v4016 = vpop.f32.mrf.mxu0
        %v4017 = vadd.f32 %v3998, %v4016
        %v4018 = vpop.f32.mrf.mxu0
        %v4019 = vadd.f32 %v4000, %v4018
        %4020 = vdwg.mxu0
        %4021 = vmatpush.bf16.msra.mxu0 %v3066
        %4022 = vmatpush.bf16.msra.mxu0 %v3058
        %4023 = vmatpush.bf16.msra.mxu0 %v3050
        %4024 = vmatpush.bf16.msra.mxu0 %v3042
        %4025 = vmatpush.bf16.msra.mxu0 %v3034
        %4026 = vmatpush.bf16.msra.mxu0 %v3026
        %4027 = vmatpush.bf16.msra.mxu0 %v3018
        %4028 = vmatpush.bf16.msra.mxu0 %v3010
        %4029 = vmatmul.bf16.gmra.mxu0 %v999
        %v4030 = vpop.f32.mrf.mxu0
        %v4031 = vadd.f32 %v4012, %v4030
        %v4032 = vpop.f32.mrf.mxu0
        %v4033 = vadd.f32 %v4014, %v4032
        %4034 = vmatmul.bf16.gmra.mxu0 %v1007
        %v4035 = vpop.f32.mrf.mxu0
        %v4036 = vadd.f32 %v4017, %v4035
        %v4037 = vpop.f32.mrf.mxu0
        %v4038 = vadd.f32 %v4019, %v4037
        %4039 = vdwg.mxu0
        %4040 = vmatpush.bf16.msra.mxu0 %v2619
        %4041 = vmatpush.bf16.msra.mxu0 %v2611
        %4042 = vmatpush.bf16.msra.mxu0 %v2603
        %4043 = vmatpush.bf16.msra.mxu0 %v2595
        %4044 = vmatpush.bf16.msra.mxu0 %v2587
        %4045 = vmatpush.bf16.msra.mxu0 %v2579
        %4046 = vmatpush.bf16.msra.mxu0 %v2571
        %4047 = vmatpush.bf16.msra.mxu0 %v2563
        %4048 = vmatmul.bf16.gmra.mxu0 %v992
        %v4049 = vpop.f32.mrf.mxu0
        %v4050 = vadd.f32 0.0, %v4049
        %v4051 = vpop.f32.mrf.mxu0
        %v4052 = vadd.f32 0.0, %v4051
        %4053 = vmatmul.bf16.gmra.mxu0 %v1000
        %v4054 = vpop.f32.mrf.mxu0
        %v4055 = vadd.f32 0.0, %v4054
        %v4056 = vpop.f32.mrf.mxu0
        %v4057 = vadd.f32 0.0, %v4056
        %4058 = vdwg.mxu0
        %4059 = vmatpush.bf16.msra.mxu0 %v2683
        %4060 = vmatpush.bf16.msra.mxu0 %v2675
        %4061 = vmatpush.bf16.msra.mxu0 %v2667
        %4062 = vmatpush.bf16.msra.mxu0 %v2659
        %4063 = vmatpush.bf16.msra.mxu0 %v2651
        %4064 = vmatpush.bf16.msra.mxu0 %v2643
        %4065 = vmatpush.bf16.msra.mxu0 %v2635
        %4066 = vmatpush.bf16.msra.mxu0 %v2627
        %4067 = vmatmul.bf16.gmra.mxu0 %v993
        %v4068 = vpop.f32.mrf.mxu0
        %v4069 = vadd.f32 %v4050, %v4068
        %v4070 = vpop.f32.mrf.mxu0
        %v4071 = vadd.f32 %v4052, %v4070
        %4072 = vmatmul.bf16.gmra.mxu0 %v1001
        %v4073 = vpop.f32.mrf.mxu0
        %v4074 = vadd.f32 %v4055, %v4073
        %v4075 = vpop.f32.mrf.mxu0
        %v4076 = vadd.f32 %v4057, %v4075
        %4077 = vdwg.mxu0
        %4078 = vmatpush.bf16.msra.mxu0 %v2747
        %4079 = vmatpush.bf16.msra.mxu0 %v2739
        %4080 = vmatpush.bf16.msra.mxu0 %v2731
        %4081 = vmatpush.bf16.msra.mxu0 %v2723
        %4082 = vmatpush.bf16.msra.mxu0 %v2715
        %4083 = vmatpush.bf16.msra.mxu0 %v2707
        %4084 = vmatpush.bf16.msra.mxu0 %v2699
        %4085 = vmatpush.bf16.msra.mxu0 %v2691
        %4086 = vmatmul.bf16.gmra.mxu0 %v994
        %v4087 = vpop.f32.mrf.mxu0
        %v4088 = vadd.f32 %v4069, %v4087
        %v4089 = vpop.f32.mrf.mxu0
        %v4090 = vadd.f32 %v4071, %v4089
        %4091 = vmatmul.bf16.gmra.mxu0 %v1002
        %v4092 = vpop.f32.mrf.mxu0
        %v4093 = vadd.f32 %v4074, %v4092
        %v4094 = vpop.f32.mrf.mxu0
        %v4095 = vadd.f32 %v4076, %v4094
        %4096 = vdwg.mxu0
        %4097 = vmatpush.bf16.msra.mxu0 %v2811
        %4098 = vmatpush.bf16.msra.mxu0 %v2803
        %4099 = vmatpush.bf16.msra.mxu0 %v2795
        %4100 = vmatpush.bf16.msra.mxu0 %v2787
        %4101 = vmatpush.bf16.msra.mxu0 %v2779
        %4102 = vmatpush.bf16.msra.mxu0 %v2771
        %4103 = vmatpush.bf16.msra.mxu0 %v2763
        %4104 = vmatpush.bf16.msra.mxu0 %v2755
        %4105 = vmatmul.bf16.gmra.mxu0 %v995
        %v4106 = vpop.f32.mrf.mxu0
        %v4107 = vadd.f32 %v4088, %v4106
        %v4108 = vpop.f32.mrf.mxu0
        %v4109 = vadd.f32 %v4090, %v4108
        %4110 = vmatmul.bf16.gmra.mxu0 %v1003
        %v4111 = vpop.f32.mrf.mxu0
        %v4112 = vadd.f32 %v4093, %v4111
        %v4113 = vpop.f32.mrf.mxu0
        %v4114 = vadd.f32 %v4095, %v4113
        %4115 = vdwg.mxu0
        %4116 = vmatpush.bf16.msra.mxu0 %v2875
        %4117 = vmatpush.bf16.msra.mxu0 %v2867
        %4118 = vmatpush.bf16.msra.mxu0 %v2859
        %4119 = vmatpush.bf16.msra.mxu0 %v2851
        %4120 = vmatpush.bf16.msra.mxu0 %v2843
        %4121 = vmatpush.bf16.msra.mxu0 %v2835
        %4122 = vmatpush.bf16.msra.mxu0 %v2827
        %4123 = vmatpush.bf16.msra.mxu0 %v2819
        %4124 = vmatmul.bf16.gmra.mxu0 %v996
        %v4125 = vpop.f32.mrf.mxu0
        %v4126 = vadd.f32 %v4107, %v4125
        %v4127 = vpop.f32.mrf.mxu0
        %v4128 = vadd.f32 %v4109, %v4127
        %4129 = vmatmul.bf16.gmra.mxu0 %v1004
        %v4130 = vpop.f32.mrf.mxu0
        %v4131 = vadd.f32 %v4112, %v4130
        %v4132 = vpop.f32.mrf.mxu0
        %v4133 = vadd.f32 %v4114, %v4132
        %4134 = vdwg.mxu0
        %4135 = vmatpush.bf16.msra.mxu0 %v2939
        %4136 = vmatpush.bf16.msra.mxu0 %v2931
        %4137 = vmatpush.bf16.msra.mxu0 %v2923
        %4138 = vmatpush.bf16.msra.mxu0 %v2915
        %4139 = vmatpush.bf16.msra.mxu0 %v2907
        %4140 = vmatpush.bf16.msra.mxu0 %v2899
        %4141 = vmatpush.bf16.msra.mxu0 %v2891
        %4142 = vmatpush.bf16.msra.mxu0 %v2883
        %4143 = vmatmul.bf16.gmra.mxu0 %v997
        %v4144 = vpop.f32.mrf.mxu0
        %v4145 = vadd.f32 %v4126, %v4144
        %v4146 = vpop.f32.mrf.mxu0
        %v4147 = vadd.f32 %v4128, %v4146
        %4148 = vmatmul.bf16.gmra.mxu0 %v1005
        %v4149 = vpop.f32.mrf.mxu0
        %v4150 = vadd.f32 %v4131, %v4149
        %v4151 = vpop.f32.mrf.mxu0
        %v4152 = vadd.f32 %v4133, %v4151
        %4153 = vdwg.mxu0
        %4154 = vmatpush.bf16.msra.mxu0 %v3003
        %4155 = vmatpush.bf16.msra.mxu0 %v2995
        %4156 = vmatpush.bf16.msra.mxu0 %v2987
        %4157 = vmatpush.bf16.msra.mxu0 %v2979
        %4158 = vmatpush.bf16.msra.mxu0 %v2971
        %4159 = vmatpush.bf16.msra.mxu0 %v2963
        %4160 = vmatpush.bf16.msra.mxu0 %v2955
        %4161 = vmatpush.bf16.msra.mxu0 %v2947
        %4162 = vmatmul.bf16.gmra.mxu0 %v998
        %v4163 = vpop.f32.mrf.mxu0
        %v4164 = vadd.f32 %v4145, %v4163
        %v4165 = vpop.f32.mrf.mxu0
        %v4166 = vadd.f32 %v4147, %v4165
        %4167 = vmatmul.bf16.gmra.mxu0 %v1006
        %v4168 = vpop.f32.mrf.mxu0
        %v4169 = vadd.f32 %v4150, %v4168
        %v4170 = vpop.f32.mrf.mxu0
        %v4171 = vadd.f32 %v4152, %v4170
        %4172 = vdwg.mxu0
        %4173 = vmatpush.bf16.msra.mxu0 %v3067
        %4174 = vmatpush.bf16.msra.mxu0 %v3059
        %4175 = vmatpush.bf16.msra.mxu0 %v3051
        %4176 = vmatpush.bf16.msra.mxu0 %v3043
        %4177 = vmatpush.bf16.msra.mxu0 %v3035
        %4178 = vmatpush.bf16.msra.mxu0 %v3027
        %4179 = vmatpush.bf16.msra.mxu0 %v3019
        %4180 = vmatpush.bf16.msra.mxu0 %v3011
        %4181 = vmatmul.bf16.gmra.mxu0 %v999
        %v4182 = vpop.f32.mrf.mxu0
        %v4183 = vadd.f32 %v4164, %v4182
        %v4184 = vpop.f32.mrf.mxu0
        %v4185 = vadd.f32 %v4166, %v4184
        %4186 = vmatmul.bf16.gmra.mxu0 %v1007
        %v4187 = vpop.f32.mrf.mxu0
        %v4188 = vadd.f32 %v4169, %v4187
        %v4189 = vpop.f32.mrf.mxu0
        %v4190 = vadd.f32 %v4171, %v4189
        %4191 = vdwg.mxu0
        %4192 = vmatpush.bf16.msra.mxu0 %v2620
        %4193 = vmatpush.bf16.msra.mxu0 %v2612
        %4194 = vmatpush.bf16.msra.mxu0 %v2604
        %4195 = vmatpush.bf16.msra.mxu0 %v2596
        %4196 = vmatpush.bf16.msra.mxu0 %v2588
        %4197 = vmatpush.bf16.msra.mxu0 %v2580
        %4198 = vmatpush.bf16.msra.mxu0 %v2572
        %4199 = vmatpush.bf16.msra.mxu0 %v2564
        %4200 = vmatmul.bf16.gmra.mxu0 %v992
        %v4201 = vpop.f32.mrf.mxu0
        %v4202 = vadd.f32 0.0, %v4201
        %v4203 = vpop.f32.mrf.mxu0
        %v4204 = vadd.f32 0.0, %v4203
        %4205 = vmatmul.bf16.gmra.mxu0 %v1000
        %v4206 = vpop.f32.mrf.mxu0
        %v4207 = vadd.f32 0.0, %v4206
        %v4208 = vpop.f32.mrf.mxu0
        %v4209 = vadd.f32 0.0, %v4208
        %4210 = vdwg.mxu0
        %4211 = vmatpush.bf16.msra.mxu0 %v2684
        %4212 = vmatpush.bf16.msra.mxu0 %v2676
        %4213 = vmatpush.bf16.msra.mxu0 %v2668
        %4214 = vmatpush.bf16.msra.mxu0 %v2660
        %4215 = vmatpush.bf16.msra.mxu0 %v2652
        %4216 = vmatpush.bf16.msra.mxu0 %v2644
        %4217 = vmatpush.bf16.msra.mxu0 %v2636
        %4218 = vmatpush.bf16.msra.mxu0 %v2628
        %4219 = vmatmul.bf16.gmra.mxu0 %v993
        %v4220 = vpop.f32.mrf.mxu0
        %v4221 = vadd.f32 %v4202, %v4220
        %v4222 = vpop.f32.mrf.mxu0
        %v4223 = vadd.f32 %v4204, %v4222
        %4224 = vmatmul.bf16.gmra.mxu0 %v1001
        %v4225 = vpop.f32.mrf.mxu0
        %v4226 = vadd.f32 %v4207, %v4225
        %v4227 = vpop.f32.mrf.mxu0
        %v4228 = vadd.f32 %v4209, %v4227
        %4229 = vdwg.mxu0
        %4230 = vmatpush.bf16.msra.mxu0 %v2748
        %4231 = vmatpush.bf16.msra.mxu0 %v2740
        %4232 = vmatpush.bf16.msra.mxu0 %v2732
        %4233 = vmatpush.bf16.msra.mxu0 %v2724
        %4234 = vmatpush.bf16.msra.mxu0 %v2716
        %4235 = vmatpush.bf16.msra.mxu0 %v2708
        %4236 = vmatpush.bf16.msra.mxu0 %v2700
        %4237 = vmatpush.bf16.msra.mxu0 %v2692
        %4238 = vmatmul.bf16.gmra.mxu0 %v994
        %v4239 = vpop.f32.mrf.mxu0
        %v4240 = vadd.f32 %v4221, %v4239
        %v4241 = vpop.f32.mrf.mxu0
        %v4242 = vadd.f32 %v4223, %v4241
        %4243 = vmatmul.bf16.gmra.mxu0 %v1002
        %v4244 = vpop.f32.mrf.mxu0
        %v4245 = vadd.f32 %v4226, %v4244
        %v4246 = vpop.f32.mrf.mxu0
        %v4247 = vadd.f32 %v4228, %v4246
        %4248 = vdwg.mxu0
        %4249 = vmatpush.bf16.msra.mxu0 %v2812
        %4250 = vmatpush.bf16.msra.mxu0 %v2804
        %4251 = vmatpush.bf16.msra.mxu0 %v2796
        %4252 = vmatpush.bf16.msra.mxu0 %v2788
        %4253 = vmatpush.bf16.msra.mxu0 %v2780
        %4254 = vmatpush.bf16.msra.mxu0 %v2772
        %4255 = vmatpush.bf16.msra.mxu0 %v2764
        %4256 = vmatpush.bf16.msra.mxu0 %v2756
        %4257 = vmatmul.bf16.gmra.mxu0 %v995
        %v4258 = vpop.f32.mrf.mxu0
        %v4259 = vadd.f32 %v4240, %v4258
        %v4260 = vpop.f32.mrf.mxu0
        %v4261 = vadd.f32 %v4242, %v4260
        %4262 = vmatmul.bf16.gmra.mxu0 %v1003
        %v4263 = vpop.f32.mrf.mxu0
        %v4264 = vadd.f32 %v4245, %v4263
        %v4265 = vpop.f32.mrf.mxu0
        %v4266 = vadd.f32 %v4247, %v4265
        %4267 = vdwg.mxu0
        %4268 = vmatpush.bf16.msra.mxu0 %v2876
        %4269 = vmatpush.bf16.msra.mxu0 %v2868
        %4270 = vmatpush.bf16.msra.mxu0 %v2860
        %4271 = vmatpush.bf16.msra.mxu0 %v2852
        %4272 = vmatpush.bf16.msra.mxu0 %v2844
        %4273 = vmatpush.bf16.msra.mxu0 %v2836
        %4274 = vmatpush.bf16.msra.mxu0 %v2828
        %4275 = vmatpush.bf16.msra.mxu0 %v2820
        %4276 = vmatmul.bf16.gmra.mxu0 %v996
        %v4277 = vpop.f32.mrf.mxu0
        %v4278 = vadd.f32 %v4259, %v4277
        %v4279 = vpop.f32.mrf.mxu0
        %v4280 = vadd.f32 %v4261, %v4279
        %4281 = vmatmul.bf16.gmra.mxu0 %v1004
        %v4282 = vpop.f32.mrf.mxu0
        %v4283 = vadd.f32 %v4264, %v4282
        %v4284 = vpop.f32.mrf.mxu0
        %v4285 = vadd.f32 %v4266, %v4284
        %4286 = vdwg.mxu0
        %4287 = vmatpush.bf16.msra.mxu0 %v2940
        %4288 = vmatpush.bf16.msra.mxu0 %v2932
        %4289 = vmatpush.bf16.msra.mxu0 %v2924
        %4290 = vmatpush.bf16.msra.mxu0 %v2916
        %4291 = vmatpush.bf16.msra.mxu0 %v2908
        %4292 = vmatpush.bf16.msra.mxu0 %v2900
        %4293 = vmatpush.bf16.msra.mxu0 %v2892
        %4294 = vmatpush.bf16.msra.mxu0 %v2884
        %4295 = vmatmul.bf16.gmra.mxu0 %v997
        %v4296 = vpop.f32.mrf.mxu0
        %v4297 = vadd.f32 %v4278, %v4296
        %v4298 = vpop.f32.mrf.mxu0
        %v4299 = vadd.f32 %v4280, %v4298
        %4300 = vmatmul.bf16.gmra.mxu0 %v1005
        %v4301 = vpop.f32.mrf.mxu0
        %v4302 = vadd.f32 %v4283, %v4301
        %v4303 = vpop.f32.mrf.mxu0
        %v4304 = vadd.f32 %v4285, %v4303
        %4305 = vdwg.mxu0
        %4306 = vmatpush.bf16.msra.mxu0 %v3004
        %4307 = vmatpush.bf16.msra.mxu0 %v2996
        %4308 = vmatpush.bf16.msra.mxu0 %v2988
        %4309 = vmatpush.bf16.msra.mxu0 %v2980
        %4310 = vmatpush.bf16.msra.mxu0 %v2972
        %4311 = vmatpush.bf16.msra.mxu0 %v2964
        %4312 = vmatpush.bf16.msra.mxu0 %v2956
        %4313 = vmatpush.bf16.msra.mxu0 %v2948
        %4314 = vmatmul.bf16.gmra.mxu0 %v998
        %v4315 = vpop.f32.mrf.mxu0
        %v4316 = vadd.f32 %v4297, %v4315
        %v4317 = vpop.f32.mrf.mxu0
        %v4318 = vadd.f32 %v4299, %v4317
        %4319 = vmatmul.bf16.gmra.mxu0 %v1006
        %v4320 = vpop.f32.mrf.mxu0
        %v4321 = vadd.f32 %v4302, %v4320
        %v4322 = vpop.f32.mrf.mxu0
        %v4323 = vadd.f32 %v4304, %v4322
        %4324 = vdwg.mxu0
        %4325 = vmatpush.bf16.msra.mxu0 %v3068
        %4326 = vmatpush.bf16.msra.mxu0 %v3060
        %4327 = vmatpush.bf16.msra.mxu0 %v3052
        %4328 = vmatpush.bf16.msra.mxu0 %v3044
        %4329 = vmatpush.bf16.msra.mxu0 %v3036
        %4330 = vmatpush.bf16.msra.mxu0 %v3028
        %4331 = vmatpush.bf16.msra.mxu0 %v3020
        %4332 = vmatpush.bf16.msra.mxu0 %v3012
        %4333 = vmatmul.bf16.gmra.mxu0 %v999
        %v4334 = vpop.f32.mrf.mxu0
        %v4335 = vadd.f32 %v4316, %v4334
        %v4336 = vpop.f32.mrf.mxu0
        %v4337 = vadd.f32 %v4318, %v4336
        %4338 = vmatmul.bf16.gmra.mxu0 %v1007
        %v4339 = vpop.f32.mrf.mxu0
        %v4340 = vadd.f32 %v4321, %v4339
        %v4341 = vpop.f32.mrf.mxu0
        %v4342 = vadd.f32 %v4323, %v4341
        %4343 = vdwg.mxu0
        %4344 = vmatpush.bf16.msra.mxu0 %v2621
        %4345 = vmatpush.bf16.msra.mxu0 %v2613
        %4346 = vmatpush.bf16.msra.mxu0 %v2605
        %4347 = vmatpush.bf16.msra.mxu0 %v2597
        %4348 = vmatpush.bf16.msra.mxu0 %v2589
        %4349 = vmatpush.bf16.msra.mxu0 %v2581
        %4350 = vmatpush.bf16.msra.mxu0 %v2573
        %4351 = vmatpush.bf16.msra.mxu0 %v2565
        %4352 = vmatmul.bf16.gmra.mxu0 %v992
        %v4353 = vpop.f32.mrf.mxu0
        %v4354 = vadd.f32 0.0, %v4353
        %v4355 = vpop.f32.mrf.mxu0
        %v4356 = vadd.f32 0.0, %v4355
        %4357 = vmatmul.bf16.gmra.mxu0 %v1000
        %v4358 = vpop.f32.mrf.mxu0
        %v4359 = vadd.f32 0.0, %v4358
        %v4360 = vpop.f32.mrf.mxu0
        %v4361 = vadd.f32 0.0, %v4360
        %4362 = vdwg.mxu0
        %4363 = vmatpush.bf16.msra.mxu0 %v2685
        %4364 = vmatpush.bf16.msra.mxu0 %v2677
        %4365 = vmatpush.bf16.msra.mxu0 %v2669
        %4366 = vmatpush.bf16.msra.mxu0 %v2661
        %4367 = vmatpush.bf16.msra.mxu0 %v2653
        %4368 = vmatpush.bf16.msra.mxu0 %v2645
        %4369 = vmatpush.bf16.msra.mxu0 %v2637
        %4370 = vmatpush.bf16.msra.mxu0 %v2629
        %4371 = vmatmul.bf16.gmra.mxu0 %v993
        %v4372 = vpop.f32.mrf.mxu0
        %v4373 = vadd.f32 %v4354, %v4372
        %v4374 = vpop.f32.mrf.mxu0
        %v4375 = vadd.f32 %v4356, %v4374
        %4376 = vmatmul.bf16.gmra.mxu0 %v1001
        %v4377 = vpop.f32.mrf.mxu0
        %v4378 = vadd.f32 %v4359, %v4377
        %v4379 = vpop.f32.mrf.mxu0
        %v4380 = vadd.f32 %v4361, %v4379
        %4381 = vdwg.mxu0
        %4382 = vmatpush.bf16.msra.mxu0 %v2749
        %4383 = vmatpush.bf16.msra.mxu0 %v2741
        %4384 = vmatpush.bf16.msra.mxu0 %v2733
        %4385 = vmatpush.bf16.msra.mxu0 %v2725
        %4386 = vmatpush.bf16.msra.mxu0 %v2717
        %4387 = vmatpush.bf16.msra.mxu0 %v2709
        %4388 = vmatpush.bf16.msra.mxu0 %v2701
        %4389 = vmatpush.bf16.msra.mxu0 %v2693
        %4390 = vmatmul.bf16.gmra.mxu0 %v994
        %v4391 = vpop.f32.mrf.mxu0
        %v4392 = vadd.f32 %v4373, %v4391
        %v4393 = vpop.f32.mrf.mxu0
        %v4394 = vadd.f32 %v4375, %v4393
        %4395 = vmatmul.bf16.gmra.mxu0 %v1002
        %v4396 = vpop.f32.mrf.mxu0
        %v4397 = vadd.f32 %v4378, %v4396
        %v4398 = vpop.f32.mrf.mxu0
        %v4399 = vadd.f32 %v4380, %v4398
        %4400 = vdwg.mxu0
        %4401 = vmatpush.bf16.msra.mxu0 %v2813
        %4402 = vmatpush.bf16.msra.mxu0 %v2805
        %4403 = vmatpush.bf16.msra.mxu0 %v2797
        %4404 = vmatpush.bf16.msra.mxu0 %v2789
        %4405 = vmatpush.bf16.msra.mxu0 %v2781
        %4406 = vmatpush.bf16.msra.mxu0 %v2773
        %4407 = vmatpush.bf16.msra.mxu0 %v2765
        %4408 = vmatpush.bf16.msra.mxu0 %v2757
        %4409 = vmatmul.bf16.gmra.mxu0 %v995
        %v4410 = vpop.f32.mrf.mxu0
        %v4411 = vadd.f32 %v4392, %v4410
        %v4412 = vpop.f32.mrf.mxu0
        %v4413 = vadd.f32 %v4394, %v4412
        %4414 = vmatmul.bf16.gmra.mxu0 %v1003
        %v4415 = vpop.f32.mrf.mxu0
        %v4416 = vadd.f32 %v4397, %v4415
        %v4417 = vpop.f32.mrf.mxu0
        %v4418 = vadd.f32 %v4399, %v4417
        %4419 = vdwg.mxu0
        %4420 = vmatpush.bf16.msra.mxu0 %v2877
        %4421 = vmatpush.bf16.msra.mxu0 %v2869
        %4422 = vmatpush.bf16.msra.mxu0 %v2861
        %4423 = vmatpush.bf16.msra.mxu0 %v2853
        %4424 = vmatpush.bf16.msra.mxu0 %v2845
        %4425 = vmatpush.bf16.msra.mxu0 %v2837
        %4426 = vmatpush.bf16.msra.mxu0 %v2829
        %4427 = vmatpush.bf16.msra.mxu0 %v2821
        %4428 = vmatmul.bf16.gmra.mxu0 %v996
        %v4429 = vpop.f32.mrf.mxu0
        %v4430 = vadd.f32 %v4411, %v4429
        %v4431 = vpop.f32.mrf.mxu0
        %v4432 = vadd.f32 %v4413, %v4431
        %4433 = vmatmul.bf16.gmra.mxu0 %v1004
        %v4434 = vpop.f32.mrf.mxu0
        %v4435 = vadd.f32 %v4416, %v4434
        %v4436 = vpop.f32.mrf.mxu0
        %v4437 = vadd.f32 %v4418, %v4436
        %4438 = vdwg.mxu0
        %4439 = vmatpush.bf16.msra.mxu0 %v2941
        %4440 = vmatpush.bf16.msra.mxu0 %v2933
        %4441 = vmatpush.bf16.msra.mxu0 %v2925
        %4442 = vmatpush.bf16.msra.mxu0 %v2917
        %4443 = vmatpush.bf16.msra.mxu0 %v2909
        %4444 = vmatpush.bf16.msra.mxu0 %v2901
        %4445 = vmatpush.bf16.msra.mxu0 %v2893
        %4446 = vmatpush.bf16.msra.mxu0 %v2885
        %4447 = vmatmul.bf16.gmra.mxu0 %v997
        %v4448 = vpop.f32.mrf.mxu0
        %v4449 = vadd.f32 %v4430, %v4448
        %v4450 = vpop.f32.mrf.mxu0
        %v4451 = vadd.f32 %v4432, %v4450
        %4452 = vmatmul.bf16.gmra.mxu0 %v1005
        %v4453 = vpop.f32.mrf.mxu0
        %v4454 = vadd.f32 %v4435, %v4453
        %v4455 = vpop.f32.mrf.mxu0
        %v4456 = vadd.f32 %v4437, %v4455
        %4457 = vdwg.mxu0
        %4458 = vmatpush.bf16.msra.mxu0 %v3005
        %4459 = vmatpush.bf16.msra.mxu0 %v2997
        %4460 = vmatpush.bf16.msra.mxu0 %v2989
        %4461 = vmatpush.bf16.msra.mxu0 %v2981
        %4462 = vmatpush.bf16.msra.mxu0 %v2973
        %4463 = vmatpush.bf16.msra.mxu0 %v2965
        %4464 = vmatpush.bf16.msra.mxu0 %v2957
        %4465 = vmatpush.bf16.msra.mxu0 %v2949
        %4466 = vmatmul.bf16.gmra.mxu0 %v998
        %v4467 = vpop.f32.mrf.mxu0
        %v4468 = vadd.f32 %v4449, %v4467
        %v4469 = vpop.f32.mrf.mxu0
        %v4470 = vadd.f32 %v4451, %v4469
        %4471 = vmatmul.bf16.gmra.mxu0 %v1006
        %v4472 = vpop.f32.mrf.mxu0
        %v4473 = vadd.f32 %v4454, %v4472
        %v4474 = vpop.f32.mrf.mxu0
        %v4475 = vadd.f32 %v4456, %v4474
        %4476 = vdwg.mxu0
        %4477 = vmatpush.bf16.msra.mxu0 %v3069
        %4478 = vmatpush.bf16.msra.mxu0 %v3061
        %4479 = vmatpush.bf16.msra.mxu0 %v3053
        %4480 = vmatpush.bf16.msra.mxu0 %v3045
        %4481 = vmatpush.bf16.msra.mxu0 %v3037
        %4482 = vmatpush.bf16.msra.mxu0 %v3029
        %4483 = vmatpush.bf16.msra.mxu0 %v3021
        %4484 = vmatpush.bf16.msra.mxu0 %v3013
        %4485 = vmatmul.bf16.gmra.mxu0 %v999
        %v4486 = vpop.f32.mrf.mxu0
        %v4487 = vadd.f32 %v4468, %v4486
        %v4488 = vpop.f32.mrf.mxu0
        %v4489 = vadd.f32 %v4470, %v4488
        %4490 = vmatmul.bf16.gmra.mxu0 %v1007
        %v4491 = vpop.f32.mrf.mxu0
        %v4492 = vadd.f32 %v4473, %v4491
        %v4493 = vpop.f32.mrf.mxu0
        %v4494 = vadd.f32 %v4475, %v4493
        %4495 = vdwg.mxu0
        %4496 = vmatpush.bf16.msra.mxu0 %v2622
        %4497 = vmatpush.bf16.msra.mxu0 %v2614
        %4498 = vmatpush.bf16.msra.mxu0 %v2606
        %4499 = vmatpush.bf16.msra.mxu0 %v2598
        %4500 = vmatpush.bf16.msra.mxu0 %v2590
        %4501 = vmatpush.bf16.msra.mxu0 %v2582
        %4502 = vmatpush.bf16.msra.mxu0 %v2574
        %4503 = vmatpush.bf16.msra.mxu0 %v2566
        %4504 = vmatmul.bf16.gmra.mxu0 %v992
        %v4505 = vpop.f32.mrf.mxu0
        %v4506 = vadd.f32 0.0, %v4505
        %v4507 = vpop.f32.mrf.mxu0
        %v4508 = vadd.f32 0.0, %v4507
        %4509 = vmatmul.bf16.gmra.mxu0 %v1000
        %v4510 = vpop.f32.mrf.mxu0
        %v4511 = vadd.f32 0.0, %v4510
        %v4512 = vpop.f32.mrf.mxu0
        %v4513 = vadd.f32 0.0, %v4512
        %4514 = vdwg.mxu0
        %4515 = vmatpush.bf16.msra.mxu0 %v2686
        %4516 = vmatpush.bf16.msra.mxu0 %v2678
        %4517 = vmatpush.bf16.msra.mxu0 %v2670
        %4518 = vmatpush.bf16.msra.mxu0 %v2662
        %4519 = vmatpush.bf16.msra.mxu0 %v2654
        %4520 = vmatpush.bf16.msra.mxu0 %v2646
        %4521 = vmatpush.bf16.msra.mxu0 %v2638
        %4522 = vmatpush.bf16.msra.mxu0 %v2630
        %4523 = vmatmul.bf16.gmra.mxu0 %v993
        %v4524 = vpop.f32.mrf.mxu0
        %v4525 = vadd.f32 %v4506, %v4524
        %v4526 = vpop.f32.mrf.mxu0
        %v4527 = vadd.f32 %v4508, %v4526
        %4528 = vmatmul.bf16.gmra.mxu0 %v1001
        %v4529 = vpop.f32.mrf.mxu0
        %v4530 = vadd.f32 %v4511, %v4529
        %v4531 = vpop.f32.mrf.mxu0
        %v4532 = vadd.f32 %v4513, %v4531
        %4533 = vdwg.mxu0
        %4534 = vmatpush.bf16.msra.mxu0 %v2750
        %4535 = vmatpush.bf16.msra.mxu0 %v2742
        %4536 = vmatpush.bf16.msra.mxu0 %v2734
        %4537 = vmatpush.bf16.msra.mxu0 %v2726
        %4538 = vmatpush.bf16.msra.mxu0 %v2718
        %4539 = vmatpush.bf16.msra.mxu0 %v2710
        %4540 = vmatpush.bf16.msra.mxu0 %v2702
        %4541 = vmatpush.bf16.msra.mxu0 %v2694
        %4542 = vmatmul.bf16.gmra.mxu0 %v994
        %v4543 = vpop.f32.mrf.mxu0
        %v4544 = vadd.f32 %v4525, %v4543
        %v4545 = vpop.f32.mrf.mxu0
        %v4546 = vadd.f32 %v4527, %v4545
        %4547 = vmatmul.bf16.gmra.mxu0 %v1002
        %v4548 = vpop.f32.mrf.mxu0
        %v4549 = vadd.f32 %v4530, %v4548
        %v4550 = vpop.f32.mrf.mxu0
        %v4551 = vadd.f32 %v4532, %v4550
        %4552 = vdwg.mxu0
        %4553 = vmatpush.bf16.msra.mxu0 %v2814
        %4554 = vmatpush.bf16.msra.mxu0 %v2806
        %4555 = vmatpush.bf16.msra.mxu0 %v2798
        %4556 = vmatpush.bf16.msra.mxu0 %v2790
        %4557 = vmatpush.bf16.msra.mxu0 %v2782
        %4558 = vmatpush.bf16.msra.mxu0 %v2774
        %4559 = vmatpush.bf16.msra.mxu0 %v2766
        %4560 = vmatpush.bf16.msra.mxu0 %v2758
        %4561 = vmatmul.bf16.gmra.mxu0 %v995
        %v4562 = vpop.f32.mrf.mxu0
        %v4563 = vadd.f32 %v4544, %v4562
        %v4564 = vpop.f32.mrf.mxu0
        %v4565 = vadd.f32 %v4546, %v4564
        %4566 = vmatmul.bf16.gmra.mxu0 %v1003
        %v4567 = vpop.f32.mrf.mxu0
        %v4568 = vadd.f32 %v4549, %v4567
        %v4569 = vpop.f32.mrf.mxu0
        %v4570 = vadd.f32 %v4551, %v4569
        %4571 = vdwg.mxu0
        %4572 = vmatpush.bf16.msra.mxu0 %v2878
        %4573 = vmatpush.bf16.msra.mxu0 %v2870
        %4574 = vmatpush.bf16.msra.mxu0 %v2862
        %4575 = vmatpush.bf16.msra.mxu0 %v2854
        %4576 = vmatpush.bf16.msra.mxu0 %v2846
        %4577 = vmatpush.bf16.msra.mxu0 %v2838
        %4578 = vmatpush.bf16.msra.mxu0 %v2830
        %4579 = vmatpush.bf16.msra.mxu0 %v2822
        %4580 = vmatmul.bf16.gmra.mxu0 %v996
        %v4581 = vpop.f32.mrf.mxu0
        %v4582 = vadd.f32 %v4563, %v4581
        %v4583 = vpop.f32.mrf.mxu0
        %v4584 = vadd.f32 %v4565, %v4583
        %4585 = vmatmul.bf16.gmra.mxu0 %v1004
        %v4586 = vpop.f32.mrf.mxu0
        %v4587 = vadd.f32 %v4568, %v4586
        %v4588 = vpop.f32.mrf.mxu0
        %v4589 = vadd.f32 %v4570, %v4588
        %4590 = vdwg.mxu0
        %4591 = vmatpush.bf16.msra.mxu0 %v2942
        %4592 = vmatpush.bf16.msra.mxu0 %v2934
        %4593 = vmatpush.bf16.msra.mxu0 %v2926
        %4594 = vmatpush.bf16.msra.mxu0 %v2918
        %4595 = vmatpush.bf16.msra.mxu0 %v2910
        %4596 = vmatpush.bf16.msra.mxu0 %v2902
        %4597 = vmatpush.bf16.msra.mxu0 %v2894
        %4598 = vmatpush.bf16.msra.mxu0 %v2886
        %4599 = vmatmul.bf16.gmra.mxu0 %v997
        %v4600 = vpop.f32.mrf.mxu0
        %v4601 = vadd.f32 %v4582, %v4600
        %v4602 = vpop.f32.mrf.mxu0
        %v4603 = vadd.f32 %v4584, %v4602
        %4604 = vmatmul.bf16.gmra.mxu0 %v1005
        %v4605 = vpop.f32.mrf.mxu0
        %v4606 = vadd.f32 %v4587, %v4605
        %v4607 = vpop.f32.mrf.mxu0
        %v4608 = vadd.f32 %v4589, %v4607
        %4609 = vdwg.mxu0
        %4610 = vmatpush.bf16.msra.mxu0 %v3006
        %4611 = vmatpush.bf16.msra.mxu0 %v2998
        %4612 = vmatpush.bf16.msra.mxu0 %v2990
        %4613 = vmatpush.bf16.msra.mxu0 %v2982
        %4614 = vmatpush.bf16.msra.mxu0 %v2974
        %4615 = vmatpush.bf16.msra.mxu0 %v2966
        %4616 = vmatpush.bf16.msra.mxu0 %v2958
        %4617 = vmatpush.bf16.msra.mxu0 %v2950
        %4618 = vmatmul.bf16.gmra.mxu0 %v998
        %v4619 = vpop.f32.mrf.mxu0
        %v4620 = vadd.f32 %v4601, %v4619
        %v4621 = vpop.f32.mrf.mxu0
        %v4622 = vadd.f32 %v4603, %v4621
        %4623 = vmatmul.bf16.gmra.mxu0 %v1006
        %v4624 = vpop.f32.mrf.mxu0
        %v4625 = vadd.f32 %v4606, %v4624
        %v4626 = vpop.f32.mrf.mxu0
        %v4627 = vadd.f32 %v4608, %v4626
        %4628 = vdwg.mxu0
        %4629 = vmatpush.bf16.msra.mxu0 %v3070
        %4630 = vmatpush.bf16.msra.mxu0 %v3062
        %4631 = vmatpush.bf16.msra.mxu0 %v3054
        %4632 = vmatpush.bf16.msra.mxu0 %v3046
        %4633 = vmatpush.bf16.msra.mxu0 %v3038
        %4634 = vmatpush.bf16.msra.mxu0 %v3030
        %4635 = vmatpush.bf16.msra.mxu0 %v3022
        %4636 = vmatpush.bf16.msra.mxu0 %v3014
        %4637 = vmatmul.bf16.gmra.mxu0 %v999
        %v4638 = vpop.f32.mrf.mxu0
        %v4639 = vadd.f32 %v4620, %v4638
        %v4640 = vpop.f32.mrf.mxu0
        %v4641 = vadd.f32 %v4622, %v4640
        %4642 = vmatmul.bf16.gmra.mxu0 %v1007
        %v4643 = vpop.f32.mrf.mxu0
        %v4644 = vadd.f32 %v4625, %v4643
        %v4645 = vpop.f32.mrf.mxu0
        %v4646 = vadd.f32 %v4627, %v4645
        %4647 = vdwg.mxu0
        %4648 = vmatpush.bf16.msra.mxu0 %v2623
        %4649 = vmatpush.bf16.msra.mxu0 %v2615
        %4650 = vmatpush.bf16.msra.mxu0 %v2607
        %4651 = vmatpush.bf16.msra.mxu0 %v2599
        %4652 = vmatpush.bf16.msra.mxu0 %v2591
        %4653 = vmatpush.bf16.msra.mxu0 %v2583
        %4654 = vmatpush.bf16.msra.mxu0 %v2575
        %4655 = vmatpush.bf16.msra.mxu0 %v2567
        %4656 = vmatmul.bf16.gmra.mxu0 %v992
        %v4657 = vpop.f32.mrf.mxu0
        %v4658 = vadd.f32 0.0, %v4657
        %v4659 = vpop.f32.mrf.mxu0
        %v4660 = vadd.f32 0.0, %v4659
        %4661 = vmatmul.bf16.gmra.mxu0 %v1000
        %v4662 = vpop.f32.mrf.mxu0
        %v4663 = vadd.f32 0.0, %v4662
        %v4664 = vpop.f32.mrf.mxu0
        %v4665 = vadd.f32 0.0, %v4664
        %4666 = vdwg.mxu0
        %4667 = vmatpush.bf16.msra.mxu0 %v2687
        %4668 = vmatpush.bf16.msra.mxu0 %v2679
        %4669 = vmatpush.bf16.msra.mxu0 %v2671
        %4670 = vmatpush.bf16.msra.mxu0 %v2663
        %4671 = vmatpush.bf16.msra.mxu0 %v2655
        %4672 = vmatpush.bf16.msra.mxu0 %v2647
        %4673 = vmatpush.bf16.msra.mxu0 %v2639
        %4674 = vmatpush.bf16.msra.mxu0 %v2631
        %4675 = vmatmul.bf16.gmra.mxu0 %v993
        %v4676 = vpop.f32.mrf.mxu0
        %v4677 = vadd.f32 %v4658, %v4676
        %v4678 = vpop.f32.mrf.mxu0
        %v4679 = vadd.f32 %v4660, %v4678
        %4680 = vmatmul.bf16.gmra.mxu0 %v1001
        %v4681 = vpop.f32.mrf.mxu0
        %v4682 = vadd.f32 %v4663, %v4681
        %v4683 = vpop.f32.mrf.mxu0
        %v4684 = vadd.f32 %v4665, %v4683
        %4685 = vdwg.mxu0
        %4686 = vmatpush.bf16.msra.mxu0 %v2751
        %4687 = vmatpush.bf16.msra.mxu0 %v2743
        %4688 = vmatpush.bf16.msra.mxu0 %v2735
        %4689 = vmatpush.bf16.msra.mxu0 %v2727
        %4690 = vmatpush.bf16.msra.mxu0 %v2719
        %4691 = vmatpush.bf16.msra.mxu0 %v2711
        %4692 = vmatpush.bf16.msra.mxu0 %v2703
        %4693 = vmatpush.bf16.msra.mxu0 %v2695
        %4694 = vmatmul.bf16.gmra.mxu0 %v994
        %v4695 = vpop.f32.mrf.mxu0
        %v4696 = vadd.f32 %v4677, %v4695
        %v4697 = vpop.f32.mrf.mxu0
        %v4698 = vadd.f32 %v4679, %v4697
        %4699 = vmatmul.bf16.gmra.mxu0 %v1002
        %v4700 = vpop.f32.mrf.mxu0
        %v4701 = vadd.f32 %v4682, %v4700
        %v4702 = vpop.f32.mrf.mxu0
        %v4703 = vadd.f32 %v4684, %v4702
        %4704 = vdwg.mxu0
        %4705 = vmatpush.bf16.msra.mxu0 %v2815
        %4706 = vmatpush.bf16.msra.mxu0 %v2807
        %4707 = vmatpush.bf16.msra.mxu0 %v2799
        %4708 = vmatpush.bf16.msra.mxu0 %v2791
        %4709 = vmatpush.bf16.msra.mxu0 %v2783
        %4710 = vmatpush.bf16.msra.mxu0 %v2775
        %4711 = vmatpush.bf16.msra.mxu0 %v2767
        %4712 = vmatpush.bf16.msra.mxu0 %v2759
        %4713 = vmatmul.bf16.gmra.mxu0 %v995
        %v4714 = vpop.f32.mrf.mxu0
        %v4715 = vadd.f32 %v4696, %v4714
        %v4716 = vpop.f32.mrf.mxu0
        %v4717 = vadd.f32 %v4698, %v4716
        %4718 = vmatmul.bf16.gmra.mxu0 %v1003
        %v4719 = vpop.f32.mrf.mxu0
        %v4720 = vadd.f32 %v4701, %v4719
        %v4721 = vpop.f32.mrf.mxu0
        %v4722 = vadd.f32 %v4703, %v4721
        %4723 = vdwg.mxu0
        %4724 = vmatpush.bf16.msra.mxu0 %v2879
        %4725 = vmatpush.bf16.msra.mxu0 %v2871
        %4726 = vmatpush.bf16.msra.mxu0 %v2863
        %4727 = vmatpush.bf16.msra.mxu0 %v2855
        %4728 = vmatpush.bf16.msra.mxu0 %v2847
        %4729 = vmatpush.bf16.msra.mxu0 %v2839
        %4730 = vmatpush.bf16.msra.mxu0 %v2831
        %4731 = vmatpush.bf16.msra.mxu0 %v2823
        %4732 = vmatmul.bf16.gmra.mxu0 %v996
        %v4733 = vpop.f32.mrf.mxu0
        %v4734 = vadd.f32 %v4715, %v4733
        %v4735 = vpop.f32.mrf.mxu0
        %v4736 = vadd.f32 %v4717, %v4735
        %4737 = vmatmul.bf16.gmra.mxu0 %v1004
        %v4738 = vpop.f32.mrf.mxu0
        %v4739 = vadd.f32 %v4720, %v4738
        %v4740 = vpop.f32.mrf.mxu0
        %v4741 = vadd.f32 %v4722, %v4740
        %4742 = vdwg.mxu0
        %4743 = vmatpush.bf16.msra.mxu0 %v2943
        %4744 = vmatpush.bf16.msra.mxu0 %v2935
        %4745 = vmatpush.bf16.msra.mxu0 %v2927
        %4746 = vmatpush.bf16.msra.mxu0 %v2919
        %4747 = vmatpush.bf16.msra.mxu0 %v2911
        %4748 = vmatpush.bf16.msra.mxu0 %v2903
        %4749 = vmatpush.bf16.msra.mxu0 %v2895
        %4750 = vmatpush.bf16.msra.mxu0 %v2887
        %4751 = vmatmul.bf16.gmra.mxu0 %v997
        %v4752 = vpop.f32.mrf.mxu0
        %v4753 = vadd.f32 %v4734, %v4752
        %v4754 = vpop.f32.mrf.mxu0
        %v4755 = vadd.f32 %v4736, %v4754
        %4756 = vmatmul.bf16.gmra.mxu0 %v1005
        %v4757 = vpop.f32.mrf.mxu0
        %v4758 = vadd.f32 %v4739, %v4757
        %v4759 = vpop.f32.mrf.mxu0
        %v4760 = vadd.f32 %v4741, %v4759
        %4761 = vdwg.mxu0
        %4762 = vmatpush.bf16.msra.mxu0 %v3007
        %4763 = vmatpush.bf16.msra.mxu0 %v2999
        %4764 = vmatpush.bf16.msra.mxu0 %v2991
        %4765 = vmatpush.bf16.msra.mxu0 %v2983
        %4766 = vmatpush.bf16.msra.mxu0 %v2975
        %4767 = vmatpush.bf16.msra.mxu0 %v2967
        %4768 = vmatpush.bf16.msra.mxu0 %v2959
        %4769 = vmatpush.bf16.msra.mxu0 %v2951
        %4770 = vmatmul.bf16.gmra.mxu0 %v998
        %v4771 = vpop.f32.mrf.mxu0
        %v4772 = vadd.f32 %v4753, %v4771
        %v4773 = vpop.f32.mrf.mxu0
        %v4774 = vadd.f32 %v4755, %v4773
        %4775 = vmatmul.bf16.gmra.mxu0 %v1006
        %v4776 = vpop.f32.mrf.mxu0
        %v4777 = vadd.f32 %v4758, %v4776
        %v4778 = vpop.f32.mrf.mxu0
        %v4779 = vadd.f32 %v4760, %v4778
        %4780 = vdwg.mxu0
        %4781 = vmatpush.bf16.msra.mxu0 %v3071
        %4782 = vmatpush.bf16.msra.mxu0 %v3063
        %4783 = vmatpush.bf16.msra.mxu0 %v3055
        %4784 = vmatpush.bf16.msra.mxu0 %v3047
        %4785 = vmatpush.bf16.msra.mxu0 %v3039
        %4786 = vmatpush.bf16.msra.mxu0 %v3031
        %4787 = vmatpush.bf16.msra.mxu0 %v3023
        %4788 = vmatpush.bf16.msra.mxu0 %v3015
        %4789 = vmatmul.bf16.gmra.mxu0 %v999
        %v4790 = vpop.f32.mrf.mxu0
        %v4791 = vadd.f32 %v4772, %v4790
        %v4792 = vpop.f32.mrf.mxu0
        %v4793 = vadd.f32 %v4774, %v4792
        %4794 = vmatmul.bf16.gmra.mxu0 %v1007
        %v4795 = vpop.f32.mrf.mxu0
        %v4796 = vadd.f32 %v4777, %v4795
        %v4797 = vpop.f32.mrf.mxu0
        %v4798 = vadd.f32 %v4779, %v4797
        %4799 = vdwg.mxu0
        %v4800 = vadd.f32 %v384, %v3727
        %v4801 = vadd.f32 %v385, %v3879
        %v4802 = vadd.f32 %v386, %v4031
        %v4803 = vadd.f32 %v387, %v4183
        %v4804 = vadd.f32 %v388, %v4335
        %v4805 = vadd.f32 %v389, %v4487
        %v4806 = vadd.f32 %v390, %v4639
        %v4807 = vadd.f32 %v391, %v4791
        %v4808 = vadd.f32 %v392, %v3729
        %v4809 = vadd.f32 %v393, %v3881
        %v4810 = vadd.f32 %v394, %v4033
        %v4811 = vadd.f32 %v395, %v4185
        %v4812 = vadd.f32 %v396, %v4337
        %v4813 = vadd.f32 %v397, %v4489
        %v4814 = vadd.f32 %v398, %v4641
        %v4815 = vadd.f32 %v399, %v4793
        %v4816 = vadd.f32 %v400, %v3732
        %v4817 = vadd.f32 %v401, %v3884
        %v4818 = vadd.f32 %v402, %v4036
        %v4819 = vadd.f32 %v403, %v4188
        %v4820 = vadd.f32 %v404, %v4340
        %v4821 = vadd.f32 %v405, %v4492
        %v4822 = vadd.f32 %v406, %v4644
        %v4823 = vadd.f32 %v407, %v4796
        %v4824 = vadd.f32 %v408, %v3734
        %v4825 = vadd.f32 %v409, %v3886
        %v4826 = vadd.f32 %v410, %v4038
        %v4827 = vadd.f32 %v411, %v4190
        %v4828 = vadd.f32 %v412, %v4342
        %v4829 = vadd.f32 %v413, %v4494
        %v4830 = vadd.f32 %v414, %v4646
        %v4831 = vadd.f32 %v415, %v4798
        %4832 = vst [vmem:[#allocation2] sm:$0xff] %v4800
        %4833 = vst [vmem:[#allocation2 + $0x8] sm:$0xff] %v4801
        %4834 = vst [vmem:[#allocation2 + $0x10] sm:$0xff] %v4802
        %4835 = vst [vmem:[#allocation2 + $0x18] sm:$0xff] %v4803
        %4836 = vst [vmem:[#allocation2 + $0x20] sm:$0xff] %v4804
        %4837 = vst [vmem:[#allocation2 + $0x28] sm:$0xff] %v4805
        %4838 = vst [vmem:[#allocation2 + $0x30] sm:$0xff] %v4806
        %4839 = vst [vmem:[#allocation2 + $0x38] sm:$0xff] %v4807
        %4840 = vst [vmem:[#allocation2 + $0x40] sm:$0xff] %v4808
        %4841 = vst [vmem:[#allocation2 + $0x48] sm:$0xff] %v4809
        %4842 = vst [vmem:[#allocation2 + $0x50] sm:$0xff] %v4810
        %4843 = vst [vmem:[#allocation2 + $0x58] sm:$0xff] %v4811
        %4844 = vst [vmem:[#allocation2 + $0x60] sm:$0xff] %v4812
        %4845 = vst [vmem:[#allocation2 + $0x68] sm:$0xff] %v4813
        %4846 = vst [vmem:[#allocation2 + $0x70] sm:$0xff] %v4814
        %4847 = vst [vmem:[#allocation2 + $0x78] sm:$0xff] %v4815
        %4848 = vst [vmem:[#allocation2 + $0x80] sm:$0xff] %v4816
        %4849 = vst [vmem:[#allocation2 + $0x88] sm:$0xff] %v4817
        %4850 = vst [vmem:[#allocation2 + $0x90] sm:$0xff] %v4818
        %4851 = vst [vmem:[#allocation2 + $0x98] sm:$0xff] %v4819
        %4852 = vst [vmem:[#allocation2 + $0xa0] sm:$0xff] %v4820
        %4853 = vst [vmem:[#allocation2 + $0xa8] sm:$0xff] %v4821
        %4854 = vst [vmem:[#allocation2 + $0xb0] sm:$0xff] %v4822
        %4855 = vst [vmem:[#allocation2 + $0xb8] sm:$0xff] %v4823
        %4856 = vst [vmem:[#allocation2 + $0xc0] sm:$0xff] %v4824
        %4857 = vst [vmem:[#allocation2 + $0xc8] sm:$0xff] %v4825
        %4858 = vst [vmem:[#allocation2 + $0xd0] sm:$0xff] %v4826
        %4859 = vst [vmem:[#allocation2 + $0xd8] sm:$0xff] %v4827
        %4860 = vst [vmem:[#allocation2 + $0xe0] sm:$0xff] %v4828
        %4861 = vst [vmem:[#allocation2 + $0xe8] sm:$0xff] %v4829
        %4862 = vst [vmem:[#allocation2 + $0xf0] sm:$0xff] %v4830
        %4863 = vst [vmem:[#allocation2 + $0xf8] sm:$0xff] %v4831
        %p4864 = scmp.eq.s32.totalorder %s26, 4
        // Predicated region
        $region69: #{tpu_custom_call.1} parent=43 // pred_check
          %p4865 = pneg %p4864
        $region70: #{tpu_custom_call.1} parent=43 // pred_check_branch
          %4867 = sbr.rel (%p4865) target = $region72
        $region71: #{tpu_custom_call.1} parent=43 // pred_region
          %v4868 = vld [vmem:[#allocation8] ss:$8 sm:$0xf]
          %v4869 = vld [vmem:[#allocation8] ss:$8 sm:$0xf0]
          %v4870 = vor.u32 %v4868, %v4869
          %s4871 = scalar_lea.vmem [#allocation8], 1
          %v4872 = vld [vmem:[%s4871] ss:$8 sm:$0xf]
          %v4873 = vld [vmem:[%s4871] ss:$8 sm:$0xf0]
          %v4874 = vor.u32 %v4872, %v4873
          %s4875 = scalar_lea.vmem [#allocation8], 2
          %v4876 = vld [vmem:[%s4875] ss:$8 sm:$0xf]
          %v4877 = vld [vmem:[%s4875] ss:$8 sm:$0xf0]
          %v4878 = vor.u32 %v4876, %v4877
          %s4879 = scalar_lea.vmem [#allocation8], 3
          %v4880 = vld [vmem:[%s4879] ss:$8 sm:$0xf]
          %v4881 = vld [vmem:[%s4879] ss:$8 sm:$0xf0]
          %v4882 = vor.u32 %v4880, %v4881
          %s4883 = scalar_lea.vmem [#allocation8], 4
          %v4884 = vld [vmem:[%s4883] ss:$8 sm:$0xf]
          %v4885 = vld [vmem:[%s4883] ss:$8 sm:$0xf0]
          %v4886 = vor.u32 %v4884, %v4885
          %s4887 = scalar_lea.vmem [#allocation8], 5
          %v4888 = vld [vmem:[%s4887] ss:$8 sm:$0xf]
          %v4889 = vld [vmem:[%s4887] ss:$8 sm:$0xf0]
          %v4890 = vor.u32 %v4888, %v4889
          %v4891 = vld [vmem:[#allocation2] sm:$0xff]
          %v4892 = vld [vmem:[#allocation2 + $0x8] sm:$0xff]
          %v4893 = vld [vmem:[#allocation2 + $0x10] sm:$0xff]
          %v4894 = vld [vmem:[#allocation2 + $0x18] sm:$0xff]
          %v4895 = vld [vmem:[#allocation2 + $0x20] sm:$0xff]
          %v4896 = vld [vmem:[#allocation2 + $0x28] sm:$0xff]
          %v4897 = vld [vmem:[#allocation2 + $0x30] sm:$0xff]
          %v4898 = vld [vmem:[#allocation2 + $0x38] sm:$0xff]
          %v4899 = vld [vmem:[#allocation2 + $0x40] sm:$0xff]
          %v4900 = vld [vmem:[#allocation2 + $0x48] sm:$0xff]
          %v4901 = vld [vmem:[#allocation2 + $0x50] sm:$0xff]
          %v4902 = vld [vmem:[#allocation2 + $0x58] sm:$0xff]
          %v4903 = vld [vmem:[#allocation2 + $0x60] sm:$0xff]
          %v4904 = vld [vmem:[#allocation2 + $0x68] sm:$0xff]
          %v4905 = vld [vmem:[#allocation2 + $0x70] sm:$0xff]
          %v4906 = vld [vmem:[#allocation2 + $0x78] sm:$0xff]
          %v4907 = vld [vmem:[#allocation2 + $0x80] sm:$0xff]
          %v4908 = vld [vmem:[#allocation2 + $0x88] sm:$0xff]
          %v4909 = vld [vmem:[#allocation2 + $0x90] sm:$0xff]
          %v4910 = vld [vmem:[#allocation2 + $0x98] sm:$0xff]
          %v4911 = vld [vmem:[#allocation2 + $0xa0] sm:$0xff]
          %v4912 = vld [vmem:[#allocation2 + $0xa8] sm:$0xff]
          %v4913 = vld [vmem:[#allocation2 + $0xb0] sm:$0xff]
          %v4914 = vld [vmem:[#allocation2 + $0xb8] sm:$0xff]
          %v4915 = vld [vmem:[#allocation2 + $0xc0] sm:$0xff]
          %v4916 = vld [vmem:[#allocation2 + $0xc8] sm:$0xff]
          %v4917 = vld [vmem:[#allocation2 + $0xd0] sm:$0xff]
          %v4918 = vld [vmem:[#allocation2 + $0xd8] sm:$0xff]
          %v4919 = vld [vmem:[#allocation2 + $0xe0] sm:$0xff]
          %v4920 = vld [vmem:[#allocation2 + $0xe8] sm:$0xff]
          %v4921 = vld [vmem:[#allocation2 + $0xf0] sm:$0xff]
          %v4922 = vld [vmem:[#allocation2 + $0xf8] sm:$0xff]
          %v4924 = vperm.slane %v4870, 0
          %v4925 = vperm.slane %v4870, 1
          %v4926 = vperm.slane %v4870, 2
          %v4927 = vperm.slane %v4870, 3
          %v4928 = vperm.slane %v4870, 4
          %v4929 = vperm.slane %v4870, 5
          %v4930 = vperm.slane %v4870, 6
          %v4931 = vperm.slane %v4870, 7
          %v4940 = vadd.f32 %v4891, %v4924
          %v4941 = vadd.f32 %v4892, %v4925
          %v4942 = vadd.f32 %v4893, %v4926
          %v4943 = vadd.f32 %v4894, %v4927
          %v4944 = vadd.f32 %v4895, %v4928
          %v4945 = vadd.f32 %v4896, %v4929
          %v4946 = vadd.f32 %v4897, %v4930
          %v4947 = vadd.f32 %v4898, %v4931
          %v4948 = vadd.f32 %v4899, %v4924
          %v4949 = vadd.f32 %v4900, %v4925
          %v4950 = vadd.f32 %v4901, %v4926
          %v4951 = vadd.f32 %v4902, %v4927
          %v4952 = vadd.f32 %v4903, %v4928
          %v4953 = vadd.f32 %v4904, %v4929
          %v4954 = vadd.f32 %v4905, %v4930
          %v4955 = vadd.f32 %v4906, %v4931
          %v4956 = vadd.f32 %v4907, %v4924
          %v4957 = vadd.f32 %v4908, %v4925
          %v4958 = vadd.f32 %v4909, %v4926
          %v4959 = vadd.f32 %v4910, %v4927
          %v4960 = vadd.f32 %v4911, %v4928
          %v4961 = vadd.f32 %v4912, %v4929
          %v4962 = vadd.f32 %v4913, %v4930
          %v4963 = vadd.f32 %v4914, %v4931
          %v4964 = vadd.f32 %v4915, %v4924
          %v4965 = vadd.f32 %v4916, %v4925
          %v4966 = vadd.f32 %v4917, %v4926
          %v4967 = vadd.f32 %v4918, %v4927
          %v4968 = vadd.f32 %v4919, %v4928
          %v4969 = vadd.f32 %v4920, %v4929
          %v4970 = vadd.f32 %v4921, %v4930
          %v4971 = vadd.f32 %v4922, %v4931
          %4972 = vst [vmem:[#allocation2] sm:$0xff] %v4940
          %4973 = vst [vmem:[#allocation2 + $0x8] sm:$0xff] %v4941
          %4974 = vst [vmem:[#allocation2 + $0x10] sm:$0xff] %v4942
          %4975 = vst [vmem:[#allocation2 + $0x18] sm:$0xff] %v4943
          %4976 = vst [vmem:[#allocation2 + $0x20] sm:$0xff] %v4944
          %4977 = vst [vmem:[#allocation2 + $0x28] sm:$0xff] %v4945
          %4978 = vst [vmem:[#allocation2 + $0x30] sm:$0xff] %v4946
          %4979 = vst [vmem:[#allocation2 + $0x38] sm:$0xff] %v4947
          %4980 = vst [vmem:[#allocation2 + $0x40] sm:$0xff] %v4948
          %4981 = vst [vmem:[#allocation2 + $0x48] sm:$0xff] %v4949
          %4982 = vst [vmem:[#allocation2 + $0x50] sm:$0xff] %v4950
          %4983 = vst [vmem:[#allocation2 + $0x58] sm:$0xff] %v4951
          %4984 = vst [vmem:[#allocation2 + $0x60] sm:$0xff] %v4952
          %4985 = vst [vmem:[#allocation2 + $0x68] sm:$0xff] %v4953
          %4986 = vst [vmem:[#allocation2 + $0x70] sm:$0xff] %v4954
          %4987 = vst [vmem:[#allocation2 + $0x78] sm:$0xff] %v4955
          %4988 = vst [vmem:[#allocation2 + $0x80] sm:$0xff] %v4956
          %4989 = vst [vmem:[#allocation2 + $0x88] sm:$0xff] %v4957
          %4990 = vst [vmem:[#allocation2 + $0x90] sm:$0xff] %v4958
          %4991 = vst [vmem:[#allocation2 + $0x98] sm:$0xff] %v4959
          %4992 = vst [vmem:[#allocation2 + $0xa0] sm:$0xff] %v4960
          %4993 = vst [vmem:[#allocation2 + $0xa8] sm:$0xff] %v4961
          %4994 = vst [vmem:[#allocation2 + $0xb0] sm:$0xff] %v4962
          %4995 = vst [vmem:[#allocation2 + $0xb8] sm:$0xff] %v4963
          %4996 = vst [vmem:[#allocation2 + $0xc0] sm:$0xff] %v4964
          %4997 = vst [vmem:[#allocation2 + $0xc8] sm:$0xff] %v4965
          %4998 = vst [vmem:[#allocation2 + $0xd0] sm:$0xff] %v4966
          %4999 = vst [vmem:[#allocation2 + $0xd8] sm:$0xff] %v4967
          %5000 = vst [vmem:[#allocation2 + $0xe0] sm:$0xff] %v4968
          %5001 = vst [vmem:[#allocation2 + $0xe8] sm:$0xff] %v4969
          %5002 = vst [vmem:[#allocation2 + $0xf0] sm:$0xff] %v4970
          %5003 = vst [vmem:[#allocation2 + $0xf8] sm:$0xff] %v4971
          %v5004 = vld [vmem:[#allocation2] sm:$0xff]
          %v5005 = vld [vmem:[#allocation2 + $0x8] sm:$0xff]
          %v5006 = vld [vmem:[#allocation2 + $0x10] sm:$0xff]
          %v5007 = vld [vmem:[#allocation2 + $0x18] sm:$0xff]
          %v5008 = vld [vmem:[#allocation2 + $0x20] sm:$0xff]
          %v5009 = vld [vmem:[#allocation2 + $0x28] sm:$0xff]
          %v5010 = vld [vmem:[#allocation2 + $0x30] sm:$0xff]
          %v5011 = vld [vmem:[#allocation2 + $0x38] sm:$0xff]
          %v5012 = vld [vmem:[#allocation2 + $0x40] sm:$0xff]
          %v5013 = vld [vmem:[#allocation2 + $0x48] sm:$0xff]
          %v5014 = vld [vmem:[#allocation2 + $0x50] sm:$0xff]
          %v5015 = vld [vmem:[#allocation2 + $0x58] sm:$0xff]
          %v5016 = vld [vmem:[#allocation2 + $0x60] sm:$0xff]
          %v5017 = vld [vmem:[#allocation2 + $0x68] sm:$0xff]
          %v5018 = vld [vmem:[#allocation2 + $0x70] sm:$0xff]
          %v5019 = vld [vmem:[#allocation2 + $0x78] sm:$0xff]
          %v5020 = vld [vmem:[#allocation2 + $0x80] sm:$0xff]
          %v5021 = vld [vmem:[#allocation2 + $0x88] sm:$0xff]
          %v5022 = vld [vmem:[#allocation2 + $0x90] sm:$0xff]
          %v5023 = vld [vmem:[#allocation2 + $0x98] sm:$0xff]
          %v5024 = vld [vmem:[#allocation2 + $0xa0] sm:$0xff]
          %v5025 = vld [vmem:[#allocation2 + $0xa8] sm:$0xff]
          %v5026 = vld [vmem:[#allocation2 + $0xb0] sm:$0xff]
          %v5027 = vld [vmem:[#allocation2 + $0xb8] sm:$0xff]
          %v5028 = vld [vmem:[#allocation2 + $0xc0] sm:$0xff]
          %v5029 = vld [vmem:[#allocation2 + $0xc8] sm:$0xff]
          %v5030 = vld [vmem:[#allocation2 + $0xd0] sm:$0xff]
          %v5031 = vld [vmem:[#allocation2 + $0xd8] sm:$0xff]
          %v5032 = vld [vmem:[#allocation2 + $0xe0] sm:$0xff]
          %v5033 = vld [vmem:[#allocation2 + $0xe8] sm:$0xff]
          %v5034 = vld [vmem:[#allocation2 + $0xf0] sm:$0xff]
          %v5035 = vld [vmem:[#allocation2 + $0xf8] sm:$0xff]
          %v5036 = vadd.f32 %v5004, %v5012
          %v5037 = vadd.f32 %v5036, %v5020
          %v5038 = vadd.f32 %v5037, %v5028
          %v5039 = vrot.slane %v5038, 4
          %v5040 = vadd.f32 %v5038, %v5039
          %v5041 = vrot.slane %v5040, 2
          %v5042 = vadd.f32 %v5040, %v5041
          %v5043 = vrot.slane %v5042, 1
          %v5044 = vadd.f32 %v5042, %v5043
          %v5045 = vadd.f32 %v5005, %v5013
          %v5046 = vadd.f32 %v5045, %v5021
          %v5047 = vadd.f32 %v5046, %v5029
          %v5048 = vrot.slane %v5047, 4
          %v5049 = vadd.f32 %v5047, %v5048
          %v5050 = vrot.slane %v5049, 2
          %v5051 = vadd.f32 %v5049, %v5050
          %v5052 = vrot.slane %v5051, 1
          %v5053 = vadd.f32 %v5051, %v5052
          %v5054 = vadd.f32 %v5006, %v5014
          %v5055 = vadd.f32 %v5054, %v5022
          %v5056 = vadd.f32 %v5055, %v5030
          %v5057 = vrot.slane %v5056, 4
          %v5058 = vadd.f32 %v5056, %v5057
          %v5059 = vrot.slane %v5058, 2
          %v5060 = vadd.f32 %v5058, %v5059
          %v5061 = vrot.slane %v5060, 1
          %v5062 = vadd.f32 %v5060, %v5061
          %v5063 = vadd.f32 %v5007, %v5015
          %v5064 = vadd.f32 %v5063, %v5023
          %v5065 = vadd.f32 %v5064, %v5031
          %v5066 = vrot.slane %v5065, 4
          %v5067 = vadd.f32 %v5065, %v5066
          %v5068 = vrot.slane %v5067, 2
          %v5069 = vadd.f32 %v5067, %v5068
          %v5070 = vrot.slane %v5069, 1
          %v5071 = vadd.f32 %v5069, %v5070
          %v5072 = vadd.f32 %v5008, %v5016
          %v5073 = vadd.f32 %v5072, %v5024
          %v5074 = vadd.f32 %v5073, %v5032
          %v5075 = vrot.slane %v5074, 4
          %v5076 = vadd.f32 %v5074, %v5075
          %v5077 = vrot.slane %v5076, 2
          %v5078 = vadd.f32 %v5076, %v5077
          %v5079 = vrot.slane %v5078, 1
          %v5080 = vadd.f32 %v5078, %v5079
          %v5081 = vadd.f32 %v5009, %v5017
          %v5082 = vadd.f32 %v5081, %v5025
          %v5083 = vadd.f32 %v5082, %v5033
          %v5084 = vrot.slane %v5083, 4
          %v5085 = vadd.f32 %v5083, %v5084
          %v5086 = vrot.slane %v5085, 2
          %v5087 = vadd.f32 %v5085, %v5086
          %v5088 = vrot.slane %v5087, 1
          %v5089 = vadd.f32 %v5087, %v5088
          %v5090 = vadd.f32 %v5010, %v5018
          %v5091 = vadd.f32 %v5090, %v5026
          %v5092 = vadd.f32 %v5091, %v5034
          %v5093 = vrot.slane %v5092, 4
          %v5094 = vadd.f32 %v5092, %v5093
          %v5095 = vrot.slane %v5094, 2
          %v5096 = vadd.f32 %v5094, %v5095
          %v5097 = vrot.slane %v5096, 1
          %v5098 = vadd.f32 %v5096, %v5097
          %v5099 = vadd.f32 %v5011, %v5019
          %v5100 = vadd.f32 %v5099, %v5027
          %v5101 = vadd.f32 %v5100, %v5035
          %v5102 = vrot.slane %v5101, 4
          %v5103 = vadd.f32 %v5101, %v5102
          %v5104 = vrot.slane %v5103, 2
          %v5105 = vadd.f32 %v5103, %v5104
          %v5106 = vrot.slane %v5105, 1
          %v5107 = vadd.f32 %v5105, %v5106
          %v5108 = vrcp.pop 32.0
          %v5109 = vmul.f32 32.0, %v5108
          %v5110 = vsub.f32 1.0, %v5109
          %v5111 = vmul.f32 %v5108, %v5110
          %v5112 = vadd.f32 %v5108, %v5111
          %vm5113 = vweird.f32 %v5108
          %v5114 = vsel %vm5113, %v5108, %v5112
          %v5115 = vmul.f32 %v5044, %v5114
          %v5116 = vmul.f32 %v5053, %v5114
          %v5117 = vmul.f32 %v5062, %v5114
          %v5118 = vmul.f32 %v5071, %v5114
          %v5119 = vmul.f32 %v5080, %v5114
          %v5120 = vmul.f32 %v5089, %v5114
          %v5121 = vmul.f32 %v5098, %v5114
          %v5122 = vmul.f32 %v5107, %v5114
          %v5123 = vsub.f32 %v5004, %v5115
          %v5124 = vsub.f32 %v5005, %v5116
          %v5125 = vsub.f32 %v5006, %v5117
          %v5126 = vsub.f32 %v5007, %v5118
          %v5127 = vsub.f32 %v5008, %v5119
          %v5128 = vsub.f32 %v5009, %v5120
          %v5129 = vsub.f32 %v5010, %v5121
          %v5130 = vsub.f32 %v5011, %v5122
          %v5131 = vsub.f32 %v5012, %v5115
          %v5132 = vsub.f32 %v5013, %v5116
          %v5133 = vsub.f32 %v5014, %v5117
          %v5134 = vsub.f32 %v5015, %v5118
          %v5135 = vsub.f32 %v5016, %v5119
          %v5136 = vsub.f32 %v5017, %v5120
          %v5137 = vsub.f32 %v5018, %v5121
          %v5138 = vsub.f32 %v5019, %v5122
          %v5139 = vsub.f32 %v5020, %v5115
          %v5140 = vsub.f32 %v5021, %v5116
          %v5141 = vsub.f32 %v5022, %v5117
          %v5142 = vsub.f32 %v5023, %v5118
          %v5143 = vsub.f32 %v5024, %v5119
          %v5144 = vsub.f32 %v5025, %v5120
          %v5145 = vsub.f32 %v5026, %v5121
          %v5146 = vsub.f32 %v5027, %v5122
          %v5147 = vsub.f32 %v5028, %v5115
          %v5148 = vsub.f32 %v5029, %v5116
          %v5149 = vsub.f32 %v5030, %v5117
          %v5150 = vsub.f32 %v5031, %v5118
          %v5151 = vsub.f32 %v5032, %v5119
          %v5152 = vsub.f32 %v5033, %v5120
          %v5153 = vsub.f32 %v5034, %v5121
          %v5154 = vsub.f32 %v5035, %v5122
          %v5155 = vmul.f32 %v5123, %v5123
          %v5156 = vmul.f32 %v5124, %v5124
          %v5157 = vmul.f32 %v5125, %v5125
          %v5158 = vmul.f32 %v5126, %v5126
          %v5159 = vmul.f32 %v5127, %v5127
          %v5160 = vmul.f32 %v5128, %v5128
          %v5161 = vmul.f32 %v5129, %v5129
          %v5162 = vmul.f32 %v5130, %v5130
          %v5163 = vmul.f32 %v5131, %v5131
          %v5164 = vmul.f32 %v5132, %v5132
          %v5165 = vmul.f32 %v5133, %v5133
          %v5166 = vmul.f32 %v5134, %v5134
          %v5167 = vmul.f32 %v5135, %v5135
          %v5168 = vmul.f32 %v5136, %v5136
          %v5169 = vmul.f32 %v5137, %v5137
          %v5170 = vmul.f32 %v5138, %v5138
          %v5171 = vmul.f32 %v5139, %v5139
          %v5172 = vmul.f32 %v5140, %v5140
          %v5173 = vmul.f32 %v5141, %v5141
          %v5174 = vmul.f32 %v5142, %v5142
          %v5175 = vmul.f32 %v5143, %v5143
          %v5176 = vmul.f32 %v5144, %v5144
          %v5177 = vmul.f32 %v5145, %v5145
          %v5178 = vmul.f32 %v5146, %v5146
          %v5179 = vmul.f32 %v5147, %v5147
          %v5180 = vmul.f32 %v5148, %v5148
          %v5181 = vmul.f32 %v5149, %v5149
          %v5182 = vmul.f32 %v5150, %v5150
          %v5183 = vmul.f32 %v5151, %v5151
          %v5184 = vmul.f32 %v5152, %v5152
          %v5185 = vmul.f32 %v5153, %v5153
          %v5186 = vmul.f32 %v5154, %v5154
          %v5187 = vadd.f32 %v5155, %v5163
          %v5188 = vadd.f32 %v5187, %v5171
          %v5189 = vadd.f32 %v5188, %v5179
          %v5190 = vrot.slane %v5189, 4
          %v5191 = vadd.f32 %v5189, %v5190
          %v5192 = vrot.slane %v5191, 2
          %v5193 = vadd.f32 %v5191, %v5192
          %v5194 = vrot.slane %v5193, 1
          %v5195 = vadd.f32 %v5193, %v5194
          %v5196 = vadd.f32 %v5156, %v5164
          %v5197 = vadd.f32 %v5196, %v5172
          %v5198 = vadd.f32 %v5197, %v5180
          %v5199 = vrot.slane %v5198, 4
          %v5200 = vadd.f32 %v5198, %v5199
          %v5201 = vrot.slane %v5200, 2
          %v5202 = vadd.f32 %v5200, %v5201
          %v5203 = vrot.slane %v5202, 1
          %v5204 = vadd.f32 %v5202, %v5203
          %v5205 = vadd.f32 %v5157, %v5165
          %v5206 = vadd.f32 %v5205, %v5173
          %v5207 = vadd.f32 %v5206, %v5181
          %v5208 = vrot.slane %v5207, 4
          %v5209 = vadd.f32 %v5207, %v5208
          %v5210 = vrot.slane %v5209, 2
          %v5211 = vadd.f32 %v5209, %v5210
          %v5212 = vrot.slane %v5211, 1
          %v5213 = vadd.f32 %v5211, %v5212
          %v5214 = vadd.f32 %v5158, %v5166
          %v5215 = vadd.f32 %v5214, %v5174
          %v5216 = vadd.f32 %v5215, %v5182
          %v5217 = vrot.slane %v5216, 4
          %v5218 = vadd.f32 %v5216, %v5217
          %v5219 = vrot.slane %v5218, 2
          %v5220 = vadd.f32 %v5218, %v5219
          %v5221 = vrot.slane %v5220, 1
          %v5222 = vadd.f32 %v5220, %v5221
          %v5223 = vadd.f32 %v5159, %v5167
          %v5224 = vadd.f32 %v5223, %v5175
          %v5225 = vadd.f32 %v5224, %v5183
          %v5226 = vrot.slane %v5225, 4
          %v5227 = vadd.f32 %v5225, %v5226
          %v5228 = vrot.slane %v5227, 2
          %v5229 = vadd.f32 %v5227, %v5228
          %v5230 = vrot.slane %v5229, 1
          %v5231 = vadd.f32 %v5229, %v5230
          %v5232 = vadd.f32 %v5160, %v5168
          %v5233 = vadd.f32 %v5232, %v5176
          %v5234 = vadd.f32 %v5233, %v5184
          %v5235 = vrot.slane %v5234, 4
          %v5236 = vadd.f32 %v5234, %v5235
          %v5237 = vrot.slane %v5236, 2
          %v5238 = vadd.f32 %v5236, %v5237
          %v5239 = vrot.slane %v5238, 1
          %v5240 = vadd.f32 %v5238, %v5239
          %v5241 = vadd.f32 %v5161, %v5169
          %v5242 = vadd.f32 %v5241, %v5177
          %v5243 = vadd.f32 %v5242, %v5185
          %v5244 = vrot.slane %v5243, 4
          %v5245 = vadd.f32 %v5243, %v5244
          %v5246 = vrot.slane %v5245, 2
          %v5247 = vadd.f32 %v5245, %v5246
          %v5248 = vrot.slane %v5247, 1
          %v5249 = vadd.f32 %v5247, %v5248
          %v5250 = vadd.f32 %v5162, %v5170
          %v5251 = vadd.f32 %v5250, %v5178
          %v5252 = vadd.f32 %v5251, %v5186
          %v5253 = vrot.slane %v5252, 4
          %v5254 = vadd.f32 %v5252, %v5253
          %v5255 = vrot.slane %v5254, 2
          %v5256 = vadd.f32 %v5254, %v5255
          %v5257 = vrot.slane %v5256, 1
          %v5258 = vadd.f32 %v5256, %v5257
          %v5259 = vmul.f32 %v5195, %v5114
          %v5260 = vmul.f32 %v5204, %v5114
          %v5261 = vmul.f32 %v5213, %v5114
          %v5262 = vmul.f32 %v5222, %v5114
          %v5263 = vmul.f32 %v5231, %v5114
          %v5264 = vmul.f32 %v5240, %v5114
          %v5265 = vmul.f32 %v5249, %v5114
          %v5266 = vmul.f32 %v5258, %v5114
          %v5267 = vadd.f32 %v5259, 1e-05
          %v5268 = vadd.f32 %v5260, 1e-05
          %v5269 = vadd.f32 %v5261, 1e-05
          %v5270 = vadd.f32 %v5262, 1e-05
          %v5271 = vadd.f32 %v5263, 1e-05
          %v5272 = vadd.f32 %v5264, 1e-05
          %v5273 = vadd.f32 %v5265, 1e-05
          %v5274 = vadd.f32 %v5266, 1e-05
          %v5275 = vrsqrt.pop %v5267
          %v5276 = vmul.f32 %v5275, %v5267
          %v5277 = vmul.f32 %v5276, %v5275
          %v5278 = vmul.f32 0.5, %v5277
          %v5279 = vsub.f32 1.5, %v5278
          %v5280 = vmul.f32 %v5275, %v5279
          %vm5281 = vweird.f32 %v5267
          %vm5282 = vweird.f32 %v5275
          %vm5283 = vmor %vm5281, %vm5282
          %v5284 = vsel %vm5283, %v5275, %v5280
          %v5285 = vrsqrt.pop %v5268
          %v5286 = vmul.f32 %v5285, %v5268
          %v5287 = vmul.f32 %v5286, %v5285
          %v5288 = vmul.f32 0.5, %v5287
          %v5289 = vsub.f32 1.5, %v5288
          %v5290 = vmul.f32 %v5285, %v5289
          %vm5291 = vweird.f32 %v5268
          %vm5292 = vweird.f32 %v5285
          %vm5293 = vmor %vm5291, %vm5292
          %v5294 = vsel %vm5293, %v5285, %v5290
          %v5295 = vrsqrt.pop %v5269
          %v5296 = vmul.f32 %v5295, %v5269
          %v5297 = vmul.f32 %v5296, %v5295
          %v5298 = vmul.f32 0.5, %v5297
          %v5299 = vsub.f32 1.5, %v5298
          %v5300 = vmul.f32 %v5295, %v5299
          %vm5301 = vweird.f32 %v5269
          %vm5302 = vweird.f32 %v5295
          %vm5303 = vmor %vm5301, %vm5302
          %v5304 = vsel %vm5303, %v5295, %v5300
          %v5305 = vrsqrt.pop %v5270
          %v5306 = vmul.f32 %v5305, %v5270
          %v5307 = vmul.f32 %v5306, %v5305
          %v5308 = vmul.f32 0.5, %v5307
          %v5309 = vsub.f32 1.5, %v5308
          %v5310 = vmul.f32 %v5305, %v5309
          %vm5311 = vweird.f32 %v5270
          %vm5312 = vweird.f32 %v5305
          %vm5313 = vmor %vm5311, %vm5312
          %v5314 = vsel %vm5313, %v5305, %v5310
          %v5315 = vrsqrt.pop %v5271
          %v5316 = vmul.f32 %v5315, %v5271
          %v5317 = vmul.f32 %v5316, %v5315
          %v5318 = vmul.f32 0.5, %v5317
          %v5319 = vsub.f32 1.5, %v5318
          %v5320 = vmul.f32 %v5315, %v5319
          %vm5321 = vweird.f32 %v5271
          %vm5322 = vweird.f32 %v5315
          %vm5323 = vmor %vm5321, %vm5322
          %v5324 = vsel %vm5323, %v5315, %v5320
          %v5325 = vrsqrt.pop %v5272
          %v5326 = vmul.f32 %v5325, %v5272
          %v5327 = vmul.f32 %v5326, %v5325
          %v5328 = vmul.f32 0.5, %v5327
          %v5329 = vsub.f32 1.5, %v5328
          %v5330 = vmul.f32 %v5325, %v5329
          %vm5331 = vweird.f32 %v5272
          %vm5332 = vweird.f32 %v5325
          %vm5333 = vmor %vm5331, %vm5332
          %v5334 = vsel %vm5333, %v5325, %v5330
          %v5335 = vrsqrt.pop %v5273
          %v5336 = vmul.f32 %v5335, %v5273
          %v5337 = vmul.f32 %v5336, %v5335
          %v5338 = vmul.f32 0.5, %v5337
          %v5339 = vsub.f32 1.5, %v5338
          %v5340 = vmul.f32 %v5335, %v5339
          %vm5341 = vweird.f32 %v5273
          %vm5342 = vweird.f32 %v5335
          %vm5343 = vmor %vm5341, %vm5342
          %v5344 = vsel %vm5343, %v5335, %v5340
          %v5345 = vrsqrt.pop %v5274
          %v5346 = vmul.f32 %v5345, %v5274
          %v5347 = vmul.f32 %v5346, %v5345
          %v5348 = vmul.f32 0.5, %v5347
          %v5349 = vsub.f32 1.5, %v5348
          %v5350 = vmul.f32 %v5345, %v5349
          %vm5351 = vweird.f32 %v5274
          %vm5352 = vweird.f32 %v5345
          %vm5353 = vmor %vm5351, %vm5352
          %v5354 = vsel %vm5353, %v5345, %v5350
          %v5355 = vmul.f32 %v5123, %v5284
          %v5356 = vmul.f32 %v5124, %v5294
          %v5357 = vmul.f32 %v5125, %v5304
          %v5358 = vmul.f32 %v5126, %v5314
          %v5359 = vmul.f32 %v5127, %v5324
          %v5360 = vmul.f32 %v5128, %v5334
          %v5361 = vmul.f32 %v5129, %v5344
          %v5362 = vmul.f32 %v5130, %v5354
          %v5363 = vmul.f32 %v5131, %v5284
          %v5364 = vmul.f32 %v5132, %v5294
          %v5365 = vmul.f32 %v5133, %v5304
          %v5366 = vmul.f32 %v5134, %v5314
          %v5367 = vmul.f32 %v5135, %v5324
          %v5368 = vmul.f32 %v5136, %v5334
          %v5369 = vmul.f32 %v5137, %v5344
          %v5370 = vmul.f32 %v5138, %v5354
          %v5371 = vmul.f32 %v5139, %v5284
          %v5372 = vmul.f32 %v5140, %v5294
          %v5373 = vmul.f32 %v5141, %v5304
          %v5374 = vmul.f32 %v5142, %v5314
          %v5375 = vmul.f32 %v5143, %v5324
          %v5376 = vmul.f32 %v5144, %v5334
          %v5377 = vmul.f32 %v5145, %v5344
          %v5378 = vmul.f32 %v5146, %v5354
          %v5379 = vmul.f32 %v5147, %v5284
          %v5380 = vmul.f32 %v5148, %v5294
          %v5381 = vmul.f32 %v5149, %v5304
          %v5382 = vmul.f32 %v5150, %v5314
          %v5383 = vmul.f32 %v5151, %v5324
          %v5384 = vmul.f32 %v5152, %v5334
          %v5385 = vmul.f32 %v5153, %v5344
          %v5386 = vmul.f32 %v5154, %v5354
          %v5388 = vperm.slane %v4878, 0
          %v5389 = vperm.slane %v4878, 1
          %v5390 = vperm.slane %v4878, 2
          %v5391 = vperm.slane %v4878, 3
          %v5392 = vperm.slane %v4878, 4
          %v5393 = vperm.slane %v4878, 5
          %v5394 = vperm.slane %v4878, 6
          %v5395 = vperm.slane %v4878, 7
          %v5404 = vmul.f32 %v5355, %v5388
          %v5405 = vmul.f32 %v5356, %v5389
          %v5406 = vmul.f32 %v5357, %v5390
          %v5407 = vmul.f32 %v5358, %v5391
          %v5408 = vmul.f32 %v5359, %v5392
          %v5409 = vmul.f32 %v5360, %v5393
          %v5410 = vmul.f32 %v5361, %v5394
          %v5411 = vmul.f32 %v5362, %v5395
          %v5412 = vmul.f32 %v5363, %v5388
          %v5413 = vmul.f32 %v5364, %v5389
          %v5414 = vmul.f32 %v5365, %v5390
          %v5415 = vmul.f32 %v5366, %v5391
          %v5416 = vmul.f32 %v5367, %v5392
          %v5417 = vmul.f32 %v5368, %v5393
          %v5418 = vmul.f32 %v5369, %v5394
          %v5419 = vmul.f32 %v5370, %v5395
          %v5420 = vmul.f32 %v5371, %v5388
          %v5421 = vmul.f32 %v5372, %v5389
          %v5422 = vmul.f32 %v5373, %v5390
          %v5423 = vmul.f32 %v5374, %v5391
          %v5424 = vmul.f32 %v5375, %v5392
          %v5425 = vmul.f32 %v5376, %v5393
          %v5426 = vmul.f32 %v5377, %v5394
          %v5427 = vmul.f32 %v5378, %v5395
          %v5428 = vmul.f32 %v5379, %v5388
          %v5429 = vmul.f32 %v5380, %v5389
          %v5430 = vmul.f32 %v5381, %v5390
          %v5431 = vmul.f32 %v5382, %v5391
          %v5432 = vmul.f32 %v5383, %v5392
          %v5433 = vmul.f32 %v5384, %v5393
          %v5434 = vmul.f32 %v5385, %v5394
          %v5435 = vmul.f32 %v5386, %v5395
          %v5437 = vperm.slane %v4882, 0
          %v5438 = vperm.slane %v4882, 1
          %v5439 = vperm.slane %v4882, 2
          %v5440 = vperm.slane %v4882, 3
          %v5441 = vperm.slane %v4882, 4
          %v5442 = vperm.slane %v4882, 5
          %v5443 = vperm.slane %v4882, 6
          %v5444 = vperm.slane %v4882, 7
          %v5453 = vadd.f32 %v5404, %v5437
          %v5454 = vadd.f32 %v5405, %v5438
          %v5455 = vadd.f32 %v5406, %v5439
          %v5456 = vadd.f32 %v5407, %v5440
          %v5457 = vadd.f32 %v5408, %v5441
          %v5458 = vadd.f32 %v5409, %v5442
          %v5459 = vadd.f32 %v5410, %v5443
          %v5460 = vadd.f32 %v5411, %v5444
          %v5461 = vadd.f32 %v5412, %v5437
          %v5462 = vadd.f32 %v5413, %v5438
          %v5463 = vadd.f32 %v5414, %v5439
          %v5464 = vadd.f32 %v5415, %v5440
          %v5465 = vadd.f32 %v5416, %v5441
          %v5466 = vadd.f32 %v5417, %v5442
          %v5467 = vadd.f32 %v5418, %v5443
          %v5468 = vadd.f32 %v5419, %v5444
          %v5469 = vadd.f32 %v5420, %v5437
          %v5470 = vadd.f32 %v5421, %v5438
          %v5471 = vadd.f32 %v5422, %v5439
          %v5472 = vadd.f32 %v5423, %v5440
          %v5473 = vadd.f32 %v5424, %v5441
          %v5474 = vadd.f32 %v5425, %v5442
          %v5475 = vadd.f32 %v5426, %v5443
          %v5476 = vadd.f32 %v5427, %v5444
          %v5477 = vadd.f32 %v5428, %v5437
          %v5478 = vadd.f32 %v5429, %v5438
          %v5479 = vadd.f32 %v5430, %v5439
          %v5480 = vadd.f32 %v5431, %v5440
          %v5481 = vadd.f32 %v5432, %v5441
          %v5482 = vadd.f32 %v5433, %v5442
          %v5483 = vadd.f32 %v5434, %v5443
          %v5484 = vadd.f32 %v5435, %v5444
          %v5485 = vmax.f32 %v5453, 0.0
          %v5486 = vmax.f32 %v5454, 0.0
          %v5487 = vmax.f32 %v5455, 0.0
          %v5488 = vmax.f32 %v5456, 0.0
          %v5489 = vmax.f32 %v5457, 0.0
          %v5490 = vmax.f32 %v5458, 0.0
          %v5491 = vmax.f32 %v5459, 0.0
          %v5492 = vmax.f32 %v5460, 0.0
          %v5493 = vmax.f32 %v5461, 0.0
          %v5494 = vmax.f32 %v5462, 0.0
          %v5495 = vmax.f32 %v5463, 0.0
          %v5496 = vmax.f32 %v5464, 0.0
          %v5497 = vmax.f32 %v5465, 0.0
          %v5498 = vmax.f32 %v5466, 0.0
          %v5499 = vmax.f32 %v5467, 0.0
          %v5500 = vmax.f32 %v5468, 0.0
          %v5501 = vmax.f32 %v5469, 0.0
          %v5502 = vmax.f32 %v5470, 0.0
          %v5503 = vmax.f32 %v5471, 0.0
          %v5504 = vmax.f32 %v5472, 0.0
          %v5505 = vmax.f32 %v5473, 0.0
          %v5506 = vmax.f32 %v5474, 0.0
          %v5507 = vmax.f32 %v5475, 0.0
          %v5508 = vmax.f32 %v5476, 0.0
          %v5509 = vmax.f32 %v5477, 0.0
          %v5510 = vmax.f32 %v5478, 0.0
          %v5511 = vmax.f32 %v5479, 0.0
          %v5512 = vmax.f32 %v5480, 0.0
          %v5513 = vmax.f32 %v5481, 0.0
          %v5514 = vmax.f32 %v5482, 0.0
          %v5515 = vmax.f32 %v5483, 0.0
          %v5516 = vmax.f32 %v5484, 0.0
          %v5517 = vpack.c.bf16 %v5493, %v5485
          %v5518 = vpack.c.bf16 %v5494, %v5486
          %v5519 = vpack.c.bf16 %v5495, %v5487
          %v5520 = vpack.c.bf16 %v5496, %v5488
          %v5521 = vpack.c.bf16 %v5497, %v5489
          %v5522 = vpack.c.bf16 %v5498, %v5490
          %v5523 = vpack.c.bf16 %v5499, %v5491
          %v5524 = vpack.c.bf16 %v5500, %v5492
          %v5525 = vpack.c.bf16 %v5509, %v5501
          %v5526 = vpack.c.bf16 %v5510, %v5502
          %v5527 = vpack.c.bf16 %v5511, %v5503
          %v5528 = vpack.c.bf16 %v5512, %v5504
          %v5529 = vpack.c.bf16 %v5513, %v5505
          %v5530 = vpack.c.bf16 %v5514, %v5506
          %v5531 = vpack.c.bf16 %v5515, %v5507
          %v5532 = vpack.c.bf16 %v5516, %v5508
          %v5533 = vld [vmem:[#allocation9] sm:$0xff]
          %v5534 = vld [vmem:[#allocation9 + $0x8] sm:$0xff]
          %v5535 = vld [vmem:[#allocation9 + $0x10] sm:$0xff]
          %v5536 = vld [vmem:[#allocation9 + $0x18] sm:$0xff]
          %v5537 = vld [vmem:[#allocation9 + $0x20] sm:$0xff]
          %v5538 = vld [vmem:[#allocation9 + $0x28] sm:$0xff]
          %v5539 = vld [vmem:[#allocation9 + $0x30] sm:$0xff]
          %v5540 = vld [vmem:[#allocation9 + $0x38] sm:$0xff]
          %v5541 = vld [vmem:[#allocation9 + $0x40] sm:$0xff]
          %v5542 = vld [vmem:[#allocation9 + $0x48] sm:$0xff]
          %v5543 = vld [vmem:[#allocation9 + $0x50] sm:$0xff]
          %v5544 = vld [vmem:[#allocation9 + $0x58] sm:$0xff]
          %v5545 = vld [vmem:[#allocation9 + $0x60] sm:$0xff]
          %v5546 = vld [vmem:[#allocation9 + $0x68] sm:$0xff]
          %v5547 = vld [vmem:[#allocation9 + $0x70] sm:$0xff]
          %v5548 = vld [vmem:[#allocation9 + $0x78] sm:$0xff]
          %v5549 = vld [vmem:[#allocation9 + $0x80] sm:$0xff]
          %v5550 = vld [vmem:[#allocation9 + $0x88] sm:$0xff]
          %v5551 = vld [vmem:[#allocation9 + $0x90] sm:$0xff]
          %v5552 = vld [vmem:[#allocation9 + $0x98] sm:$0xff]
          %v5553 = vld [vmem:[#allocation9 + $0xa0] sm:$0xff]
          %v5554 = vld [vmem:[#allocation9 + $0xa8] sm:$0xff]
          %v5555 = vld [vmem:[#allocation9 + $0xb0] sm:$0xff]
          %v5556 = vld [vmem:[#allocation9 + $0xb8] sm:$0xff]
          %v5557 = vld [vmem:[#allocation9 + $0xc0] sm:$0xff]
          %v5558 = vld [vmem:[#allocation9 + $0xc8] sm:$0xff]
          %v5559 = vld [vmem:[#allocation9 + $0xd0] sm:$0xff]
          %v5560 = vld [vmem:[#allocation9 + $0xd8] sm:$0xff]
          %v5561 = vld [vmem:[#allocation9 + $0xe0] sm:$0xff]
          %v5562 = vld [vmem:[#allocation9 + $0xe8] sm:$0xff]
          %v5563 = vld [vmem:[#allocation9 + $0xf0] sm:$0xff]
          %v5564 = vld [vmem:[#allocation9 + $0xf8] sm:$0xff]
          %v5565 = vld [vmem:[#allocation9 + $0x100] sm:$0xff]
          %v5566 = vld [vmem:[#allocation9 + $0x108] sm:$0xff]
          %v5567 = vld [vmem:[#allocation9 + $0x110] sm:$0xff]
          %v5568 = vld [vmem:[#allocation9 + $0x118] sm:$0xff]
          %v5569 = vld [vmem:[#allocation9 + $0x120] sm:$0xff]
          %v5570 = vld [vmem:[#allocation9 + $0x128] sm:$0xff]
          %v5571 = vld [vmem:[#allocation9 + $0x130] sm:$0xff]
          %v5572 = vld [vmem:[#allocation9 + $0x138] sm:$0xff]
          %v5573 = vld [vmem:[#allocation9 + $0x140] sm:$0xff]
          %v5574 = vld [vmem:[#allocation9 + $0x148] sm:$0xff]
          %v5575 = vld [vmem:[#allocation9 + $0x150] sm:$0xff]
          %v5576 = vld [vmem:[#allocation9 + $0x158] sm:$0xff]
          %v5577 = vld [vmem:[#allocation9 + $0x160] sm:$0xff]
          %v5578 = vld [vmem:[#allocation9 + $0x168] sm:$0xff]
          %v5579 = vld [vmem:[#allocation9 + $0x170] sm:$0xff]
          %v5580 = vld [vmem:[#allocation9 + $0x178] sm:$0xff]
          %v5581 = vld [vmem:[#allocation9 + $0x180] sm:$0xff]
          %v5582 = vld [vmem:[#allocation9 + $0x188] sm:$0xff]
          %v5583 = vld [vmem:[#allocation9 + $0x190] sm:$0xff]
          %v5584 = vld [vmem:[#allocation9 + $0x198] sm:$0xff]
          %v5585 = vld [vmem:[#allocation9 + $0x1a0] sm:$0xff]
          %v5586 = vld [vmem:[#allocation9 + $0x1a8] sm:$0xff]
          %v5587 = vld [vmem:[#allocation9 + $0x1b0] sm:$0xff]
          %v5588 = vld [vmem:[#allocation9 + $0x1b8] sm:$0xff]
          %v5589 = vld [vmem:[#allocation9 + $0x1c0] sm:$0xff]
          %v5590 = vld [vmem:[#allocation9 + $0x1c8] sm:$0xff]
          %v5591 = vld [vmem:[#allocation9 + $0x1d0] sm:$0xff]
          %v5592 = vld [vmem:[#allocation9 + $0x1d8] sm:$0xff]
          %v5593 = vld [vmem:[#allocation9 + $0x1e0] sm:$0xff]
          %v5594 = vld [vmem:[#allocation9 + $0x1e8] sm:$0xff]
          %v5595 = vld [vmem:[#allocation9 + $0x1f0] sm:$0xff]
          %v5596 = vld [vmem:[#allocation9 + $0x1f8] sm:$0xff]
          %v5597 = vld [vmem:[#allocation9 + $0x200] sm:$0xff]
          %v5598 = vld [vmem:[#allocation9 + $0x208] sm:$0xff]
          %v5599 = vld [vmem:[#allocation9 + $0x210] sm:$0xff]
          %v5600 = vld [vmem:[#allocation9 + $0x218] sm:$0xff]
          %v5601 = vld [vmem:[#allocation9 + $0x220] sm:$0xff]
          %v5602 = vld [vmem:[#allocation9 + $0x228] sm:$0xff]
          %v5603 = vld [vmem:[#allocation9 + $0x230] sm:$0xff]
          %v5604 = vld [vmem:[#allocation9 + $0x238] sm:$0xff]
          %v5605 = vld [vmem:[#allocation9 + $0x240] sm:$0xff]
          %v5606 = vld [vmem:[#allocation9 + $0x248] sm:$0xff]
          %v5607 = vld [vmem:[#allocation9 + $0x250] sm:$0xff]
          %v5608 = vld [vmem:[#allocation9 + $0x258] sm:$0xff]
          %v5609 = vld [vmem:[#allocation9 + $0x260] sm:$0xff]
          %v5610 = vld [vmem:[#allocation9 + $0x268] sm:$0xff]
          %v5611 = vld [vmem:[#allocation9 + $0x270] sm:$0xff]
          %v5612 = vld [vmem:[#allocation9 + $0x278] sm:$0xff]
          %v5613 = vld [vmem:[#allocation9 + $0x280] sm:$0xff]
          %v5614 = vld [vmem:[#allocation9 + $0x288] sm:$0xff]
          %v5615 = vld [vmem:[#allocation9 + $0x290] sm:$0xff]
          %v5616 = vld [vmem:[#allocation9 + $0x298] sm:$0xff]
          %v5617 = vld [vmem:[#allocation9 + $0x2a0] sm:$0xff]
          %v5618 = vld [vmem:[#allocation9 + $0x2a8] sm:$0xff]
          %v5619 = vld [vmem:[#allocation9 + $0x2b0] sm:$0xff]
          %v5620 = vld [vmem:[#allocation9 + $0x2b8] sm:$0xff]
          %v5621 = vld [vmem:[#allocation9 + $0x2c0] sm:$0xff]
          %v5622 = vld [vmem:[#allocation9 + $0x2c8] sm:$0xff]
          %v5623 = vld [vmem:[#allocation9 + $0x2d0] sm:$0xff]
          %v5624 = vld [vmem:[#allocation9 + $0x2d8] sm:$0xff]
          %v5625 = vld [vmem:[#allocation9 + $0x2e0] sm:$0xff]
          %v5626 = vld [vmem:[#allocation9 + $0x2e8] sm:$0xff]
          %v5627 = vld [vmem:[#allocation9 + $0x2f0] sm:$0xff]
          %v5628 = vld [vmem:[#allocation9 + $0x2f8] sm:$0xff]
          %v5629 = vld [vmem:[#allocation9 + $0x300] sm:$0xff]
          %v5630 = vld [vmem:[#allocation9 + $0x308] sm:$0xff]
          %v5631 = vld [vmem:[#allocation9 + $0x310] sm:$0xff]
          %v5632 = vld [vmem:[#allocation9 + $0x318] sm:$0xff]
          %v5633 = vld [vmem:[#allocation9 + $0x320] sm:$0xff]
          %v5634 = vld [vmem:[#allocation9 + $0x328] sm:$0xff]
          %v5635 = vld [vmem:[#allocation9 + $0x330] sm:$0xff]
          %v5636 = vld [vmem:[#allocation9 + $0x338] sm:$0xff]
          %v5637 = vld [vmem:[#allocation9 + $0x340] sm:$0xff]
          %v5638 = vld [vmem:[#allocation9 + $0x348] sm:$0xff]
          %v5639 = vld [vmem:[#allocation9 + $0x350] sm:$0xff]
          %v5640 = vld [vmem:[#allocation9 + $0x358] sm:$0xff]
          %v5641 = vld [vmem:[#allocation9 + $0x360] sm:$0xff]
          %v5642 = vld [vmem:[#allocation9 + $0x368] sm:$0xff]
          %v5643 = vld [vmem:[#allocation9 + $0x370] sm:$0xff]
          %v5644 = vld [vmem:[#allocation9 + $0x378] sm:$0xff]
          %v5645 = vld [vmem:[#allocation9 + $0x380] sm:$0xff]
          %v5646 = vld [vmem:[#allocation9 + $0x388] sm:$0xff]
          %v5647 = vld [vmem:[#allocation9 + $0x390] sm:$0xff]
          %v5648 = vld [vmem:[#allocation9 + $0x398] sm:$0xff]
          %v5649 = vld [vmem:[#allocation9 + $0x3a0] sm:$0xff]
          %v5650 = vld [vmem:[#allocation9 + $0x3a8] sm:$0xff]
          %v5651 = vld [vmem:[#allocation9 + $0x3b0] sm:$0xff]
          %v5652 = vld [vmem:[#allocation9 + $0x3b8] sm:$0xff]
          %v5653 = vld [vmem:[#allocation9 + $0x3c0] sm:$0xff]
          %v5654 = vld [vmem:[#allocation9 + $0x3c8] sm:$0xff]
          %v5655 = vld [vmem:[#allocation9 + $0x3d0] sm:$0xff]
          %v5656 = vld [vmem:[#allocation9 + $0x3d8] sm:$0xff]
          %v5657 = vld [vmem:[#allocation9 + $0x3e0] sm:$0xff]
          %v5658 = vld [vmem:[#allocation9 + $0x3e8] sm:$0xff]
          %v5659 = vld [vmem:[#allocation9 + $0x3f0] sm:$0xff]
          %v5660 = vld [vmem:[#allocation9 + $0x3f8] sm:$0xff]
          %v5661 = vld [vmem:[#allocation9 + $0x400] sm:$0xff]
          %v5662 = vld [vmem:[#allocation9 + $0x408] sm:$0xff]
          %v5663 = vld [vmem:[#allocation9 + $0x410] sm:$0xff]
          %v5664 = vld [vmem:[#allocation9 + $0x418] sm:$0xff]
          %v5665 = vld [vmem:[#allocation9 + $0x420] sm:$0xff]
          %v5666 = vld [vmem:[#allocation9 + $0x428] sm:$0xff]
          %v5667 = vld [vmem:[#allocation9 + $0x430] sm:$0xff]
          %v5668 = vld [vmem:[#allocation9 + $0x438] sm:$0xff]
          %v5669 = vld [vmem:[#allocation9 + $0x440] sm:$0xff]
          %v5670 = vld [vmem:[#allocation9 + $0x448] sm:$0xff]
          %v5671 = vld [vmem:[#allocation9 + $0x450] sm:$0xff]
          %v5672 = vld [vmem:[#allocation9 + $0x458] sm:$0xff]
          %v5673 = vld [vmem:[#allocation9 + $0x460] sm:$0xff]
          %v5674 = vld [vmem:[#allocation9 + $0x468] sm:$0xff]
          %v5675 = vld [vmem:[#allocation9 + $0x470] sm:$0xff]
          %v5676 = vld [vmem:[#allocation9 + $0x478] sm:$0xff]
          %v5677 = vld [vmem:[#allocation9 + $0x480] sm:$0xff]
          %v5678 = vld [vmem:[#allocation9 + $0x488] sm:$0xff]
          %v5679 = vld [vmem:[#allocation9 + $0x490] sm:$0xff]
          %v5680 = vld [vmem:[#allocation9 + $0x498] sm:$0xff]
          %v5681 = vld [vmem:[#allocation9 + $0x4a0] sm:$0xff]
          %v5682 = vld [vmem:[#allocation9 + $0x4a8] sm:$0xff]
          %v5683 = vld [vmem:[#allocation9 + $0x4b0] sm:$0xff]
          %v5684 = vld [vmem:[#allocation9 + $0x4b8] sm:$0xff]
          %v5685 = vld [vmem:[#allocation9 + $0x4c0] sm:$0xff]
          %v5686 = vld [vmem:[#allocation9 + $0x4c8] sm:$0xff]
          %v5687 = vld [vmem:[#allocation9 + $0x4d0] sm:$0xff]
          %v5688 = vld [vmem:[#allocation9 + $0x4d8] sm:$0xff]
          %v5689 = vld [vmem:[#allocation9 + $0x4e0] sm:$0xff]
          %v5690 = vld [vmem:[#allocation9 + $0x4e8] sm:$0xff]
          %v5691 = vld [vmem:[#allocation9 + $0x4f0] sm:$0xff]
          %v5692 = vld [vmem:[#allocation9 + $0x4f8] sm:$0xff]
          %v5693 = vld [vmem:[#allocation9 + $0x500] sm:$0xff]
          %v5694 = vld [vmem:[#allocation9 + $0x508] sm:$0xff]
          %v5695 = vld [vmem:[#allocation9 + $0x510] sm:$0xff]
          %v5696 = vld [vmem:[#allocation9 + $0x518] sm:$0xff]
          %v5697 = vld [vmem:[#allocation9 + $0x520] sm:$0xff]
          %v5698 = vld [vmem:[#allocation9 + $0x528] sm:$0xff]
          %v5699 = vld [vmem:[#allocation9 + $0x530] sm:$0xff]
          %v5700 = vld [vmem:[#allocation9 + $0x538] sm:$0xff]
          %v5701 = vld [vmem:[#allocation9 + $0x540] sm:$0xff]
          %v5702 = vld [vmem:[#allocation9 + $0x548] sm:$0xff]
          %v5703 = vld [vmem:[#allocation9 + $0x550] sm:$0xff]
          %v5704 = vld [vmem:[#allocation9 + $0x558] sm:$0xff]
          %v5705 = vld [vmem:[#allocation9 + $0x560] sm:$0xff]
          %v5706 = vld [vmem:[#allocation9 + $0x568] sm:$0xff]
          %v5707 = vld [vmem:[#allocation9 + $0x570] sm:$0xff]
          %v5708 = vld [vmem:[#allocation9 + $0x578] sm:$0xff]
          %v5709 = vld [vmem:[#allocation9 + $0x580] sm:$0xff]
          %v5710 = vld [vmem:[#allocation9 + $0x588] sm:$0xff]
          %v5711 = vld [vmem:[#allocation9 + $0x590] sm:$0xff]
          %v5712 = vld [vmem:[#allocation9 + $0x598] sm:$0xff]
          %v5713 = vld [vmem:[#allocation9 + $0x5a0] sm:$0xff]
          %v5714 = vld [vmem:[#allocation9 + $0x5a8] sm:$0xff]
          %v5715 = vld [vmem:[#allocation9 + $0x5b0] sm:$0xff]
          %v5716 = vld [vmem:[#allocation9 + $0x5b8] sm:$0xff]
          %v5717 = vld [vmem:[#allocation9 + $0x5c0] sm:$0xff]
          %v5718 = vld [vmem:[#allocation9 + $0x5c8] sm:$0xff]
          %v5719 = vld [vmem:[#allocation9 + $0x5d0] sm:$0xff]
          %v5720 = vld [vmem:[#allocation9 + $0x5d8] sm:$0xff]
          %v5721 = vld [vmem:[#allocation9 + $0x5e0] sm:$0xff]
          %v5722 = vld [vmem:[#allocation9 + $0x5e8] sm:$0xff]
          %v5723 = vld [vmem:[#allocation9 + $0x5f0] sm:$0xff]
          %v5724 = vld [vmem:[#allocation9 + $0x5f8] sm:$0xff]
          %v5725 = vld [vmem:[#allocation9 + $0x600] sm:$0xff]
          %v5726 = vld [vmem:[#allocation9 + $0x608] sm:$0xff]
          %v5727 = vld [vmem:[#allocation9 + $0x610] sm:$0xff]
          %v5728 = vld [vmem:[#allocation9 + $0x618] sm:$0xff]
          %v5729 = vld [vmem:[#allocation9 + $0x620] sm:$0xff]
          %v5730 = vld [vmem:[#allocation9 + $0x628] sm:$0xff]
          %v5731 = vld [vmem:[#allocation9 + $0x630] sm:$0xff]
          %v5732 = vld [vmem:[#allocation9 + $0x638] sm:$0xff]
          %v5733 = vld [vmem:[#allocation9 + $0x640] sm:$0xff]
          %v5734 = vld [vmem:[#allocation9 + $0x648] sm:$0xff]
          %v5735 = vld [vmem:[#allocation9 + $0x650] sm:$0xff]
          %v5736 = vld [vmem:[#allocation9 + $0x658] sm:$0xff]
          %v5737 = vld [vmem:[#allocation9 + $0x660] sm:$0xff]
          %v5738 = vld [vmem:[#allocation9 + $0x668] sm:$0xff]
          %v5739 = vld [vmem:[#allocation9 + $0x670] sm:$0xff]
          %v5740 = vld [vmem:[#allocation9 + $0x678] sm:$0xff]
          %v5741 = vld [vmem:[#allocation9 + $0x680] sm:$0xff]
          %v5742 = vld [vmem:[#allocation9 + $0x688] sm:$0xff]
          %v5743 = vld [vmem:[#allocation9 + $0x690] sm:$0xff]
          %v5744 = vld [vmem:[#allocation9 + $0x698] sm:$0xff]
          %v5745 = vld [vmem:[#allocation9 + $0x6a0] sm:$0xff]
          %v5746 = vld [vmem:[#allocation9 + $0x6a8] sm:$0xff]
          %v5747 = vld [vmem:[#allocation9 + $0x6b0] sm:$0xff]
          %v5748 = vld [vmem:[#allocation9 + $0x6b8] sm:$0xff]
          %v5749 = vld [vmem:[#allocation9 + $0x6c0] sm:$0xff]
          %v5750 = vld [vmem:[#allocation9 + $0x6c8] sm:$0xff]
          %v5751 = vld [vmem:[#allocation9 + $0x6d0] sm:$0xff]
          %v5752 = vld [vmem:[#allocation9 + $0x6d8] sm:$0xff]
          %v5753 = vld [vmem:[#allocation9 + $0x6e0] sm:$0xff]
          %v5754 = vld [vmem:[#allocation9 + $0x6e8] sm:$0xff]
          %v5755 = vld [vmem:[#allocation9 + $0x6f0] sm:$0xff]
          %v5756 = vld [vmem:[#allocation9 + $0x6f8] sm:$0xff]
          %v5757 = vld [vmem:[#allocation9 + $0x700] sm:$0xff]
          %v5758 = vld [vmem:[#allocation9 + $0x708] sm:$0xff]
          %v5759 = vld [vmem:[#allocation9 + $0x710] sm:$0xff]
          %v5760 = vld [vmem:[#allocation9 + $0x718] sm:$0xff]
          %v5761 = vld [vmem:[#allocation9 + $0x720] sm:$0xff]
          %v5762 = vld [vmem:[#allocation9 + $0x728] sm:$0xff]
          %v5763 = vld [vmem:[#allocation9 + $0x730] sm:$0xff]
          %v5764 = vld [vmem:[#allocation9 + $0x738] sm:$0xff]
          %v5765 = vld [vmem:[#allocation9 + $0x740] sm:$0xff]
          %v5766 = vld [vmem:[#allocation9 + $0x748] sm:$0xff]
          %v5767 = vld [vmem:[#allocation9 + $0x750] sm:$0xff]
          %v5768 = vld [vmem:[#allocation9 + $0x758] sm:$0xff]
          %v5769 = vld [vmem:[#allocation9 + $0x760] sm:$0xff]
          %v5770 = vld [vmem:[#allocation9 + $0x768] sm:$0xff]
          %v5771 = vld [vmem:[#allocation9 + $0x770] sm:$0xff]
          %v5772 = vld [vmem:[#allocation9 + $0x778] sm:$0xff]
          %v5773 = vld [vmem:[#allocation9 + $0x780] sm:$0xff]
          %v5774 = vld [vmem:[#allocation9 + $0x788] sm:$0xff]
          %v5775 = vld [vmem:[#allocation9 + $0x790] sm:$0xff]
          %v5776 = vld [vmem:[#allocation9 + $0x798] sm:$0xff]
          %v5777 = vld [vmem:[#allocation9 + $0x7a0] sm:$0xff]
          %v5778 = vld [vmem:[#allocation9 + $0x7a8] sm:$0xff]
          %v5779 = vld [vmem:[#allocation9 + $0x7b0] sm:$0xff]
          %v5780 = vld [vmem:[#allocation9 + $0x7b8] sm:$0xff]
          %v5781 = vld [vmem:[#allocation9 + $0x7c0] sm:$0xff]
          %v5782 = vld [vmem:[#allocation9 + $0x7c8] sm:$0xff]
          %v5783 = vld [vmem:[#allocation9 + $0x7d0] sm:$0xff]
          %v5784 = vld [vmem:[#allocation9 + $0x7d8] sm:$0xff]
          %v5785 = vld [vmem:[#allocation9 + $0x7e0] sm:$0xff]
          %v5786 = vld [vmem:[#allocation9 + $0x7e8] sm:$0xff]
          %v5787 = vld [vmem:[#allocation9 + $0x7f0] sm:$0xff]
          %v5788 = vld [vmem:[#allocation9 + $0x7f8] sm:$0xff]
          %v5789 = vld [vmem:[#allocation9 + $0x800] sm:$0xff]
          %v5790 = vld [vmem:[#allocation9 + $0x808] sm:$0xff]
          %v5791 = vld [vmem:[#allocation9 + $0x810] sm:$0xff]
          %v5792 = vld [vmem:[#allocation9 + $0x818] sm:$0xff]
          %v5793 = vld [vmem:[#allocation9 + $0x820] sm:$0xff]
          %v5794 = vld [vmem:[#allocation9 + $0x828] sm:$0xff]
          %v5795 = vld [vmem:[#allocation9 + $0x830] sm:$0xff]
          %v5796 = vld [vmem:[#allocation9 + $0x838] sm:$0xff]
          %v5797 = vld [vmem:[#allocation9 + $0x840] sm:$0xff]
          %v5798 = vld [vmem:[#allocation9 + $0x848] sm:$0xff]
          %v5799 = vld [vmem:[#allocation9 + $0x850] sm:$0xff]
          %v5800 = vld [vmem:[#allocation9 + $0x858] sm:$0xff]
          %v5801 = vld [vmem:[#allocation9 + $0x860] sm:$0xff]
          %v5802 = vld [vmem:[#allocation9 + $0x868] sm:$0xff]
          %v5803 = vld [vmem:[#allocation9 + $0x870] sm:$0xff]
          %v5804 = vld [vmem:[#allocation9 + $0x878] sm:$0xff]
          %v5805 = vld [vmem:[#allocation9 + $0x880] sm:$0xff]
          %v5806 = vld [vmem:[#allocation9 + $0x888] sm:$0xff]
          %v5807 = vld [vmem:[#allocation9 + $0x890] sm:$0xff]
          %v5808 = vld [vmem:[#allocation9 + $0x898] sm:$0xff]
          %v5809 = vld [vmem:[#allocation9 + $0x8a0] sm:$0xff]
          %v5810 = vld [vmem:[#allocation9 + $0x8a8] sm:$0xff]
          %v5811 = vld [vmem:[#allocation9 + $0x8b0] sm:$0xff]
          %v5812 = vld [vmem:[#allocation9 + $0x8b8] sm:$0xff]
          %v5813 = vld [vmem:[#allocation9 + $0x8c0] sm:$0xff]
          %v5814 = vld [vmem:[#allocation9 + $0x8c8] sm:$0xff]
          %v5815 = vld [vmem:[#allocation9 + $0x8d0] sm:$0xff]
          %v5816 = vld [vmem:[#allocation9 + $0x8d8] sm:$0xff]
          %v5817 = vld [vmem:[#allocation9 + $0x8e0] sm:$0xff]
          %v5818 = vld [vmem:[#allocation9 + $0x8e8] sm:$0xff]
          %v5819 = vld [vmem:[#allocation9 + $0x8f0] sm:$0xff]
          %v5820 = vld [vmem:[#allocation9 + $0x8f8] sm:$0xff]
          %v5821 = vld [vmem:[#allocation9 + $0x900] sm:$0xff]
          %v5822 = vld [vmem:[#allocation9 + $0x908] sm:$0xff]
          %v5823 = vld [vmem:[#allocation9 + $0x910] sm:$0xff]
          %v5824 = vld [vmem:[#allocation9 + $0x918] sm:$0xff]
          %v5825 = vld [vmem:[#allocation9 + $0x920] sm:$0xff]
          %v5826 = vld [vmem:[#allocation9 + $0x928] sm:$0xff]
          %v5827 = vld [vmem:[#allocation9 + $0x930] sm:$0xff]
          %v5828 = vld [vmem:[#allocation9 + $0x938] sm:$0xff]
          %v5829 = vld [vmem:[#allocation9 + $0x940] sm:$0xff]
          %v5830 = vld [vmem:[#allocation9 + $0x948] sm:$0xff]
          %v5831 = vld [vmem:[#allocation9 + $0x950] sm:$0xff]
          %v5832 = vld [vmem:[#allocation9 + $0x958] sm:$0xff]
          %v5833 = vld [vmem:[#allocation9 + $0x960] sm:$0xff]
          %v5834 = vld [vmem:[#allocation9 + $0x968] sm:$0xff]
          %v5835 = vld [vmem:[#allocation9 + $0x970] sm:$0xff]
          %v5836 = vld [vmem:[#allocation9 + $0x978] sm:$0xff]
          %v5837 = vld [vmem:[#allocation9 + $0x980] sm:$0xff]
          %v5838 = vld [vmem:[#allocation9 + $0x988] sm:$0xff]
          %v5839 = vld [vmem:[#allocation9 + $0x990] sm:$0xff]
          %v5840 = vld [vmem:[#allocation9 + $0x998] sm:$0xff]
          %v5841 = vld [vmem:[#allocation9 + $0x9a0] sm:$0xff]
          %v5842 = vld [vmem:[#allocation9 + $0x9a8] sm:$0xff]
          %v5843 = vld [vmem:[#allocation9 + $0x9b0] sm:$0xff]
          %v5844 = vld [vmem:[#allocation9 + $0x9b8] sm:$0xff]
          %v5845 = vld [vmem:[#allocation9 + $0x9c0] sm:$0xff]
          %v5846 = vld [vmem:[#allocation9 + $0x9c8] sm:$0xff]
          %v5847 = vld [vmem:[#allocation9 + $0x9d0] sm:$0xff]
          %v5848 = vld [vmem:[#allocation9 + $0x9d8] sm:$0xff]
          %v5849 = vld [vmem:[#allocation9 + $0x9e0] sm:$0xff]
          %v5850 = vld [vmem:[#allocation9 + $0x9e8] sm:$0xff]
          %v5851 = vld [vmem:[#allocation9 + $0x9f0] sm:$0xff]
          %v5852 = vld [vmem:[#allocation9 + $0x9f8] sm:$0xff]
          %v5853 = vld [vmem:[#allocation9 + $0xa00] sm:$0xff]
          %v5854 = vld [vmem:[#allocation9 + $0xa08] sm:$0xff]
          %v5855 = vld [vmem:[#allocation9 + $0xa10] sm:$0xff]
          %v5856 = vld [vmem:[#allocation9 + $0xa18] sm:$0xff]
          %v5857 = vld [vmem:[#allocation9 + $0xa20] sm:$0xff]
          %v5858 = vld [vmem:[#allocation9 + $0xa28] sm:$0xff]
          %v5859 = vld [vmem:[#allocation9 + $0xa30] sm:$0xff]
          %v5860 = vld [vmem:[#allocation9 + $0xa38] sm:$0xff]
          %v5861 = vld [vmem:[#allocation9 + $0xa40] sm:$0xff]
          %v5862 = vld [vmem:[#allocation9 + $0xa48] sm:$0xff]
          %v5863 = vld [vmem:[#allocation9 + $0xa50] sm:$0xff]
          %v5864 = vld [vmem:[#allocation9 + $0xa58] sm:$0xff]
          %v5865 = vld [vmem:[#allocation9 + $0xa60] sm:$0xff]
          %v5866 = vld [vmem:[#allocation9 + $0xa68] sm:$0xff]
          %v5867 = vld [vmem:[#allocation9 + $0xa70] sm:$0xff]
          %v5868 = vld [vmem:[#allocation9 + $0xa78] sm:$0xff]
          %v5869 = vld [vmem:[#allocation9 + $0xa80] sm:$0xff]
          %v5870 = vld [vmem:[#allocation9 + $0xa88] sm:$0xff]
          %v5871 = vld [vmem:[#allocation9 + $0xa90] sm:$0xff]
          %v5872 = vld [vmem:[#allocation9 + $0xa98] sm:$0xff]
          %v5873 = vld [vmem:[#allocation9 + $0xaa0] sm:$0xff]
          %v5874 = vld [vmem:[#allocation9 + $0xaa8] sm:$0xff]
          %v5875 = vld [vmem:[#allocation9 + $0xab0] sm:$0xff]
          %v5876 = vld [vmem:[#allocation9 + $0xab8] sm:$0xff]
          %v5877 = vld [vmem:[#allocation9 + $0xac0] sm:$0xff]
          %v5878 = vld [vmem:[#allocation9 + $0xac8] sm:$0xff]
          %v5879 = vld [vmem:[#allocation9 + $0xad0] sm:$0xff]
          %v5880 = vld [vmem:[#allocation9 + $0xad8] sm:$0xff]
          %v5881 = vld [vmem:[#allocation9 + $0xae0] sm:$0xff]
          %v5882 = vld [vmem:[#allocation9 + $0xae8] sm:$0xff]
          %v5883 = vld [vmem:[#allocation9 + $0xaf0] sm:$0xff]
          %v5884 = vld [vmem:[#allocation9 + $0xaf8] sm:$0xff]
          %v5885 = vld [vmem:[#allocation9 + $0xb00] sm:$0xff]
          %v5886 = vld [vmem:[#allocation9 + $0xb08] sm:$0xff]
          %v5887 = vld [vmem:[#allocation9 + $0xb10] sm:$0xff]
          %v5888 = vld [vmem:[#allocation9 + $0xb18] sm:$0xff]
          %v5889 = vld [vmem:[#allocation9 + $0xb20] sm:$0xff]
          %v5890 = vld [vmem:[#allocation9 + $0xb28] sm:$0xff]
          %v5891 = vld [vmem:[#allocation9 + $0xb30] sm:$0xff]
          %v5892 = vld [vmem:[#allocation9 + $0xb38] sm:$0xff]
          %v5893 = vld [vmem:[#allocation9 + $0xb40] sm:$0xff]
          %v5894 = vld [vmem:[#allocation9 + $0xb48] sm:$0xff]
          %v5895 = vld [vmem:[#allocation9 + $0xb50] sm:$0xff]
          %v5896 = vld [vmem:[#allocation9 + $0xb58] sm:$0xff]
          %v5897 = vld [vmem:[#allocation9 + $0xb60] sm:$0xff]
          %v5898 = vld [vmem:[#allocation9 + $0xb68] sm:$0xff]
          %v5899 = vld [vmem:[#allocation9 + $0xb70] sm:$0xff]
          %v5900 = vld [vmem:[#allocation9 + $0xb78] sm:$0xff]
          %v5901 = vld [vmem:[#allocation9 + $0xb80] sm:$0xff]
          %v5902 = vld [vmem:[#allocation9 + $0xb88] sm:$0xff]
          %v5903 = vld [vmem:[#allocation9 + $0xb90] sm:$0xff]
          %v5904 = vld [vmem:[#allocation9 + $0xb98] sm:$0xff]
          %v5905 = vld [vmem:[#allocation9 + $0xba0] sm:$0xff]
          %v5906 = vld [vmem:[#allocation9 + $0xba8] sm:$0xff]
          %v5907 = vld [vmem:[#allocation9 + $0xbb0] sm:$0xff]
          %v5908 = vld [vmem:[#allocation9 + $0xbb8] sm:$0xff]
          %v5909 = vld [vmem:[#allocation9 + $0xbc0] sm:$0xff]
          %v5910 = vld [vmem:[#allocation9 + $0xbc8] sm:$0xff]
          %v5911 = vld [vmem:[#allocation9 + $0xbd0] sm:$0xff]
          %v5912 = vld [vmem:[#allocation9 + $0xbd8] sm:$0xff]
          %v5913 = vld [vmem:[#allocation9 + $0xbe0] sm:$0xff]
          %v5914 = vld [vmem:[#allocation9 + $0xbe8] sm:$0xff]
          %v5915 = vld [vmem:[#allocation9 + $0xbf0] sm:$0xff]
          %v5916 = vld [vmem:[#allocation9 + $0xbf8] sm:$0xff]
          %v5917 = vld [vmem:[#allocation9 + $0xc00] sm:$0xff]
          %v5918 = vld [vmem:[#allocation9 + $0xc08] sm:$0xff]
          %v5919 = vld [vmem:[#allocation9 + $0xc10] sm:$0xff]
          %v5920 = vld [vmem:[#allocation9 + $0xc18] sm:$0xff]
          %v5921 = vld [vmem:[#allocation9 + $0xc20] sm:$0xff]
          %v5922 = vld [vmem:[#allocation9 + $0xc28] sm:$0xff]
          %v5923 = vld [vmem:[#allocation9 + $0xc30] sm:$0xff]
          %v5924 = vld [vmem:[#allocation9 + $0xc38] sm:$0xff]
          %v5925 = vld [vmem:[#allocation9 + $0xc40] sm:$0xff]
          %v5926 = vld [vmem:[#allocation9 + $0xc48] sm:$0xff]
          %v5927 = vld [vmem:[#allocation9 + $0xc50] sm:$0xff]
          %v5928 = vld [vmem:[#allocation9 + $0xc58] sm:$0xff]
          %v5929 = vld [vmem:[#allocation9 + $0xc60] sm:$0xff]
          %v5930 = vld [vmem:[#allocation9 + $0xc68] sm:$0xff]
          %v5931 = vld [vmem:[#allocation9 + $0xc70] sm:$0xff]
          %v5932 = vld [vmem:[#allocation9 + $0xc78] sm:$0xff]
          %v5933 = vld [vmem:[#allocation9 + $0xc80] sm:$0xff]
          %v5934 = vld [vmem:[#allocation9 + $0xc88] sm:$0xff]
          %v5935 = vld [vmem:[#allocation9 + $0xc90] sm:$0xff]
          %v5936 = vld [vmem:[#allocation9 + $0xc98] sm:$0xff]
          %v5937 = vld [vmem:[#allocation9 + $0xca0] sm:$0xff]
          %v5938 = vld [vmem:[#allocation9 + $0xca8] sm:$0xff]
          %v5939 = vld [vmem:[#allocation9 + $0xcb0] sm:$0xff]
          %v5940 = vld [vmem:[#allocation9 + $0xcb8] sm:$0xff]
          %v5941 = vld [vmem:[#allocation9 + $0xcc0] sm:$0xff]
          %v5942 = vld [vmem:[#allocation9 + $0xcc8] sm:$0xff]
          %v5943 = vld [vmem:[#allocation9 + $0xcd0] sm:$0xff]
          %v5944 = vld [vmem:[#allocation9 + $0xcd8] sm:$0xff]
          %v5945 = vld [vmem:[#allocation9 + $0xce0] sm:$0xff]
          %v5946 = vld [vmem:[#allocation9 + $0xce8] sm:$0xff]
          %v5947 = vld [vmem:[#allocation9 + $0xcf0] sm:$0xff]
          %v5948 = vld [vmem:[#allocation9 + $0xcf8] sm:$0xff]
          %v5949 = vld [vmem:[#allocation9 + $0xd00] sm:$0xff]
          %v5950 = vld [vmem:[#allocation9 + $0xd08] sm:$0xff]
          %v5951 = vld [vmem:[#allocation9 + $0xd10] sm:$0xff]
          %v5952 = vld [vmem:[#allocation9 + $0xd18] sm:$0xff]
          %v5953 = vld [vmem:[#allocation9 + $0xd20] sm:$0xff]
          %v5954 = vld [vmem:[#allocation9 + $0xd28] sm:$0xff]
          %v5955 = vld [vmem:[#allocation9 + $0xd30] sm:$0xff]
          %v5956 = vld [vmem:[#allocation9 + $0xd38] sm:$0xff]
          %v5957 = vld [vmem:[#allocation9 + $0xd40] sm:$0xff]
          %v5958 = vld [vmem:[#allocation9 + $0xd48] sm:$0xff]
          %v5959 = vld [vmem:[#allocation9 + $0xd50] sm:$0xff]
          %v5960 = vld [vmem:[#allocation9 + $0xd58] sm:$0xff]
          %v5961 = vld [vmem:[#allocation9 + $0xd60] sm:$0xff]
          %v5962 = vld [vmem:[#allocation9 + $0xd68] sm:$0xff]
          %v5963 = vld [vmem:[#allocation9 + $0xd70] sm:$0xff]
          %v5964 = vld [vmem:[#allocation9 + $0xd78] sm:$0xff]
          %v5965 = vld [vmem:[#allocation9 + $0xd80] sm:$0xff]
          %v5966 = vld [vmem:[#allocation9 + $0xd88] sm:$0xff]
          %v5967 = vld [vmem:[#allocation9 + $0xd90] sm:$0xff]
          %v5968 = vld [vmem:[#allocation9 + $0xd98] sm:$0xff]
          %v5969 = vld [vmem:[#allocation9 + $0xda0] sm:$0xff]
          %v5970 = vld [vmem:[#allocation9 + $0xda8] sm:$0xff]
          %v5971 = vld [vmem:[#allocation9 + $0xdb0] sm:$0xff]
          %v5972 = vld [vmem:[#allocation9 + $0xdb8] sm:$0xff]
          %v5973 = vld [vmem:[#allocation9 + $0xdc0] sm:$0xff]
          %v5974 = vld [vmem:[#allocation9 + $0xdc8] sm:$0xff]
          %v5975 = vld [vmem:[#allocation9 + $0xdd0] sm:$0xff]
          %v5976 = vld [vmem:[#allocation9 + $0xdd8] sm:$0xff]
          %v5977 = vld [vmem:[#allocation9 + $0xde0] sm:$0xff]
          %v5978 = vld [vmem:[#allocation9 + $0xde8] sm:$0xff]
          %v5979 = vld [vmem:[#allocation9 + $0xdf0] sm:$0xff]
          %v5980 = vld [vmem:[#allocation9 + $0xdf8] sm:$0xff]
          %v5981 = vld [vmem:[#allocation9 + $0xe00] sm:$0xff]
          %v5982 = vld [vmem:[#allocation9 + $0xe08] sm:$0xff]
          %v5983 = vld [vmem:[#allocation9 + $0xe10] sm:$0xff]
          %v5984 = vld [vmem:[#allocation9 + $0xe18] sm:$0xff]
          %v5985 = vld [vmem:[#allocation9 + $0xe20] sm:$0xff]
          %v5986 = vld [vmem:[#allocation9 + $0xe28] sm:$0xff]
          %v5987 = vld [vmem:[#allocation9 + $0xe30] sm:$0xff]
          %v5988 = vld [vmem:[#allocation9 + $0xe38] sm:$0xff]
          %v5989 = vld [vmem:[#allocation9 + $0xe40] sm:$0xff]
          %v5990 = vld [vmem:[#allocation9 + $0xe48] sm:$0xff]
          %v5991 = vld [vmem:[#allocation9 + $0xe50] sm:$0xff]
          %v5992 = vld [vmem:[#allocation9 + $0xe58] sm:$0xff]
          %v5993 = vld [vmem:[#allocation9 + $0xe60] sm:$0xff]
          %v5994 = vld [vmem:[#allocation9 + $0xe68] sm:$0xff]
          %v5995 = vld [vmem:[#allocation9 + $0xe70] sm:$0xff]
          %v5996 = vld [vmem:[#allocation9 + $0xe78] sm:$0xff]
          %v5997 = vld [vmem:[#allocation9 + $0xe80] sm:$0xff]
          %v5998 = vld [vmem:[#allocation9 + $0xe88] sm:$0xff]
          %v5999 = vld [vmem:[#allocation9 + $0xe90] sm:$0xff]
          %v6000 = vld [vmem:[#allocation9 + $0xe98] sm:$0xff]
          %v6001 = vld [vmem:[#allocation9 + $0xea0] sm:$0xff]
          %v6002 = vld [vmem:[#allocation9 + $0xea8] sm:$0xff]
          %v6003 = vld [vmem:[#allocation9 + $0xeb0] sm:$0xff]
          %v6004 = vld [vmem:[#allocation9 + $0xeb8] sm:$0xff]
          %v6005 = vld [vmem:[#allocation9 + $0xec0] sm:$0xff]
          %v6006 = vld [vmem:[#allocation9 + $0xec8] sm:$0xff]
          %v6007 = vld [vmem:[#allocation9 + $0xed0] sm:$0xff]
          %v6008 = vld [vmem:[#allocation9 + $0xed8] sm:$0xff]
          %v6009 = vld [vmem:[#allocation9 + $0xee0] sm:$0xff]
          %v6010 = vld [vmem:[#allocation9 + $0xee8] sm:$0xff]
          %v6011 = vld [vmem:[#allocation9 + $0xef0] sm:$0xff]
          %v6012 = vld [vmem:[#allocation9 + $0xef8] sm:$0xff]
          %v6013 = vld [vmem:[#allocation9 + $0xf00] sm:$0xff]
          %v6014 = vld [vmem:[#allocation9 + $0xf08] sm:$0xff]
          %v6015 = vld [vmem:[#allocation9 + $0xf10] sm:$0xff]
          %v6016 = vld [vmem:[#allocation9 + $0xf18] sm:$0xff]
          %v6017 = vld [vmem:[#allocation9 + $0xf20] sm:$0xff]
          %v6018 = vld [vmem:[#allocation9 + $0xf28] sm:$0xff]
          %v6019 = vld [vmem:[#allocation9 + $0xf30] sm:$0xff]
          %v6020 = vld [vmem:[#allocation9 + $0xf38] sm:$0xff]
          %v6021 = vld [vmem:[#allocation9 + $0xf40] sm:$0xff]
          %v6022 = vld [vmem:[#allocation9 + $0xf48] sm:$0xff]
          %v6023 = vld [vmem:[#allocation9 + $0xf50] sm:$0xff]
          %v6024 = vld [vmem:[#allocation9 + $0xf58] sm:$0xff]
          %v6025 = vld [vmem:[#allocation9 + $0xf60] sm:$0xff]
          %v6026 = vld [vmem:[#allocation9 + $0xf68] sm:$0xff]
          %v6027 = vld [vmem:[#allocation9 + $0xf70] sm:$0xff]
          %v6028 = vld [vmem:[#allocation9 + $0xf78] sm:$0xff]
          %v6029 = vld [vmem:[#allocation9 + $0xf80] sm:$0xff]
          %v6030 = vld [vmem:[#allocation9 + $0xf88] sm:$0xff]
          %v6031 = vld [vmem:[#allocation9 + $0xf90] sm:$0xff]
          %v6032 = vld [vmem:[#allocation9 + $0xf98] sm:$0xff]
          %v6033 = vld [vmem:[#allocation9 + $0xfa0] sm:$0xff]
          %v6034 = vld [vmem:[#allocation9 + $0xfa8] sm:$0xff]
          %v6035 = vld [vmem:[#allocation9 + $0xfb0] sm:$0xff]
          %v6036 = vld [vmem:[#allocation9 + $0xfb8] sm:$0xff]
          %v6037 = vld [vmem:[#allocation9 + $0xfc0] sm:$0xff]
          %v6038 = vld [vmem:[#allocation9 + $0xfc8] sm:$0xff]
          %v6039 = vld [vmem:[#allocation9 + $0xfd0] sm:$0xff]
          %v6040 = vld [vmem:[#allocation9 + $0xfd8] sm:$0xff]
          %v6041 = vld [vmem:[#allocation9 + $0xfe0] sm:$0xff]
          %v6042 = vld [vmem:[#allocation9 + $0xfe8] sm:$0xff]
          %v6043 = vld [vmem:[#allocation9 + $0xff0] sm:$0xff]
          %v6044 = vld [vmem:[#allocation9 + $0xff8] sm:$0xff]
          %v6046 = vperm.slane %v4874, 0
          %v6047 = vperm.slane %v4874, 1
          %v6048 = vperm.slane %v4874, 2
          %v6049 = vperm.slane %v4874, 3
          %v6050 = vperm.slane %v4874, 4
          %v6051 = vperm.slane %v4874, 5
          %v6052 = vperm.slane %v4874, 6
          %v6053 = vperm.slane %v4874, 7
          %v6574 = vunpack.c.l.b16 %v5533
          %v6575 = vunpack.c.h.b16 %v5533
          %v6576 = vunpack.c.l.b16 %v5534
          %v6577 = vunpack.c.h.b16 %v5534
          %v6578 = vunpack.c.l.b16 %v5535
          %v6579 = vunpack.c.h.b16 %v5535
          %v6580 = vunpack.c.l.b16 %v5536
          %v6581 = vunpack.c.h.b16 %v5536
          %v6582 = vunpack.c.l.b16 %v5537
          %v6583 = vunpack.c.h.b16 %v5537
          %v6584 = vunpack.c.l.b16 %v5538
          %v6585 = vunpack.c.h.b16 %v5538
          %v6586 = vunpack.c.l.b16 %v5539
          %v6587 = vunpack.c.h.b16 %v5539
          %v6588 = vunpack.c.l.b16 %v5540
          %v6589 = vunpack.c.h.b16 %v5540
          %v6590 = vunpack.c.l.b16 %v5541
          %v6591 = vunpack.c.h.b16 %v5541
          %v6592 = vunpack.c.l.b16 %v5542
          %v6593 = vunpack.c.h.b16 %v5542
          %v6594 = vunpack.c.l.b16 %v5543
          %v6595 = vunpack.c.h.b16 %v5543
          %v6596 = vunpack.c.l.b16 %v5544
          %v6597 = vunpack.c.h.b16 %v5544
          %v6598 = vunpack.c.l.b16 %v5545
          %v6599 = vunpack.c.h.b16 %v5545
          %v6600 = vunpack.c.l.b16 %v5546
          %v6601 = vunpack.c.h.b16 %v5546
          %v6602 = vunpack.c.l.b16 %v5547
          %v6603 = vunpack.c.h.b16 %v5547
          %v6604 = vunpack.c.l.b16 %v5548
          %v6605 = vunpack.c.h.b16 %v5548
          %v6606 = vunpack.c.l.b16 %v5549
          %v6607 = vunpack.c.h.b16 %v5549
          %v6608 = vunpack.c.l.b16 %v5550
          %v6609 = vunpack.c.h.b16 %v5550
          %v6610 = vunpack.c.l.b16 %v5551
          %v6611 = vunpack.c.h.b16 %v5551
          %v6612 = vunpack.c.l.b16 %v5552
          %v6613 = vunpack.c.h.b16 %v5552
          %v6614 = vunpack.c.l.b16 %v5553
          %v6615 = vunpack.c.h.b16 %v5553
          %v6616 = vunpack.c.l.b16 %v5554
          %v6617 = vunpack.c.h.b16 %v5554
          %v6618 = vunpack.c.l.b16 %v5555
          %v6619 = vunpack.c.h.b16 %v5555
          %v6620 = vunpack.c.l.b16 %v5556
          %v6621 = vunpack.c.h.b16 %v5556
          %v6622 = vunpack.c.l.b16 %v5557
          %v6623 = vunpack.c.h.b16 %v5557
          %v6624 = vunpack.c.l.b16 %v5558
          %v6625 = vunpack.c.h.b16 %v5558
          %v6626 = vunpack.c.l.b16 %v5559
          %v6627 = vunpack.c.h.b16 %v5559
          %v6628 = vunpack.c.l.b16 %v5560
          %v6629 = vunpack.c.h.b16 %v5560
          %v6630 = vunpack.c.l.b16 %v5561
          %v6631 = vunpack.c.h.b16 %v5561
          %v6632 = vunpack.c.l.b16 %v5562
          %v6633 = vunpack.c.h.b16 %v5562
          %v6634 = vunpack.c.l.b16 %v5563
          %v6635 = vunpack.c.h.b16 %v5563
          %v6636 = vunpack.c.l.b16 %v5564
          %v6637 = vunpack.c.h.b16 %v5564
          %v6638 = vunpack.c.l.b16 %v5565
          %v6639 = vunpack.c.h.b16 %v5565
          %v6640 = vunpack.c.l.b16 %v5566
          %v6641 = vunpack.c.h.b16 %v5566
          %v6642 = vunpack.c.l.b16 %v5567
          %v6643 = vunpack.c.h.b16 %v5567
          %v6644 = vunpack.c.l.b16 %v5568
          %v6645 = vunpack.c.h.b16 %v5568
          %v6646 = vunpack.c.l.b16 %v5569
          %v6647 = vunpack.c.h.b16 %v5569
          %v6648 = vunpack.c.l.b16 %v5570
          %v6649 = vunpack.c.h.b16 %v5570
          %v6650 = vunpack.c.l.b16 %v5571
          %v6651 = vunpack.c.h.b16 %v5571
          %v6652 = vunpack.c.l.b16 %v5572
          %v6653 = vunpack.c.h.b16 %v5572
          %v6654 = vunpack.c.l.b16 %v5573
          %v6655 = vunpack.c.h.b16 %v5573
          %v6656 = vunpack.c.l.b16 %v5574
          %v6657 = vunpack.c.h.b16 %v5574
          %v6658 = vunpack.c.l.b16 %v5575
          %v6659 = vunpack.c.h.b16 %v5575
          %v6660 = vunpack.c.l.b16 %v5576
          %v6661 = vunpack.c.h.b16 %v5576
          %v6662 = vunpack.c.l.b16 %v5577
          %v6663 = vunpack.c.h.b16 %v5577
          %v6664 = vunpack.c.l.b16 %v5578
          %v6665 = vunpack.c.h.b16 %v5578
          %v6666 = vunpack.c.l.b16 %v5579
          %v6667 = vunpack.c.h.b16 %v5579
          %v6668 = vunpack.c.l.b16 %v5580
          %v6669 = vunpack.c.h.b16 %v5580
          %v6670 = vunpack.c.l.b16 %v5581
          %v6671 = vunpack.c.h.b16 %v5581
          %v6672 = vunpack.c.l.b16 %v5582
          %v6673 = vunpack.c.h.b16 %v5582
          %v6674 = vunpack.c.l.b16 %v5583
          %v6675 = vunpack.c.h.b16 %v5583
          %v6676 = vunpack.c.l.b16 %v5584
          %v6677 = vunpack.c.h.b16 %v5584
          %v6678 = vunpack.c.l.b16 %v5585
          %v6679 = vunpack.c.h.b16 %v5585
          %v6680 = vunpack.c.l.b16 %v5586
          %v6681 = vunpack.c.h.b16 %v5586
          %v6682 = vunpack.c.l.b16 %v5587
          %v6683 = vunpack.c.h.b16 %v5587
          %v6684 = vunpack.c.l.b16 %v5588
          %v6685 = vunpack.c.h.b16 %v5588
          %v6686 = vunpack.c.l.b16 %v5589
          %v6687 = vunpack.c.h.b16 %v5589
          %v6688 = vunpack.c.l.b16 %v5590
          %v6689 = vunpack.c.h.b16 %v5590
          %v6690 = vunpack.c.l.b16 %v5591
          %v6691 = vunpack.c.h.b16 %v5591
          %v6692 = vunpack.c.l.b16 %v5592
          %v6693 = vunpack.c.h.b16 %v5592
          %v6694 = vunpack.c.l.b16 %v5593
          %v6695 = vunpack.c.h.b16 %v5593
          %v6696 = vunpack.c.l.b16 %v5594
          %v6697 = vunpack.c.h.b16 %v5594
          %v6698 = vunpack.c.l.b16 %v5595
          %v6699 = vunpack.c.h.b16 %v5595
          %v6700 = vunpack.c.l.b16 %v5596
          %v6701 = vunpack.c.h.b16 %v5596
          %v6702 = vunpack.c.l.b16 %v5597
          %v6703 = vunpack.c.h.b16 %v5597
          %v6704 = vunpack.c.l.b16 %v5598
          %v6705 = vunpack.c.h.b16 %v5598
          %v6706 = vunpack.c.l.b16 %v5599
          %v6707 = vunpack.c.h.b16 %v5599
          %v6708 = vunpack.c.l.b16 %v5600
          %v6709 = vunpack.c.h.b16 %v5600
          %v6710 = vunpack.c.l.b16 %v5601
          %v6711 = vunpack.c.h.b16 %v5601
          %v6712 = vunpack.c.l.b16 %v5602
          %v6713 = vunpack.c.h.b16 %v5602
          %v6714 = vunpack.c.l.b16 %v5603
          %v6715 = vunpack.c.h.b16 %v5603
          %v6716 = vunpack.c.l.b16 %v5604
          %v6717 = vunpack.c.h.b16 %v5604
          %v6718 = vunpack.c.l.b16 %v5605
          %v6719 = vunpack.c.h.b16 %v5605
          %v6720 = vunpack.c.l.b16 %v5606
          %v6721 = vunpack.c.h.b16 %v5606
          %v6722 = vunpack.c.l.b16 %v5607
          %v6723 = vunpack.c.h.b16 %v5607
          %v6724 = vunpack.c.l.b16 %v5608
          %v6725 = vunpack.c.h.b16 %v5608
          %v6726 = vunpack.c.l.b16 %v5609
          %v6727 = vunpack.c.h.b16 %v5609
          %v6728 = vunpack.c.l.b16 %v5610
          %v6729 = vunpack.c.h.b16 %v5610
          %v6730 = vunpack.c.l.b16 %v5611
          %v6731 = vunpack.c.h.b16 %v5611
          %v6732 = vunpack.c.l.b16 %v5612
          %v6733 = vunpack.c.h.b16 %v5612
          %v6734 = vunpack.c.l.b16 %v5613
          %v6735 = vunpack.c.h.b16 %v5613
          %v6736 = vunpack.c.l.b16 %v5614
          %v6737 = vunpack.c.h.b16 %v5614
          %v6738 = vunpack.c.l.b16 %v5615
          %v6739 = vunpack.c.h.b16 %v5615
          %v6740 = vunpack.c.l.b16 %v5616
          %v6741 = vunpack.c.h.b16 %v5616
          %v6742 = vunpack.c.l.b16 %v5617
          %v6743 = vunpack.c.h.b16 %v5617
          %v6744 = vunpack.c.l.b16 %v5618
          %v6745 = vunpack.c.h.b16 %v5618
          %v6746 = vunpack.c.l.b16 %v5619
          %v6747 = vunpack.c.h.b16 %v5619
          %v6748 = vunpack.c.l.b16 %v5620
          %v6749 = vunpack.c.h.b16 %v5620
          %v6750 = vunpack.c.l.b16 %v5621
          %v6751 = vunpack.c.h.b16 %v5621
          %v6752 = vunpack.c.l.b16 %v5622
          %v6753 = vunpack.c.h.b16 %v5622
          %v6754 = vunpack.c.l.b16 %v5623
          %v6755 = vunpack.c.h.b16 %v5623
          %v6756 = vunpack.c.l.b16 %v5624
          %v6757 = vunpack.c.h.b16 %v5624
          %v6758 = vunpack.c.l.b16 %v5625
          %v6759 = vunpack.c.h.b16 %v5625
          %v6760 = vunpack.c.l.b16 %v5626
          %v6761 = vunpack.c.h.b16 %v5626
          %v6762 = vunpack.c.l.b16 %v5627
          %v6763 = vunpack.c.h.b16 %v5627
          %v6764 = vunpack.c.l.b16 %v5628
          %v6765 = vunpack.c.h.b16 %v5628
          %v6766 = vunpack.c.l.b16 %v5629
          %v6767 = vunpack.c.h.b16 %v5629
          %v6768 = vunpack.c.l.b16 %v5630
          %v6769 = vunpack.c.h.b16 %v5630
          %v6770 = vunpack.c.l.b16 %v5631
          %v6771 = vunpack.c.h.b16 %v5631
          %v6772 = vunpack.c.l.b16 %v5632
          %v6773 = vunpack.c.h.b16 %v5632
          %v6774 = vunpack.c.l.b16 %v5633
          %v6775 = vunpack.c.h.b16 %v5633
          %v6776 = vunpack.c.l.b16 %v5634
          %v6777 = vunpack.c.h.b16 %v5634
          %v6778 = vunpack.c.l.b16 %v5635
          %v6779 = vunpack.c.h.b16 %v5635
          %v6780 = vunpack.c.l.b16 %v5636
          %v6781 = vunpack.c.h.b16 %v5636
          %v6782 = vunpack.c.l.b16 %v5637
          %v6783 = vunpack.c.h.b16 %v5637
          %v6784 = vunpack.c.l.b16 %v5638
          %v6785 = vunpack.c.h.b16 %v5638
          %v6786 = vunpack.c.l.b16 %v5639
          %v6787 = vunpack.c.h.b16 %v5639
          %v6788 = vunpack.c.l.b16 %v5640
          %v6789 = vunpack.c.h.b16 %v5640
          %v6790 = vunpack.c.l.b16 %v5641
          %v6791 = vunpack.c.h.b16 %v5641
          %v6792 = vunpack.c.l.b16 %v5642
          %v6793 = vunpack.c.h.b16 %v5642
          %v6794 = vunpack.c.l.b16 %v5643
          %v6795 = vunpack.c.h.b16 %v5643
          %v6796 = vunpack.c.l.b16 %v5644
          %v6797 = vunpack.c.h.b16 %v5644
          %v6798 = vunpack.c.l.b16 %v5645
          %v6799 = vunpack.c.h.b16 %v5645
          %v6800 = vunpack.c.l.b16 %v5646
          %v6801 = vunpack.c.h.b16 %v5646
          %v6802 = vunpack.c.l.b16 %v5647
          %v6803 = vunpack.c.h.b16 %v5647
          %v6804 = vunpack.c.l.b16 %v5648
          %v6805 = vunpack.c.h.b16 %v5648
          %v6806 = vunpack.c.l.b16 %v5649
          %v6807 = vunpack.c.h.b16 %v5649
          %v6808 = vunpack.c.l.b16 %v5650
          %v6809 = vunpack.c.h.b16 %v5650
          %v6810 = vunpack.c.l.b16 %v5651
          %v6811 = vunpack.c.h.b16 %v5651
          %v6812 = vunpack.c.l.b16 %v5652
          %v6813 = vunpack.c.h.b16 %v5652
          %v6814 = vunpack.c.l.b16 %v5653
          %v6815 = vunpack.c.h.b16 %v5653
          %v6816 = vunpack.c.l.b16 %v5654
          %v6817 = vunpack.c.h.b16 %v5654
          %v6818 = vunpack.c.l.b16 %v5655
          %v6819 = vunpack.c.h.b16 %v5655
          %v6820 = vunpack.c.l.b16 %v5656
          %v6821 = vunpack.c.h.b16 %v5656
          %v6822 = vunpack.c.l.b16 %v5657
          %v6823 = vunpack.c.h.b16 %v5657
          %v6824 = vunpack.c.l.b16 %v5658
          %v6825 = vunpack.c.h.b16 %v5658
          %v6826 = vunpack.c.l.b16 %v5659
          %v6827 = vunpack.c.h.b16 %v5659
          %v6828 = vunpack.c.l.b16 %v5660
          %v6829 = vunpack.c.h.b16 %v5660
          %v6830 = vunpack.c.l.b16 %v5661
          %v6831 = vunpack.c.h.b16 %v5661
          %v6832 = vunpack.c.l.b16 %v5662
          %v6833 = vunpack.c.h.b16 %v5662
          %v6834 = vunpack.c.l.b16 %v5663
          %v6835 = vunpack.c.h.b16 %v5663
          %v6836 = vunpack.c.l.b16 %v5664
          %v6837 = vunpack.c.h.b16 %v5664
          %v6838 = vunpack.c.l.b16 %v5665
          %v6839 = vunpack.c.h.b16 %v5665
          %v6840 = vunpack.c.l.b16 %v5666
          %v6841 = vunpack.c.h.b16 %v5666
          %v6842 = vunpack.c.l.b16 %v5667
          %v6843 = vunpack.c.h.b16 %v5667
          %v6844 = vunpack.c.l.b16 %v5668
          %v6845 = vunpack.c.h.b16 %v5668
          %v6846 = vunpack.c.l.b16 %v5669
          %v6847 = vunpack.c.h.b16 %v5669
          %v6848 = vunpack.c.l.b16 %v5670
          %v6849 = vunpack.c.h.b16 %v5670
          %v6850 = vunpack.c.l.b16 %v5671
          %v6851 = vunpack.c.h.b16 %v5671
          %v6852 = vunpack.c.l.b16 %v5672
          %v6853 = vunpack.c.h.b16 %v5672
          %v6854 = vunpack.c.l.b16 %v5673
          %v6855 = vunpack.c.h.b16 %v5673
          %v6856 = vunpack.c.l.b16 %v5674
          %v6857 = vunpack.c.h.b16 %v5674
          %v6858 = vunpack.c.l.b16 %v5675
          %v6859 = vunpack.c.h.b16 %v5675
          %v6860 = vunpack.c.l.b16 %v5676
          %v6861 = vunpack.c.h.b16 %v5676
          %v6862 = vunpack.c.l.b16 %v5677
          %v6863 = vunpack.c.h.b16 %v5677
          %v6864 = vunpack.c.l.b16 %v5678
          %v6865 = vunpack.c.h.b16 %v5678
          %v6866 = vunpack.c.l.b16 %v5679
          %v6867 = vunpack.c.h.b16 %v5679
          %v6868 = vunpack.c.l.b16 %v5680
          %v6869 = vunpack.c.h.b16 %v5680
          %v6870 = vunpack.c.l.b16 %v5681
          %v6871 = vunpack.c.h.b16 %v5681
          %v6872 = vunpack.c.l.b16 %v5682
          %v6873 = vunpack.c.h.b16 %v5682
          %v6874 = vunpack.c.l.b16 %v5683
          %v6875 = vunpack.c.h.b16 %v5683
          %v6876 = vunpack.c.l.b16 %v5684
          %v6877 = vunpack.c.h.b16 %v5684
          %v6878 = vunpack.c.l.b16 %v5685
          %v6879 = vunpack.c.h.b16 %v5685
          %v6880 = vunpack.c.l.b16 %v5686
          %v6881 = vunpack.c.h.b16 %v5686
          %v6882 = vunpack.c.l.b16 %v5687
          %v6883 = vunpack.c.h.b16 %v5687
          %v6884 = vunpack.c.l.b16 %v5688
          %v6885 = vunpack.c.h.b16 %v5688
          %v6886 = vunpack.c.l.b16 %v5689
          %v6887 = vunpack.c.h.b16 %v5689
          %v6888 = vunpack.c.l.b16 %v5690
          %v6889 = vunpack.c.h.b16 %v5690
          %v6890 = vunpack.c.l.b16 %v5691
          %v6891 = vunpack.c.h.b16 %v5691
          %v6892 = vunpack.c.l.b16 %v5692
          %v6893 = vunpack.c.h.b16 %v5692
          %v6894 = vunpack.c.l.b16 %v5693
          %v6895 = vunpack.c.h.b16 %v5693
          %v6896 = vunpack.c.l.b16 %v5694
          %v6897 = vunpack.c.h.b16 %v5694
          %v6898 = vunpack.c.l.b16 %v5695
          %v6899 = vunpack.c.h.b16 %v5695
          %v6900 = vunpack.c.l.b16 %v5696
          %v6901 = vunpack.c.h.b16 %v5696
          %v6902 = vunpack.c.l.b16 %v5697
          %v6903 = vunpack.c.h.b16 %v5697
          %v6904 = vunpack.c.l.b16 %v5698
          %v6905 = vunpack.c.h.b16 %v5698
          %v6906 = vunpack.c.l.b16 %v5699
          %v6907 = vunpack.c.h.b16 %v5699
          %v6908 = vunpack.c.l.b16 %v5700
          %v6909 = vunpack.c.h.b16 %v5700
          %v6910 = vunpack.c.l.b16 %v5701
          %v6911 = vunpack.c.h.b16 %v5701
          %v6912 = vunpack.c.l.b16 %v5702
          %v6913 = vunpack.c.h.b16 %v5702
          %v6914 = vunpack.c.l.b16 %v5703
          %v6915 = vunpack.c.h.b16 %v5703
          %v6916 = vunpack.c.l.b16 %v5704
          %v6917 = vunpack.c.h.b16 %v5704
          %v6918 = vunpack.c.l.b16 %v5705
          %v6919 = vunpack.c.h.b16 %v5705
          %v6920 = vunpack.c.l.b16 %v5706
          %v6921 = vunpack.c.h.b16 %v5706
          %v6922 = vunpack.c.l.b16 %v5707
          %v6923 = vunpack.c.h.b16 %v5707
          %v6924 = vunpack.c.l.b16 %v5708
          %v6925 = vunpack.c.h.b16 %v5708
          %v6926 = vunpack.c.l.b16 %v5709
          %v6927 = vunpack.c.h.b16 %v5709
          %v6928 = vunpack.c.l.b16 %v5710
          %v6929 = vunpack.c.h.b16 %v5710
          %v6930 = vunpack.c.l.b16 %v5711
          %v6931 = vunpack.c.h.b16 %v5711
          %v6932 = vunpack.c.l.b16 %v5712
          %v6933 = vunpack.c.h.b16 %v5712
          %v6934 = vunpack.c.l.b16 %v5713
          %v6935 = vunpack.c.h.b16 %v5713
          %v6936 = vunpack.c.l.b16 %v5714
          %v6937 = vunpack.c.h.b16 %v5714
          %v6938 = vunpack.c.l.b16 %v5715
          %v6939 = vunpack.c.h.b16 %v5715
          %v6940 = vunpack.c.l.b16 %v5716
          %v6941 = vunpack.c.h.b16 %v5716
          %v6942 = vunpack.c.l.b16 %v5717
          %v6943 = vunpack.c.h.b16 %v5717
          %v6944 = vunpack.c.l.b16 %v5718
          %v6945 = vunpack.c.h.b16 %v5718
          %v6946 = vunpack.c.l.b16 %v5719
          %v6947 = vunpack.c.h.b16 %v5719
          %v6948 = vunpack.c.l.b16 %v5720
          %v6949 = vunpack.c.h.b16 %v5720
          %v6950 = vunpack.c.l.b16 %v5721
          %v6951 = vunpack.c.h.b16 %v5721
          %v6952 = vunpack.c.l.b16 %v5722
          %v6953 = vunpack.c.h.b16 %v5722
          %v6954 = vunpack.c.l.b16 %v5723
          %v6955 = vunpack.c.h.b16 %v5723
          %v6956 = vunpack.c.l.b16 %v5724
          %v6957 = vunpack.c.h.b16 %v5724
          %v6958 = vunpack.c.l.b16 %v5725
          %v6959 = vunpack.c.h.b16 %v5725
          %v6960 = vunpack.c.l.b16 %v5726
          %v6961 = vunpack.c.h.b16 %v5726
          %v6962 = vunpack.c.l.b16 %v5727
          %v6963 = vunpack.c.h.b16 %v5727
          %v6964 = vunpack.c.l.b16 %v5728
          %v6965 = vunpack.c.h.b16 %v5728
          %v6966 = vunpack.c.l.b16 %v5729
          %v6967 = vunpack.c.h.b16 %v5729
          %v6968 = vunpack.c.l.b16 %v5730
          %v6969 = vunpack.c.h.b16 %v5730
          %v6970 = vunpack.c.l.b16 %v5731
          %v6971 = vunpack.c.h.b16 %v5731
          %v6972 = vunpack.c.l.b16 %v5732
          %v6973 = vunpack.c.h.b16 %v5732
          %v6974 = vunpack.c.l.b16 %v5733
          %v6975 = vunpack.c.h.b16 %v5733
          %v6976 = vunpack.c.l.b16 %v5734
          %v6977 = vunpack.c.h.b16 %v5734
          %v6978 = vunpack.c.l.b16 %v5735
          %v6979 = vunpack.c.h.b16 %v5735
          %v6980 = vunpack.c.l.b16 %v5736
          %v6981 = vunpack.c.h.b16 %v5736
          %v6982 = vunpack.c.l.b16 %v5737
          %v6983 = vunpack.c.h.b16 %v5737
          %v6984 = vunpack.c.l.b16 %v5738
          %v6985 = vunpack.c.h.b16 %v5738
          %v6986 = vunpack.c.l.b16 %v5739
          %v6987 = vunpack.c.h.b16 %v5739
          %v6988 = vunpack.c.l.b16 %v5740
          %v6989 = vunpack.c.h.b16 %v5740
          %v6990 = vunpack.c.l.b16 %v5741
          %v6991 = vunpack.c.h.b16 %v5741
          %v6992 = vunpack.c.l.b16 %v5742
          %v6993 = vunpack.c.h.b16 %v5742
          %v6994 = vunpack.c.l.b16 %v5743
          %v6995 = vunpack.c.h.b16 %v5743
          %v6996 = vunpack.c.l.b16 %v5744
          %v6997 = vunpack.c.h.b16 %v5744
          %v6998 = vunpack.c.l.b16 %v5745
          %v6999 = vunpack.c.h.b16 %v5745
          %v7000 = vunpack.c.l.b16 %v5746
          %v7001 = vunpack.c.h.b16 %v5746
          %v7002 = vunpack.c.l.b16 %v5747
          %v7003 = vunpack.c.h.b16 %v5747
          %v7004 = vunpack.c.l.b16 %v5748
          %v7005 = vunpack.c.h.b16 %v5748
          %v7006 = vunpack.c.l.b16 %v5749
          %v7007 = vunpack.c.h.b16 %v5749
          %v7008 = vunpack.c.l.b16 %v5750
          %v7009 = vunpack.c.h.b16 %v5750
          %v7010 = vunpack.c.l.b16 %v5751
          %v7011 = vunpack.c.h.b16 %v5751
          %v7012 = vunpack.c.l.b16 %v5752
          %v7013 = vunpack.c.h.b16 %v5752
          %v7014 = vunpack.c.l.b16 %v5753
          %v7015 = vunpack.c.h.b16 %v5753
          %v7016 = vunpack.c.l.b16 %v5754
          %v7017 = vunpack.c.h.b16 %v5754
          %v7018 = vunpack.c.l.b16 %v5755
          %v7019 = vunpack.c.h.b16 %v5755
          %v7020 = vunpack.c.l.b16 %v5756
          %v7021 = vunpack.c.h.b16 %v5756
          %v7022 = vunpack.c.l.b16 %v5757
          %v7023 = vunpack.c.h.b16 %v5757
          %v7024 = vunpack.c.l.b16 %v5758
          %v7025 = vunpack.c.h.b16 %v5758
          %v7026 = vunpack.c.l.b16 %v5759
          %v7027 = vunpack.c.h.b16 %v5759
          %v7028 = vunpack.c.l.b16 %v5760
          %v7029 = vunpack.c.h.b16 %v5760
          %v7030 = vunpack.c.l.b16 %v5761
          %v7031 = vunpack.c.h.b16 %v5761
          %v7032 = vunpack.c.l.b16 %v5762
          %v7033 = vunpack.c.h.b16 %v5762
          %v7034 = vunpack.c.l.b16 %v5763
          %v7035 = vunpack.c.h.b16 %v5763
          %v7036 = vunpack.c.l.b16 %v5764
          %v7037 = vunpack.c.h.b16 %v5764
          %v7038 = vunpack.c.l.b16 %v5765
          %v7039 = vunpack.c.h.b16 %v5765
          %v7040 = vunpack.c.l.b16 %v5766
          %v7041 = vunpack.c.h.b16 %v5766
          %v7042 = vunpack.c.l.b16 %v5767
          %v7043 = vunpack.c.h.b16 %v5767
          %v7044 = vunpack.c.l.b16 %v5768
          %v7045 = vunpack.c.h.b16 %v5768
          %v7046 = vunpack.c.l.b16 %v5769
          %v7047 = vunpack.c.h.b16 %v5769
          %v7048 = vunpack.c.l.b16 %v5770
          %v7049 = vunpack.c.h.b16 %v5770
          %v7050 = vunpack.c.l.b16 %v5771
          %v7051 = vunpack.c.h.b16 %v5771
          %v7052 = vunpack.c.l.b16 %v5772
          %v7053 = vunpack.c.h.b16 %v5772
          %v7054 = vunpack.c.l.b16 %v5773
          %v7055 = vunpack.c.h.b16 %v5773
          %v7056 = vunpack.c.l.b16 %v5774
          %v7057 = vunpack.c.h.b16 %v5774
          %v7058 = vunpack.c.l.b16 %v5775
          %v7059 = vunpack.c.h.b16 %v5775
          %v7060 = vunpack.c.l.b16 %v5776
          %v7061 = vunpack.c.h.b16 %v5776
          %v7062 = vunpack.c.l.b16 %v5777
          %v7063 = vunpack.c.h.b16 %v5777
          %v7064 = vunpack.c.l.b16 %v5778
          %v7065 = vunpack.c.h.b16 %v5778
          %v7066 = vunpack.c.l.b16 %v5779
          %v7067 = vunpack.c.h.b16 %v5779
          %v7068 = vunpack.c.l.b16 %v5780
          %v7069 = vunpack.c.h.b16 %v5780
          %v7070 = vunpack.c.l.b16 %v5781
          %v7071 = vunpack.c.h.b16 %v5781
          %v7072 = vunpack.c.l.b16 %v5782
          %v7073 = vunpack.c.h.b16 %v5782
          %v7074 = vunpack.c.l.b16 %v5783
          %v7075 = vunpack.c.h.b16 %v5783
          %v7076 = vunpack.c.l.b16 %v5784
          %v7077 = vunpack.c.h.b16 %v5784
          %v7078 = vunpack.c.l.b16 %v5785
          %v7079 = vunpack.c.h.b16 %v5785
          %v7080 = vunpack.c.l.b16 %v5786
          %v7081 = vunpack.c.h.b16 %v5786
          %v7082 = vunpack.c.l.b16 %v5787
          %v7083 = vunpack.c.h.b16 %v5787
          %v7084 = vunpack.c.l.b16 %v5788
          %v7085 = vunpack.c.h.b16 %v5788
          %v7086 = vunpack.c.l.b16 %v5789
          %v7087 = vunpack.c.h.b16 %v5789
          %v7088 = vunpack.c.l.b16 %v5790
          %v7089 = vunpack.c.h.b16 %v5790
          %v7090 = vunpack.c.l.b16 %v5791
          %v7091 = vunpack.c.h.b16 %v5791
          %v7092 = vunpack.c.l.b16 %v5792
          %v7093 = vunpack.c.h.b16 %v5792
          %v7094 = vunpack.c.l.b16 %v5793
          %v7095 = vunpack.c.h.b16 %v5793
          %v7096 = vunpack.c.l.b16 %v5794
          %v7097 = vunpack.c.h.b16 %v5794
          %v7098 = vunpack.c.l.b16 %v5795
          %v7099 = vunpack.c.h.b16 %v5795
          %v7100 = vunpack.c.l.b16 %v5796
          %v7101 = vunpack.c.h.b16 %v5796
          %v7102 = vunpack.c.l.b16 %v5797
          %v7103 = vunpack.c.h.b16 %v5797
          %v7104 = vunpack.c.l.b16 %v5798
          %v7105 = vunpack.c.h.b16 %v5798
          %v7106 = vunpack.c.l.b16 %v5799
          %v7107 = vunpack.c.h.b16 %v5799
          %v7108 = vunpack.c.l.b16 %v5800
          %v7109 = vunpack.c.h.b16 %v5800
          %v7110 = vunpack.c.l.b16 %v5801
          %v7111 = vunpack.c.h.b16 %v5801
          %v7112 = vunpack.c.l.b16 %v5802
          %v7113 = vunpack.c.h.b16 %v5802
          %v7114 = vunpack.c.l.b16 %v5803
          %v7115 = vunpack.c.h.b16 %v5803
          %v7116 = vunpack.c.l.b16 %v5804
          %v7117 = vunpack.c.h.b16 %v5804
          %v7118 = vunpack.c.l.b16 %v5805
          %v7119 = vunpack.c.h.b16 %v5805
          %v7120 = vunpack.c.l.b16 %v5806
          %v7121 = vunpack.c.h.b16 %v5806
          %v7122 = vunpack.c.l.b16 %v5807
          %v7123 = vunpack.c.h.b16 %v5807
          %v7124 = vunpack.c.l.b16 %v5808
          %v7125 = vunpack.c.h.b16 %v5808
          %v7126 = vunpack.c.l.b16 %v5809
          %v7127 = vunpack.c.h.b16 %v5809
          %v7128 = vunpack.c.l.b16 %v5810
          %v7129 = vunpack.c.h.b16 %v5810
          %v7130 = vunpack.c.l.b16 %v5811
          %v7131 = vunpack.c.h.b16 %v5811
          %v7132 = vunpack.c.l.b16 %v5812
          %v7133 = vunpack.c.h.b16 %v5812
          %v7134 = vunpack.c.l.b16 %v5813
          %v7135 = vunpack.c.h.b16 %v5813
          %v7136 = vunpack.c.l.b16 %v5814
          %v7137 = vunpack.c.h.b16 %v5814
          %v7138 = vunpack.c.l.b16 %v5815
          %v7139 = vunpack.c.h.b16 %v5815
          %v7140 = vunpack.c.l.b16 %v5816
          %v7141 = vunpack.c.h.b16 %v5816
          %v7142 = vunpack.c.l.b16 %v5817
          %v7143 = vunpack.c.h.b16 %v5817
          %v7144 = vunpack.c.l.b16 %v5818
          %v7145 = vunpack.c.h.b16 %v5818
          %v7146 = vunpack.c.l.b16 %v5819
          %v7147 = vunpack.c.h.b16 %v5819
          %v7148 = vunpack.c.l.b16 %v5820
          %v7149 = vunpack.c.h.b16 %v5820
          %v7150 = vunpack.c.l.b16 %v5821
          %v7151 = vunpack.c.h.b16 %v5821
          %v7152 = vunpack.c.l.b16 %v5822
          %v7153 = vunpack.c.h.b16 %v5822
          %v7154 = vunpack.c.l.b16 %v5823
          %v7155 = vunpack.c.h.b16 %v5823
          %v7156 = vunpack.c.l.b16 %v5824
          %v7157 = vunpack.c.h.b16 %v5824
          %v7158 = vunpack.c.l.b16 %v5825
          %v7159 = vunpack.c.h.b16 %v5825
          %v7160 = vunpack.c.l.b16 %v5826
          %v7161 = vunpack.c.h.b16 %v5826
          %v7162 = vunpack.c.l.b16 %v5827
          %v7163 = vunpack.c.h.b16 %v5827
          %v7164 = vunpack.c.l.b16 %v5828
          %v7165 = vunpack.c.h.b16 %v5828
          %v7166 = vunpack.c.l.b16 %v5829
          %v7167 = vunpack.c.h.b16 %v5829
          %v7168 = vunpack.c.l.b16 %v5830
          %v7169 = vunpack.c.h.b16 %v5830
          %v7170 = vunpack.c.l.b16 %v5831
          %v7171 = vunpack.c.h.b16 %v5831
          %v7172 = vunpack.c.l.b16 %v5832
          %v7173 = vunpack.c.h.b16 %v5832
          %v7174 = vunpack.c.l.b16 %v5833
          %v7175 = vunpack.c.h.b16 %v5833
          %v7176 = vunpack.c.l.b16 %v5834
          %v7177 = vunpack.c.h.b16 %v5834
          %v7178 = vunpack.c.l.b16 %v5835
          %v7179 = vunpack.c.h.b16 %v5835
          %v7180 = vunpack.c.l.b16 %v5836
          %v7181 = vunpack.c.h.b16 %v5836
          %v7182 = vunpack.c.l.b16 %v5837
          %v7183 = vunpack.c.h.b16 %v5837
          %v7184 = vunpack.c.l.b16 %v5838
          %v7185 = vunpack.c.h.b16 %v5838
          %v7186 = vunpack.c.l.b16 %v5839
          %v7187 = vunpack.c.h.b16 %v5839
          %v7188 = vunpack.c.l.b16 %v5840
          %v7189 = vunpack.c.h.b16 %v5840
          %v7190 = vunpack.c.l.b16 %v5841
          %v7191 = vunpack.c.h.b16 %v5841
          %v7192 = vunpack.c.l.b16 %v5842
          %v7193 = vunpack.c.h.b16 %v5842
          %v7194 = vunpack.c.l.b16 %v5843
          %v7195 = vunpack.c.h.b16 %v5843
          %v7196 = vunpack.c.l.b16 %v5844
          %v7197 = vunpack.c.h.b16 %v5844
          %v7198 = vunpack.c.l.b16 %v5845
          %v7199 = vunpack.c.h.b16 %v5845
          %v7200 = vunpack.c.l.b16 %v5846
          %v7201 = vunpack.c.h.b16 %v5846
          %v7202 = vunpack.c.l.b16 %v5847
          %v7203 = vunpack.c.h.b16 %v5847
          %v7204 = vunpack.c.l.b16 %v5848
          %v7205 = vunpack.c.h.b16 %v5848
          %v7206 = vunpack.c.l.b16 %v5849
          %v7207 = vunpack.c.h.b16 %v5849
          %v7208 = vunpack.c.l.b16 %v5850
          %v7209 = vunpack.c.h.b16 %v5850
          %v7210 = vunpack.c.l.b16 %v5851
          %v7211 = vunpack.c.h.b16 %v5851
          %v7212 = vunpack.c.l.b16 %v5852
          %v7213 = vunpack.c.h.b16 %v5852
          %v7214 = vunpack.c.l.b16 %v5853
          %v7215 = vunpack.c.h.b16 %v5853
          %v7216 = vunpack.c.l.b16 %v5854
          %v7217 = vunpack.c.h.b16 %v5854
          %v7218 = vunpack.c.l.b16 %v5855
          %v7219 = vunpack.c.h.b16 %v5855
          %v7220 = vunpack.c.l.b16 %v5856
          %v7221 = vunpack.c.h.b16 %v5856
          %v7222 = vunpack.c.l.b16 %v5857
          %v7223 = vunpack.c.h.b16 %v5857
          %v7224 = vunpack.c.l.b16 %v5858
          %v7225 = vunpack.c.h.b16 %v5858
          %v7226 = vunpack.c.l.b16 %v5859
          %v7227 = vunpack.c.h.b16 %v5859
          %v7228 = vunpack.c.l.b16 %v5860
          %v7229 = vunpack.c.h.b16 %v5860
          %v7230 = vunpack.c.l.b16 %v5861
          %v7231 = vunpack.c.h.b16 %v5861
          %v7232 = vunpack.c.l.b16 %v5862
          %v7233 = vunpack.c.h.b16 %v5862
          %v7234 = vunpack.c.l.b16 %v5863
          %v7235 = vunpack.c.h.b16 %v5863
          %v7236 = vunpack.c.l.b16 %v5864
          %v7237 = vunpack.c.h.b16 %v5864
          %v7238 = vunpack.c.l.b16 %v5865
          %v7239 = vunpack.c.h.b16 %v5865
          %v7240 = vunpack.c.l.b16 %v5866
          %v7241 = vunpack.c.h.b16 %v5866
          %v7242 = vunpack.c.l.b16 %v5867
          %v7243 = vunpack.c.h.b16 %v5867
          %v7244 = vunpack.c.l.b16 %v5868
          %v7245 = vunpack.c.h.b16 %v5868
          %v7246 = vunpack.c.l.b16 %v5869
          %v7247 = vunpack.c.h.b16 %v5869
          %v7248 = vunpack.c.l.b16 %v5870
          %v7249 = vunpack.c.h.b16 %v5870
          %v7250 = vunpack.c.l.b16 %v5871
          %v7251 = vunpack.c.h.b16 %v5871
          %v7252 = vunpack.c.l.b16 %v5872
          %v7253 = vunpack.c.h.b16 %v5872
          %v7254 = vunpack.c.l.b16 %v5873
          %v7255 = vunpack.c.h.b16 %v5873
          %v7256 = vunpack.c.l.b16 %v5874
          %v7257 = vunpack.c.h.b16 %v5874
          %v7258 = vunpack.c.l.b16 %v5875
          %v7259 = vunpack.c.h.b16 %v5875
          %v7260 = vunpack.c.l.b16 %v5876
          %v7261 = vunpack.c.h.b16 %v5876
          %v7262 = vunpack.c.l.b16 %v5877
          %v7263 = vunpack.c.h.b16 %v5877
          %v7264 = vunpack.c.l.b16 %v5878
          %v7265 = vunpack.c.h.b16 %v5878
          %v7266 = vunpack.c.l.b16 %v5879
          %v7267 = vunpack.c.h.b16 %v5879
          %v7268 = vunpack.c.l.b16 %v5880
          %v7269 = vunpack.c.h.b16 %v5880
          %v7270 = vunpack.c.l.b16 %v5881
          %v7271 = vunpack.c.h.b16 %v5881
          %v7272 = vunpack.c.l.b16 %v5882
          %v7273 = vunpack.c.h.b16 %v5882
          %v7274 = vunpack.c.l.b16 %v5883
          %v7275 = vunpack.c.h.b16 %v5883
          %v7276 = vunpack.c.l.b16 %v5884
          %v7277 = vunpack.c.h.b16 %v5884
          %v7278 = vunpack.c.l.b16 %v5885
          %v7279 = vunpack.c.h.b16 %v5885
          %v7280 = vunpack.c.l.b16 %v5886
          %v7281 = vunpack.c.h.b16 %v5886
          %v7282 = vunpack.c.l.b16 %v5887
          %v7283 = vunpack.c.h.b16 %v5887
          %v7284 = vunpack.c.l.b16 %v5888
          %v7285 = vunpack.c.h.b16 %v5888
          %v7286 = vunpack.c.l.b16 %v5889
          %v7287 = vunpack.c.h.b16 %v5889
          %v7288 = vunpack.c.l.b16 %v5890
          %v7289 = vunpack.c.h.b16 %v5890
          %v7290 = vunpack.c.l.b16 %v5891
          %v7291 = vunpack.c.h.b16 %v5891
          %v7292 = vunpack.c.l.b16 %v5892
          %v7293 = vunpack.c.h.b16 %v5892
          %v7294 = vunpack.c.l.b16 %v5893
          %v7295 = vunpack.c.h.b16 %v5893
          %v7296 = vunpack.c.l.b16 %v5894
          %v7297 = vunpack.c.h.b16 %v5894
          %v7298 = vunpack.c.l.b16 %v5895
          %v7299 = vunpack.c.h.b16 %v5895
          %v7300 = vunpack.c.l.b16 %v5896
          %v7301 = vunpack.c.h.b16 %v5896
          %v7302 = vunpack.c.l.b16 %v5897
          %v7303 = vunpack.c.h.b16 %v5897
          %v7304 = vunpack.c.l.b16 %v5898
          %v7305 = vunpack.c.h.b16 %v5898
          %v7306 = vunpack.c.l.b16 %v5899
          %v7307 = vunpack.c.h.b16 %v5899
          %v7308 = vunpack.c.l.b16 %v5900
          %v7309 = vunpack.c.h.b16 %v5900
          %v7310 = vunpack.c.l.b16 %v5901
          %v7311 = vunpack.c.h.b16 %v5901
          %v7312 = vunpack.c.l.b16 %v5902
          %v7313 = vunpack.c.h.b16 %v5902
          %v7314 = vunpack.c.l.b16 %v5903
          %v7315 = vunpack.c.h.b16 %v5903
          %v7316 = vunpack.c.l.b16 %v5904
          %v7317 = vunpack.c.h.b16 %v5904
          %v7318 = vunpack.c.l.b16 %v5905
          %v7319 = vunpack.c.h.b16 %v5905
          %v7320 = vunpack.c.l.b16 %v5906
          %v7321 = vunpack.c.h.b16 %v5906
          %v7322 = vunpack.c.l.b16 %v5907
          %v7323 = vunpack.c.h.b16 %v5907
          %v7324 = vunpack.c.l.b16 %v5908
          %v7325 = vunpack.c.h.b16 %v5908
          %v7326 = vunpack.c.l.b16 %v5909
          %v7327 = vunpack.c.h.b16 %v5909
          %v7328 = vunpack.c.l.b16 %v5910
          %v7329 = vunpack.c.h.b16 %v5910
          %v7330 = vunpack.c.l.b16 %v5911
          %v7331 = vunpack.c.h.b16 %v5911
          %v7332 = vunpack.c.l.b16 %v5912
          %v7333 = vunpack.c.h.b16 %v5912
          %v7334 = vunpack.c.l.b16 %v5913
          %v7335 = vunpack.c.h.b16 %v5913
          %v7336 = vunpack.c.l.b16 %v5914
          %v7337 = vunpack.c.h.b16 %v5914
          %v7338 = vunpack.c.l.b16 %v5915
          %v7339 = vunpack.c.h.b16 %v5915
          %v7340 = vunpack.c.l.b16 %v5916
          %v7341 = vunpack.c.h.b16 %v5916
          %v7342 = vunpack.c.l.b16 %v5917
          %v7343 = vunpack.c.h.b16 %v5917
          %v7344 = vunpack.c.l.b16 %v5918
          %v7345 = vunpack.c.h.b16 %v5918
          %v7346 = vunpack.c.l.b16 %v5919
          %v7347 = vunpack.c.h.b16 %v5919
          %v7348 = vunpack.c.l.b16 %v5920
          %v7349 = vunpack.c.h.b16 %v5920
          %v7350 = vunpack.c.l.b16 %v5921
          %v7351 = vunpack.c.h.b16 %v5921
          %v7352 = vunpack.c.l.b16 %v5922
          %v7353 = vunpack.c.h.b16 %v5922
          %v7354 = vunpack.c.l.b16 %v5923
          %v7355 = vunpack.c.h.b16 %v5923
          %v7356 = vunpack.c.l.b16 %v5924
          %v7357 = vunpack.c.h.b16 %v5924
          %v7358 = vunpack.c.l.b16 %v5925
          %v7359 = vunpack.c.h.b16 %v5925
          %v7360 = vunpack.c.l.b16 %v5926
          %v7361 = vunpack.c.h.b16 %v5926
          %v7362 = vunpack.c.l.b16 %v5927
          %v7363 = vunpack.c.h.b16 %v5927
          %v7364 = vunpack.c.l.b16 %v5928
          %v7365 = vunpack.c.h.b16 %v5928
          %v7366 = vunpack.c.l.b16 %v5929
          %v7367 = vunpack.c.h.b16 %v5929
          %v7368 = vunpack.c.l.b16 %v5930
          %v7369 = vunpack.c.h.b16 %v5930
          %v7370 = vunpack.c.l.b16 %v5931
          %v7371 = vunpack.c.h.b16 %v5931
          %v7372 = vunpack.c.l.b16 %v5932
          %v7373 = vunpack.c.h.b16 %v5932
          %v7374 = vunpack.c.l.b16 %v5933
          %v7375 = vunpack.c.h.b16 %v5933
          %v7376 = vunpack.c.l.b16 %v5934
          %v7377 = vunpack.c.h.b16 %v5934
          %v7378 = vunpack.c.l.b16 %v5935
          %v7379 = vunpack.c.h.b16 %v5935
          %v7380 = vunpack.c.l.b16 %v5936
          %v7381 = vunpack.c.h.b16 %v5936
          %v7382 = vunpack.c.l.b16 %v5937
          %v7383 = vunpack.c.h.b16 %v5937
          %v7384 = vunpack.c.l.b16 %v5938
          %v7385 = vunpack.c.h.b16 %v5938
          %v7386 = vunpack.c.l.b16 %v5939
          %v7387 = vunpack.c.h.b16 %v5939
          %v7388 = vunpack.c.l.b16 %v5940
          %v7389 = vunpack.c.h.b16 %v5940
          %v7390 = vunpack.c.l.b16 %v5941
          %v7391 = vunpack.c.h.b16 %v5941
          %v7392 = vunpack.c.l.b16 %v5942
          %v7393 = vunpack.c.h.b16 %v5942
          %v7394 = vunpack.c.l.b16 %v5943
          %v7395 = vunpack.c.h.b16 %v5943
          %v7396 = vunpack.c.l.b16 %v5944
          %v7397 = vunpack.c.h.b16 %v5944
          %v7398 = vunpack.c.l.b16 %v5945
          %v7399 = vunpack.c.h.b16 %v5945
          %v7400 = vunpack.c.l.b16 %v5946
          %v7401 = vunpack.c.h.b16 %v5946
          %v7402 = vunpack.c.l.b16 %v5947
          %v7403 = vunpack.c.h.b16 %v5947
          %v7404 = vunpack.c.l.b16 %v5948
          %v7405 = vunpack.c.h.b16 %v5948
          %v7406 = vunpack.c.l.b16 %v5949
          %v7407 = vunpack.c.h.b16 %v5949
          %v7408 = vunpack.c.l.b16 %v5950
          %v7409 = vunpack.c.h.b16 %v5950
          %v7410 = vunpack.c.l.b16 %v5951
          %v7411 = vunpack.c.h.b16 %v5951
          %v7412 = vunpack.c.l.b16 %v5952
          %v7413 = vunpack.c.h.b16 %v5952
          %v7414 = vunpack.c.l.b16 %v5953
          %v7415 = vunpack.c.h.b16 %v5953
          %v7416 = vunpack.c.l.b16 %v5954
          %v7417 = vunpack.c.h.b16 %v5954
          %v7418 = vunpack.c.l.b16 %v5955
          %v7419 = vunpack.c.h.b16 %v5955
          %v7420 = vunpack.c.l.b16 %v5956
          %v7421 = vunpack.c.h.b16 %v5956
          %v7422 = vunpack.c.l.b16 %v5957
          %v7423 = vunpack.c.h.b16 %v5957
          %v7424 = vunpack.c.l.b16 %v5958
          %v7425 = vunpack.c.h.b16 %v5958
          %v7426 = vunpack.c.l.b16 %v5959
          %v7427 = vunpack.c.h.b16 %v5959
          %v7428 = vunpack.c.l.b16 %v5960
          %v7429 = vunpack.c.h.b16 %v5960
          %v7430 = vunpack.c.l.b16 %v5961
          %v7431 = vunpack.c.h.b16 %v5961
          %v7432 = vunpack.c.l.b16 %v5962
          %v7433 = vunpack.c.h.b16 %v5962
          %v7434 = vunpack.c.l.b16 %v5963
          %v7435 = vunpack.c.h.b16 %v5963
          %v7436 = vunpack.c.l.b16 %v5964
          %v7437 = vunpack.c.h.b16 %v5964
          %v7438 = vunpack.c.l.b16 %v5965
          %v7439 = vunpack.c.h.b16 %v5965
          %v7440 = vunpack.c.l.b16 %v5966
          %v7441 = vunpack.c.h.b16 %v5966
          %v7442 = vunpack.c.l.b16 %v5967
          %v7443 = vunpack.c.h.b16 %v5967
          %v7444 = vunpack.c.l.b16 %v5968
          %v7445 = vunpack.c.h.b16 %v5968
          %v7446 = vunpack.c.l.b16 %v5969
          %v7447 = vunpack.c.h.b16 %v5969
          %v7448 = vunpack.c.l.b16 %v5970
          %v7449 = vunpack.c.h.b16 %v5970
          %v7450 = vunpack.c.l.b16 %v5971
          %v7451 = vunpack.c.h.b16 %v5971
          %v7452 = vunpack.c.l.b16 %v5972
          %v7453 = vunpack.c.h.b16 %v5972
          %v7454 = vunpack.c.l.b16 %v5973
          %v7455 = vunpack.c.h.b16 %v5973
          %v7456 = vunpack.c.l.b16 %v5974
          %v7457 = vunpack.c.h.b16 %v5974
          %v7458 = vunpack.c.l.b16 %v5975
          %v7459 = vunpack.c.h.b16 %v5975
          %v7460 = vunpack.c.l.b16 %v5976
          %v7461 = vunpack.c.h.b16 %v5976
          %v7462 = vunpack.c.l.b16 %v5977
          %v7463 = vunpack.c.h.b16 %v5977
          %v7464 = vunpack.c.l.b16 %v5978
          %v7465 = vunpack.c.h.b16 %v5978
          %v7466 = vunpack.c.l.b16 %v5979
          %v7467 = vunpack.c.h.b16 %v5979
          %v7468 = vunpack.c.l.b16 %v5980
          %v7469 = vunpack.c.h.b16 %v5980
          %v7470 = vunpack.c.l.b16 %v5981
          %v7471 = vunpack.c.h.b16 %v5981
          %v7472 = vunpack.c.l.b16 %v5982
          %v7473 = vunpack.c.h.b16 %v5982
          %v7474 = vunpack.c.l.b16 %v5983
          %v7475 = vunpack.c.h.b16 %v5983
          %v7476 = vunpack.c.l.b16 %v5984
          %v7477 = vunpack.c.h.b16 %v5984
          %v7478 = vunpack.c.l.b16 %v5985
          %v7479 = vunpack.c.h.b16 %v5985
          %v7480 = vunpack.c.l.b16 %v5986
          %v7481 = vunpack.c.h.b16 %v5986
          %v7482 = vunpack.c.l.b16 %v5987
          %v7483 = vunpack.c.h.b16 %v5987
          %v7484 = vunpack.c.l.b16 %v5988
          %v7485 = vunpack.c.h.b16 %v5988
          %v7486 = vunpack.c.l.b16 %v5989
          %v7487 = vunpack.c.h.b16 %v5989
          %v7488 = vunpack.c.l.b16 %v5990
          %v7489 = vunpack.c.h.b16 %v5990
          %v7490 = vunpack.c.l.b16 %v5991
          %v7491 = vunpack.c.h.b16 %v5991
          %v7492 = vunpack.c.l.b16 %v5992
          %v7493 = vunpack.c.h.b16 %v5992
          %v7494 = vunpack.c.l.b16 %v5993
          %v7495 = vunpack.c.h.b16 %v5993
          %v7496 = vunpack.c.l.b16 %v5994
          %v7497 = vunpack.c.h.b16 %v5994
          %v7498 = vunpack.c.l.b16 %v5995
          %v7499 = vunpack.c.h.b16 %v5995
          %v7500 = vunpack.c.l.b16 %v5996
          %v7501 = vunpack.c.h.b16 %v5996
          %v7502 = vunpack.c.l.b16 %v5997
          %v7503 = vunpack.c.h.b16 %v5997
          %v7504 = vunpack.c.l.b16 %v5998
          %v7505 = vunpack.c.h.b16 %v5998
          %v7506 = vunpack.c.l.b16 %v5999
          %v7507 = vunpack.c.h.b16 %v5999
          %v7508 = vunpack.c.l.b16 %v6000
          %v7509 = vunpack.c.h.b16 %v6000
          %v7510 = vunpack.c.l.b16 %v6001
          %v7511 = vunpack.c.h.b16 %v6001
          %v7512 = vunpack.c.l.b16 %v6002
          %v7513 = vunpack.c.h.b16 %v6002
          %v7514 = vunpack.c.l.b16 %v6003
          %v7515 = vunpack.c.h.b16 %v6003
          %v7516 = vunpack.c.l.b16 %v6004
          %v7517 = vunpack.c.h.b16 %v6004
          %v7518 = vunpack.c.l.b16 %v6005
          %v7519 = vunpack.c.h.b16 %v6005
          %v7520 = vunpack.c.l.b16 %v6006
          %v7521 = vunpack.c.h.b16 %v6006
          %v7522 = vunpack.c.l.b16 %v6007
          %v7523 = vunpack.c.h.b16 %v6007
          %v7524 = vunpack.c.l.b16 %v6008
          %v7525 = vunpack.c.h.b16 %v6008
          %v7526 = vunpack.c.l.b16 %v6009
          %v7527 = vunpack.c.h.b16 %v6009
          %v7528 = vunpack.c.l.b16 %v6010
          %v7529 = vunpack.c.h.b16 %v6010
          %v7530 = vunpack.c.l.b16 %v6011
          %v7531 = vunpack.c.h.b16 %v6011
          %v7532 = vunpack.c.l.b16 %v6012
          %v7533 = vunpack.c.h.b16 %v6012
          %v7534 = vunpack.c.l.b16 %v6013
          %v7535 = vunpack.c.h.b16 %v6013
          %v7536 = vunpack.c.l.b16 %v6014
          %v7537 = vunpack.c.h.b16 %v6014
          %v7538 = vunpack.c.l.b16 %v6015
          %v7539 = vunpack.c.h.b16 %v6015
          %v7540 = vunpack.c.l.b16 %v6016
          %v7541 = vunpack.c.h.b16 %v6016
          %v7542 = vunpack.c.l.b16 %v6017
          %v7543 = vunpack.c.h.b16 %v6017
          %v7544 = vunpack.c.l.b16 %v6018
          %v7545 = vunpack.c.h.b16 %v6018
          %v7546 = vunpack.c.l.b16 %v6019
          %v7547 = vunpack.c.h.b16 %v6019
          %v7548 = vunpack.c.l.b16 %v6020
          %v7549 = vunpack.c.h.b16 %v6020
          %v7550 = vunpack.c.l.b16 %v6021
          %v7551 = vunpack.c.h.b16 %v6021
          %v7552 = vunpack.c.l.b16 %v6022
          %v7553 = vunpack.c.h.b16 %v6022
          %v7554 = vunpack.c.l.b16 %v6023
          %v7555 = vunpack.c.h.b16 %v6023
          %v7556 = vunpack.c.l.b16 %v6024
          %v7557 = vunpack.c.h.b16 %v6024
          %v7558 = vunpack.c.l.b16 %v6025
          %v7559 = vunpack.c.h.b16 %v6025
          %v7560 = vunpack.c.l.b16 %v6026
          %v7561 = vunpack.c.h.b16 %v6026
          %v7562 = vunpack.c.l.b16 %v6027
          %v7563 = vunpack.c.h.b16 %v6027
          %v7564 = vunpack.c.l.b16 %v6028
          %v7565 = vunpack.c.h.b16 %v6028
          %v7566 = vunpack.c.l.b16 %v6029
          %v7567 = vunpack.c.h.b16 %v6029
          %v7568 = vunpack.c.l.b16 %v6030
          %v7569 = vunpack.c.h.b16 %v6030
          %v7570 = vunpack.c.l.b16 %v6031
          %v7571 = vunpack.c.h.b16 %v6031
          %v7572 = vunpack.c.l.b16 %v6032
          %v7573 = vunpack.c.h.b16 %v6032
          %v7574 = vunpack.c.l.b16 %v6033
          %v7575 = vunpack.c.h.b16 %v6033
          %v7576 = vunpack.c.l.b16 %v6034
          %v7577 = vunpack.c.h.b16 %v6034
          %v7578 = vunpack.c.l.b16 %v6035
          %v7579 = vunpack.c.h.b16 %v6035
          %v7580 = vunpack.c.l.b16 %v6036
          %v7581 = vunpack.c.h.b16 %v6036
          %v7582 = vunpack.c.l.b16 %v6037
          %v7583 = vunpack.c.h.b16 %v6037
          %v7584 = vunpack.c.l.b16 %v6038
          %v7585 = vunpack.c.h.b16 %v6038
          %v7586 = vunpack.c.l.b16 %v6039
          %v7587 = vunpack.c.h.b16 %v6039
          %v7588 = vunpack.c.l.b16 %v6040
          %v7589 = vunpack.c.h.b16 %v6040
          %v7590 = vunpack.c.l.b16 %v6041
          %v7591 = vunpack.c.h.b16 %v6041
          %v7592 = vunpack.c.l.b16 %v6042
          %v7593 = vunpack.c.h.b16 %v6042
          %v7594 = vunpack.c.l.b16 %v6043
          %v7595 = vunpack.c.h.b16 %v6043
          %v7596 = vunpack.c.l.b16 %v6044
          %v7597 = vunpack.c.h.b16 %v6044
          %v7598 = vpack.c.b16 %v6582, %v6574
          %v7599 = vpack.c.b16 %v6583, %v6575
          %v7600 = vpack.c.b16 %v6584, %v6576
          %v7601 = vpack.c.b16 %v6585, %v6577
          %v7602 = vpack.c.b16 %v6586, %v6578
          %v7603 = vpack.c.b16 %v6587, %v6579
          %v7604 = vpack.c.b16 %v6588, %v6580
          %v7605 = vpack.c.b16 %v6589, %v6581
          %v7606 = vpack.c.b16 %v6598, %v6590
          %v7607 = vpack.c.b16 %v6599, %v6591
          %v7608 = vpack.c.b16 %v6600, %v6592
          %v7609 = vpack.c.b16 %v6601, %v6593
          %v7610 = vpack.c.b16 %v6602, %v6594
          %v7611 = vpack.c.b16 %v6603, %v6595
          %v7612 = vpack.c.b16 %v6604, %v6596
          %v7613 = vpack.c.b16 %v6605, %v6597
          %v7614 = vpack.c.b16 %v6614, %v6606
          %v7615 = vpack.c.b16 %v6615, %v6607
          %v7616 = vpack.c.b16 %v6616, %v6608
          %v7617 = vpack.c.b16 %v6617, %v6609
          %v7618 = vpack.c.b16 %v6618, %v6610
          %v7619 = vpack.c.b16 %v6619, %v6611
          %v7620 = vpack.c.b16 %v6620, %v6612
          %v7621 = vpack.c.b16 %v6621, %v6613
          %v7622 = vpack.c.b16 %v6630, %v6622
          %v7623 = vpack.c.b16 %v6631, %v6623
          %v7624 = vpack.c.b16 %v6632, %v6624
          %v7625 = vpack.c.b16 %v6633, %v6625
          %v7626 = vpack.c.b16 %v6634, %v6626
          %v7627 = vpack.c.b16 %v6635, %v6627
          %v7628 = vpack.c.b16 %v6636, %v6628
          %v7629 = vpack.c.b16 %v6637, %v6629
          %v7630 = vpack.c.b16 %v6646, %v6638
          %v7631 = vpack.c.b16 %v6647, %v6639
          %v7632 = vpack.c.b16 %v6648, %v6640
          %v7633 = vpack.c.b16 %v6649, %v6641
          %v7634 = vpack.c.b16 %v6650, %v6642
          %v7635 = vpack.c.b16 %v6651, %v6643
          %v7636 = vpack.c.b16 %v6652, %v6644
          %v7637 = vpack.c.b16 %v6653, %v6645
          %v7638 = vpack.c.b16 %v6662, %v6654
          %v7639 = vpack.c.b16 %v6663, %v6655
          %v7640 = vpack.c.b16 %v6664, %v6656
          %v7641 = vpack.c.b16 %v6665, %v6657
          %v7642 = vpack.c.b16 %v6666, %v6658
          %v7643 = vpack.c.b16 %v6667, %v6659
          %v7644 = vpack.c.b16 %v6668, %v6660
          %v7645 = vpack.c.b16 %v6669, %v6661
          %v7646 = vpack.c.b16 %v6678, %v6670
          %v7647 = vpack.c.b16 %v6679, %v6671
          %v7648 = vpack.c.b16 %v6680, %v6672
          %v7649 = vpack.c.b16 %v6681, %v6673
          %v7650 = vpack.c.b16 %v6682, %v6674
          %v7651 = vpack.c.b16 %v6683, %v6675
          %v7652 = vpack.c.b16 %v6684, %v6676
          %v7653 = vpack.c.b16 %v6685, %v6677
          %v7654 = vpack.c.b16 %v6694, %v6686
          %v7655 = vpack.c.b16 %v6695, %v6687
          %v7656 = vpack.c.b16 %v6696, %v6688
          %v7657 = vpack.c.b16 %v6697, %v6689
          %v7658 = vpack.c.b16 %v6698, %v6690
          %v7659 = vpack.c.b16 %v6699, %v6691
          %v7660 = vpack.c.b16 %v6700, %v6692
          %v7661 = vpack.c.b16 %v6701, %v6693
          %v7662 = vpack.c.b16 %v6710, %v6702
          %v7663 = vpack.c.b16 %v6711, %v6703
          %v7664 = vpack.c.b16 %v6712, %v6704
          %v7665 = vpack.c.b16 %v6713, %v6705
          %v7666 = vpack.c.b16 %v6714, %v6706
          %v7667 = vpack.c.b16 %v6715, %v6707
          %v7668 = vpack.c.b16 %v6716, %v6708
          %v7669 = vpack.c.b16 %v6717, %v6709
          %v7670 = vpack.c.b16 %v6726, %v6718
          %v7671 = vpack.c.b16 %v6727, %v6719
          %v7672 = vpack.c.b16 %v6728, %v6720
          %v7673 = vpack.c.b16 %v6729, %v6721
          %v7674 = vpack.c.b16 %v6730, %v6722
          %v7675 = vpack.c.b16 %v6731, %v6723
          %v7676 = vpack.c.b16 %v6732, %v6724
          %v7677 = vpack.c.b16 %v6733, %v6725
          %v7678 = vpack.c.b16 %v6742, %v6734
          %v7679 = vpack.c.b16 %v6743, %v6735
          %v7680 = vpack.c.b16 %v6744, %v6736
          %v7681 = vpack.c.b16 %v6745, %v6737
          %v7682 = vpack.c.b16 %v6746, %v6738
          %v7683 = vpack.c.b16 %v6747, %v6739
          %v7684 = vpack.c.b16 %v6748, %v6740
          %v7685 = vpack.c.b16 %v6749, %v6741
          %v7686 = vpack.c.b16 %v6758, %v6750
          %v7687 = vpack.c.b16 %v6759, %v6751
          %v7688 = vpack.c.b16 %v6760, %v6752
          %v7689 = vpack.c.b16 %v6761, %v6753
          %v7690 = vpack.c.b16 %v6762, %v6754
          %v7691 = vpack.c.b16 %v6763, %v6755
          %v7692 = vpack.c.b16 %v6764, %v6756
          %v7693 = vpack.c.b16 %v6765, %v6757
          %v7694 = vpack.c.b16 %v6774, %v6766
          %v7695 = vpack.c.b16 %v6775, %v6767
          %v7696 = vpack.c.b16 %v6776, %v6768
          %v7697 = vpack.c.b16 %v6777, %v6769
          %v7698 = vpack.c.b16 %v6778, %v6770
          %v7699 = vpack.c.b16 %v6779, %v6771
          %v7700 = vpack.c.b16 %v6780, %v6772
          %v7701 = vpack.c.b16 %v6781, %v6773
          %v7702 = vpack.c.b16 %v6790, %v6782
          %v7703 = vpack.c.b16 %v6791, %v6783
          %v7704 = vpack.c.b16 %v6792, %v6784
          %v7705 = vpack.c.b16 %v6793, %v6785
          %v7706 = vpack.c.b16 %v6794, %v6786
          %v7707 = vpack.c.b16 %v6795, %v6787
          %v7708 = vpack.c.b16 %v6796, %v6788
          %v7709 = vpack.c.b16 %v6797, %v6789
          %v7710 = vpack.c.b16 %v6806, %v6798
          %v7711 = vpack.c.b16 %v6807, %v6799
          %v7712 = vpack.c.b16 %v6808, %v6800
          %v7713 = vpack.c.b16 %v6809, %v6801
          %v7714 = vpack.c.b16 %v6810, %v6802
          %v7715 = vpack.c.b16 %v6811, %v6803
          %v7716 = vpack.c.b16 %v6812, %v6804
          %v7717 = vpack.c.b16 %v6813, %v6805
          %v7718 = vpack.c.b16 %v6822, %v6814
          %v7719 = vpack.c.b16 %v6823, %v6815
          %v7720 = vpack.c.b16 %v6824, %v6816
          %v7721 = vpack.c.b16 %v6825, %v6817
          %v7722 = vpack.c.b16 %v6826, %v6818
          %v7723 = vpack.c.b16 %v6827, %v6819
          %v7724 = vpack.c.b16 %v6828, %v6820
          %v7725 = vpack.c.b16 %v6829, %v6821
          %v7726 = vpack.c.b16 %v6838, %v6830
          %v7727 = vpack.c.b16 %v6839, %v6831
          %v7728 = vpack.c.b16 %v6840, %v6832
          %v7729 = vpack.c.b16 %v6841, %v6833
          %v7730 = vpack.c.b16 %v6842, %v6834
          %v7731 = vpack.c.b16 %v6843, %v6835
          %v7732 = vpack.c.b16 %v6844, %v6836
          %v7733 = vpack.c.b16 %v6845, %v6837
          %v7734 = vpack.c.b16 %v6854, %v6846
          %v7735 = vpack.c.b16 %v6855, %v6847
          %v7736 = vpack.c.b16 %v6856, %v6848
          %v7737 = vpack.c.b16 %v6857, %v6849
          %v7738 = vpack.c.b16 %v6858, %v6850
          %v7739 = vpack.c.b16 %v6859, %v6851
          %v7740 = vpack.c.b16 %v6860, %v6852
          %v7741 = vpack.c.b16 %v6861, %v6853
          %v7742 = vpack.c.b16 %v6870, %v6862
          %v7743 = vpack.c.b16 %v6871, %v6863
          %v7744 = vpack.c.b16 %v6872, %v6864
          %v7745 = vpack.c.b16 %v6873, %v6865
          %v7746 = vpack.c.b16 %v6874, %v6866
          %v7747 = vpack.c.b16 %v6875, %v6867
          %v7748 = vpack.c.b16 %v6876, %v6868
          %v7749 = vpack.c.b16 %v6877, %v6869
          %v7750 = vpack.c.b16 %v6886, %v6878
          %v7751 = vpack.c.b16 %v6887, %v6879
          %v7752 = vpack.c.b16 %v6888, %v6880
          %v7753 = vpack.c.b16 %v6889, %v6881
          %v7754 = vpack.c.b16 %v6890, %v6882
          %v7755 = vpack.c.b16 %v6891, %v6883
          %v7756 = vpack.c.b16 %v6892, %v6884
          %v7757 = vpack.c.b16 %v6893, %v6885
          %v7758 = vpack.c.b16 %v6902, %v6894
          %v7759 = vpack.c.b16 %v6903, %v6895
          %v7760 = vpack.c.b16 %v6904, %v6896
          %v7761 = vpack.c.b16 %v6905, %v6897
          %v7762 = vpack.c.b16 %v6906, %v6898
          %v7763 = vpack.c.b16 %v6907, %v6899
          %v7764 = vpack.c.b16 %v6908, %v6900
          %v7765 = vpack.c.b16 %v6909, %v6901
          %v7766 = vpack.c.b16 %v6918, %v6910
          %v7767 = vpack.c.b16 %v6919, %v6911
          %v7768 = vpack.c.b16 %v6920, %v6912
          %v7769 = vpack.c.b16 %v6921, %v6913
          %v7770 = vpack.c.b16 %v6922, %v6914
          %v7771 = vpack.c.b16 %v6923, %v6915
          %v7772 = vpack.c.b16 %v6924, %v6916
          %v7773 = vpack.c.b16 %v6925, %v6917
          %v7774 = vpack.c.b16 %v6934, %v6926
          %v7775 = vpack.c.b16 %v6935, %v6927
          %v7776 = vpack.c.b16 %v6936, %v6928
          %v7777 = vpack.c.b16 %v6937, %v6929
          %v7778 = vpack.c.b16 %v6938, %v6930
          %v7779 = vpack.c.b16 %v6939, %v6931
          %v7780 = vpack.c.b16 %v6940, %v6932
          %v7781 = vpack.c.b16 %v6941, %v6933
          %v7782 = vpack.c.b16 %v6950, %v6942
          %v7783 = vpack.c.b16 %v6951, %v6943
          %v7784 = vpack.c.b16 %v6952, %v6944
          %v7785 = vpack.c.b16 %v6953, %v6945
          %v7786 = vpack.c.b16 %v6954, %v6946
          %v7787 = vpack.c.b16 %v6955, %v6947
          %v7788 = vpack.c.b16 %v6956, %v6948
          %v7789 = vpack.c.b16 %v6957, %v6949
          %v7790 = vpack.c.b16 %v6966, %v6958
          %v7791 = vpack.c.b16 %v6967, %v6959
          %v7792 = vpack.c.b16 %v6968, %v6960
          %v7793 = vpack.c.b16 %v6969, %v6961
          %v7794 = vpack.c.b16 %v6970, %v6962
          %v7795 = vpack.c.b16 %v6971, %v6963
          %v7796 = vpack.c.b16 %v6972, %v6964
          %v7797 = vpack.c.b16 %v6973, %v6965
          %v7798 = vpack.c.b16 %v6982, %v6974
          %v7799 = vpack.c.b16 %v6983, %v6975
          %v7800 = vpack.c.b16 %v6984, %v6976
          %v7801 = vpack.c.b16 %v6985, %v6977
          %v7802 = vpack.c.b16 %v6986, %v6978
          %v7803 = vpack.c.b16 %v6987, %v6979
          %v7804 = vpack.c.b16 %v6988, %v6980
          %v7805 = vpack.c.b16 %v6989, %v6981
          %v7806 = vpack.c.b16 %v6998, %v6990
          %v7807 = vpack.c.b16 %v6999, %v6991
          %v7808 = vpack.c.b16 %v7000, %v6992
          %v7809 = vpack.c.b16 %v7001, %v6993
          %v7810 = vpack.c.b16 %v7002, %v6994
          %v7811 = vpack.c.b16 %v7003, %v6995
          %v7812 = vpack.c.b16 %v7004, %v6996
          %v7813 = vpack.c.b16 %v7005, %v6997
          %v7814 = vpack.c.b16 %v7014, %v7006
          %v7815 = vpack.c.b16 %v7015, %v7007
          %v7816 = vpack.c.b16 %v7016, %v7008
          %v7817 = vpack.c.b16 %v7017, %v7009
          %v7818 = vpack.c.b16 %v7018, %v7010
          %v7819 = vpack.c.b16 %v7019, %v7011
          %v7820 = vpack.c.b16 %v7020, %v7012
          %v7821 = vpack.c.b16 %v7021, %v7013
          %v7822 = vpack.c.b16 %v7030, %v7022
          %v7823 = vpack.c.b16 %v7031, %v7023
          %v7824 = vpack.c.b16 %v7032, %v7024
          %v7825 = vpack.c.b16 %v7033, %v7025
          %v7826 = vpack.c.b16 %v7034, %v7026
          %v7827 = vpack.c.b16 %v7035, %v7027
          %v7828 = vpack.c.b16 %v7036, %v7028
          %v7829 = vpack.c.b16 %v7037, %v7029
          %v7830 = vpack.c.b16 %v7046, %v7038
          %v7831 = vpack.c.b16 %v7047, %v7039
          %v7832 = vpack.c.b16 %v7048, %v7040
          %v7833 = vpack.c.b16 %v7049, %v7041
          %v7834 = vpack.c.b16 %v7050, %v7042
          %v7835 = vpack.c.b16 %v7051, %v7043
          %v7836 = vpack.c.b16 %v7052, %v7044
          %v7837 = vpack.c.b16 %v7053, %v7045
          %v7838 = vpack.c.b16 %v7062, %v7054
          %v7839 = vpack.c.b16 %v7063, %v7055
          %v7840 = vpack.c.b16 %v7064, %v7056
          %v7841 = vpack.c.b16 %v7065, %v7057
          %v7842 = vpack.c.b16 %v7066, %v7058
          %v7843 = vpack.c.b16 %v7067, %v7059
          %v7844 = vpack.c.b16 %v7068, %v7060
          %v7845 = vpack.c.b16 %v7069, %v7061
          %v7846 = vpack.c.b16 %v7078, %v7070
          %v7847 = vpack.c.b16 %v7079, %v7071
          %v7848 = vpack.c.b16 %v7080, %v7072
          %v7849 = vpack.c.b16 %v7081, %v7073
          %v7850 = vpack.c.b16 %v7082, %v7074
          %v7851 = vpack.c.b16 %v7083, %v7075
          %v7852 = vpack.c.b16 %v7084, %v7076
          %v7853 = vpack.c.b16 %v7085, %v7077
          %v7854 = vpack.c.b16 %v7094, %v7086
          %v7855 = vpack.c.b16 %v7095, %v7087
          %v7856 = vpack.c.b16 %v7096, %v7088
          %v7857 = vpack.c.b16 %v7097, %v7089
          %v7858 = vpack.c.b16 %v7098, %v7090
          %v7859 = vpack.c.b16 %v7099, %v7091
          %v7860 = vpack.c.b16 %v7100, %v7092
          %v7861 = vpack.c.b16 %v7101, %v7093
          %v7862 = vpack.c.b16 %v7110, %v7102
          %v7863 = vpack.c.b16 %v7111, %v7103
          %v7864 = vpack.c.b16 %v7112, %v7104
          %v7865 = vpack.c.b16 %v7113, %v7105
          %v7866 = vpack.c.b16 %v7114, %v7106
          %v7867 = vpack.c.b16 %v7115, %v7107
          %v7868 = vpack.c.b16 %v7116, %v7108
          %v7869 = vpack.c.b16 %v7117, %v7109
          %v7870 = vpack.c.b16 %v7126, %v7118
          %v7871 = vpack.c.b16 %v7127, %v7119
          %v7872 = vpack.c.b16 %v7128, %v7120
          %v7873 = vpack.c.b16 %v7129, %v7121
          %v7874 = vpack.c.b16 %v7130, %v7122
          %v7875 = vpack.c.b16 %v7131, %v7123
          %v7876 = vpack.c.b16 %v7132, %v7124
          %v7877 = vpack.c.b16 %v7133, %v7125
          %v7878 = vpack.c.b16 %v7142, %v7134
          %v7879 = vpack.c.b16 %v7143, %v7135
          %v7880 = vpack.c.b16 %v7144, %v7136
          %v7881 = vpack.c.b16 %v7145, %v7137
          %v7882 = vpack.c.b16 %v7146, %v7138
          %v7883 = vpack.c.b16 %v7147, %v7139
          %v7884 = vpack.c.b16 %v7148, %v7140
          %v7885 = vpack.c.b16 %v7149, %v7141
          %v7886 = vpack.c.b16 %v7158, %v7150
          %v7887 = vpack.c.b16 %v7159, %v7151
          %v7888 = vpack.c.b16 %v7160, %v7152
          %v7889 = vpack.c.b16 %v7161, %v7153
          %v7890 = vpack.c.b16 %v7162, %v7154
          %v7891 = vpack.c.b16 %v7163, %v7155
          %v7892 = vpack.c.b16 %v7164, %v7156
          %v7893 = vpack.c.b16 %v7165, %v7157
          %v7894 = vpack.c.b16 %v7174, %v7166
          %v7895 = vpack.c.b16 %v7175, %v7167
          %v7896 = vpack.c.b16 %v7176, %v7168
          %v7897 = vpack.c.b16 %v7177, %v7169
          %v7898 = vpack.c.b16 %v7178, %v7170
          %v7899 = vpack.c.b16 %v7179, %v7171
          %v7900 = vpack.c.b16 %v7180, %v7172
          %v7901 = vpack.c.b16 %v7181, %v7173
          %v7902 = vpack.c.b16 %v7190, %v7182
          %v7903 = vpack.c.b16 %v7191, %v7183
          %v7904 = vpack.c.b16 %v7192, %v7184
          %v7905 = vpack.c.b16 %v7193, %v7185
          %v7906 = vpack.c.b16 %v7194, %v7186
          %v7907 = vpack.c.b16 %v7195, %v7187
          %v7908 = vpack.c.b16 %v7196, %v7188
          %v7909 = vpack.c.b16 %v7197, %v7189
          %v7910 = vpack.c.b16 %v7206, %v7198
          %v7911 = vpack.c.b16 %v7207, %v7199
          %v7912 = vpack.c.b16 %v7208, %v7200
          %v7913 = vpack.c.b16 %v7209, %v7201
          %v7914 = vpack.c.b16 %v7210, %v7202
          %v7915 = vpack.c.b16 %v7211, %v7203
          %v7916 = vpack.c.b16 %v7212, %v7204
          %v7917 = vpack.c.b16 %v7213, %v7205
          %v7918 = vpack.c.b16 %v7222, %v7214
          %v7919 = vpack.c.b16 %v7223, %v7215
          %v7920 = vpack.c.b16 %v7224, %v7216
          %v7921 = vpack.c.b16 %v7225, %v7217
          %v7922 = vpack.c.b16 %v7226, %v7218
          %v7923 = vpack.c.b16 %v7227, %v7219
          %v7924 = vpack.c.b16 %v7228, %v7220
          %v7925 = vpack.c.b16 %v7229, %v7221
          %v7926 = vpack.c.b16 %v7238, %v7230
          %v7927 = vpack.c.b16 %v7239, %v7231
          %v7928 = vpack.c.b16 %v7240, %v7232
          %v7929 = vpack.c.b16 %v7241, %v7233
          %v7930 = vpack.c.b16 %v7242, %v7234
          %v7931 = vpack.c.b16 %v7243, %v7235
          %v7932 = vpack.c.b16 %v7244, %v7236
          %v7933 = vpack.c.b16 %v7245, %v7237
          %v7934 = vpack.c.b16 %v7254, %v7246
          %v7935 = vpack.c.b16 %v7255, %v7247
          %v7936 = vpack.c.b16 %v7256, %v7248
          %v7937 = vpack.c.b16 %v7257, %v7249
          %v7938 = vpack.c.b16 %v7258, %v7250
          %v7939 = vpack.c.b16 %v7259, %v7251
          %v7940 = vpack.c.b16 %v7260, %v7252
          %v7941 = vpack.c.b16 %v7261, %v7253
          %v7942 = vpack.c.b16 %v7270, %v7262
          %v7943 = vpack.c.b16 %v7271, %v7263
          %v7944 = vpack.c.b16 %v7272, %v7264
          %v7945 = vpack.c.b16 %v7273, %v7265
          %v7946 = vpack.c.b16 %v7274, %v7266
          %v7947 = vpack.c.b16 %v7275, %v7267
          %v7948 = vpack.c.b16 %v7276, %v7268
          %v7949 = vpack.c.b16 %v7277, %v7269
          %v7950 = vpack.c.b16 %v7286, %v7278
          %v7951 = vpack.c.b16 %v7287, %v7279
          %v7952 = vpack.c.b16 %v7288, %v7280
          %v7953 = vpack.c.b16 %v7289, %v7281
          %v7954 = vpack.c.b16 %v7290, %v7282
          %v7955 = vpack.c.b16 %v7291, %v7283
          %v7956 = vpack.c.b16 %v7292, %v7284
          %v7957 = vpack.c.b16 %v7293, %v7285
          %v7958 = vpack.c.b16 %v7302, %v7294
          %v7959 = vpack.c.b16 %v7303, %v7295
          %v7960 = vpack.c.b16 %v7304, %v7296
          %v7961 = vpack.c.b16 %v7305, %v7297
          %v7962 = vpack.c.b16 %v7306, %v7298
          %v7963 = vpack.c.b16 %v7307, %v7299
          %v7964 = vpack.c.b16 %v7308, %v7300
          %v7965 = vpack.c.b16 %v7309, %v7301
          %v7966 = vpack.c.b16 %v7318, %v7310
          %v7967 = vpack.c.b16 %v7319, %v7311
          %v7968 = vpack.c.b16 %v7320, %v7312
          %v7969 = vpack.c.b16 %v7321, %v7313
          %v7970 = vpack.c.b16 %v7322, %v7314
          %v7971 = vpack.c.b16 %v7323, %v7315
          %v7972 = vpack.c.b16 %v7324, %v7316
          %v7973 = vpack.c.b16 %v7325, %v7317
          %v7974 = vpack.c.b16 %v7334, %v7326
          %v7975 = vpack.c.b16 %v7335, %v7327
          %v7976 = vpack.c.b16 %v7336, %v7328
          %v7977 = vpack.c.b16 %v7337, %v7329
          %v7978 = vpack.c.b16 %v7338, %v7330
          %v7979 = vpack.c.b16 %v7339, %v7331
          %v7980 = vpack.c.b16 %v7340, %v7332
          %v7981 = vpack.c.b16 %v7341, %v7333
          %v7982 = vpack.c.b16 %v7350, %v7342
          %v7983 = vpack.c.b16 %v7351, %v7343
          %v7984 = vpack.c.b16 %v7352, %v7344
          %v7985 = vpack.c.b16 %v7353, %v7345
          %v7986 = vpack.c.b16 %v7354, %v7346
          %v7987 = vpack.c.b16 %v7355, %v7347
          %v7988 = vpack.c.b16 %v7356, %v7348
          %v7989 = vpack.c.b16 %v7357, %v7349
          %v7990 = vpack.c.b16 %v7366, %v7358
          %v7991 = vpack.c.b16 %v7367, %v7359
          %v7992 = vpack.c.b16 %v7368, %v7360
          %v7993 = vpack.c.b16 %v7369, %v7361
          %v7994 = vpack.c.b16 %v7370, %v7362
          %v7995 = vpack.c.b16 %v7371, %v7363
          %v7996 = vpack.c.b16 %v7372, %v7364
          %v7997 = vpack.c.b16 %v7373, %v7365
          %v7998 = vpack.c.b16 %v7382, %v7374
          %v7999 = vpack.c.b16 %v7383, %v7375
          %v8000 = vpack.c.b16 %v7384, %v7376
          %v8001 = vpack.c.b16 %v7385, %v7377
          %v8002 = vpack.c.b16 %v7386, %v7378
          %v8003 = vpack.c.b16 %v7387, %v7379
          %v8004 = vpack.c.b16 %v7388, %v7380
          %v8005 = vpack.c.b16 %v7389, %v7381
          %v8006 = vpack.c.b16 %v7398, %v7390
          %v8007 = vpack.c.b16 %v7399, %v7391
          %v8008 = vpack.c.b16 %v7400, %v7392
          %v8009 = vpack.c.b16 %v7401, %v7393
          %v8010 = vpack.c.b16 %v7402, %v7394
          %v8011 = vpack.c.b16 %v7403, %v7395
          %v8012 = vpack.c.b16 %v7404, %v7396
          %v8013 = vpack.c.b16 %v7405, %v7397
          %v8014 = vpack.c.b16 %v7414, %v7406
          %v8015 = vpack.c.b16 %v7415, %v7407
          %v8016 = vpack.c.b16 %v7416, %v7408
          %v8017 = vpack.c.b16 %v7417, %v7409
          %v8018 = vpack.c.b16 %v7418, %v7410
          %v8019 = vpack.c.b16 %v7419, %v7411
          %v8020 = vpack.c.b16 %v7420, %v7412
          %v8021 = vpack.c.b16 %v7421, %v7413
          %v8022 = vpack.c.b16 %v7430, %v7422
          %v8023 = vpack.c.b16 %v7431, %v7423
          %v8024 = vpack.c.b16 %v7432, %v7424
          %v8025 = vpack.c.b16 %v7433, %v7425
          %v8026 = vpack.c.b16 %v7434, %v7426
          %v8027 = vpack.c.b16 %v7435, %v7427
          %v8028 = vpack.c.b16 %v7436, %v7428
          %v8029 = vpack.c.b16 %v7437, %v7429
          %v8030 = vpack.c.b16 %v7446, %v7438
          %v8031 = vpack.c.b16 %v7447, %v7439
          %v8032 = vpack.c.b16 %v7448, %v7440
          %v8033 = vpack.c.b16 %v7449, %v7441
          %v8034 = vpack.c.b16 %v7450, %v7442
          %v8035 = vpack.c.b16 %v7451, %v7443
          %v8036 = vpack.c.b16 %v7452, %v7444
          %v8037 = vpack.c.b16 %v7453, %v7445
          %v8038 = vpack.c.b16 %v7462, %v7454
          %v8039 = vpack.c.b16 %v7463, %v7455
          %v8040 = vpack.c.b16 %v7464, %v7456
          %v8041 = vpack.c.b16 %v7465, %v7457
          %v8042 = vpack.c.b16 %v7466, %v7458
          %v8043 = vpack.c.b16 %v7467, %v7459
          %v8044 = vpack.c.b16 %v7468, %v7460
          %v8045 = vpack.c.b16 %v7469, %v7461
          %v8046 = vpack.c.b16 %v7478, %v7470
          %v8047 = vpack.c.b16 %v7479, %v7471
          %v8048 = vpack.c.b16 %v7480, %v7472
          %v8049 = vpack.c.b16 %v7481, %v7473
          %v8050 = vpack.c.b16 %v7482, %v7474
          %v8051 = vpack.c.b16 %v7483, %v7475
          %v8052 = vpack.c.b16 %v7484, %v7476
          %v8053 = vpack.c.b16 %v7485, %v7477
          %v8054 = vpack.c.b16 %v7494, %v7486
          %v8055 = vpack.c.b16 %v7495, %v7487
          %v8056 = vpack.c.b16 %v7496, %v7488
          %v8057 = vpack.c.b16 %v7497, %v7489
          %v8058 = vpack.c.b16 %v7498, %v7490
          %v8059 = vpack.c.b16 %v7499, %v7491
          %v8060 = vpack.c.b16 %v7500, %v7492
          %v8061 = vpack.c.b16 %v7501, %v7493
          %v8062 = vpack.c.b16 %v7510, %v7502
          %v8063 = vpack.c.b16 %v7511, %v7503
          %v8064 = vpack.c.b16 %v7512, %v7504
          %v8065 = vpack.c.b16 %v7513, %v7505
          %v8066 = vpack.c.b16 %v7514, %v7506
          %v8067 = vpack.c.b16 %v7515, %v7507
          %v8068 = vpack.c.b16 %v7516, %v7508
          %v8069 = vpack.c.b16 %v7517, %v7509
          %v8070 = vpack.c.b16 %v7526, %v7518
          %v8071 = vpack.c.b16 %v7527, %v7519
          %v8072 = vpack.c.b16 %v7528, %v7520
          %v8073 = vpack.c.b16 %v7529, %v7521
          %v8074 = vpack.c.b16 %v7530, %v7522
          %v8075 = vpack.c.b16 %v7531, %v7523
          %v8076 = vpack.c.b16 %v7532, %v7524
          %v8077 = vpack.c.b16 %v7533, %v7525
          %v8078 = vpack.c.b16 %v7542, %v7534
          %v8079 = vpack.c.b16 %v7543, %v7535
          %v8080 = vpack.c.b16 %v7544, %v7536
          %v8081 = vpack.c.b16 %v7545, %v7537
          %v8082 = vpack.c.b16 %v7546, %v7538
          %v8083 = vpack.c.b16 %v7547, %v7539
          %v8084 = vpack.c.b16 %v7548, %v7540
          %v8085 = vpack.c.b16 %v7549, %v7541
          %v8086 = vpack.c.b16 %v7558, %v7550
          %v8087 = vpack.c.b16 %v7559, %v7551
          %v8088 = vpack.c.b16 %v7560, %v7552
          %v8089 = vpack.c.b16 %v7561, %v7553
          %v8090 = vpack.c.b16 %v7562, %v7554
          %v8091 = vpack.c.b16 %v7563, %v7555
          %v8092 = vpack.c.b16 %v7564, %v7556
          %v8093 = vpack.c.b16 %v7565, %v7557
          %v8094 = vpack.c.b16 %v7574, %v7566
          %v8095 = vpack.c.b16 %v7575, %v7567
          %v8096 = vpack.c.b16 %v7576, %v7568
          %v8097 = vpack.c.b16 %v7577, %v7569
          %v8098 = vpack.c.b16 %v7578, %v7570
          %v8099 = vpack.c.b16 %v7579, %v7571
          %v8100 = vpack.c.b16 %v7580, %v7572
          %v8101 = vpack.c.b16 %v7581, %v7573
          %v8102 = vpack.c.b16 %v7590, %v7582
          %v8103 = vpack.c.b16 %v7591, %v7583
          %v8104 = vpack.c.b16 %v7592, %v7584
          %v8105 = vpack.c.b16 %v7593, %v7585
          %v8106 = vpack.c.b16 %v7594, %v7586
          %v8107 = vpack.c.b16 %v7595, %v7587
          %v8108 = vpack.c.b16 %v7596, %v7588
          %v8109 = vpack.c.b16 %v7597, %v7589
          %8622 = vmatpush.bf16.msra.mxu0 %v7654
          %8623 = vmatpush.bf16.msra.mxu0 %v7646
          %8624 = vmatpush.bf16.msra.mxu0 %v7638
          %8625 = vmatpush.bf16.msra.mxu0 %v7630
          %8626 = vmatpush.bf16.msra.mxu0 %v7622
          %8627 = vmatpush.bf16.msra.mxu0 %v7614
          %8628 = vmatpush.bf16.msra.mxu0 %v7606
          %8629 = vmatpush.bf16.msra.mxu0 %v7598
          %8630 = vmatmul.bf16.gmra.mxu0 %v5517
          %v8631 = vpop.f32.mrf.mxu0
          %v8632 = vadd.f32 %v6046, %v8631
          %v8633 = vpop.f32.mrf.mxu0
          %v8634 = vadd.f32 %v6046, %v8633
          %8635 = vmatmul.bf16.gmra.mxu0 %v5525
          %v8636 = vpop.f32.mrf.mxu0
          %v8637 = vadd.f32 %v6046, %v8636
          %v8638 = vpop.f32.mrf.mxu0
          %v8639 = vadd.f32 %v6046, %v8638
          %8640 = vdwg.mxu0
          %8641 = vmatpush.bf16.msra.mxu0 %v7718
          %8642 = vmatpush.bf16.msra.mxu0 %v7710
          %8643 = vmatpush.bf16.msra.mxu0 %v7702
          %8644 = vmatpush.bf16.msra.mxu0 %v7694
          %8645 = vmatpush.bf16.msra.mxu0 %v7686
          %8646 = vmatpush.bf16.msra.mxu0 %v7678
          %8647 = vmatpush.bf16.msra.mxu0 %v7670
          %8648 = vmatpush.bf16.msra.mxu0 %v7662
          %8649 = vmatmul.bf16.gmra.mxu0 %v5518
          %v8650 = vpop.f32.mrf.mxu0
          %v8651 = vadd.f32 %v8632, %v8650
          %v8652 = vpop.f32.mrf.mxu0
          %v8653 = vadd.f32 %v8634, %v8652
          %8654 = vmatmul.bf16.gmra.mxu0 %v5526
          %v8655 = vpop.f32.mrf.mxu0
          %v8656 = vadd.f32 %v8637, %v8655
          %v8657 = vpop.f32.mrf.mxu0
          %v8658 = vadd.f32 %v8639, %v8657
          %8659 = vdwg.mxu0
          %8660 = vmatpush.bf16.msra.mxu0 %v7782
          %8661 = vmatpush.bf16.msra.mxu0 %v7774
          %8662 = vmatpush.bf16.msra.mxu0 %v7766
          %8663 = vmatpush.bf16.msra.mxu0 %v7758
          %8664 = vmatpush.bf16.msra.mxu0 %v7750
          %8665 = vmatpush.bf16.msra.mxu0 %v7742
          %8666 = vmatpush.bf16.msra.mxu0 %v7734
          %8667 = vmatpush.bf16.msra.mxu0 %v7726
          %8668 = vmatmul.bf16.gmra.mxu0 %v5519
          %v8669 = vpop.f32.mrf.mxu0
          %v8670 = vadd.f32 %v8651, %v8669
          %v8671 = vpop.f32.mrf.mxu0
          %v8672 = vadd.f32 %v8653, %v8671
          %8673 = vmatmul.bf16.gmra.mxu0 %v5527
          %v8674 = vpop.f32.mrf.mxu0
          %v8675 = vadd.f32 %v8656, %v8674
          %v8676 = vpop.f32.mrf.mxu0
          %v8677 = vadd.f32 %v8658, %v8676
          %8678 = vdwg.mxu0
          %8679 = vmatpush.bf16.msra.mxu0 %v7846
          %8680 = vmatpush.bf16.msra.mxu0 %v7838
          %8681 = vmatpush.bf16.msra.mxu0 %v7830
          %8682 = vmatpush.bf16.msra.mxu0 %v7822
          %8683 = vmatpush.bf16.msra.mxu0 %v7814
          %8684 = vmatpush.bf16.msra.mxu0 %v7806
          %8685 = vmatpush.bf16.msra.mxu0 %v7798
          %8686 = vmatpush.bf16.msra.mxu0 %v7790
          %8687 = vmatmul.bf16.gmra.mxu0 %v5520
          %v8688 = vpop.f32.mrf.mxu0
          %v8689 = vadd.f32 %v8670, %v8688
          %v8690 = vpop.f32.mrf.mxu0
          %v8691 = vadd.f32 %v8672, %v8690
          %8692 = vmatmul.bf16.gmra.mxu0 %v5528
          %v8693 = vpop.f32.mrf.mxu0
          %v8694 = vadd.f32 %v8675, %v8693
          %v8695 = vpop.f32.mrf.mxu0
          %v8696 = vadd.f32 %v8677, %v8695
          %8697 = vdwg.mxu0
          %8698 = vmatpush.bf16.msra.mxu0 %v7910
          %8699 = vmatpush.bf16.msra.mxu0 %v7902
          %8700 = vmatpush.bf16.msra.mxu0 %v7894
          %8701 = vmatpush.bf16.msra.mxu0 %v7886
          %8702 = vmatpush.bf16.msra.mxu0 %v7878
          %8703 = vmatpush.bf16.msra.mxu0 %v7870
          %8704 = vmatpush.bf16.msra.mxu0 %v7862
          %8705 = vmatpush.bf16.msra.mxu0 %v7854
          %8706 = vmatmul.bf16.gmra.mxu0 %v5521
          %v8707 = vpop.f32.mrf.mxu0
          %v8708 = vadd.f32 %v8689, %v8707
          %v8709 = vpop.f32.mrf.mxu0
          %v8710 = vadd.f32 %v8691, %v8709
          %8711 = vmatmul.bf16.gmra.mxu0 %v5529
          %v8712 = vpop.f32.mrf.mxu0
          %v8713 = vadd.f32 %v8694, %v8712
          %v8714 = vpop.f32.mrf.mxu0
          %v8715 = vadd.f32 %v8696, %v8714
          %8716 = vdwg.mxu0
          %8717 = vmatpush.bf16.msra.mxu0 %v7974
          %8718 = vmatpush.bf16.msra.mxu0 %v7966
          %8719 = vmatpush.bf16.msra.mxu0 %v7958
          %8720 = vmatpush.bf16.msra.mxu0 %v7950
          %8721 = vmatpush.bf16.msra.mxu0 %v7942
          %8722 = vmatpush.bf16.msra.mxu0 %v7934
          %8723 = vmatpush.bf16.msra.mxu0 %v7926
          %8724 = vmatpush.bf16.msra.mxu0 %v7918
          %8725 = vmatmul.bf16.gmra.mxu0 %v5522
          %v8726 = vpop.f32.mrf.mxu0
          %v8727 = vadd.f32 %v8708, %v8726
          %v8728 = vpop.f32.mrf.mxu0
          %v8729 = vadd.f32 %v8710, %v8728
          %8730 = vmatmul.bf16.gmra.mxu0 %v5530
          %v8731 = vpop.f32.mrf.mxu0
          %v8732 = vadd.f32 %v8713, %v8731
          %v8733 = vpop.f32.mrf.mxu0
          %v8734 = vadd.f32 %v8715, %v8733
          %8735 = vdwg.mxu0
          %8736 = vmatpush.bf16.msra.mxu0 %v8038
          %8737 = vmatpush.bf16.msra.mxu0 %v8030
          %8738 = vmatpush.bf16.msra.mxu0 %v8022
          %8739 = vmatpush.bf16.msra.mxu0 %v8014
          %8740 = vmatpush.bf16.msra.mxu0 %v8006
          %8741 = vmatpush.bf16.msra.mxu0 %v7998
          %8742 = vmatpush.bf16.msra.mxu0 %v7990
          %8743 = vmatpush.bf16.msra.mxu0 %v7982
          %8744 = vmatmul.bf16.gmra.mxu0 %v5523
          %v8745 = vpop.f32.mrf.mxu0
          %v8746 = vadd.f32 %v8727, %v8745
          %v8747 = vpop.f32.mrf.mxu0
          %v8748 = vadd.f32 %v8729, %v8747
          %8749 = vmatmul.bf16.gmra.mxu0 %v5531
          %v8750 = vpop.f32.mrf.mxu0
          %v8751 = vadd.f32 %v8732, %v8750
          %v8752 = vpop.f32.mrf.mxu0
          %v8753 = vadd.f32 %v8734, %v8752
          %8754 = vdwg.mxu0
          %8755 = vmatpush.bf16.msra.mxu0 %v8102
          %8756 = vmatpush.bf16.msra.mxu0 %v8094
          %8757 = vmatpush.bf16.msra.mxu0 %v8086
          %8758 = vmatpush.bf16.msra.mxu0 %v8078
          %8759 = vmatpush.bf16.msra.mxu0 %v8070
          %8760 = vmatpush.bf16.msra.mxu0 %v8062
          %8761 = vmatpush.bf16.msra.mxu0 %v8054
          %8762 = vmatpush.bf16.msra.mxu0 %v8046
          %8763 = vmatmul.bf16.gmra.mxu0 %v5524
          %v8764 = vpop.f32.mrf.mxu0
          %v8765 = vadd.f32 %v8746, %v8764
          %v8766 = vpop.f32.mrf.mxu0
          %v8767 = vadd.f32 %v8748, %v8766
          %8768 = vmatmul.bf16.gmra.mxu0 %v5532
          %v8769 = vpop.f32.mrf.mxu0
          %v8770 = vadd.f32 %v8751, %v8769
          %v8771 = vpop.f32.mrf.mxu0
          %v8772 = vadd.f32 %v8753, %v8771
          %8773 = vdwg.mxu0
          %8774 = vmatpush.bf16.msra.mxu0 %v7655
          %8775 = vmatpush.bf16.msra.mxu0 %v7647
          %8776 = vmatpush.bf16.msra.mxu0 %v7639
          %8777 = vmatpush.bf16.msra.mxu0 %v7631
          %8778 = vmatpush.bf16.msra.mxu0 %v7623
          %8779 = vmatpush.bf16.msra.mxu0 %v7615
          %8780 = vmatpush.bf16.msra.mxu0 %v7607
          %8781 = vmatpush.bf16.msra.mxu0 %v7599
          %8782 = vmatmul.bf16.gmra.mxu0 %v5517
          %v8783 = vpop.f32.mrf.mxu0
          %v8784 = vadd.f32 %v6047, %v8783
          %v8785 = vpop.f32.mrf.mxu0
          %v8786 = vadd.f32 %v6047, %v8785
          %8787 = vmatmul.bf16.gmra.mxu0 %v5525
          %v8788 = vpop.f32.mrf.mxu0
          %v8789 = vadd.f32 %v6047, %v8788
          %v8790 = vpop.f32.mrf.mxu0
          %v8791 = vadd.f32 %v6047, %v8790
          %8792 = vdwg.mxu0
          %8793 = vmatpush.bf16.msra.mxu0 %v7719
          %8794 = vmatpush.bf16.msra.mxu0 %v7711
          %8795 = vmatpush.bf16.msra.mxu0 %v7703
          %8796 = vmatpush.bf16.msra.mxu0 %v7695
          %8797 = vmatpush.bf16.msra.mxu0 %v7687
          %8798 = vmatpush.bf16.msra.mxu0 %v7679
          %8799 = vmatpush.bf16.msra.mxu0 %v7671
          %8800 = vmatpush.bf16.msra.mxu0 %v7663
          %8801 = vmatmul.bf16.gmra.mxu0 %v5518
          %v8802 = vpop.f32.mrf.mxu0
          %v8803 = vadd.f32 %v8784, %v8802
          %v8804 = vpop.f32.mrf.mxu0
          %v8805 = vadd.f32 %v8786, %v8804
          %8806 = vmatmul.bf16.gmra.mxu0 %v5526
          %v8807 = vpop.f32.mrf.mxu0
          %v8808 = vadd.f32 %v8789, %v8807
          %v8809 = vpop.f32.mrf.mxu0
          %v8810 = vadd.f32 %v8791, %v8809
          %8811 = vdwg.mxu0
          %8812 = vmatpush.bf16.msra.mxu0 %v7783
          %8813 = vmatpush.bf16.msra.mxu0 %v7775
          %8814 = vmatpush.bf16.msra.mxu0 %v7767
          %8815 = vmatpush.bf16.msra.mxu0 %v7759
          %8816 = vmatpush.bf16.msra.mxu0 %v7751
          %8817 = vmatpush.bf16.msra.mxu0 %v7743
          %8818 = vmatpush.bf16.msra.mxu0 %v7735
          %8819 = vmatpush.bf16.msra.mxu0 %v7727
          %8820 = vmatmul.bf16.gmra.mxu0 %v5519
          %v8821 = vpop.f32.mrf.mxu0
          %v8822 = vadd.f32 %v8803, %v8821
          %v8823 = vpop.f32.mrf.mxu0
          %v8824 = vadd.f32 %v8805, %v8823
          %8825 = vmatmul.bf16.gmra.mxu0 %v5527
          %v8826 = vpop.f32.mrf.mxu0
          %v8827 = vadd.f32 %v8808, %v8826
          %v8828 = vpop.f32.mrf.mxu0
          %v8829 = vadd.f32 %v8810, %v8828
          %8830 = vdwg.mxu0
          %8831 = vmatpush.bf16.msra.mxu0 %v7847
          %8832 = vmatpush.bf16.msra.mxu0 %v7839
          %8833 = vmatpush.bf16.msra.mxu0 %v7831
          %8834 = vmatpush.bf16.msra.mxu0 %v7823
          %8835 = vmatpush.bf16.msra.mxu0 %v7815
          %8836 = vmatpush.bf16.msra.mxu0 %v7807
          %8837 = vmatpush.bf16.msra.mxu0 %v7799
          %8838 = vmatpush.bf16.msra.mxu0 %v7791
          %8839 = vmatmul.bf16.gmra.mxu0 %v5520
          %v8840 = vpop.f32.mrf.mxu0
          %v8841 = vadd.f32 %v8822, %v8840
          %v8842 = vpop.f32.mrf.mxu0
          %v8843 = vadd.f32 %v8824, %v8842
          %8844 = vmatmul.bf16.gmra.mxu0 %v5528
          %v8845 = vpop.f32.mrf.mxu0
          %v8846 = vadd.f32 %v8827, %v8845
          %v8847 = vpop.f32.mrf.mxu0
          %v8848 = vadd.f32 %v8829, %v8847
          %8849 = vdwg.mxu0
          %8850 = vmatpush.bf16.msra.mxu0 %v7911
          %8851 = vmatpush.bf16.msra.mxu0 %v7903
          %8852 = vmatpush.bf16.msra.mxu0 %v7895
          %8853 = vmatpush.bf16.msra.mxu0 %v7887
          %8854 = vmatpush.bf16.msra.mxu0 %v7879
          %8855 = vmatpush.bf16.msra.mxu0 %v7871
          %8856 = vmatpush.bf16.msra.mxu0 %v7863
          %8857 = vmatpush.bf16.msra.mxu0 %v7855
          %8858 = vmatmul.bf16.gmra.mxu0 %v5521
          %v8859 = vpop.f32.mrf.mxu0
          %v8860 = vadd.f32 %v8841, %v8859
          %v8861 = vpop.f32.mrf.mxu0
          %v8862 = vadd.f32 %v8843, %v8861
          %8863 = vmatmul.bf16.gmra.mxu0 %v5529
          %v8864 = vpop.f32.mrf.mxu0
          %v8865 = vadd.f32 %v8846, %v8864
          %v8866 = vpop.f32.mrf.mxu0
          %v8867 = vadd.f32 %v8848, %v8866
          %8868 = vdwg.mxu0
          %8869 = vmatpush.bf16.msra.mxu0 %v7975
          %8870 = vmatpush.bf16.msra.mxu0 %v7967
          %8871 = vmatpush.bf16.msra.mxu0 %v7959
          %8872 = vmatpush.bf16.msra.mxu0 %v7951
          %8873 = vmatpush.bf16.msra.mxu0 %v7943
          %8874 = vmatpush.bf16.msra.mxu0 %v7935
          %8875 = vmatpush.bf16.msra.mxu0 %v7927
          %8876 = vmatpush.bf16.msra.mxu0 %v7919
          %8877 = vmatmul.bf16.gmra.mxu0 %v5522
          %v8878 = vpop.f32.mrf.mxu0
          %v8879 = vadd.f32 %v8860, %v8878
          %v8880 = vpop.f32.mrf.mxu0
          %v8881 = vadd.f32 %v8862, %v8880
          %8882 = vmatmul.bf16.gmra.mxu0 %v5530
          %v8883 = vpop.f32.mrf.mxu0
          %v8884 = vadd.f32 %v8865, %v8883
          %v8885 = vpop.f32.mrf.mxu0
          %v8886 = vadd.f32 %v8867, %v8885
          %8887 = vdwg.mxu0
          %8888 = vmatpush.bf16.msra.mxu0 %v8039
          %8889 = vmatpush.bf16.msra.mxu0 %v8031
          %8890 = vmatpush.bf16.msra.mxu0 %v8023
          %8891 = vmatpush.bf16.msra.mxu0 %v8015
          %8892 = vmatpush.bf16.msra.mxu0 %v8007
          %8893 = vmatpush.bf16.msra.mxu0 %v7999
          %8894 = vmatpush.bf16.msra.mxu0 %v7991
          %8895 = vmatpush.bf16.msra.mxu0 %v7983
          %8896 = vmatmul.bf16.gmra.mxu0 %v5523
          %v8897 = vpop.f32.mrf.mxu0
          %v8898 = vadd.f32 %v8879, %v8897
          %v8899 = vpop.f32.mrf.mxu0
          %v8900 = vadd.f32 %v8881, %v8899
          %8901 = vmatmul.bf16.gmra.mxu0 %v5531
          %v8902 = vpop.f32.mrf.mxu0
          %v8903 = vadd.f32 %v8884, %v8902
          %v8904 = vpop.f32.mrf.mxu0
          %v8905 = vadd.f32 %v8886, %v8904
          %8906 = vdwg.mxu0
          %8907 = vmatpush.bf16.msra.mxu0 %v8103
          %8908 = vmatpush.bf16.msra.mxu0 %v8095
          %8909 = vmatpush.bf16.msra.mxu0 %v8087
          %8910 = vmatpush.bf16.msra.mxu0 %v8079
          %8911 = vmatpush.bf16.msra.mxu0 %v8071
          %8912 = vmatpush.bf16.msra.mxu0 %v8063
          %8913 = vmatpush.bf16.msra.mxu0 %v8055
          %8914 = vmatpush.bf16.msra.mxu0 %v8047
          %8915 = vmatmul.bf16.gmra.mxu0 %v5524
          %v8916 = vpop.f32.mrf.mxu0
          %v8917 = vadd.f32 %v8898, %v8916
          %v8918 = vpop.f32.mrf.mxu0
          %v8919 = vadd.f32 %v8900, %v8918
          %8920 = vmatmul.bf16.gmra.mxu0 %v5532
          %v8921 = vpop.f32.mrf.mxu0
          %v8922 = vadd.f32 %v8903, %v8921
          %v8923 = vpop.f32.mrf.mxu0
          %v8924 = vadd.f32 %v8905, %v8923
          %8925 = vdwg.mxu0
          %8926 = vmatpush.bf16.msra.mxu0 %v7656
          %8927 = vmatpush.bf16.msra.mxu0 %v7648
          %8928 = vmatpush.bf16.msra.mxu0 %v7640
          %8929 = vmatpush.bf16.msra.mxu0 %v7632
          %8930 = vmatpush.bf16.msra.mxu0 %v7624
          %8931 = vmatpush.bf16.msra.mxu0 %v7616
          %8932 = vmatpush.bf16.msra.mxu0 %v7608
          %8933 = vmatpush.bf16.msra.mxu0 %v7600
          %8934 = vmatmul.bf16.gmra.mxu0 %v5517
          %v8935 = vpop.f32.mrf.mxu0
          %v8936 = vadd.f32 %v6048, %v8935
          %v8937 = vpop.f32.mrf.mxu0
          %v8938 = vadd.f32 %v6048, %v8937
          %8939 = vmatmul.bf16.gmra.mxu0 %v5525
          %v8940 = vpop.f32.mrf.mxu0
          %v8941 = vadd.f32 %v6048, %v8940
          %v8942 = vpop.f32.mrf.mxu0
          %v8943 = vadd.f32 %v6048, %v8942
          %8944 = vdwg.mxu0
          %8945 = vmatpush.bf16.msra.mxu0 %v7720
          %8946 = vmatpush.bf16.msra.mxu0 %v7712
          %8947 = vmatpush.bf16.msra.mxu0 %v7704
          %8948 = vmatpush.bf16.msra.mxu0 %v7696
          %8949 = vmatpush.bf16.msra.mxu0 %v7688
          %8950 = vmatpush.bf16.msra.mxu0 %v7680
          %8951 = vmatpush.bf16.msra.mxu0 %v7672
          %8952 = vmatpush.bf16.msra.mxu0 %v7664
          %8953 = vmatmul.bf16.gmra.mxu0 %v5518
          %v8954 = vpop.f32.mrf.mxu0
          %v8955 = vadd.f32 %v8936, %v8954
          %v8956 = vpop.f32.mrf.mxu0
          %v8957 = vadd.f32 %v8938, %v8956
          %8958 = vmatmul.bf16.gmra.mxu0 %v5526
          %v8959 = vpop.f32.mrf.mxu0
          %v8960 = vadd.f32 %v8941, %v8959
          %v8961 = vpop.f32.mrf.mxu0
          %v8962 = vadd.f32 %v8943, %v8961
          %8963 = vdwg.mxu0
          %8964 = vmatpush.bf16.msra.mxu0 %v7784
          %8965 = vmatpush.bf16.msra.mxu0 %v7776
          %8966 = vmatpush.bf16.msra.mxu0 %v7768
          %8967 = vmatpush.bf16.msra.mxu0 %v7760
          %8968 = vmatpush.bf16.msra.mxu0 %v7752
          %8969 = vmatpush.bf16.msra.mxu0 %v7744
          %8970 = vmatpush.bf16.msra.mxu0 %v7736
          %8971 = vmatpush.bf16.msra.mxu0 %v7728
          %8972 = vmatmul.bf16.gmra.mxu0 %v5519
          %v8973 = vpop.f32.mrf.mxu0
          %v8974 = vadd.f32 %v8955, %v8973
          %v8975 = vpop.f32.mrf.mxu0
          %v8976 = vadd.f32 %v8957, %v8975
          %8977 = vmatmul.bf16.gmra.mxu0 %v5527
          %v8978 = vpop.f32.mrf.mxu0
          %v8979 = vadd.f32 %v8960, %v8978
          %v8980 = vpop.f32.mrf.mxu0
          %v8981 = vadd.f32 %v8962, %v8980
          %8982 = vdwg.mxu0
          %8983 = vmatpush.bf16.msra.mxu0 %v7848
          %8984 = vmatpush.bf16.msra.mxu0 %v7840
          %8985 = vmatpush.bf16.msra.mxu0 %v7832
          %8986 = vmatpush.bf16.msra.mxu0 %v7824
          %8987 = vmatpush.bf16.msra.mxu0 %v7816
          %8988 = vmatpush.bf16.msra.mxu0 %v7808
          %8989 = vmatpush.bf16.msra.mxu0 %v7800
          %8990 = vmatpush.bf16.msra.mxu0 %v7792
          %8991 = vmatmul.bf16.gmra.mxu0 %v5520
          %v8992 = vpop.f32.mrf.mxu0
          %v8993 = vadd.f32 %v8974, %v8992
          %v8994 = vpop.f32.mrf.mxu0
          %v8995 = vadd.f32 %v8976, %v8994
          %8996 = vmatmul.bf16.gmra.mxu0 %v5528
          %v8997 = vpop.f32.mrf.mxu0
          %v8998 = vadd.f32 %v8979, %v8997
          %v8999 = vpop.f32.mrf.mxu0
          %v9000 = vadd.f32 %v8981, %v8999
          %9001 = vdwg.mxu0
          %9002 = vmatpush.bf16.msra.mxu0 %v7912
          %9003 = vmatpush.bf16.msra.mxu0 %v7904
          %9004 = vmatpush.bf16.msra.mxu0 %v7896
          %9005 = vmatpush.bf16.msra.mxu0 %v7888
          %9006 = vmatpush.bf16.msra.mxu0 %v7880
          %9007 = vmatpush.bf16.msra.mxu0 %v7872
          %9008 = vmatpush.bf16.msra.mxu0 %v7864
          %9009 = vmatpush.bf16.msra.mxu0 %v7856
          %9010 = vmatmul.bf16.gmra.mxu0 %v5521
          %v9011 = vpop.f32.mrf.mxu0
          %v9012 = vadd.f32 %v8993, %v9011
          %v9013 = vpop.f32.mrf.mxu0
          %v9014 = vadd.f32 %v8995, %v9013
          %9015 = vmatmul.bf16.gmra.mxu0 %v5529
          %v9016 = vpop.f32.mrf.mxu0
          %v9017 = vadd.f32 %v8998, %v9016
          %v9018 = vpop.f32.mrf.mxu0
          %v9019 = vadd.f32 %v9000, %v9018
          %9020 = vdwg.mxu0
          %9021 = vmatpush.bf16.msra.mxu0 %v7976
          %9022 = vmatpush.bf16.msra.mxu0 %v7968
          %9023 = vmatpush.bf16.msra.mxu0 %v7960
          %9024 = vmatpush.bf16.msra.mxu0 %v7952
          %9025 = vmatpush.bf16.msra.mxu0 %v7944
          %9026 = vmatpush.bf16.msra.mxu0 %v7936
          %9027 = vmatpush.bf16.msra.mxu0 %v7928
          %9028 = vmatpush.bf16.msra.mxu0 %v7920
          %9029 = vmatmul.bf16.gmra.mxu0 %v5522
          %v9030 = vpop.f32.mrf.mxu0
          %v9031 = vadd.f32 %v9012, %v9030
          %v9032 = vpop.f32.mrf.mxu0
          %v9033 = vadd.f32 %v9014, %v9032
          %9034 = vmatmul.bf16.gmra.mxu0 %v5530
          %v9035 = vpop.f32.mrf.mxu0
          %v9036 = vadd.f32 %v9017, %v9035
          %v9037 = vpop.f32.mrf.mxu0
          %v9038 = vadd.f32 %v9019, %v9037
          %9039 = vdwg.mxu0
          %9040 = vmatpush.bf16.msra.mxu0 %v8040
          %9041 = vmatpush.bf16.msra.mxu0 %v8032
          %9042 = vmatpush.bf16.msra.mxu0 %v8024
          %9043 = vmatpush.bf16.msra.mxu0 %v8016
          %9044 = vmatpush.bf16.msra.mxu0 %v8008
          %9045 = vmatpush.bf16.msra.mxu0 %v8000
          %9046 = vmatpush.bf16.msra.mxu0 %v7992
          %9047 = vmatpush.bf16.msra.mxu0 %v7984
          %9048 = vmatmul.bf16.gmra.mxu0 %v5523
          %v9049 = vpop.f32.mrf.mxu0
          %v9050 = vadd.f32 %v9031, %v9049
          %v9051 = vpop.f32.mrf.mxu0
          %v9052 = vadd.f32 %v9033, %v9051
          %9053 = vmatmul.bf16.gmra.mxu0 %v5531
          %v9054 = vpop.f32.mrf.mxu0
          %v9055 = vadd.f32 %v9036, %v9054
          %v9056 = vpop.f32.mrf.mxu0
          %v9057 = vadd.f32 %v9038, %v9056
          %9058 = vdwg.mxu0
          %9059 = vmatpush.bf16.msra.mxu0 %v8104
          %9060 = vmatpush.bf16.msra.mxu0 %v8096
          %9061 = vmatpush.bf16.msra.mxu0 %v8088
          %9062 = vmatpush.bf16.msra.mxu0 %v8080
          %9063 = vmatpush.bf16.msra.mxu0 %v8072
          %9064 = vmatpush.bf16.msra.mxu0 %v8064
          %9065 = vmatpush.bf16.msra.mxu0 %v8056
          %9066 = vmatpush.bf16.msra.mxu0 %v8048
          %9067 = vmatmul.bf16.gmra.mxu0 %v5524
          %v9068 = vpop.f32.mrf.mxu0
          %v9069 = vadd.f32 %v9050, %v9068
          %v9070 = vpop.f32.mrf.mxu0
          %v9071 = vadd.f32 %v9052, %v9070
          %9072 = vmatmul.bf16.gmra.mxu0 %v5532
          %v9073 = vpop.f32.mrf.mxu0
          %v9074 = vadd.f32 %v9055, %v9073
          %v9075 = vpop.f32.mrf.mxu0
          %v9076 = vadd.f32 %v9057, %v9075
          %9077 = vdwg.mxu0
          %9078 = vmatpush.bf16.msra.mxu0 %v7657
          %9079 = vmatpush.bf16.msra.mxu0 %v7649
          %9080 = vmatpush.bf16.msra.mxu0 %v7641
          %9081 = vmatpush.bf16.msra.mxu0 %v7633
          %9082 = vmatpush.bf16.msra.mxu0 %v7625
          %9083 = vmatpush.bf16.msra.mxu0 %v7617
          %9084 = vmatpush.bf16.msra.mxu0 %v7609
          %9085 = vmatpush.bf16.msra.mxu0 %v7601
          %9086 = vmatmul.bf16.gmra.mxu0 %v5517
          %v9087 = vpop.f32.mrf.mxu0
          %v9088 = vadd.f32 %v6049, %v9087
          %v9089 = vpop.f32.mrf.mxu0
          %v9090 = vadd.f32 %v6049, %v9089
          %9091 = vmatmul.bf16.gmra.mxu0 %v5525
          %v9092 = vpop.f32.mrf.mxu0
          %v9093 = vadd.f32 %v6049, %v9092
          %v9094 = vpop.f32.mrf.mxu0
          %v9095 = vadd.f32 %v6049, %v9094
          %9096 = vdwg.mxu0
          %9097 = vmatpush.bf16.msra.mxu0 %v7721
          %9098 = vmatpush.bf16.msra.mxu0 %v7713
          %9099 = vmatpush.bf16.msra.mxu0 %v7705
          %9100 = vmatpush.bf16.msra.mxu0 %v7697
          %9101 = vmatpush.bf16.msra.mxu0 %v7689
          %9102 = vmatpush.bf16.msra.mxu0 %v7681
          %9103 = vmatpush.bf16.msra.mxu0 %v7673
          %9104 = vmatpush.bf16.msra.mxu0 %v7665
          %9105 = vmatmul.bf16.gmra.mxu0 %v5518
          %v9106 = vpop.f32.mrf.mxu0
          %v9107 = vadd.f32 %v9088, %v9106
          %v9108 = vpop.f32.mrf.mxu0
          %v9109 = vadd.f32 %v9090, %v9108
          %9110 = vmatmul.bf16.gmra.mxu0 %v5526
          %v9111 = vpop.f32.mrf.mxu0
          %v9112 = vadd.f32 %v9093, %v9111
          %v9113 = vpop.f32.mrf.mxu0
          %v9114 = vadd.f32 %v9095, %v9113
          %9115 = vdwg.mxu0
          %9116 = vmatpush.bf16.msra.mxu0 %v7785
          %9117 = vmatpush.bf16.msra.mxu0 %v7777
          %9118 = vmatpush.bf16.msra.mxu0 %v7769
          %9119 = vmatpush.bf16.msra.mxu0 %v7761
          %9120 = vmatpush.bf16.msra.mxu0 %v7753
          %9121 = vmatpush.bf16.msra.mxu0 %v7745
          %9122 = vmatpush.bf16.msra.mxu0 %v7737
          %9123 = vmatpush.bf16.msra.mxu0 %v7729
          %9124 = vmatmul.bf16.gmra.mxu0 %v5519
          %v9125 = vpop.f32.mrf.mxu0
          %v9126 = vadd.f32 %v9107, %v9125
          %v9127 = vpop.f32.mrf.mxu0
          %v9128 = vadd.f32 %v9109, %v9127
          %9129 = vmatmul.bf16.gmra.mxu0 %v5527
          %v9130 = vpop.f32.mrf.mxu0
          %v9131 = vadd.f32 %v9112, %v9130
          %v9132 = vpop.f32.mrf.mxu0
          %v9133 = vadd.f32 %v9114, %v9132
          %9134 = vdwg.mxu0
          %9135 = vmatpush.bf16.msra.mxu0 %v7849
          %9136 = vmatpush.bf16.msra.mxu0 %v7841
          %9137 = vmatpush.bf16.msra.mxu0 %v7833
          %9138 = vmatpush.bf16.msra.mxu0 %v7825
          %9139 = vmatpush.bf16.msra.mxu0 %v7817
          %9140 = vmatpush.bf16.msra.mxu0 %v7809
          %9141 = vmatpush.bf16.msra.mxu0 %v7801
          %9142 = vmatpush.bf16.msra.mxu0 %v7793
          %9143 = vmatmul.bf16.gmra.mxu0 %v5520
          %v9144 = vpop.f32.mrf.mxu0
          %v9145 = vadd.f32 %v9126, %v9144
          %v9146 = vpop.f32.mrf.mxu0
          %v9147 = vadd.f32 %v9128, %v9146
          %9148 = vmatmul.bf16.gmra.mxu0 %v5528
          %v9149 = vpop.f32.mrf.mxu0
          %v9150 = vadd.f32 %v9131, %v9149
          %v9151 = vpop.f32.mrf.mxu0
          %v9152 = vadd.f32 %v9133, %v9151
          %9153 = vdwg.mxu0
          %9154 = vmatpush.bf16.msra.mxu0 %v7913
          %9155 = vmatpush.bf16.msra.mxu0 %v7905
          %9156 = vmatpush.bf16.msra.mxu0 %v7897
          %9157 = vmatpush.bf16.msra.mxu0 %v7889
          %9158 = vmatpush.bf16.msra.mxu0 %v7881
          %9159 = vmatpush.bf16.msra.mxu0 %v7873
          %9160 = vmatpush.bf16.msra.mxu0 %v7865
          %9161 = vmatpush.bf16.msra.mxu0 %v7857
          %9162 = vmatmul.bf16.gmra.mxu0 %v5521
          %v9163 = vpop.f32.mrf.mxu0
          %v9164 = vadd.f32 %v9145, %v9163
          %v9165 = vpop.f32.mrf.mxu0
          %v9166 = vadd.f32 %v9147, %v9165
          %9167 = vmatmul.bf16.gmra.mxu0 %v5529
          %v9168 = vpop.f32.mrf.mxu0
          %v9169 = vadd.f32 %v9150, %v9168
          %v9170 = vpop.f32.mrf.mxu0
          %v9171 = vadd.f32 %v9152, %v9170
          %9172 = vdwg.mxu0
          %9173 = vmatpush.bf16.msra.mxu0 %v7977
          %9174 = vmatpush.bf16.msra.mxu0 %v7969
          %9175 = vmatpush.bf16.msra.mxu0 %v7961
          %9176 = vmatpush.bf16.msra.mxu0 %v7953
          %9177 = vmatpush.bf16.msra.mxu0 %v7945
          %9178 = vmatpush.bf16.msra.mxu0 %v7937
          %9179 = vmatpush.bf16.msra.mxu0 %v7929
          %9180 = vmatpush.bf16.msra.mxu0 %v7921
          %9181 = vmatmul.bf16.gmra.mxu0 %v5522
          %v9182 = vpop.f32.mrf.mxu0
          %v9183 = vadd.f32 %v9164, %v9182
          %v9184 = vpop.f32.mrf.mxu0
          %v9185 = vadd.f32 %v9166, %v9184
          %9186 = vmatmul.bf16.gmra.mxu0 %v5530
          %v9187 = vpop.f32.mrf.mxu0
          %v9188 = vadd.f32 %v9169, %v9187
          %v9189 = vpop.f32.mrf.mxu0
          %v9190 = vadd.f32 %v9171, %v9189
          %9191 = vdwg.mxu0
          %9192 = vmatpush.bf16.msra.mxu0 %v8041
          %9193 = vmatpush.bf16.msra.mxu0 %v8033
          %9194 = vmatpush.bf16.msra.mxu0 %v8025
          %9195 = vmatpush.bf16.msra.mxu0 %v8017
          %9196 = vmatpush.bf16.msra.mxu0 %v8009
          %9197 = vmatpush.bf16.msra.mxu0 %v8001
          %9198 = vmatpush.bf16.msra.mxu0 %v7993
          %9199 = vmatpush.bf16.msra.mxu0 %v7985
          %9200 = vmatmul.bf16.gmra.mxu0 %v5523
          %v9201 = vpop.f32.mrf.mxu0
          %v9202 = vadd.f32 %v9183, %v9201
          %v9203 = vpop.f32.mrf.mxu0
          %v9204 = vadd.f32 %v9185, %v9203
          %9205 = vmatmul.bf16.gmra.mxu0 %v5531
          %v9206 = vpop.f32.mrf.mxu0
          %v9207 = vadd.f32 %v9188, %v9206
          %v9208 = vpop.f32.mrf.mxu0
          %v9209 = vadd.f32 %v9190, %v9208
          %9210 = vdwg.mxu0
          %9211 = vmatpush.bf16.msra.mxu0 %v8105
          %9212 = vmatpush.bf16.msra.mxu0 %v8097
          %9213 = vmatpush.bf16.msra.mxu0 %v8089
          %9214 = vmatpush.bf16.msra.mxu0 %v8081
          %9215 = vmatpush.bf16.msra.mxu0 %v8073
          %9216 = vmatpush.bf16.msra.mxu0 %v8065
          %9217 = vmatpush.bf16.msra.mxu0 %v8057
          %9218 = vmatpush.bf16.msra.mxu0 %v8049
          %9219 = vmatmul.bf16.gmra.mxu0 %v5524
          %v9220 = vpop.f32.mrf.mxu0
          %v9221 = vadd.f32 %v9202, %v9220
          %v9222 = vpop.f32.mrf.mxu0
          %v9223 = vadd.f32 %v9204, %v9222
          %9224 = vmatmul.bf16.gmra.mxu0 %v5532
          %v9225 = vpop.f32.mrf.mxu0
          %v9226 = vadd.f32 %v9207, %v9225
          %v9227 = vpop.f32.mrf.mxu0
          %v9228 = vadd.f32 %v9209, %v9227
          %9229 = vdwg.mxu0
          %9230 = vmatpush.bf16.msra.mxu0 %v7658
          %9231 = vmatpush.bf16.msra.mxu0 %v7650
          %9232 = vmatpush.bf16.msra.mxu0 %v7642
          %9233 = vmatpush.bf16.msra.mxu0 %v7634
          %9234 = vmatpush.bf16.msra.mxu0 %v7626
          %9235 = vmatpush.bf16.msra.mxu0 %v7618
          %9236 = vmatpush.bf16.msra.mxu0 %v7610
          %9237 = vmatpush.bf16.msra.mxu0 %v7602
          %9238 = vmatmul.bf16.gmra.mxu0 %v5517
          %v9239 = vpop.f32.mrf.mxu0
          %v9240 = vadd.f32 %v6050, %v9239
          %v9241 = vpop.f32.mrf.mxu0
          %v9242 = vadd.f32 %v6050, %v9241
          %9243 = vmatmul.bf16.gmra.mxu0 %v5525
          %v9244 = vpop.f32.mrf.mxu0
          %v9245 = vadd.f32 %v6050, %v9244
          %v9246 = vpop.f32.mrf.mxu0
          %v9247 = vadd.f32 %v6050, %v9246
          %9248 = vdwg.mxu0
          %9249 = vmatpush.bf16.msra.mxu0 %v7722
          %9250 = vmatpush.bf16.msra.mxu0 %v7714
          %9251 = vmatpush.bf16.msra.mxu0 %v7706
          %9252 = vmatpush.bf16.msra.mxu0 %v7698
          %9253 = vmatpush.bf16.msra.mxu0 %v7690
          %9254 = vmatpush.bf16.msra.mxu0 %v7682
          %9255 = vmatpush.bf16.msra.mxu0 %v7674
          %9256 = vmatpush.bf16.msra.mxu0 %v7666
          %9257 = vmatmul.bf16.gmra.mxu0 %v5518
          %v9258 = vpop.f32.mrf.mxu0
          %v9259 = vadd.f32 %v9240, %v9258
          %v9260 = vpop.f32.mrf.mxu0
          %v9261 = vadd.f32 %v9242, %v9260
          %9262 = vmatmul.bf16.gmra.mxu0 %v5526
          %v9263 = vpop.f32.mrf.mxu0
          %v9264 = vadd.f32 %v9245, %v9263
          %v9265 = vpop.f32.mrf.mxu0
          %v9266 = vadd.f32 %v9247, %v9265
          %9267 = vdwg.mxu0
          %9268 = vmatpush.bf16.msra.mxu0 %v7786
          %9269 = vmatpush.bf16.msra.mxu0 %v7778
          %9270 = vmatpush.bf16.msra.mxu0 %v7770
          %9271 = vmatpush.bf16.msra.mxu0 %v7762
          %9272 = vmatpush.bf16.msra.mxu0 %v7754
          %9273 = vmatpush.bf16.msra.mxu0 %v7746
          %9274 = vmatpush.bf16.msra.mxu0 %v7738
          %9275 = vmatpush.bf16.msra.mxu0 %v7730
          %9276 = vmatmul.bf16.gmra.mxu0 %v5519
          %v9277 = vpop.f32.mrf.mxu0
          %v9278 = vadd.f32 %v9259, %v9277
          %v9279 = vpop.f32.mrf.mxu0
          %v9280 = vadd.f32 %v9261, %v9279
          %9281 = vmatmul.bf16.gmra.mxu0 %v5527
          %v9282 = vpop.f32.mrf.mxu0
          %v9283 = vadd.f32 %v9264, %v9282
          %v9284 = vpop.f32.mrf.mxu0
          %v9285 = vadd.f32 %v9266, %v9284
          %9286 = vdwg.mxu0
          %9287 = vmatpush.bf16.msra.mxu0 %v7850
          %9288 = vmatpush.bf16.msra.mxu0 %v7842
          %9289 = vmatpush.bf16.msra.mxu0 %v7834
          %9290 = vmatpush.bf16.msra.mxu0 %v7826
          %9291 = vmatpush.bf16.msra.mxu0 %v7818
          %9292 = vmatpush.bf16.msra.mxu0 %v7810
          %9293 = vmatpush.bf16.msra.mxu0 %v7802
          %9294 = vmatpush.bf16.msra.mxu0 %v7794
          %9295 = vmatmul.bf16.gmra.mxu0 %v5520
          %v9296 = vpop.f32.mrf.mxu0
          %v9297 = vadd.f32 %v9278, %v9296
          %v9298 = vpop.f32.mrf.mxu0
          %v9299 = vadd.f32 %v9280, %v9298
          %9300 = vmatmul.bf16.gmra.mxu0 %v5528
          %v9301 = vpop.f32.mrf.mxu0
          %v9302 = vadd.f32 %v9283, %v9301
          %v9303 = vpop.f32.mrf.mxu0
          %v9304 = vadd.f32 %v9285, %v9303
          %9305 = vdwg.mxu0
          %9306 = vmatpush.bf16.msra.mxu0 %v7914
          %9307 = vmatpush.bf16.msra.mxu0 %v7906
          %9308 = vmatpush.bf16.msra.mxu0 %v7898
          %9309 = vmatpush.bf16.msra.mxu0 %v7890
          %9310 = vmatpush.bf16.msra.mxu0 %v7882
          %9311 = vmatpush.bf16.msra.mxu0 %v7874
          %9312 = vmatpush.bf16.msra.mxu0 %v7866
          %9313 = vmatpush.bf16.msra.mxu0 %v7858
          %9314 = vmatmul.bf16.gmra.mxu0 %v5521
          %v9315 = vpop.f32.mrf.mxu0
          %v9316 = vadd.f32 %v9297, %v9315
          %v9317 = vpop.f32.mrf.mxu0
          %v9318 = vadd.f32 %v9299, %v9317
          %9319 = vmatmul.bf16.gmra.mxu0 %v5529
          %v9320 = vpop.f32.mrf.mxu0
          %v9321 = vadd.f32 %v9302, %v9320
          %v9322 = vpop.f32.mrf.mxu0
          %v9323 = vadd.f32 %v9304, %v9322
          %9324 = vdwg.mxu0
          %9325 = vmatpush.bf16.msra.mxu0 %v7978
          %9326 = vmatpush.bf16.msra.mxu0 %v7970
          %9327 = vmatpush.bf16.msra.mxu0 %v7962
          %9328 = vmatpush.bf16.msra.mxu0 %v7954
          %9329 = vmatpush.bf16.msra.mxu0 %v7946
          %9330 = vmatpush.bf16.msra.mxu0 %v7938
          %9331 = vmatpush.bf16.msra.mxu0 %v7930
          %9332 = vmatpush.bf16.msra.mxu0 %v7922
          %9333 = vmatmul.bf16.gmra.mxu0 %v5522
          %v9334 = vpop.f32.mrf.mxu0
          %v9335 = vadd.f32 %v9316, %v9334
          %v9336 = vpop.f32.mrf.mxu0
          %v9337 = vadd.f32 %v9318, %v9336
          %9338 = vmatmul.bf16.gmra.mxu0 %v5530
          %v9339 = vpop.f32.mrf.mxu0
          %v9340 = vadd.f32 %v9321, %v9339
          %v9341 = vpop.f32.mrf.mxu0
          %v9342 = vadd.f32 %v9323, %v9341
          %9343 = vdwg.mxu0
          %9344 = vmatpush.bf16.msra.mxu0 %v8042
          %9345 = vmatpush.bf16.msra.mxu0 %v8034
          %9346 = vmatpush.bf16.msra.mxu0 %v8026
          %9347 = vmatpush.bf16.msra.mxu0 %v8018
          %9348 = vmatpush.bf16.msra.mxu0 %v8010
          %9349 = vmatpush.bf16.msra.mxu0 %v8002
          %9350 = vmatpush.bf16.msra.mxu0 %v7994
          %9351 = vmatpush.bf16.msra.mxu0 %v7986
          %9352 = vmatmul.bf16.gmra.mxu0 %v5523
          %v9353 = vpop.f32.mrf.mxu0
          %v9354 = vadd.f32 %v9335, %v9353
          %v9355 = vpop.f32.mrf.mxu0
          %v9356 = vadd.f32 %v9337, %v9355
          %9357 = vmatmul.bf16.gmra.mxu0 %v5531
          %v9358 = vpop.f32.mrf.mxu0
          %v9359 = vadd.f32 %v9340, %v9358
          %v9360 = vpop.f32.mrf.mxu0
          %v9361 = vadd.f32 %v9342, %v9360
          %9362 = vdwg.mxu0
          %9363 = vmatpush.bf16.msra.mxu0 %v8106
          %9364 = vmatpush.bf16.msra.mxu0 %v8098
          %9365 = vmatpush.bf16.msra.mxu0 %v8090
          %9366 = vmatpush.bf16.msra.mxu0 %v8082
          %9367 = vmatpush.bf16.msra.mxu0 %v8074
          %9368 = vmatpush.bf16.msra.mxu0 %v8066
          %9369 = vmatpush.bf16.msra.mxu0 %v8058
          %9370 = vmatpush.bf16.msra.mxu0 %v8050
          %9371 = vmatmul.bf16.gmra.mxu0 %v5524
          %v9372 = vpop.f32.mrf.mxu0
          %v9373 = vadd.f32 %v9354, %v9372
          %v9374 = vpop.f32.mrf.mxu0
          %v9375 = vadd.f32 %v9356, %v9374
          %9376 = vmatmul.bf16.gmra.mxu0 %v5532
          %v9377 = vpop.f32.mrf.mxu0
          %v9378 = vadd.f32 %v9359, %v9377
          %v9379 = vpop.f32.mrf.mxu0
          %v9380 = vadd.f32 %v9361, %v9379
          %9381 = vdwg.mxu0
          %9382 = vmatpush.bf16.msra.mxu0 %v7659
          %9383 = vmatpush.bf16.msra.mxu0 %v7651
          %9384 = vmatpush.bf16.msra.mxu0 %v7643
          %9385 = vmatpush.bf16.msra.mxu0 %v7635
          %9386 = vmatpush.bf16.msra.mxu0 %v7627
          %9387 = vmatpush.bf16.msra.mxu0 %v7619
          %9388 = vmatpush.bf16.msra.mxu0 %v7611
          %9389 = vmatpush.bf16.msra.mxu0 %v7603
          %9390 = vmatmul.bf16.gmra.mxu0 %v5517
          %v9391 = vpop.f32.mrf.mxu0
          %v9392 = vadd.f32 %v6051, %v9391
          %v9393 = vpop.f32.mrf.mxu0
          %v9394 = vadd.f32 %v6051, %v9393
          %9395 = vmatmul.bf16.gmra.mxu0 %v5525
          %v9396 = vpop.f32.mrf.mxu0
          %v9397 = vadd.f32 %v6051, %v9396
          %v9398 = vpop.f32.mrf.mxu0
          %v9399 = vadd.f32 %v6051, %v9398
          %9400 = vdwg.mxu0
          %9401 = vmatpush.bf16.msra.mxu0 %v7723
          %9402 = vmatpush.bf16.msra.mxu0 %v7715
          %9403 = vmatpush.bf16.msra.mxu0 %v7707
          %9404 = vmatpush.bf16.msra.mxu0 %v7699
          %9405 = vmatpush.bf16.msra.mxu0 %v7691
          %9406 = vmatpush.bf16.msra.mxu0 %v7683
          %9407 = vmatpush.bf16.msra.mxu0 %v7675
          %9408 = vmatpush.bf16.msra.mxu0 %v7667
          %9409 = vmatmul.bf16.gmra.mxu0 %v5518
          %v9410 = vpop.f32.mrf.mxu0
          %v9411 = vadd.f32 %v9392, %v9410
          %v9412 = vpop.f32.mrf.mxu0
          %v9413 = vadd.f32 %v9394, %v9412
          %9414 = vmatmul.bf16.gmra.mxu0 %v5526
          %v9415 = vpop.f32.mrf.mxu0
          %v9416 = vadd.f32 %v9397, %v9415
          %v9417 = vpop.f32.mrf.mxu0
          %v9418 = vadd.f32 %v9399, %v9417
          %9419 = vdwg.mxu0
          %9420 = vmatpush.bf16.msra.mxu0 %v7787
          %9421 = vmatpush.bf16.msra.mxu0 %v7779
          %9422 = vmatpush.bf16.msra.mxu0 %v7771
          %9423 = vmatpush.bf16.msra.mxu0 %v7763
          %9424 = vmatpush.bf16.msra.mxu0 %v7755
          %9425 = vmatpush.bf16.msra.mxu0 %v7747
          %9426 = vmatpush.bf16.msra.mxu0 %v7739
          %9427 = vmatpush.bf16.msra.mxu0 %v7731
          %9428 = vmatmul.bf16.gmra.mxu0 %v5519
          %v9429 = vpop.f32.mrf.mxu0
          %v9430 = vadd.f32 %v9411, %v9429
          %v9431 = vpop.f32.mrf.mxu0
          %v9432 = vadd.f32 %v9413, %v9431
          %9433 = vmatmul.bf16.gmra.mxu0 %v5527
          %v9434 = vpop.f32.mrf.mxu0
          %v9435 = vadd.f32 %v9416, %v9434
          %v9436 = vpop.f32.mrf.mxu0
          %v9437 = vadd.f32 %v9418, %v9436
          %9438 = vdwg.mxu0
          %9439 = vmatpush.bf16.msra.mxu0 %v7851
          %9440 = vmatpush.bf16.msra.mxu0 %v7843
          %9441 = vmatpush.bf16.msra.mxu0 %v7835
          %9442 = vmatpush.bf16.msra.mxu0 %v7827
          %9443 = vmatpush.bf16.msra.mxu0 %v7819
          %9444 = vmatpush.bf16.msra.mxu0 %v7811
          %9445 = vmatpush.bf16.msra.mxu0 %v7803
          %9446 = vmatpush.bf16.msra.mxu0 %v7795
          %9447 = vmatmul.bf16.gmra.mxu0 %v5520
          %v9448 = vpop.f32.mrf.mxu0
          %v9449 = vadd.f32 %v9430, %v9448
          %v9450 = vpop.f32.mrf.mxu0
          %v9451 = vadd.f32 %v9432, %v9450
          %9452 = vmatmul.bf16.gmra.mxu0 %v5528
          %v9453 = vpop.f32.mrf.mxu0
          %v9454 = vadd.f32 %v9435, %v9453
          %v9455 = vpop.f32.mrf.mxu0
          %v9456 = vadd.f32 %v9437, %v9455
          %9457 = vdwg.mxu0
          %9458 = vmatpush.bf16.msra.mxu0 %v7915
          %9459 = vmatpush.bf16.msra.mxu0 %v7907
          %9460 = vmatpush.bf16.msra.mxu0 %v7899
          %9461 = vmatpush.bf16.msra.mxu0 %v7891
          %9462 = vmatpush.bf16.msra.mxu0 %v7883
          %9463 = vmatpush.bf16.msra.mxu0 %v7875
          %9464 = vmatpush.bf16.msra.mxu0 %v7867
          %9465 = vmatpush.bf16.msra.mxu0 %v7859
          %9466 = vmatmul.bf16.gmra.mxu0 %v5521
          %v9467 = vpop.f32.mrf.mxu0
          %v9468 = vadd.f32 %v9449, %v9467
          %v9469 = vpop.f32.mrf.mxu0
          %v9470 = vadd.f32 %v9451, %v9469
          %9471 = vmatmul.bf16.gmra.mxu0 %v5529
          %v9472 = vpop.f32.mrf.mxu0
          %v9473 = vadd.f32 %v9454, %v9472
          %v9474 = vpop.f32.mrf.mxu0
          %v9475 = vadd.f32 %v9456, %v9474
          %9476 = vdwg.mxu0
          %9477 = vmatpush.bf16.msra.mxu0 %v7979
          %9478 = vmatpush.bf16.msra.mxu0 %v7971
          %9479 = vmatpush.bf16.msra.mxu0 %v7963
          %9480 = vmatpush.bf16.msra.mxu0 %v7955
          %9481 = vmatpush.bf16.msra.mxu0 %v7947
          %9482 = vmatpush.bf16.msra.mxu0 %v7939
          %9483 = vmatpush.bf16.msra.mxu0 %v7931
          %9484 = vmatpush.bf16.msra.mxu0 %v7923
          %9485 = vmatmul.bf16.gmra.mxu0 %v5522
          %v9486 = vpop.f32.mrf.mxu0
          %v9487 = vadd.f32 %v9468, %v9486
          %v9488 = vpop.f32.mrf.mxu0
          %v9489 = vadd.f32 %v9470, %v9488
          %9490 = vmatmul.bf16.gmra.mxu0 %v5530
          %v9491 = vpop.f32.mrf.mxu0
          %v9492 = vadd.f32 %v9473, %v9491
          %v9493 = vpop.f32.mrf.mxu0
          %v9494 = vadd.f32 %v9475, %v9493
          %9495 = vdwg.mxu0
          %9496 = vmatpush.bf16.msra.mxu0 %v8043
          %9497 = vmatpush.bf16.msra.mxu0 %v8035
          %9498 = vmatpush.bf16.msra.mxu0 %v8027
          %9499 = vmatpush.bf16.msra.mxu0 %v8019
          %9500 = vmatpush.bf16.msra.mxu0 %v8011
          %9501 = vmatpush.bf16.msra.mxu0 %v8003
          %9502 = vmatpush.bf16.msra.mxu0 %v7995
          %9503 = vmatpush.bf16.msra.mxu0 %v7987
          %9504 = vmatmul.bf16.gmra.mxu0 %v5523
          %v9505 = vpop.f32.mrf.mxu0
          %v9506 = vadd.f32 %v9487, %v9505
          %v9507 = vpop.f32.mrf.mxu0
          %v9508 = vadd.f32 %v9489, %v9507
          %9509 = vmatmul.bf16.gmra.mxu0 %v5531
          %v9510 = vpop.f32.mrf.mxu0
          %v9511 = vadd.f32 %v9492, %v9510
          %v9512 = vpop.f32.mrf.mxu0
          %v9513 = vadd.f32 %v9494, %v9512
          %9514 = vdwg.mxu0
          %9515 = vmatpush.bf16.msra.mxu0 %v8107
          %9516 = vmatpush.bf16.msra.mxu0 %v8099
          %9517 = vmatpush.bf16.msra.mxu0 %v8091
          %9518 = vmatpush.bf16.msra.mxu0 %v8083
          %9519 = vmatpush.bf16.msra.mxu0 %v8075
          %9520 = vmatpush.bf16.msra.mxu0 %v8067
          %9521 = vmatpush.bf16.msra.mxu0 %v8059
          %9522 = vmatpush.bf16.msra.mxu0 %v8051
          %9523 = vmatmul.bf16.gmra.mxu0 %v5524
          %v9524 = vpop.f32.mrf.mxu0
          %v9525 = vadd.f32 %v9506, %v9524
          %v9526 = vpop.f32.mrf.mxu0
          %v9527 = vadd.f32 %v9508, %v9526
          %9528 = vmatmul.bf16.gmra.mxu0 %v5532
          %v9529 = vpop.f32.mrf.mxu0
          %v9530 = vadd.f32 %v9511, %v9529
          %v9531 = vpop.f32.mrf.mxu0
          %v9532 = vadd.f32 %v9513, %v9531
          %9533 = vdwg.mxu0
          %9534 = vmatpush.bf16.msra.mxu0 %v7660
          %9535 = vmatpush.bf16.msra.mxu0 %v7652
          %9536 = vmatpush.bf16.msra.mxu0 %v7644
          %9537 = vmatpush.bf16.msra.mxu0 %v7636
          %9538 = vmatpush.bf16.msra.mxu0 %v7628
          %9539 = vmatpush.bf16.msra.mxu0 %v7620
          %9540 = vmatpush.bf16.msra.mxu0 %v7612
          %9541 = vmatpush.bf16.msra.mxu0 %v7604
          %9542 = vmatmul.bf16.gmra.mxu0 %v5517
          %v9543 = vpop.f32.mrf.mxu0
          %v9544 = vadd.f32 %v6052, %v9543
          %v9545 = vpop.f32.mrf.mxu0
          %v9546 = vadd.f32 %v6052, %v9545
          %9547 = vmatmul.bf16.gmra.mxu0 %v5525
          %v9548 = vpop.f32.mrf.mxu0
          %v9549 = vadd.f32 %v6052, %v9548
          %v9550 = vpop.f32.mrf.mxu0
          %v9551 = vadd.f32 %v6052, %v9550
          %9552 = vdwg.mxu0
          %9553 = vmatpush.bf16.msra.mxu0 %v7724
          %9554 = vmatpush.bf16.msra.mxu0 %v7716
          %9555 = vmatpush.bf16.msra.mxu0 %v7708
          %9556 = vmatpush.bf16.msra.mxu0 %v7700
          %9557 = vmatpush.bf16.msra.mxu0 %v7692
          %9558 = vmatpush.bf16.msra.mxu0 %v7684
          %9559 = vmatpush.bf16.msra.mxu0 %v7676
          %9560 = vmatpush.bf16.msra.mxu0 %v7668
          %9561 = vmatmul.bf16.gmra.mxu0 %v5518
          %v9562 = vpop.f32.mrf.mxu0
          %v9563 = vadd.f32 %v9544, %v9562
          %v9564 = vpop.f32.mrf.mxu0
          %v9565 = vadd.f32 %v9546, %v9564
          %9566 = vmatmul.bf16.gmra.mxu0 %v5526
          %v9567 = vpop.f32.mrf.mxu0
          %v9568 = vadd.f32 %v9549, %v9567
          %v9569 = vpop.f32.mrf.mxu0
          %v9570 = vadd.f32 %v9551, %v9569
          %9571 = vdwg.mxu0
          %9572 = vmatpush.bf16.msra.mxu0 %v7788
          %9573 = vmatpush.bf16.msra.mxu0 %v7780
          %9574 = vmatpush.bf16.msra.mxu0 %v7772
          %9575 = vmatpush.bf16.msra.mxu0 %v7764
          %9576 = vmatpush.bf16.msra.mxu0 %v7756
          %9577 = vmatpush.bf16.msra.mxu0 %v7748
          %9578 = vmatpush.bf16.msra.mxu0 %v7740
          %9579 = vmatpush.bf16.msra.mxu0 %v7732
          %9580 = vmatmul.bf16.gmra.mxu0 %v5519
          %v9581 = vpop.f32.mrf.mxu0
          %v9582 = vadd.f32 %v9563, %v9581
          %v9583 = vpop.f32.mrf.mxu0
          %v9584 = vadd.f32 %v9565, %v9583
          %9585 = vmatmul.bf16.gmra.mxu0 %v5527
          %v9586 = vpop.f32.mrf.mxu0
          %v9587 = vadd.f32 %v9568, %v9586
          %v9588 = vpop.f32.mrf.mxu0
          %v9589 = vadd.f32 %v9570, %v9588
          %9590 = vdwg.mxu0
          %9591 = vmatpush.bf16.msra.mxu0 %v7852
          %9592 = vmatpush.bf16.msra.mxu0 %v7844
          %9593 = vmatpush.bf16.msra.mxu0 %v7836
          %9594 = vmatpush.bf16.msra.mxu0 %v7828
          %9595 = vmatpush.bf16.msra.mxu0 %v7820
          %9596 = vmatpush.bf16.msra.mxu0 %v7812
          %9597 = vmatpush.bf16.msra.mxu0 %v7804
          %9598 = vmatpush.bf16.msra.mxu0 %v7796
          %9599 = vmatmul.bf16.gmra.mxu0 %v5520
          %v9600 = vpop.f32.mrf.mxu0
          %v9601 = vadd.f32 %v9582, %v9600
          %v9602 = vpop.f32.mrf.mxu0
          %v9603 = vadd.f32 %v9584, %v9602
          %9604 = vmatmul.bf16.gmra.mxu0 %v5528
          %v9605 = vpop.f32.mrf.mxu0
          %v9606 = vadd.f32 %v9587, %v9605
          %v9607 = vpop.f32.mrf.mxu0
          %v9608 = vadd.f32 %v9589, %v9607
          %9609 = vdwg.mxu0
          %9610 = vmatpush.bf16.msra.mxu0 %v7916
          %9611 = vmatpush.bf16.msra.mxu0 %v7908
          %9612 = vmatpush.bf16.msra.mxu0 %v7900
          %9613 = vmatpush.bf16.msra.mxu0 %v7892
          %9614 = vmatpush.bf16.msra.mxu0 %v7884
          %9615 = vmatpush.bf16.msra.mxu0 %v7876
          %9616 = vmatpush.bf16.msra.mxu0 %v7868
          %9617 = vmatpush.bf16.msra.mxu0 %v7860
          %9618 = vmatmul.bf16.gmra.mxu0 %v5521
          %v9619 = vpop.f32.mrf.mxu0
          %v9620 = vadd.f32 %v9601, %v9619
          %v9621 = vpop.f32.mrf.mxu0
          %v9622 = vadd.f32 %v9603, %v9621
          %9623 = vmatmul.bf16.gmra.mxu0 %v5529
          %v9624 = vpop.f32.mrf.mxu0
          %v9625 = vadd.f32 %v9606, %v9624
          %v9626 = vpop.f32.mrf.mxu0
          %v9627 = vadd.f32 %v9608, %v9626
          %9628 = vdwg.mxu0
          %9629 = vmatpush.bf16.msra.mxu0 %v7980
          %9630 = vmatpush.bf16.msra.mxu0 %v7972
          %9631 = vmatpush.bf16.msra.mxu0 %v7964
          %9632 = vmatpush.bf16.msra.mxu0 %v7956
          %9633 = vmatpush.bf16.msra.mxu0 %v7948
          %9634 = vmatpush.bf16.msra.mxu0 %v7940
          %9635 = vmatpush.bf16.msra.mxu0 %v7932
          %9636 = vmatpush.bf16.msra.mxu0 %v7924
          %9637 = vmatmul.bf16.gmra.mxu0 %v5522
          %v9638 = vpop.f32.mrf.mxu0
          %v9639 = vadd.f32 %v9620, %v9638
          %v9640 = vpop.f32.mrf.mxu0
          %v9641 = vadd.f32 %v9622, %v9640
          %9642 = vmatmul.bf16.gmra.mxu0 %v5530
          %v9643 = vpop.f32.mrf.mxu0
          %v9644 = vadd.f32 %v9625, %v9643
          %v9645 = vpop.f32.mrf.mxu0
          %v9646 = vadd.f32 %v9627, %v9645
          %9647 = vdwg.mxu0
          %9648 = vmatpush.bf16.msra.mxu0 %v8044
          %9649 = vmatpush.bf16.msra.mxu0 %v8036
          %9650 = vmatpush.bf16.msra.mxu0 %v8028
          %9651 = vmatpush.bf16.msra.mxu0 %v8020
          %9652 = vmatpush.bf16.msra.mxu0 %v8012
          %9653 = vmatpush.bf16.msra.mxu0 %v8004
          %9654 = vmatpush.bf16.msra.mxu0 %v7996
          %9655 = vmatpush.bf16.msra.mxu0 %v7988
          %9656 = vmatmul.bf16.gmra.mxu0 %v5523
          %v9657 = vpop.f32.mrf.mxu0
          %v9658 = vadd.f32 %v9639, %v9657
          %v9659 = vpop.f32.mrf.mxu0
          %v9660 = vadd.f32 %v9641, %v9659
          %9661 = vmatmul.bf16.gmra.mxu0 %v5531
          %v9662 = vpop.f32.mrf.mxu0
          %v9663 = vadd.f32 %v9644, %v9662
          %v9664 = vpop.f32.mrf.mxu0
          %v9665 = vadd.f32 %v9646, %v9664
          %9666 = vdwg.mxu0
          %9667 = vmatpush.bf16.msra.mxu0 %v8108
          %9668 = vmatpush.bf16.msra.mxu0 %v8100
          %9669 = vmatpush.bf16.msra.mxu0 %v8092
          %9670 = vmatpush.bf16.msra.mxu0 %v8084
          %9671 = vmatpush.bf16.msra.mxu0 %v8076
          %9672 = vmatpush.bf16.msra.mxu0 %v8068
          %9673 = vmatpush.bf16.msra.mxu0 %v8060
          %9674 = vmatpush.bf16.msra.mxu0 %v8052
          %9675 = vmatmul.bf16.gmra.mxu0 %v5524
          %v9676 = vpop.f32.mrf.mxu0
          %v9677 = vadd.f32 %v9658, %v9676
          %v9678 = vpop.f32.mrf.mxu0
          %v9679 = vadd.f32 %v9660, %v9678
          %9680 = vmatmul.bf16.gmra.mxu0 %v5532
          %v9681 = vpop.f32.mrf.mxu0
          %v9682 = vadd.f32 %v9663, %v9681
          %v9683 = vpop.f32.mrf.mxu0
          %v9684 = vadd.f32 %v9665, %v9683
          %9685 = vdwg.mxu0
          %9686 = vmatpush.bf16.msra.mxu0 %v7661
          %9687 = vmatpush.bf16.msra.mxu0 %v7653
          %9688 = vmatpush.bf16.msra.mxu0 %v7645
          %9689 = vmatpush.bf16.msra.mxu0 %v7637
          %9690 = vmatpush.bf16.msra.mxu0 %v7629
          %9691 = vmatpush.bf16.msra.mxu0 %v7621
          %9692 = vmatpush.bf16.msra.mxu0 %v7613
          %9693 = vmatpush.bf16.msra.mxu0 %v7605
          %9694 = vmatmul.bf16.gmra.mxu0 %v5517
          %v9695 = vpop.f32.mrf.mxu0
          %v9696 = vadd.f32 %v6053, %v9695
          %v9697 = vpop.f32.mrf.mxu0
          %v9698 = vadd.f32 %v6053, %v9697
          %9699 = vmatmul.bf16.gmra.mxu0 %v5525
          %v9700 = vpop.f32.mrf.mxu0
          %v9701 = vadd.f32 %v6053, %v9700
          %v9702 = vpop.f32.mrf.mxu0
          %v9703 = vadd.f32 %v6053, %v9702
          %9704 = vdwg.mxu0
          %9705 = vmatpush.bf16.msra.mxu0 %v7725
          %9706 = vmatpush.bf16.msra.mxu0 %v7717
          %9707 = vmatpush.bf16.msra.mxu0 %v7709
          %9708 = vmatpush.bf16.msra.mxu0 %v7701
          %9709 = vmatpush.bf16.msra.mxu0 %v7693
          %9710 = vmatpush.bf16.msra.mxu0 %v7685
          %9711 = vmatpush.bf16.msra.mxu0 %v7677
          %9712 = vmatpush.bf16.msra.mxu0 %v7669
          %9713 = vmatmul.bf16.gmra.mxu0 %v5518
          %v9714 = vpop.f32.mrf.mxu0
          %v9715 = vadd.f32 %v9696, %v9714
          %v9716 = vpop.f32.mrf.mxu0
          %v9717 = vadd.f32 %v9698, %v9716
          %9718 = vmatmul.bf16.gmra.mxu0 %v5526
          %v9719 = vpop.f32.mrf.mxu0
          %v9720 = vadd.f32 %v9701, %v9719
          %v9721 = vpop.f32.mrf.mxu0
          %v9722 = vadd.f32 %v9703, %v9721
          %9723 = vdwg.mxu0
          %9724 = vmatpush.bf16.msra.mxu0 %v7789
          %9725 = vmatpush.bf16.msra.mxu0 %v7781
          %9726 = vmatpush.bf16.msra.mxu0 %v7773
          %9727 = vmatpush.bf16.msra.mxu0 %v7765
          %9728 = vmatpush.bf16.msra.mxu0 %v7757
          %9729 = vmatpush.bf16.msra.mxu0 %v7749
          %9730 = vmatpush.bf16.msra.mxu0 %v7741
          %9731 = vmatpush.bf16.msra.mxu0 %v7733
          %9732 = vmatmul.bf16.gmra.mxu0 %v5519
          %v9733 = vpop.f32.mrf.mxu0
          %v9734 = vadd.f32 %v9715, %v9733
          %v9735 = vpop.f32.mrf.mxu0
          %v9736 = vadd.f32 %v9717, %v9735
          %9737 = vmatmul.bf16.gmra.mxu0 %v5527
          %v9738 = vpop.f32.mrf.mxu0
          %v9739 = vadd.f32 %v9720, %v9738
          %v9740 = vpop.f32.mrf.mxu0
          %v9741 = vadd.f32 %v9722, %v9740
          %9742 = vdwg.mxu0
          %9743 = vmatpush.bf16.msra.mxu0 %v7853
          %9744 = vmatpush.bf16.msra.mxu0 %v7845
          %9745 = vmatpush.bf16.msra.mxu0 %v7837
          %9746 = vmatpush.bf16.msra.mxu0 %v7829
          %9747 = vmatpush.bf16.msra.mxu0 %v7821
          %9748 = vmatpush.bf16.msra.mxu0 %v7813
          %9749 = vmatpush.bf16.msra.mxu0 %v7805
          %9750 = vmatpush.bf16.msra.mxu0 %v7797
          %9751 = vmatmul.bf16.gmra.mxu0 %v5520
          %v9752 = vpop.f32.mrf.mxu0
          %v9753 = vadd.f32 %v9734, %v9752
          %v9754 = vpop.f32.mrf.mxu0
          %v9755 = vadd.f32 %v9736, %v9754
          %9756 = vmatmul.bf16.gmra.mxu0 %v5528
          %v9757 = vpop.f32.mrf.mxu0
          %v9758 = vadd.f32 %v9739, %v9757
          %v9759 = vpop.f32.mrf.mxu0
          %v9760 = vadd.f32 %v9741, %v9759
          %9761 = vdwg.mxu0
          %9762 = vmatpush.bf16.msra.mxu0 %v7917
          %9763 = vmatpush.bf16.msra.mxu0 %v7909
          %9764 = vmatpush.bf16.msra.mxu0 %v7901
          %9765 = vmatpush.bf16.msra.mxu0 %v7893
          %9766 = vmatpush.bf16.msra.mxu0 %v7885
          %9767 = vmatpush.bf16.msra.mxu0 %v7877
          %9768 = vmatpush.bf16.msra.mxu0 %v7869
          %9769 = vmatpush.bf16.msra.mxu0 %v7861
          %9770 = vmatmul.bf16.gmra.mxu0 %v5521
          %v9771 = vpop.f32.mrf.mxu0
          %v9772 = vadd.f32 %v9753, %v9771
          %v9773 = vpop.f32.mrf.mxu0
          %v9774 = vadd.f32 %v9755, %v9773
          %9775 = vmatmul.bf16.gmra.mxu0 %v5529
          %v9776 = vpop.f32.mrf.mxu0
          %v9777 = vadd.f32 %v9758, %v9776
          %v9778 = vpop.f32.mrf.mxu0
          %v9779 = vadd.f32 %v9760, %v9778
          %9780 = vdwg.mxu0
          %9781 = vmatpush.bf16.msra.mxu0 %v7981
          %9782 = vmatpush.bf16.msra.mxu0 %v7973
          %9783 = vmatpush.bf16.msra.mxu0 %v7965
          %9784 = vmatpush.bf16.msra.mxu0 %v7957
          %9785 = vmatpush.bf16.msra.mxu0 %v7949
          %9786 = vmatpush.bf16.msra.mxu0 %v7941
          %9787 = vmatpush.bf16.msra.mxu0 %v7933
          %9788 = vmatpush.bf16.msra.mxu0 %v7925
          %9789 = vmatmul.bf16.gmra.mxu0 %v5522
          %v9790 = vpop.f32.mrf.mxu0
          %v9791 = vadd.f32 %v9772, %v9790
          %v9792 = vpop.f32.mrf.mxu0
          %v9793 = vadd.f32 %v9774, %v9792
          %9794 = vmatmul.bf16.gmra.mxu0 %v5530
          %v9795 = vpop.f32.mrf.mxu0
          %v9796 = vadd.f32 %v9777, %v9795
          %v9797 = vpop.f32.mrf.mxu0
          %v9798 = vadd.f32 %v9779, %v9797
          %9799 = vdwg.mxu0
          %9800 = vmatpush.bf16.msra.mxu0 %v8045
          %9801 = vmatpush.bf16.msra.mxu0 %v8037
          %9802 = vmatpush.bf16.msra.mxu0 %v8029
          %9803 = vmatpush.bf16.msra.mxu0 %v8021
          %9804 = vmatpush.bf16.msra.mxu0 %v8013
          %9805 = vmatpush.bf16.msra.mxu0 %v8005
          %9806 = vmatpush.bf16.msra.mxu0 %v7997
          %9807 = vmatpush.bf16.msra.mxu0 %v7989
          %9808 = vmatmul.bf16.gmra.mxu0 %v5523
          %v9809 = vpop.f32.mrf.mxu0
          %v9810 = vadd.f32 %v9791, %v9809
          %v9811 = vpop.f32.mrf.mxu0
          %v9812 = vadd.f32 %v9793, %v9811
          %9813 = vmatmul.bf16.gmra.mxu0 %v5531
          %v9814 = vpop.f32.mrf.mxu0
          %v9815 = vadd.f32 %v9796, %v9814
          %v9816 = vpop.f32.mrf.mxu0
          %v9817 = vadd.f32 %v9798, %v9816
          %9818 = vdwg.mxu0
          %9819 = vmatpush.bf16.msra.mxu0 %v8109
          %9820 = vmatpush.bf16.msra.mxu0 %v8101
          %9821 = vmatpush.bf16.msra.mxu0 %v8093
          %9822 = vmatpush.bf16.msra.mxu0 %v8085
          %9823 = vmatpush.bf16.msra.mxu0 %v8077
          %9824 = vmatpush.bf16.msra.mxu0 %v8069
          %9825 = vmatpush.bf16.msra.mxu0 %v8061
          %9826 = vmatpush.bf16.msra.mxu0 %v8053
          %9827 = vmatmul.bf16.gmra.mxu0 %v5524
          %v9828 = vpop.f32.mrf.mxu0
          %v9829 = vadd.f32 %v9810, %v9828
          %v9830 = vpop.f32.mrf.mxu0
          %v9831 = vadd.f32 %v9812, %v9830
          %9832 = vmatmul.bf16.gmra.mxu0 %v5532
          %v9833 = vpop.f32.mrf.mxu0
          %v9834 = vadd.f32 %v9815, %v9833
          %v9835 = vpop.f32.mrf.mxu0
          %v9836 = vadd.f32 %v9817, %v9835
          %9837 = vdwg.mxu0
          %v9838 = vadd.f32 %v5004, %v8765
          %v9839 = vadd.f32 %v5005, %v8917
          %v9840 = vadd.f32 %v5006, %v9069
          %v9841 = vadd.f32 %v5007, %v9221
          %v9842 = vadd.f32 %v5008, %v9373
          %v9843 = vadd.f32 %v5009, %v9525
          %v9844 = vadd.f32 %v5010, %v9677
          %v9845 = vadd.f32 %v5011, %v9829
          %v9846 = vadd.f32 %v5012, %v8767
          %v9847 = vadd.f32 %v5013, %v8919
          %v9848 = vadd.f32 %v5014, %v9071
          %v9849 = vadd.f32 %v5015, %v9223
          %v9850 = vadd.f32 %v5016, %v9375
          %v9851 = vadd.f32 %v5017, %v9527
          %v9852 = vadd.f32 %v5018, %v9679
          %v9853 = vadd.f32 %v5019, %v9831
          %v9854 = vadd.f32 %v5020, %v8770
          %v9855 = vadd.f32 %v5021, %v8922
          %v9856 = vadd.f32 %v5022, %v9074
          %v9857 = vadd.f32 %v5023, %v9226
          %v9858 = vadd.f32 %v5024, %v9378
          %v9859 = vadd.f32 %v5025, %v9530
          %v9860 = vadd.f32 %v5026, %v9682
          %v9861 = vadd.f32 %v5027, %v9834
          %v9862 = vadd.f32 %v5028, %v8772
          %v9863 = vadd.f32 %v5029, %v8924
          %v9864 = vadd.f32 %v5030, %v9076
          %v9865 = vadd.f32 %v5031, %v9228
          %v9866 = vadd.f32 %v5032, %v9380
          %v9867 = vadd.f32 %v5033, %v9532
          %v9868 = vadd.f32 %v5034, %v9684
          %v9869 = vadd.f32 %v5035, %v9836
          %9870 = vst [vmem:[#allocation2] sm:$0xff] %v9838
          %9871 = vst [vmem:[#allocation2 + $0x8] sm:$0xff] %v9839
          %9872 = vst [vmem:[#allocation2 + $0x10] sm:$0xff] %v9840
          %9873 = vst [vmem:[#allocation2 + $0x18] sm:$0xff] %v9841
          %9874 = vst [vmem:[#allocation2 + $0x20] sm:$0xff] %v9842
          %9875 = vst [vmem:[#allocation2 + $0x28] sm:$0xff] %v9843
          %9876 = vst [vmem:[#allocation2 + $0x30] sm:$0xff] %v9844
          %9877 = vst [vmem:[#allocation2 + $0x38] sm:$0xff] %v9845
          %9878 = vst [vmem:[#allocation2 + $0x40] sm:$0xff] %v9846
          %9879 = vst [vmem:[#allocation2 + $0x48] sm:$0xff] %v9847
          %9880 = vst [vmem:[#allocation2 + $0x50] sm:$0xff] %v9848
          %9881 = vst [vmem:[#allocation2 + $0x58] sm:$0xff] %v9849
          %9882 = vst [vmem:[#allocation2 + $0x60] sm:$0xff] %v9850
          %9883 = vst [vmem:[#allocation2 + $0x68] sm:$0xff] %v9851
          %9884 = vst [vmem:[#allocation2 + $0x70] sm:$0xff] %v9852
          %9885 = vst [vmem:[#allocation2 + $0x78] sm:$0xff] %v9853
          %9886 = vst [vmem:[#allocation2 + $0x80] sm:$0xff] %v9854
          %9887 = vst [vmem:[#allocation2 + $0x88] sm:$0xff] %v9855
          %9888 = vst [vmem:[#allocation2 + $0x90] sm:$0xff] %v9856
          %9889 = vst [vmem:[#allocation2 + $0x98] sm:$0xff] %v9857
          %9890 = vst [vmem:[#allocation2 + $0xa0] sm:$0xff] %v9858
          %9891 = vst [vmem:[#allocation2 + $0xa8] sm:$0xff] %v9859
          %9892 = vst [vmem:[#allocation2 + $0xb0] sm:$0xff] %v9860
          %9893 = vst [vmem:[#allocation2 + $0xb8] sm:$0xff] %v9861
          %9894 = vst [vmem:[#allocation2 + $0xc0] sm:$0xff] %v9862
          %9895 = vst [vmem:[#allocation2 + $0xc8] sm:$0xff] %v9863
          %9896 = vst [vmem:[#allocation2 + $0xd0] sm:$0xff] %v9864
          %9897 = vst [vmem:[#allocation2 + $0xd8] sm:$0xff] %v9865
          %9898 = vst [vmem:[#allocation2 + $0xe0] sm:$0xff] %v9866
          %9899 = vst [vmem:[#allocation2 + $0xe8] sm:$0xff] %v9867
          %9900 = vst [vmem:[#allocation2 + $0xf0] sm:$0xff] %v9868
          %9901 = vst [vmem:[#allocation2 + $0xf8] sm:$0xff] %v9869
          %v9902 = vld [vmem:[#allocation2] sm:$0xff]
          %v9903 = vld [vmem:[#allocation2 + $0x8] sm:$0xff]
          %v9904 = vld [vmem:[#allocation2 + $0x10] sm:$0xff]
          %v9905 = vld [vmem:[#allocation2 + $0x18] sm:$0xff]
          %v9906 = vld [vmem:[#allocation2 + $0x20] sm:$0xff]
          %v9907 = vld [vmem:[#allocation2 + $0x28] sm:$0xff]
          %v9908 = vld [vmem:[#allocation2 + $0x30] sm:$0xff]
          %v9909 = vld [vmem:[#allocation2 + $0x38] sm:$0xff]
          %v9910 = vld [vmem:[#allocation2 + $0x40] sm:$0xff]
          %v9911 = vld [vmem:[#allocation2 + $0x48] sm:$0xff]
          %v9912 = vld [vmem:[#allocation2 + $0x50] sm:$0xff]
          %v9913 = vld [vmem:[#allocation2 + $0x58] sm:$0xff]
          %v9914 = vld [vmem:[#allocation2 + $0x60] sm:$0xff]
          %v9915 = vld [vmem:[#allocation2 + $0x68] sm:$0xff]
          %v9916 = vld [vmem:[#allocation2 + $0x70] sm:$0xff]
          %v9917 = vld [vmem:[#allocation2 + $0x78] sm:$0xff]
          %v9918 = vld [vmem:[#allocation2 + $0x80] sm:$0xff]
          %v9919 = vld [vmem:[#allocation2 + $0x88] sm:$0xff]
          %v9920 = vld [vmem:[#allocation2 + $0x90] sm:$0xff]
          %v9921 = vld [vmem:[#allocation2 + $0x98] sm:$0xff]
          %v9922 = vld [vmem:[#allocation2 + $0xa0] sm:$0xff]
          %v9923 = vld [vmem:[#allocation2 + $0xa8] sm:$0xff]
          %v9924 = vld [vmem:[#allocation2 + $0xb0] sm:$0xff]
          %v9925 = vld [vmem:[#allocation2 + $0xb8] sm:$0xff]
          %v9926 = vld [vmem:[#allocation2 + $0xc0] sm:$0xff]
          %v9927 = vld [vmem:[#allocation2 + $0xc8] sm:$0xff]
          %v9928 = vld [vmem:[#allocation2 + $0xd0] sm:$0xff]
          %v9929 = vld [vmem:[#allocation2 + $0xd8] sm:$0xff]
          %v9930 = vld [vmem:[#allocation2 + $0xe0] sm:$0xff]
          %v9931 = vld [vmem:[#allocation2 + $0xe8] sm:$0xff]
          %v9932 = vld [vmem:[#allocation2 + $0xf0] sm:$0xff]
          %v9933 = vld [vmem:[#allocation2 + $0xf8] sm:$0xff]
          %v9934 = vadd.f32 %v9902, %v9910
          %v9935 = vadd.f32 %v9934, %v9918
          %v9936 = vadd.f32 %v9935, %v9926
          %v9937 = vrot.slane %v9936, 4
          %v9938 = vadd.f32 %v9936, %v9937
          %v9939 = vrot.slane %v9938, 2
          %v9940 = vadd.f32 %v9938, %v9939
          %v9941 = vrot.slane %v9940, 1
          %v9942 = vadd.f32 %v9940, %v9941
          %v9943 = vadd.f32 %v9903, %v9911
          %v9944 = vadd.f32 %v9943, %v9919
          %v9945 = vadd.f32 %v9944, %v9927
          %v9946 = vrot.slane %v9945, 4
          %v9947 = vadd.f32 %v9945, %v9946
          %v9948 = vrot.slane %v9947, 2
          %v9949 = vadd.f32 %v9947, %v9948
          %v9950 = vrot.slane %v9949, 1
          %v9951 = vadd.f32 %v9949, %v9950
          %v9952 = vadd.f32 %v9904, %v9912
          %v9953 = vadd.f32 %v9952, %v9920
          %v9954 = vadd.f32 %v9953, %v9928
          %v9955 = vrot.slane %v9954, 4
          %v9956 = vadd.f32 %v9954, %v9955
          %v9957 = vrot.slane %v9956, 2
          %v9958 = vadd.f32 %v9956, %v9957
          %v9959 = vrot.slane %v9958, 1
          %v9960 = vadd.f32 %v9958, %v9959
          %v9961 = vadd.f32 %v9905, %v9913
          %v9962 = vadd.f32 %v9961, %v9921
          %v9963 = vadd.f32 %v9962, %v9929
          %v9964 = vrot.slane %v9963, 4
          %v9965 = vadd.f32 %v9963, %v9964
          %v9966 = vrot.slane %v9965, 2
          %v9967 = vadd.f32 %v9965, %v9966
          %v9968 = vrot.slane %v9967, 1
          %v9969 = vadd.f32 %v9967, %v9968
          %v9970 = vadd.f32 %v9906, %v9914
          %v9971 = vadd.f32 %v9970, %v9922
          %v9972 = vadd.f32 %v9971, %v9930
          %v9973 = vrot.slane %v9972, 4
          %v9974 = vadd.f32 %v9972, %v9973
          %v9975 = vrot.slane %v9974, 2
          %v9976 = vadd.f32 %v9974, %v9975
          %v9977 = vrot.slane %v9976, 1
          %v9978 = vadd.f32 %v9976, %v9977
          %v9979 = vadd.f32 %v9907, %v9915
          %v9980 = vadd.f32 %v9979, %v9923
          %v9981 = vadd.f32 %v9980, %v9931
          %v9982 = vrot.slane %v9981, 4
          %v9983 = vadd.f32 %v9981, %v9982
          %v9984 = vrot.slane %v9983, 2
          %v9985 = vadd.f32 %v9983, %v9984
          %v9986 = vrot.slane %v9985, 1
          %v9987 = vadd.f32 %v9985, %v9986
          %v9988 = vadd.f32 %v9908, %v9916
          %v9989 = vadd.f32 %v9988, %v9924
          %v9990 = vadd.f32 %v9989, %v9932
          %v9991 = vrot.slane %v9990, 4
          %v9992 = vadd.f32 %v9990, %v9991
          %v9993 = vrot.slane %v9992, 2
          %v9994 = vadd.f32 %v9992, %v9993
          %v9995 = vrot.slane %v9994, 1
          %v9996 = vadd.f32 %v9994, %v9995
          %v9997 = vadd.f32 %v9909, %v9917
          %v9998 = vadd.f32 %v9997, %v9925
          %v9999 = vadd.f32 %v9998, %v9933
          %v10000 = vrot.slane %v9999, 4
          %v10001 = vadd.f32 %v9999, %v10000
          %v10002 = vrot.slane %v10001, 2
          %v10003 = vadd.f32 %v10001, %v10002
          %v10004 = vrot.slane %v10003, 1
          %v10005 = vadd.f32 %v10003, %v10004
          %v10006 = vmul.f32 %v9942, %v5114
          %v10007 = vmul.f32 %v9951, %v5114
          %v10008 = vmul.f32 %v9960, %v5114
          %v10009 = vmul.f32 %v9969, %v5114
          %v10010 = vmul.f32 %v9978, %v5114
          %v10011 = vmul.f32 %v9987, %v5114
          %v10012 = vmul.f32 %v9996, %v5114
          %v10013 = vmul.f32 %v10005, %v5114
          %v10014 = vsub.f32 %v9902, %v10006
          %v10015 = vsub.f32 %v9903, %v10007
          %v10016 = vsub.f32 %v9904, %v10008
          %v10017 = vsub.f32 %v9905, %v10009
          %v10018 = vsub.f32 %v9906, %v10010
          %v10019 = vsub.f32 %v9907, %v10011
          %v10020 = vsub.f32 %v9908, %v10012
          %v10021 = vsub.f32 %v9909, %v10013
          %v10022 = vsub.f32 %v9910, %v10006
          %v10023 = vsub.f32 %v9911, %v10007
          %v10024 = vsub.f32 %v9912, %v10008
          %v10025 = vsub.f32 %v9913, %v10009
          %v10026 = vsub.f32 %v9914, %v10010
          %v10027 = vsub.f32 %v9915, %v10011
          %v10028 = vsub.f32 %v9916, %v10012
          %v10029 = vsub.f32 %v9917, %v10013
          %v10030 = vsub.f32 %v9918, %v10006
          %v10031 = vsub.f32 %v9919, %v10007
          %v10032 = vsub.f32 %v9920, %v10008
          %v10033 = vsub.f32 %v9921, %v10009
          %v10034 = vsub.f32 %v9922, %v10010
          %v10035 = vsub.f32 %v9923, %v10011
          %v10036 = vsub.f32 %v9924, %v10012
          %v10037 = vsub.f32 %v9925, %v10013
          %v10038 = vsub.f32 %v9926, %v10006
          %v10039 = vsub.f32 %v9927, %v10007
          %v10040 = vsub.f32 %v9928, %v10008
          %v10041 = vsub.f32 %v9929, %v10009
          %v10042 = vsub.f32 %v9930, %v10010
          %v10043 = vsub.f32 %v9931, %v10011
          %v10044 = vsub.f32 %v9932, %v10012
          %v10045 = vsub.f32 %v9933, %v10013
          %v10046 = vmul.f32 %v10014, %v10014
          %v10047 = vmul.f32 %v10015, %v10015
          %v10048 = vmul.f32 %v10016, %v10016
          %v10049 = vmul.f32 %v10017, %v10017
          %v10050 = vmul.f32 %v10018, %v10018
          %v10051 = vmul.f32 %v10019, %v10019
          %v10052 = vmul.f32 %v10020, %v10020
          %v10053 = vmul.f32 %v10021, %v10021
          %v10054 = vmul.f32 %v10022, %v10022
          %v10055 = vmul.f32 %v10023, %v10023
          %v10056 = vmul.f32 %v10024, %v10024
          %v10057 = vmul.f32 %v10025, %v10025
          %v10058 = vmul.f32 %v10026, %v10026
          %v10059 = vmul.f32 %v10027, %v10027
          %v10060 = vmul.f32 %v10028, %v10028
          %v10061 = vmul.f32 %v10029, %v10029
          %v10062 = vmul.f32 %v10030, %v10030
          %v10063 = vmul.f32 %v10031, %v10031
          %v10064 = vmul.f32 %v10032, %v10032
          %v10065 = vmul.f32 %v10033, %v10033
          %v10066 = vmul.f32 %v10034, %v10034
          %v10067 = vmul.f32 %v10035, %v10035
          %v10068 = vmul.f32 %v10036, %v10036
          %v10069 = vmul.f32 %v10037, %v10037
          %v10070 = vmul.f32 %v10038, %v10038
          %v10071 = vmul.f32 %v10039, %v10039
          %v10072 = vmul.f32 %v10040, %v10040
          %v10073 = vmul.f32 %v10041, %v10041
          %v10074 = vmul.f32 %v10042, %v10042
          %v10075 = vmul.f32 %v10043, %v10043
          %v10076 = vmul.f32 %v10044, %v10044
          %v10077 = vmul.f32 %v10045, %v10045
          %v10078 = vadd.f32 %v10046, %v10054
          %v10079 = vadd.f32 %v10078, %v10062
          %v10080 = vadd.f32 %v10079, %v10070
          %v10081 = vrot.slane %v10080, 4
          %v10082 = vadd.f32 %v10080, %v10081
          %v10083 = vrot.slane %v10082, 2
          %v10084 = vadd.f32 %v10082, %v10083
          %v10085 = vrot.slane %v10084, 1
          %v10086 = vadd.f32 %v10084, %v10085
          %v10087 = vadd.f32 %v10047, %v10055
          %v10088 = vadd.f32 %v10087, %v10063
          %v10089 = vadd.f32 %v10088, %v10071
          %v10090 = vrot.slane %v10089, 4
          %v10091 = vadd.f32 %v10089, %v10090
          %v10092 = vrot.slane %v10091, 2
          %v10093 = vadd.f32 %v10091, %v10092
          %v10094 = vrot.slane %v10093, 1
          %v10095 = vadd.f32 %v10093, %v10094
          %v10096 = vadd.f32 %v10048, %v10056
          %v10097 = vadd.f32 %v10096, %v10064
          %v10098 = vadd.f32 %v10097, %v10072
          %v10099 = vrot.slane %v10098, 4
          %v10100 = vadd.f32 %v10098, %v10099
          %v10101 = vrot.slane %v10100, 2
          %v10102 = vadd.f32 %v10100, %v10101
          %v10103 = vrot.slane %v10102, 1
          %v10104 = vadd.f32 %v10102, %v10103
          %v10105 = vadd.f32 %v10049, %v10057
          %v10106 = vadd.f32 %v10105, %v10065
          %v10107 = vadd.f32 %v10106, %v10073
          %v10108 = vrot.slane %v10107, 4
          %v10109 = vadd.f32 %v10107, %v10108
          %v10110 = vrot.slane %v10109, 2
          %v10111 = vadd.f32 %v10109, %v10110
          %v10112 = vrot.slane %v10111, 1
          %v10113 = vadd.f32 %v10111, %v10112
          %v10114 = vadd.f32 %v10050, %v10058
          %v10115 = vadd.f32 %v10114, %v10066
          %v10116 = vadd.f32 %v10115, %v10074
          %v10117 = vrot.slane %v10116, 4
          %v10118 = vadd.f32 %v10116, %v10117
          %v10119 = vrot.slane %v10118, 2
          %v10120 = vadd.f32 %v10118, %v10119
          %v10121 = vrot.slane %v10120, 1
          %v10122 = vadd.f32 %v10120, %v10121
          %v10123 = vadd.f32 %v10051, %v10059
          %v10124 = vadd.f32 %v10123, %v10067
          %v10125 = vadd.f32 %v10124, %v10075
          %v10126 = vrot.slane %v10125, 4
          %v10127 = vadd.f32 %v10125, %v10126
          %v10128 = vrot.slane %v10127, 2
          %v10129 = vadd.f32 %v10127, %v10128
          %v10130 = vrot.slane %v10129, 1
          %v10131 = vadd.f32 %v10129, %v10130
          %v10132 = vadd.f32 %v10052, %v10060
          %v10133 = vadd.f32 %v10132, %v10068
          %v10134 = vadd.f32 %v10133, %v10076
          %v10135 = vrot.slane %v10134, 4
          %v10136 = vadd.f32 %v10134, %v10135
          %v10137 = vrot.slane %v10136, 2
          %v10138 = vadd.f32 %v10136, %v10137
          %v10139 = vrot.slane %v10138, 1
          %v10140 = vadd.f32 %v10138, %v10139
          %v10141 = vadd.f32 %v10053, %v10061
          %v10142 = vadd.f32 %v10141, %v10069
          %v10143 = vadd.f32 %v10142, %v10077
          %v10144 = vrot.slane %v10143, 4
          %v10145 = vadd.f32 %v10143, %v10144
          %v10146 = vrot.slane %v10145, 2
          %v10147 = vadd.f32 %v10145, %v10146
          %v10148 = vrot.slane %v10147, 1
          %v10149 = vadd.f32 %v10147, %v10148
          %v10150 = vmul.f32 %v10086, %v5114
          %v10151 = vmul.f32 %v10095, %v5114
          %v10152 = vmul.f32 %v10104, %v5114
          %v10153 = vmul.f32 %v10113, %v5114
          %v10154 = vmul.f32 %v10122, %v5114
          %v10155 = vmul.f32 %v10131, %v5114
          %v10156 = vmul.f32 %v10140, %v5114
          %v10157 = vmul.f32 %v10149, %v5114
          %v10158 = vadd.f32 %v10150, 1e-05
          %v10159 = vadd.f32 %v10151, 1e-05
          %v10160 = vadd.f32 %v10152, 1e-05
          %v10161 = vadd.f32 %v10153, 1e-05
          %v10162 = vadd.f32 %v10154, 1e-05
          %v10163 = vadd.f32 %v10155, 1e-05
          %v10164 = vadd.f32 %v10156, 1e-05
          %v10165 = vadd.f32 %v10157, 1e-05
          %v10166 = vrsqrt.pop %v10158
          %v10167 = vmul.f32 %v10166, %v10158
          %v10168 = vmul.f32 %v10167, %v10166
          %v10169 = vmul.f32 0.5, %v10168
          %v10170 = vsub.f32 1.5, %v10169
          %v10171 = vmul.f32 %v10166, %v10170
          %vm10172 = vweird.f32 %v10158
          %vm10173 = vweird.f32 %v10166
          %vm10174 = vmor %vm10172, %vm10173
          %v10175 = vsel %vm10174, %v10166, %v10171
          %v10176 = vrsqrt.pop %v10159
          %v10177 = vmul.f32 %v10176, %v10159
          %v10178 = vmul.f32 %v10177, %v10176
          %v10179 = vmul.f32 0.5, %v10178
          %v10180 = vsub.f32 1.5, %v10179
          %v10181 = vmul.f32 %v10176, %v10180
          %vm10182 = vweird.f32 %v10159
          %vm10183 = vweird.f32 %v10176
          %vm10184 = vmor %vm10182, %vm10183
          %v10185 = vsel %vm10184, %v10176, %v10181
          %v10186 = vrsqrt.pop %v10160
          %v10187 = vmul.f32 %v10186, %v10160
          %v10188 = vmul.f32 %v10187, %v10186
          %v10189 = vmul.f32 0.5, %v10188
          %v10190 = vsub.f32 1.5, %v10189
          %v10191 = vmul.f32 %v10186, %v10190
          %vm10192 = vweird.f32 %v10160
          %vm10193 = vweird.f32 %v10186
          %vm10194 = vmor %vm10192, %vm10193
          %v10195 = vsel %vm10194, %v10186, %v10191
          %v10196 = vrsqrt.pop %v10161
          %v10197 = vmul.f32 %v10196, %v10161
          %v10198 = vmul.f32 %v10197, %v10196
          %v10199 = vmul.f32 0.5, %v10198
          %v10200 = vsub.f32 1.5, %v10199
          %v10201 = vmul.f32 %v10196, %v10200
          %vm10202 = vweird.f32 %v10161
          %vm10203 = vweird.f32 %v10196
          %vm10204 = vmor %vm10202, %vm10203
          %v10205 = vsel %vm10204, %v10196, %v10201
          %v10206 = vrsqrt.pop %v10162
          %v10207 = vmul.f32 %v10206, %v10162
          %v10208 = vmul.f32 %v10207, %v10206
          %v10209 = vmul.f32 0.5, %v10208
          %v10210 = vsub.f32 1.5, %v10209
          %v10211 = vmul.f32 %v10206, %v10210
          %vm10212 = vweird.f32 %v10162
          %vm10213 = vweird.f32 %v10206
          %vm10214 = vmor %vm10212, %vm10213
          %v10215 = vsel %vm10214, %v10206, %v10211
          %v10216 = vrsqrt.pop %v10163
          %v10217 = vmul.f32 %v10216, %v10163
          %v10218 = vmul.f32 %v10217, %v10216
          %v10219 = vmul.f32 0.5, %v10218
          %v10220 = vsub.f32 1.5, %v10219
          %v10221 = vmul.f32 %v10216, %v10220
          %vm10222 = vweird.f32 %v10163
          %vm10223 = vweird.f32 %v10216
          %vm10224 = vmor %vm10222, %vm10223
          %v10225 = vsel %vm10224, %v10216, %v10221
          %v10226 = vrsqrt.pop %v10164
          %v10227 = vmul.f32 %v10226, %v10164
          %v10228 = vmul.f32 %v10227, %v10226
          %v10229 = vmul.f32 0.5, %v10228
          %v10230 = vsub.f32 1.5, %v10229
          %v10231 = vmul.f32 %v10226, %v10230
          %vm10232 = vweird.f32 %v10164
          %vm10233 = vweird.f32 %v10226
          %vm10234 = vmor %vm10232, %vm10233
          %v10235 = vsel %vm10234, %v10226, %v10231
          %v10236 = vrsqrt.pop %v10165
          %v10237 = vmul.f32 %v10236, %v10165
          %v10238 = vmul.f32 %v10237, %v10236
          %v10239 = vmul.f32 0.5, %v10238
          %v10240 = vsub.f32 1.5, %v10239
          %v10241 = vmul.f32 %v10236, %v10240
          %vm10242 = vweird.f32 %v10165
          %vm10243 = vweird.f32 %v10236
          %vm10244 = vmor %vm10242, %vm10243
          %v10245 = vsel %vm10244, %v10236, %v10241
          %v10246 = vmul.f32 %v10014, %v10175
          %v10247 = vmul.f32 %v10015, %v10185
          %v10248 = vmul.f32 %v10016, %v10195
          %v10249 = vmul.f32 %v10017, %v10205
          %v10250 = vmul.f32 %v10018, %v10215
          %v10251 = vmul.f32 %v10019, %v10225
          %v10252 = vmul.f32 %v10020, %v10235
          %v10253 = vmul.f32 %v10021, %v10245
          %v10254 = vmul.f32 %v10022, %v10175
          %v10255 = vmul.f32 %v10023, %v10185
          %v10256 = vmul.f32 %v10024, %v10195
          %v10257 = vmul.f32 %v10025, %v10205
          %v10258 = vmul.f32 %v10026, %v10215
          %v10259 = vmul.f32 %v10027, %v10225
          %v10260 = vmul.f32 %v10028, %v10235
          %v10261 = vmul.f32 %v10029, %v10245
          %v10262 = vmul.f32 %v10030, %v10175
          %v10263 = vmul.f32 %v10031, %v10185
          %v10264 = vmul.f32 %v10032, %v10195
          %v10265 = vmul.f32 %v10033, %v10205
          %v10266 = vmul.f32 %v10034, %v10215
          %v10267 = vmul.f32 %v10035, %v10225
          %v10268 = vmul.f32 %v10036, %v10235
          %v10269 = vmul.f32 %v10037, %v10245
          %v10270 = vmul.f32 %v10038, %v10175
          %v10271 = vmul.f32 %v10039, %v10185
          %v10272 = vmul.f32 %v10040, %v10195
          %v10273 = vmul.f32 %v10041, %v10205
          %v10274 = vmul.f32 %v10042, %v10215
          %v10275 = vmul.f32 %v10043, %v10225
          %v10276 = vmul.f32 %v10044, %v10235
          %v10277 = vmul.f32 %v10045, %v10245
          %v10279 = vperm.slane %v4886, 0
          %v10280 = vperm.slane %v4886, 1
          %v10281 = vperm.slane %v4886, 2
          %v10282 = vperm.slane %v4886, 3
          %v10283 = vperm.slane %v4886, 4
          %v10284 = vperm.slane %v4886, 5
          %v10285 = vperm.slane %v4886, 6
          %v10286 = vperm.slane %v4886, 7
          %v10295 = vmul.f32 %v10246, %v10279
          %v10296 = vmul.f32 %v10247, %v10280
          %v10297 = vmul.f32 %v10248, %v10281
          %v10298 = vmul.f32 %v10249, %v10282
          %v10299 = vmul.f32 %v10250, %v10283
          %v10300 = vmul.f32 %v10251, %v10284
          %v10301 = vmul.f32 %v10252, %v10285
          %v10302 = vmul.f32 %v10253, %v10286
          %v10303 = vmul.f32 %v10254, %v10279
          %v10304 = vmul.f32 %v10255, %v10280
          %v10305 = vmul.f32 %v10256, %v10281
          %v10306 = vmul.f32 %v10257, %v10282
          %v10307 = vmul.f32 %v10258, %v10283
          %v10308 = vmul.f32 %v10259, %v10284
          %v10309 = vmul.f32 %v10260, %v10285
          %v10310 = vmul.f32 %v10261, %v10286
          %v10311 = vmul.f32 %v10262, %v10279
          %v10312 = vmul.f32 %v10263, %v10280
          %v10313 = vmul.f32 %v10264, %v10281
          %v10314 = vmul.f32 %v10265, %v10282
          %v10315 = vmul.f32 %v10266, %v10283
          %v10316 = vmul.f32 %v10267, %v10284
          %v10317 = vmul.f32 %v10268, %v10285
          %v10318 = vmul.f32 %v10269, %v10286
          %v10319 = vmul.f32 %v10270, %v10279
          %v10320 = vmul.f32 %v10271, %v10280
          %v10321 = vmul.f32 %v10272, %v10281
          %v10322 = vmul.f32 %v10273, %v10282
          %v10323 = vmul.f32 %v10274, %v10283
          %v10324 = vmul.f32 %v10275, %v10284
          %v10325 = vmul.f32 %v10276, %v10285
          %v10326 = vmul.f32 %v10277, %v10286
          %v10328 = vperm.slane %v4890, 0
          %v10329 = vperm.slane %v4890, 1
          %v10330 = vperm.slane %v4890, 2
          %v10331 = vperm.slane %v4890, 3
          %v10332 = vperm.slane %v4890, 4
          %v10333 = vperm.slane %v4890, 5
          %v10334 = vperm.slane %v4890, 6
          %v10335 = vperm.slane %v4890, 7
          %v10344 = vadd.f32 %v10295, %v10328
          %v10345 = vadd.f32 %v10296, %v10329
          %v10346 = vadd.f32 %v10297, %v10330
          %v10347 = vadd.f32 %v10298, %v10331
          %v10348 = vadd.f32 %v10299, %v10332
          %v10349 = vadd.f32 %v10300, %v10333
          %v10350 = vadd.f32 %v10301, %v10334
          %v10351 = vadd.f32 %v10302, %v10335
          %v10352 = vadd.f32 %v10303, %v10328
          %v10353 = vadd.f32 %v10304, %v10329
          %v10354 = vadd.f32 %v10305, %v10330
          %v10355 = vadd.f32 %v10306, %v10331
          %v10356 = vadd.f32 %v10307, %v10332
          %v10357 = vadd.f32 %v10308, %v10333
          %v10358 = vadd.f32 %v10309, %v10334
          %v10359 = vadd.f32 %v10310, %v10335
          %v10360 = vadd.f32 %v10311, %v10328
          %v10361 = vadd.f32 %v10312, %v10329
          %v10362 = vadd.f32 %v10313, %v10330
          %v10363 = vadd.f32 %v10314, %v10331
          %v10364 = vadd.f32 %v10315, %v10332
          %v10365 = vadd.f32 %v10316, %v10333
          %v10366 = vadd.f32 %v10317, %v10334
          %v10367 = vadd.f32 %v10318, %v10335
          %v10368 = vadd.f32 %v10319, %v10328
          %v10369 = vadd.f32 %v10320, %v10329
          %v10370 = vadd.f32 %v10321, %v10330
          %v10371 = vadd.f32 %v10322, %v10331
          %v10372 = vadd.f32 %v10323, %v10332
          %v10373 = vadd.f32 %v10324, %v10333
          %v10374 = vadd.f32 %v10325, %v10334
          %v10375 = vadd.f32 %v10326, %v10335
          %v10376 = vmax.f32 %v10344, 0.0
          %v10377 = vmax.f32 %v10345, 0.0
          %v10378 = vmax.f32 %v10346, 0.0
          %v10379 = vmax.f32 %v10347, 0.0
          %v10380 = vmax.f32 %v10348, 0.0
          %v10381 = vmax.f32 %v10349, 0.0
          %v10382 = vmax.f32 %v10350, 0.0
          %v10383 = vmax.f32 %v10351, 0.0
          %v10384 = vmax.f32 %v10352, 0.0
          %v10385 = vmax.f32 %v10353, 0.0
          %v10386 = vmax.f32 %v10354, 0.0
          %v10387 = vmax.f32 %v10355, 0.0
          %v10388 = vmax.f32 %v10356, 0.0
          %v10389 = vmax.f32 %v10357, 0.0
          %v10390 = vmax.f32 %v10358, 0.0
          %v10391 = vmax.f32 %v10359, 0.0
          %v10392 = vmax.f32 %v10360, 0.0
          %v10393 = vmax.f32 %v10361, 0.0
          %v10394 = vmax.f32 %v10362, 0.0
          %v10395 = vmax.f32 %v10363, 0.0
          %v10396 = vmax.f32 %v10364, 0.0
          %v10397 = vmax.f32 %v10365, 0.0
          %v10398 = vmax.f32 %v10366, 0.0
          %v10399 = vmax.f32 %v10367, 0.0
          %v10400 = vmax.f32 %v10368, 0.0
          %v10401 = vmax.f32 %v10369, 0.0
          %v10402 = vmax.f32 %v10370, 0.0
          %v10403 = vmax.f32 %v10371, 0.0
          %v10404 = vmax.f32 %v10372, 0.0
          %v10405 = vmax.f32 %v10373, 0.0
          %v10406 = vmax.f32 %v10374, 0.0
          %v10407 = vmax.f32 %v10375, 0.0
          %v10408 = vld [vmem:[#allocation11] sm:$0xff]
          %v10410 = vperm.slane %v10408, 0
          %v10411 = vperm.slane %v10408, 1
          %v10412 = vperm.slane %v10408, 2
          %v10413 = vperm.slane %v10408, 3
          %v10414 = vperm.slane %v10408, 4
          %v10415 = vperm.slane %v10408, 5
          %v10416 = vperm.slane %v10408, 6
          %v10417 = vperm.slane %v10408, 7
          %v10426 = vmul.f32 %v10376, %v10410
          %v10427 = vmul.f32 %v10377, %v10411
          %v10428 = vmul.f32 %v10378, %v10412
          %v10429 = vmul.f32 %v10379, %v10413
          %v10430 = vmul.f32 %v10380, %v10414
          %v10431 = vmul.f32 %v10381, %v10415
          %v10432 = vmul.f32 %v10382, %v10416
          %v10433 = vmul.f32 %v10383, %v10417
          %v10434 = vmul.f32 %v10384, %v10410
          %v10435 = vmul.f32 %v10385, %v10411
          %v10436 = vmul.f32 %v10386, %v10412
          %v10437 = vmul.f32 %v10387, %v10413
          %v10438 = vmul.f32 %v10388, %v10414
          %v10439 = vmul.f32 %v10389, %v10415
          %v10440 = vmul.f32 %v10390, %v10416
          %v10441 = vmul.f32 %v10391, %v10417
          %v10442 = vmul.f32 %v10392, %v10410
          %v10443 = vmul.f32 %v10393, %v10411
          %v10444 = vmul.f32 %v10394, %v10412
          %v10445 = vmul.f32 %v10395, %v10413
          %v10446 = vmul.f32 %v10396, %v10414
          %v10447 = vmul.f32 %v10397, %v10415
          %v10448 = vmul.f32 %v10398, %v10416
          %v10449 = vmul.f32 %v10399, %v10417
          %v10450 = vmul.f32 %v10400, %v10410
          %v10451 = vmul.f32 %v10401, %v10411
          %v10452 = vmul.f32 %v10402, %v10412
          %v10453 = vmul.f32 %v10403, %v10413
          %v10454 = vmul.f32 %v10404, %v10414
          %v10455 = vmul.f32 %v10405, %v10415
          %v10456 = vmul.f32 %v10406, %v10416
          %v10457 = vmul.f32 %v10407, %v10417
          %v10458 = vadd.f32 %v10426, %v10427
          %v10459 = vadd.f32 %v10458, %v10428
          %v10460 = vadd.f32 %v10459, %v10429
          %v10461 = vadd.f32 %v10460, %v10430
          %v10462 = vadd.f32 %v10461, %v10431
          %v10463 = vadd.f32 %v10462, %v10432
          %v10464 = vadd.f32 %v10463, %v10433
          %10465 = vadd.xlane.f32.xlu0 %v10464
          %v10466 = vpop.xlane.xlu0 %10465
          %v10467 = vadd.f32 %v10434, %v10435
          %v10468 = vadd.f32 %v10467, %v10436
          %v10469 = vadd.f32 %v10468, %v10437
          %v10470 = vadd.f32 %v10469, %v10438
          %v10471 = vadd.f32 %v10470, %v10439
          %v10472 = vadd.f32 %v10471, %v10440
          %v10473 = vadd.f32 %v10472, %v10441
          %10474 = vadd.xlane.f32.xlu0 %v10473
          %v10475 = vpop.xlane.xlu0 %10474
          %v10476 = vadd.f32 %v10442, %v10443
          %v10477 = vadd.f32 %v10476, %v10444
          %v10478 = vadd.f32 %v10477, %v10445
          %v10479 = vadd.f32 %v10478, %v10446
          %v10480 = vadd.f32 %v10479, %v10447
          %v10481 = vadd.f32 %v10480, %v10448
          %v10482 = vadd.f32 %v10481, %v10449
          %10483 = vadd.xlane.f32.xlu0 %v10482
          %v10484 = vpop.xlane.xlu0 %10483
          %v10485 = vadd.f32 %v10450, %v10451
          %v10486 = vadd.f32 %v10485, %v10452
          %v10487 = vadd.f32 %v10486, %v10453
          %v10488 = vadd.f32 %v10487, %v10454
          %v10489 = vadd.f32 %v10488, %v10455
          %v10490 = vadd.f32 %v10489, %v10456
          %v10491 = vadd.f32 %v10490, %v10457
          %10492 = vadd.xlane.f32.xlu0 %v10491
          %v10493 = vpop.xlane.xlu0 %10492
          %v10494 = vld [vmem:[#allocation3] sm:$0x1]
          %v10496 = vperm.slane %v10494, 0
          %v10498 = vadd.f32 %v10466, %v10496
          %v10499 = vadd.f32 %v10475, %v10496
          %v10500 = vadd.f32 %v10484, %v10496
          %v10501 = vadd.f32 %v10493, %v10496
          %v10502 = vxor.u32 %v10498, 2147483648
          %v10503 = vxor.u32 %v10499, 2147483648
          %v10504 = vxor.u32 %v10500, 2147483648
          %v10505 = vxor.u32 %v10501, 2147483648
          %v10506 = vmul.f32 %v10502, 1.442695
          %v10507 = vpow.pop %v10506
          %v10508 = vmul.f32 %v10503, 1.442695
          %v10509 = vpow.pop %v10508
          %v10510 = vmul.f32 %v10504, 1.442695
          %v10511 = vpow.pop %v10510
          %v10512 = vmul.f32 %v10505, 1.442695
          %v10513 = vpow.pop %v10512
          %v10514 = vadd.f32 %v10507, 1.0
          %v10515 = vadd.f32 %v10509, 1.0
          %v10516 = vadd.f32 %v10511, 1.0
          %v10517 = vadd.f32 %v10513, 1.0
          %v10518 = vrcp.pop %v10514
          %v10519 = vmul.f32 %v10514, %v10518
          %v10520 = vsub.f32 1.0, %v10519
          %v10521 = vmul.f32 %v10518, %v10520
          %v10522 = vadd.f32 %v10518, %v10521
          %vm10523 = vweird.f32 %v10514
          %vm10524 = vweird.f32 %v10518
          %vm10525 = vmor %vm10523, %vm10524
          %v10526 = vsel %vm10525, %v10518, %v10522
          %v10527 = vand.u32 2147483647, %v10514
          %vm10528 = vcmp.eq.f32.partialorder %v10527, 8.507059e+37
          %v10529 = vand.u32 %v10514, 2147483648
          %v10530 = vor.u32 1.1754944e-38, %v10529
          %v10531 = vsel %vm10528, %v10530, %v10526
          %v10532 = vmul.f32 1.0, %v10531
          %v10533 = vrcp.pop %v10515
          %v10534 = vmul.f32 %v10515, %v10533
          %v10535 = vsub.f32 1.0, %v10534
          %v10536 = vmul.f32 %v10533, %v10535
          %v10537 = vadd.f32 %v10533, %v10536
          %vm10538 = vweird.f32 %v10515
          %vm10539 = vweird.f32 %v10533
          %vm10540 = vmor %vm10538, %vm10539
          %v10541 = vsel %vm10540, %v10533, %v10537
          %v10542 = vand.u32 2147483647, %v10515
          %vm10543 = vcmp.eq.f32.partialorder %v10542, 8.507059e+37
          %v10544 = vand.u32 %v10515, 2147483648
          %v10545 = vor.u32 1.1754944e-38, %v10544
          %v10546 = vsel %vm10543, %v10545, %v10541
          %v10547 = vmul.f32 1.0, %v10546
          %v10548 = vrcp.pop %v10516
          %v10549 = vmul.f32 %v10516, %v10548
          %v10550 = vsub.f32 1.0, %v10549
          %v10551 = vmul.f32 %v10548, %v10550
          %v10552 = vadd.f32 %v10548, %v10551
          %vm10553 = vweird.f32 %v10516
          %vm10554 = vweird.f32 %v10548
          %vm10555 = vmor %vm10553, %vm10554
          %v10556 = vsel %vm10555, %v10548, %v10552
          %v10557 = vand.u32 2147483647, %v10516
          %vm10558 = vcmp.eq.f32.partialorder %v10557, 8.507059e+37
          %v10559 = vand.u32 %v10516, 2147483648
          %v10560 = vor.u32 1.1754944e-38, %v10559
          %v10561 = vsel %vm10558, %v10560, %v10556
          %v10562 = vmul.f32 1.0, %v10561
          %v10563 = vrcp.pop %v10517
          %v10564 = vmul.f32 %v10517, %v10563
          %v10565 = vsub.f32 1.0, %v10564
          %v10566 = vmul.f32 %v10563, %v10565
          %v10567 = vadd.f32 %v10563, %v10566
          %vm10568 = vweird.f32 %v10517
          %vm10569 = vweird.f32 %v10563
          %vm10570 = vmor %vm10568, %vm10569
          %v10571 = vsel %vm10570, %v10563, %v10567
          %v10572 = vand.u32 2147483647, %v10517
          %vm10573 = vcmp.eq.f32.partialorder %v10572, 8.507059e+37
          %v10574 = vand.u32 %v10517, 2147483648
          %v10575 = vor.u32 1.1754944e-38, %v10574
          %v10576 = vsel %vm10573, %v10575, %v10571
          %v10577 = vmul.f32 1.0, %v10576
          %vm10578 = vcmask 7168
          %10579 = vst.msk [vmem:[%s6] sm:$0xff] %vm10578, %v10532
          %10580 = vst.msk [vmem:[%s6 + $0x8] sm:$0xff] %vm10578, %v10547
          %10581 = vst.msk [vmem:[%s6 + $0x10] sm:$0xff] %vm10578, %v10562
          %10582 = vst.msk [vmem:[%s6 + $0x18] sm:$0xff] %vm10578, %v10577
        $region72: #{tpu_custom_call.1} parent=43 // pred_fallthru
          _
        // Predicated region
        $region73: #{tpu_custom_call.1} parent=43 // pred_check
          %p10583 = pneg %p175
        $region74: #{tpu_custom_call.1} parent=43 // pred_check_branch
          %10585 = sbr.rel (%p10583) target = $region76
        $region75: #{tpu_custom_call.1} parent=43 // pred_region
          _
        $region76: #{tpu_custom_call.1} parent=43 // pred_fallthru
          _
        // Predicated region
        $region77: #{tpu_custom_call.1} parent=43 // pred_check
          %p10586 = pneg %p175
        $region78: #{tpu_custom_call.1} parent=43 // pred_check_branch
          %10588 = sbr.rel (%p10586) target = $region80
        $region79: #{tpu_custom_call.1} parent=43 // pred_region
          _
        $region80: #{tpu_custom_call.1} parent=43 // pred_fallthru
          _
      $region44: #{tpu_custom_call.1} parent=5 // pred_fallthru
        _
      %p10589 = scmp.le.s32.totalorder 2, %s21
      // Predicated region
      $region81: #{tpu_custom_call.1} parent=5 // pred_check
        %p10590 = pneg %p10589
      $region82: #{tpu_custom_call.1} parent=5 // pred_check_branch
        %10592 = sbr.rel (%p10590) target = $region84
      $region83: #{tpu_custom_call.1} parent=5 // pred_region
        %s10593 = ssub.s32 %s21, 2
      $region84: #{tpu_custom_call.1} parent=5 // pred_fallthru
        _
    $region6: #{tpu_custom_call.1} parent=1 // loop_footer
      %s25 = sadd.s32 1, %s21
    $region7: #{tpu_custom_call.1} parent=1 // loop_footer_branch
      %20 = sbr.rel target = $region3
    $region8: #{tpu_custom_call.1} parent=1 // loop_exit
      _
    %10594 = vsyncpa [#allocation5], 1
    %s10595 = scalar_lea.sflag [#allocation5], 1
    %10596 = vsyncpa %s10595, 1
    %10597 = vsyncpa [#allocation7], 1
    %s10598 = scalar_lea.sflag [#allocation7], 1
    %10599 = vsyncpa %s10598, 1
    %10600 = vsyncpa [#allocation10], 1

</llo_original>
